<compile_context>
chip_gen: v5e
topology: v5e:2x2
jax: 0.10.0
libtpu: 0.0.40
codegen_flags: <defaults>
</compile_context>

<pallas_src>
import math
from functools import partial

import jax
import jax.numpy as jnp
from jax import lax
from jax.experimental import pallas as pl
from jax.experimental.pallas import tpu as pltpu

BN_EPS = 1e-5
_LANES = 512                  # lane-dense width for elementwise kernels
_ACT_DTYPE = jnp.bfloat16     # network activation dtype (accumulate in f32)


def _round_up(x, m):
    return ((x + m - 1) // m) * m


def _cparams(*dims):
    return pltpu.CompilerParams(
        dimension_semantics=dims,
        vmem_limit_bytes=32 * 1024 * 1024)


# ----------------------------------------------------------------------------- kernels
def _conv3x3x3_s1_kernel(x_hbm, w_ref, scale_ref, shift_ref, *rest,
                         cin, tm, rows, hw_off, w_off, has_res, act):
    """Direct stride-1 3x3x3 conv on a flattened padded volume.

    x_hbm : [mp + span_pad, cin] (HBM, pl.ANY)   -- padded activation, flat row-major
    w_ref : [27*cin, cout]                       -- taps stacked along rows
    out   : [tm, cout] per grid step; tap t reads rows [i*tm + off_t, ... + tm).
    """
    if has_res:
        res_ref, o_ref, xbuf, sem = rest
    else:
        o_ref, xbuf, sem = rest

    start = pl.multiple_of(pl.program_id(0) * tm, 8)
    cp = pltpu.make_async_copy(x_hbm.at[pl.ds(start, rows), :], xbuf, sem)
    cp.start()
    cp.wait()

    cout = o_ref.shape[-1]
    acc = jnp.zeros((tm, cout), jnp.float32)
    for dz in range(3):
        for dy in range(3):
            for dx in range(3):
                off = dz * hw_off + dy * w_off + dx          # static tap offset
                t = (dz * 3 + dy) * 3 + dx
                xt = xbuf[pl.ds(off, tm), :]                  # [tm, cin] (VMEM slice)
                wt = w_ref[t * cin:(t + 1) * cin, :]          # [cin, cout]
                acc = acc + jnp.dot(xt, wt, preferred_element_type=jnp.float32)

    acc = acc * scale_ref[...] + shift_ref[...]               # fused BatchNorm (eval)
    if has_res:
        acc = acc + res_ref[...].astype(jnp.float32)          # fused residual add
    if act == "relu":
        acc = jnp.maximum(acc, 0.0)
    o_ref[...] = acc.astype(o_ref.dtype)


def _matmul_bn_act_kernel(x_ref, w_ref, scale_ref, shift_ref, o_ref, *, act):
    acc = jnp.dot(x_ref[...], w_ref[...], preferred_element_type=jnp.float32)
    acc = acc * scale_ref[...] + shift_ref[...]
    if act == "relu":
        acc = jnp.maximum(acc, 0.0)
    o_ref[...] = acc.astype(o_ref.dtype)


def _max3_kernel(a_ref, b_ref, c_ref, o_ref):
    o_ref[...] = jnp.maximum(jnp.maximum(a_ref[...], b_ref[...]), c_ref[...])


def _head_kernel(x_ref, w_ref, b_ref, o_ref, acc_ref, *, inv_s):
    k = pl.program_id(0)

    @pl.when(k == 0)
    def _():
        acc_ref[...] = jnp.zeros_like(acc_ref)

    acc_ref[...] += jnp.sum(x_ref[...].astype(jnp.float32), axis=1)

    @pl.when(k == pl.num_programs(0) - 1)
    def _():
        pooled = acc_ref[...] * inv_s
        logits = jnp.dot(pooled, w_ref[...],
                         preferred_element_type=jnp.float32) + b_ref[...]
        o_ref[...] = jax.nn.sigmoid(logits)


# ----------------------------------------------------------------------------- wrappers
def conv3x3x3_s1(x, w, bn, act="relu", residual=None):
    """Direct (no im2col) 3x3x3, stride 1, pad 1 conv with fused BN (+residual, +act)."""
    N, D, H, W, cin = x.shape
    cout = w.shape[-1]
    Dp, Hp, Wp = D + 2, H + 2, W + 2
    mrows = N * Dp * Hp * Wp                      # output rows in padded coordinates
    guard = Hp * Wp + Wp + 1                      # |most negative tap offset|
    span = 2 * guard                              # largest (shifted) tap offset
    span_pad = _round_up(span, 8)

    tm = max(512, _round_up(min(span, 2048), 128))
    tm = min(tm, 2048, _round_up(mrows, 8))
    mp = _round_up(mrows, tm)

    xq = jnp.pad(x.astype(_ACT_DTYPE), ((0, 0), (1, 1), (1, 1), (1, 1), (0, 0)))
    xflat = xq.reshape(mrows, cin)
    tail = (mp - mrows) + (span_pad - guard)
    xbig = jnp.pad(xflat, ((guard, tail), (0, 0)))    # [mp + span_pad, cin]

    wq = w.reshape(27 * cin, cout).astype(_ACT_DTYPE)
    scale = (bn["gamma"] / jnp.sqrt(bn["var"] + BN_EPS)).astype(jnp.float32)
    shift = (bn["beta"] - bn["mean"] * scale).astype(jnp.float32)
    scale = scale.reshape(1, cout)
    shift = shift.reshape(1, cout)

    has_res = residual is not None
    args = [xbig, wq, scale, shift]
    in_specs = [
        pl.BlockSpec(memory_space=pl.ANY),                      # activation stays in HBM
        pl.BlockSpec((27 * cin, cout), lambda i: (0, 0)),
        pl.BlockSpec((1, cout), lambda i: (0, 0)),
        pl.BlockSpec((1, cout), lambda i: (0, 0)),
    ]
    if has_res:
        rp = jnp.pad(residual.astype(_ACT_DTYPE),
                     ((0, 0), (1, 1), (1, 1), (1, 1), (0, 0))).reshape(mrows, cout)
        rp = jnp.pad(rp, ((0, mp - mrows), (0, 0)))
        args.append(rp)
        in_specs.append(pl.BlockSpec((tm, cout), lambda i: (i, 0)))

    rows = tm + span_pad
    out = pl.pallas_call(
        partial(_conv3x3x3_s1_kernel, cin=cin, tm=tm, rows=rows,
                hw_off=Hp * Wp, w_off=Wp, has_res=has_res, act=act),
        out_shape=jax.ShapeDtypeStruct((mp, cout), _ACT_DTYPE),
        grid=(mp // tm,),
        in_specs=in_specs,
        out_specs=pl.BlockSpec((tm, cout), lambda i: (i, 0)),
        scratch_shapes=[pltpu.VMEM((rows, cin), _ACT_DTYPE),
                        pltpu.SemaphoreType.DMA],
        compiler_params=_cparams("parallel"),
    )(*args)
    out = out[:mrows].reshape(N, Dp, Hp, Wp, cout)
    return out[:, 1:1 + D, 1:1 + H, 1:1 + W, :]


def matmul_bn_act(x, w, scale, shift, act="none"):
    """(M,K)@(K,Cout) bf16 with fused per-channel scale/shift + activation."""
    m, k = x.shape
    cout = w.shape[1]
    tm = min(512, _round_up(m, 8))
    mp = _round_up(m, tm)
    xp = jnp.pad(x, ((0, mp - m), (0, 0)))
    out = pl.pallas_call(
        partial(_matmul_bn_act_kernel, act=act),
        out_shape=jax.ShapeDtypeStruct((mp, cout), _ACT_DTYPE),
        grid=(mp // tm,),
        in_specs=[
            pl.BlockSpec((tm, k), lambda i: (i, 0)),
            pl.BlockSpec((k, cout), lambda i: (0, 0)),
            pl.BlockSpec((1, cout), lambda i: (0, 0)),
            pl.BlockSpec((1, cout), lambda i: (0, 0)),
        ],
        out_specs=pl.BlockSpec((tm, cout), lambda i: (i, 0)),
        compiler_params=_cparams("parallel"),
    )(xp, w, scale, shift)
    return out[:m]


def im2col_3d(x, ksize, stride, pad):
    N, D, H, W, C = x.shape
    kd, kh, kw = ksize
    sd, sh, sw = stride
    pd, ph, pw = pad
    xp = jnp.pad(x, ((0, 0), (pd, pd), (ph, ph), (pw, pw), (0, 0)))
    Do = (D + 2 * pd - kd) // sd + 1
    Ho = (H + 2 * ph - kh) // sh + 1
    Wo = (W + 2 * pw - kw) // sw + 1
    cols = []
    for dz in range(kd):
        for dy in range(kh):
            for dx in range(kw):
                cols.append(xp[:, dz:dz + sd * (Do - 1) + 1:sd,
                               dy:dy + sh * (Ho - 1) + 1:sh,
                               dx:dx + sw * (Wo - 1) + 1:sw, :])
    patches = jnp.stack(cols, axis=-2)                  # [N,Do,Ho,Wo,taps,C]
    return patches.reshape(N * Do * Ho * Wo, kd * kh * kw * C), (N, Do, Ho, Wo)


def conv3d_bn_act_im2col(x, w, bn, stride, pad, act):
    """Generic strided conv (stem / stride-2 / 1x1x1) via bf16 im2col + tiled matmul."""
    kd, kh, kw, cin, cout = w.shape
    cols, (N, Do, Ho, Wo) = im2col_3d(x.astype(_ACT_DTYPE), (kd, kh, kw), stride, pad)
    scale = (bn["gamma"] / jnp.sqrt(bn["var"] + BN_EPS)).astype(jnp.float32)
    shift = (bn["beta"] - bn["mean"] * scale).astype(jnp.float32)
    out = matmul_bn_act(cols,
                        w.reshape(kd * kh * kw * cin, cout).astype(_ACT_DTYPE),
                        scale.reshape(1, cout), shift.reshape(1, cout), act)
    return out.reshape(N, Do, Ho, Wo, cout)


def _elementwise_max3(a, b, c):
    """max(a,b,c) elementwise, tiled over a lane-dense (-1, 512) layout."""
    shape, dtype, n = a.shape, a.dtype, a.size
    rows = pl.cdiv(n, _LANES)
    br = min(1024, _round_up(rows, 8))
    rows_p = _round_up(rows, br)
    total = rows_p * _LANES

    def prep(t):
        return jnp.pad(t.reshape(-1), (0, total - n)).reshape(rows_p, _LANES)

    out = pl.pallas_call(
        _max3_kernel,
        out_shape=jax.ShapeDtypeStruct((rows_p, _LANES), dtype),
        grid=(rows_p // br,),
        in_specs=[pl.BlockSpec((br, _LANES), lambda i: (i, 0))] * 3,
        out_specs=pl.BlockSpec((br, _LANES), lambda i: (i, 0)),
        compiler_params=_cparams("parallel"),
    )(prep(a), prep(b), prep(c))
    return out.reshape(-1)[:n].reshape(shape)


def _maxpool1d_3s2p1(x, axis):
    size = x.shape[axis]
    out_sz = (size + 2 - 3) // 2 + 1
    pad_cfg = [(0, 0)] * x.ndim
    pad_cfg[axis] = (1, 1)
    xp = jnp.pad(x, pad_cfg, constant_values=-jnp.inf)
    lim = 2 * (out_sz - 1) + 1
    s0 = lax.slice_in_dim(xp, 0, lim, stride=2, axis=axis)
    s1 = lax.slice_in_dim(xp, 1, 1 + lim, stride=2, axis=axis)
    s2 = lax.slice_in_dim(xp, 2, 2 + lim, stride=2, axis=axis)
    return _elementwise_max3(s0, s1, s2)


def maxpool3d_3s2p1(x):
    """MaxPool3d(kernel=3, stride=2, padding=1), done separably along D, H, W."""
    for axis in (1, 2, 3):
        x = _maxpool1d_3s2p1(x, axis)
    return x


def head(x, fc_w, fc_b, *, ts=512):
    """AdaptiveAvgPool3d((1,1,1)) -> Linear -> sigmoid as a tiled spatial reduction."""
    N, D, H, W, C = x.shape
    s = D * H * W
    xr = x.reshape(N, s, C)
    ts = min(ts, _round_up(s, 8))
    sp = _round_up(s, ts)
    xr = jnp.pad(xr, ((0, 0), (0, sp - s), (0, 0)))
    ncls = fc_w.shape[1]
    return pl.pallas_call(
        partial(_head_kernel, inv_s=1.0 / s),
        out_shape=jax.ShapeDtypeStruct((N, ncls), jnp.float32),
        grid=(sp // ts,),
        in_specs=[
            pl.BlockSpec((N, ts, C), lambda i: (0, i, 0)),
            pl.BlockSpec((C, ncls), lambda i: (0, 0)),
            pl.BlockSpec((1, ncls), lambda i: (0, 0)),
        ],
        out_specs=pl.BlockSpec((N, ncls), lambda i: (0, 0)),
        scratch_shapes=[pltpu.VMEM((N, C), jnp.float32)],
        compiler_params=_cparams("arbitrary"),
    )(xr, fc_w.astype(jnp.float32), fc_b.reshape(1, ncls).astype(jnp.float32))


# ----------------------------------------------------------------------------- model
def _kaiming_conv(key, kd, kh, kw, cin, cout):
    fan_out = cout * kd * kh * kw
    std = math.sqrt(2.0 / fan_out)
    return std * jax.random.normal(key, (kd, kh, kw, cin, cout), jnp.float32)


def _bn_params(c):
    return {"gamma": jnp.ones((c,), jnp.float32),
            "beta": jnp.zeros((c,), jnp.float32),
            "mean": jnp.zeros((c,), jnp.float32),
            "var": jnp.ones((c,), jnp.float32)}


def init_params(key, *, block_inplanes=(8, 16, 32, 64), layers=(1, 1, 1, 1),
                n_input_channels=3, conv1_t_size=7, n_classes=2, widen_factor=1.0):
    block_inplanes = [int(c * widen_factor) for c in block_inplanes]
    keys = iter(jax.random.split(key, 64))
    params = {}
    in_planes = block_inplanes[0]
    params["conv1_w"] = _kaiming_conv(next(keys), conv1_t_size, 7, 7,
                                      n_input_channels, in_planes)
    params["bn1"] = _bn_params(in_planes)

    for li, (planes, nblocks) in enumerate(zip(block_inplanes, layers)):
        stride = 1 if li == 0 else 2
        blocks = []
        for bi in range(nblocks):
            bstride = stride if bi == 0 else 1
            bp = {
                "conv1_w": _kaiming_conv(next(keys), 3, 3, 3, in_planes, planes),
                "bn1": _bn_params(planes),
                "conv2_w": _kaiming_conv(next(keys), 3, 3, 3, planes, planes),
                "bn2": _bn_params(planes),
            }
            if bi == 0 and (bstride != 1 or in_planes != planes):
                bp["down_w"] = _kaiming_conv(next(keys), 1, 1, 1, in_planes, planes)
                bp["down_bn"] = _bn_params(planes)
            blocks.append(bp)
            in_planes = planes
        params[f"layer{li + 1}"] = blocks

    fc_in = block_inplanes[3]
    k = 1.0 / math.sqrt(fc_in)
    params["fc_w"] = jax.random.uniform(next(keys), (fc_in, n_classes),
                                        jnp.float32, -k, k)
    params["fc_b"] = jax.random.uniform(next(keys), (n_classes,),
                                        jnp.float32, -k, k)
    return params


def basic_block(x, p, stride):
    if stride == 1:
        out = conv3x3x3_s1(x, p["conv1_w"], p["bn1"], act="relu")
    else:
        out = conv3d_bn_act_im2col(x, p["conv1_w"], p["bn1"],
                                   stride=(stride,) * 3, pad=(1, 1, 1), act="relu")
    if "down_w" in p:
        residual = conv3d_bn_act_im2col(x, p["down_w"], p["down_bn"],
                                        stride=(stride,) * 3, pad=(0, 0, 0), act="none")
    else:
        residual = x
    # conv2 is always stride 1: BN + residual add + ReLU fused into its epilogue.
    return conv3x3x3_s1(out, p["conv2_w"], p["bn2"], act="relu", residual=residual)


def resnet_forward(params, x_ncdhw, *, conv1_t_stride=1, no_max_pool=False):
    # layout: PyTorch NCDHW -> NDHWC (channels on the 128-lane axis), bf16 activations.
    x = jnp.transpose(x_ncdhw, (0, 2, 3, 4, 1)).astype(_ACT_DTYPE)
    t_pad = params["conv1_w"].shape[0] // 2
    x = conv3d_bn_act_im2col(x, params["conv1_w"], params["bn1"],
                             stride=(conv1_t_stride, 2, 2), pad=(t_pad, 3, 3), act="relu")
    if not no_max_pool:
        x = maxpool3d_3s2p1(x)
    for li, stride in zip((1, 2, 3, 4), (1, 2, 2, 2)):
        blocks = params[f"layer{li}"]
        x = basic_block(x, blocks[0], stride)
        for bp in blocks[1:]:
            x = basic_block(x, bp, 1)
        # Dropout3d (eval mode) == identity
    return head(x, params["fc_w"], params["fc_b"])


# ----------------------------------------------------------------------------- main
if __name__ == "__main__":
    key = jax.random.PRNGKey(0)
    pkey, xkey, ckey = jax.random.split(key, 3)

    # --- unit check: direct stride-1 conv kernel (BN + residual + ReLU fused) ---
    kx, kw, kr, kg, kb, km, kv = jax.random.split(ckey, 7)
    cx = jax.random.normal(kx, (1, 5, 6, 7, 8), jnp.float32)
    cw = 0.1 * jax.random.normal(kw, (3, 3, 3, 8, 16), jnp.float32)
    cres = jax.random.normal(kr, (1, 5, 6, 7, 16), jnp.float32)
    cbn = {"gamma": jax.random.uniform(kg, (16,), jnp.float32, 0.5, 1.5),
           "beta": 0.1 * jax.random.normal(kb, (16,), jnp.float32),
           "mean": 0.1 * jax.random.normal(km, (16,), jnp.float32),
           "var": jax.random.uniform(kv, (16,), jnp.float32, 0.5, 1.5)}
    got = conv3x3x3_s1(cx, cw, cbn, act="relu", residual=cres).astype(jnp.float32)
    xb = cx.astype(_ACT_DTYPE).astype(jnp.float32)
    wb = cw.astype(_ACT_DTYPE).astype(jnp.float32)
    ref = lax.conv_general_dilated(xb, wb, (1, 1, 1), [(1, 1)] * 3,
                                   dimension_numbers=("NDHWC", "DHWIO", "NDHWC"),
                                   precision=lax.Precision.HIGHEST)
    rscale = cbn["gamma"] / jnp.sqrt(cbn["var"] + BN_EPS)
    ref = ref * rscale + (cbn["beta"] - cbn["mean"] * rscale)
    ref = jnp.maximum(ref + cres.astype(_ACT_DTYPE).astype(jnp.float32), 0.0)
    assert bool(jnp.allclose(got, ref, atol=5e-2, rtol=5e-2)), \
        float(jnp.max(jnp.abs(got - ref)))

    # --- unit check: separable max-pool vs. reduce_window ---
    px = jax.random.normal(kx, (2, 5, 7, 6, 16), jnp.float32).astype(_ACT_DTYPE)
    pgot = maxpool3d_3s2p1(px)
    pref = lax.reduce_window(px, jnp.array(-jnp.inf, px.dtype), lax.max,
                             (1, 3, 3, 3, 1), (1, 2, 2, 2, 1),
                             [(0, 0), (1, 1), (1, 1), (1, 1), (0, 0)])
    assert pgot.shape == pref.shape
    assert bool(jnp.all(pgot == pref))

    # --- full forward pass ---
    params = init_params(pkey, block_inplanes=(8, 16, 32, 64), layers=(1, 1, 1, 1),
                         n_input_channels=3, conv1_t_size=7, n_classes=2)
    # small 3D volume: N=2, C=3, D=8, H=W=16 (NCDHW, PyTorch convention)
    x = jax.random.normal(xkey, (2, 3, 8, 16, 16), jnp.float32)

    fwd = jax.jit(resnet_forward)
    out = jax.block_until_ready(fwd(params, x))

    assert out.shape == (2, 2), out.shape
    assert bool(jnp.all(jnp.isfinite(out)))
    assert bool(jnp.all((out >= 0.0) & (out <= 1.0)))   # post-sigmoid
    print("KERNEL_OK")
</pallas_src>

<mosaic_0001>
module attributes {stable_mosaic.version = 11 : i64} {
  func.func @_conv3x3x3_s1_kernel(%arg0: i32, %arg1: memref<672x8xbf16, #tpu.memory_space<any>>, %arg2: memref<216x16xbf16, #tpu.memory_space<vmem>>, %arg3: memref<1x16xf32, #tpu.memory_space<vmem>>, %arg4: memref<1x16xf32, #tpu.memory_space<vmem>>, %arg5: memref<504x16xbf16, #tpu.memory_space<vmem>>, %arg6: memref<504x16xbf16, #tpu.memory_space<vmem>>, %arg7: memref<672x8xbf16, #tpu.memory_space<vmem>>, %arg8: memref<!tpu.dma_semaphore, #tpu.memory_space<semaphore_mem>>) attributes {dimension_semantics = [#tpu.dimension_semantics<parallel>], iteration_bounds = array<i64: 1>, scalar_prefetch = 0 : i64, scratch_operands = 2 : i64, tpu.core_type = #tpu.core_type<tc>, window_params = [{}, {pipeline_mode = #tpu.pipeline_mode<synchronous>, transform_indices = @transform_1, window_bounds = array<i64: 216, 16>}, {pipeline_mode = #tpu.pipeline_mode<synchronous>, transform_indices = @transform_2, window_bounds = array<i64: 1, 16>}, {pipeline_mode = #tpu.pipeline_mode<synchronous>, transform_indices = @transform_3, window_bounds = array<i64: 1, 16>}, {transform_indices = @transform_4, window_bounds = array<i64: 504, 16>}, {transform_indices = @transform_5, window_bounds = array<i64: 504, 16>}]} {
    %c504_i32 = arith.constant 504 : i32
    %0 = arith.muli %arg0, %c504_i32 : i32
    %1 = tpu.assume_multiple %0, 8 : i32
    %c0_i32 = arith.constant 0 : i32
    %2 = tpu.memref_slice %arg1[%1, %c0_i32] : memref<672x8xbf16, #tpu.memory_space<any>> -> memref<672x8xbf16, #tpu.memory_space<any>>
    tpu.enqueue_dma source(%2 : memref<672x8xbf16, #tpu.memory_space<any>>) target(%arg7 : memref<672x8xbf16, #tpu.memory_space<vmem>>) target_semaphore(%arg8 : memref<!tpu.dma_semaphore, #tpu.memory_space<semaphore_mem>>)
    %c0_i32_0 = arith.constant 0 : i32
    %3 = tpu.memref_slice %arg1[%1, %c0_i32_0] : memref<672x8xbf16, #tpu.memory_space<any>> -> memref<672x8xbf16, #tpu.memory_space<any>>
    tpu.wait_dma2 semaphore(%arg8 : memref<!tpu.dma_semaphore, #tpu.memory_space<semaphore_mem>>) src(%3 : memref<672x8xbf16, #tpu.memory_space<any>>) dst(%arg7 : memref<672x8xbf16, #tpu.memory_space<vmem>>)
    %cst = arith.constant 0.000000e+00 : f32
    %4 = vector.broadcast %cst : f32 to vector<504x16xf32>
    %c0 = arith.constant 0 : index
    %c0_1 = arith.constant 0 : index
    %5 = vector.load %arg7[%c0, %c0_1] : memref<672x8xbf16, #tpu.memory_space<vmem>>, vector<504x8xbf16>
    %c0_2 = arith.constant 0 : index
    %c0_3 = arith.constant 0 : index
    %6 = vector.load %arg2[%c0_2, %c0_3] : memref<216x16xbf16, #tpu.memory_space<vmem>>, vector<8x16xbf16>
    %cst_4 = arith.constant dense<0.000000e+00> : vector<504x16xf32>
    %7 = tpu.matmul %5, %6, %cst_4 {dimension_numbers = #tpu.dot_dimension_numbers<[1], [0], [0], [1], [0, 0, 1, 1], [], []>} : vector<504x8xbf16>, vector<8x16xbf16>, vector<504x16xf32> -> vector<504x16xf32>
    %8 = arith.addf %4, %7 : vector<504x16xf32>
    %c1 = arith.constant 1 : index
    %c0_5 = arith.constant 0 : index
    %9 = vector.load %arg7[%c1, %c0_5] : memref<672x8xbf16, #tpu.memory_space<vmem>>, vector<504x8xbf16>
    %c8 = arith.constant 8 : index
    %c0_6 = arith.constant 0 : index
    %10 = vector.load %arg2[%c8, %c0_6] : memref<216x16xbf16, #tpu.memory_space<vmem>>, vector<8x16xbf16>
    %cst_7 = arith.constant dense<0.000000e+00> : vector<504x16xf32>
    %11 = tpu.matmul %9, %10, %cst_7 {dimension_numbers = #tpu.dot_dimension_numbers<[1], [0], [0], [1], [0, 0, 1, 1], [], []>} : vector<504x8xbf16>, vector<8x16xbf16>, vector<504x16xf32> -> vector<504x16xf32>
    %12 = arith.addf %8, %11 : vector<504x16xf32>
    %c2 = arith.constant 2 : index
    %c0_8 = arith.constant 0 : index
    %13 = vector.load %arg7[%c2, %c0_8] : memref<672x8xbf16, #tpu.memory_space<vmem>>, vector<504x8xbf16>
    %c16 = arith.constant 16 : index
    %c0_9 = arith.constant 0 : index
    %14 = vector.load %arg2[%c16, %c0_9] : memref<216x16xbf16, #tpu.memory_space<vmem>>, vector<8x16xbf16>
    %cst_10 = arith.constant dense<0.000000e+00> : vector<504x16xf32>
    %15 = tpu.matmul %13, %14, %cst_10 {dimension_numbers = #tpu.dot_dimension_numbers<[1], [0], [0], [1], [0, 0, 1, 1], [], []>} : vector<504x8xbf16>, vector<8x16xbf16>, vector<504x16xf32> -> vector<504x16xf32>
    %16 = arith.addf %12, %15 : vector<504x16xf32>
    %c9 = arith.constant 9 : index
    %c0_11 = arith.constant 0 : index
    %17 = vector.load %arg7[%c9, %c0_11] : memref<672x8xbf16, #tpu.memory_space<vmem>>, vector<504x8xbf16>
    %c24 = arith.constant 24 : index
    %c0_12 = arith.constant 0 : index
    %18 = vector.load %arg2[%c24, %c0_12] : memref<216x16xbf16, #tpu.memory_space<vmem>>, vector<8x16xbf16>
    %cst_13 = arith.constant dense<0.000000e+00> : vector<504x16xf32>
    %19 = tpu.matmul %17, %18, %cst_13 {dimension_numbers = #tpu.dot_dimension_numbers<[1], [0], [0], [1], [0, 0, 1, 1], [], []>} : vector<504x8xbf16>, vector<8x16xbf16>, vector<504x16xf32> -> vector<504x16xf32>
    %20 = arith.addf %16, %19 : vector<504x16xf32>
    %c10 = arith.constant 10 : index
    %c0_14 = arith.constant 0 : index
    %21 = vector.load %arg7[%c10, %c0_14] : memref<672x8xbf16, #tpu.memory_space<vmem>>, vector<504x8xbf16>
    %c32 = arith.constant 32 : index
    %c0_15 = arith.constant 0 : index
    %22 = vector.load %arg2[%c32, %c0_15] : memref<216x16xbf16, #tpu.memory_space<vmem>>, vector<8x16xbf16>
    %cst_16 = arith.constant dense<0.000000e+00> : vector<504x16xf32>
    %23 = tpu.matmul %21, %22, %cst_16 {dimension_numbers = #tpu.dot_dimension_numbers<[1], [0], [0], [1], [0, 0, 1, 1], [], []>} : vector<504x8xbf16>, vector<8x16xbf16>, vector<504x16xf32> -> vector<504x16xf32>
    %24 = arith.addf %20, %23 : vector<504x16xf32>
    %c11 = arith.constant 11 : index
    %c0_17 = arith.constant 0 : index
    %25 = vector.load %arg7[%c11, %c0_17] : memref<672x8xbf16, #tpu.memory_space<vmem>>, vector<504x8xbf16>
    %c40 = arith.constant 40 : index
    %c0_18 = arith.constant 0 : index
    %26 = vector.load %arg2[%c40, %c0_18] : memref<216x16xbf16, #tpu.memory_space<vmem>>, vector<8x16xbf16>
    %cst_19 = arith.constant dense<0.000000e+00> : vector<504x16xf32>
    %27 = tpu.matmul %25, %26, %cst_19 {dimension_numbers = #tpu.dot_dimension_numbers<[1], [0], [0], [1], [0, 0, 1, 1], [], []>} : vector<504x8xbf16>, vector<8x16xbf16>, vector<504x16xf32> -> vector<504x16xf32>
    %28 = arith.addf %24, %27 : vector<504x16xf32>
    %c18 = arith.constant 18 : index
    %c0_20 = arith.constant 0 : index
    %29 = vector.load %arg7[%c18, %c0_20] : memref<672x8xbf16, #tpu.memory_space<vmem>>, vector<504x8xbf16>
    %c48 = arith.constant 48 : index
    %c0_21 = arith.constant 0 : index
    %30 = vector.load %arg2[%c48, %c0_21] : memref<216x16xbf16, #tpu.memory_space<vmem>>, vector<8x16xbf16>
    %cst_22 = arith.constant dense<0.000000e+00> : vector<504x16xf32>
    %31 = tpu.matmul %29, %30, %cst_22 {dimension_numbers = #tpu.dot_dimension_numbers<[1], [0], [0], [1], [0, 0, 1, 1], [], []>} : vector<504x8xbf16>, vector<8x16xbf16>, vector<504x16xf32> -> vector<504x16xf32>
    %32 = arith.addf %28, %31 : vector<504x16xf32>
    %c19 = arith.constant 19 : index
    %c0_23 = arith.constant 0 : index
    %33 = vector.load %arg7[%c19, %c0_23] : memref<672x8xbf16, #tpu.memory_space<vmem>>, vector<504x8xbf16>
    %c56 = arith.constant 56 : index
    %c0_24 = arith.constant 0 : index
    %34 = vector.load %arg2[%c56, %c0_24] : memref<216x16xbf16, #tpu.memory_space<vmem>>, vector<8x16xbf16>
    %cst_25 = arith.constant dense<0.000000e+00> : vector<504x16xf32>
    %35 = tpu.matmul %33, %34, %cst_25 {dimension_numbers = #tpu.dot_dimension_numbers<[1], [0], [0], [1], [0, 0, 1, 1], [], []>} : vector<504x8xbf16>, vector<8x16xbf16>, vector<504x16xf32> -> vector<504x16xf32>
    %36 = arith.addf %32, %35 : vector<504x16xf32>
    %c20 = arith.constant 20 : index
    %c0_26 = arith.constant 0 : index
    %37 = vector.load %arg7[%c20, %c0_26] : memref<672x8xbf16, #tpu.memory_space<vmem>>, vector<504x8xbf16>
    %c64 = arith.constant 64 : index
    %c0_27 = arith.constant 0 : index
    %38 = vector.load %arg2[%c64, %c0_27] : memref<216x16xbf16, #tpu.memory_space<vmem>>, vector<8x16xbf16>
    %cst_28 = arith.constant dense<0.000000e+00> : vector<504x16xf32>
    %39 = tpu.matmul %37, %38, %cst_28 {dimension_numbers = #tpu.dot_dimension_numbers<[1], [0], [0], [1], [0, 0, 1, 1], [], []>} : vector<504x8xbf16>, vector<8x16xbf16>, vector<504x16xf32> -> vector<504x16xf32>
    %40 = arith.addf %36, %39 : vector<504x16xf32>
    %c72 = arith.constant 72 : index
    %c0_29 = arith.constant 0 : index
    %41 = vector.load %arg7[%c72, %c0_29] : memref<672x8xbf16, #tpu.memory_space<vmem>>, vector<504x8xbf16>
    %c72_30 = arith.constant 72 : index
    %c0_31 = arith.constant 0 : index
    %42 = vector.load %arg2[%c72_30, %c0_31] : memref<216x16xbf16, #tpu.memory_space<vmem>>, vector<8x16xbf16>
    %cst_32 = arith.constant dense<0.000000e+00> : vector<504x16xf32>
    %43 = tpu.matmul %41, %42, %cst_32 {dimension_numbers = #tpu.dot_dimension_numbers<[1], [0], [0], [1], [0, 0, 1, 1], [], []>} : vector<504x8xbf16>, vector<8x16xbf16>, vector<504x16xf32> -> vector<504x16xf32>
    %44 = arith.addf %40, %43 : vector<504x16xf32>
    %c73 = arith.constant 73 : index
    %c0_33 = arith.constant 0 : index
    %45 = vector.load %arg7[%c73, %c0_33] : memref<672x8xbf16, #tpu.memory_space<vmem>>, vector<504x8xbf16>
    %c80 = arith.constant 80 : index
    %c0_34 = arith.constant 0 : index
    %46 = vector.load %arg2[%c80, %c0_34] : memref<216x16xbf16, #tpu.memory_space<vmem>>, vector<8x16xbf16>
    %cst_35 = arith.constant dense<0.000000e+00> : vector<504x16xf32>
    %47 = tpu.matmul %45, %46, %cst_35 {dimension_numbers = #tpu.dot_dimension_numbers<[1], [0], [0], [1], [0, 0, 1, 1], [], []>} : vector<504x8xbf16>, vector<8x16xbf16>, vector<504x16xf32> -> vector<504x16xf32>
    %48 = arith.addf %44, %47 : vector<504x16xf32>
    %c74 = arith.constant 74 : index
    %c0_36 = arith.constant 0 : index
    %49 = vector.load %arg7[%c74, %c0_36] : memref<672x8xbf16, #tpu.memory_space<vmem>>, vector<504x8xbf16>
    %c88 = arith.constant 88 : index
    %c0_37 = arith.constant 0 : index
    %50 = vector.load %arg2[%c88, %c0_37] : memref<216x16xbf16, #tpu.memory_space<vmem>>, vector<8x16xbf16>
    %cst_38 = arith.constant dense<0.000000e+00> : vector<504x16xf32>
    %51 = tpu.matmul %49, %50, %cst_38 {dimension_numbers = #tpu.dot_dimension_numbers<[1], [0], [0], [1], [0, 0, 1, 1], [], []>} : vector<504x8xbf16>, vector<8x16xbf16>, vector<504x16xf32> -> vector<504x16xf32>
    %52 = arith.addf %48, %51 : vector<504x16xf32>
    %c81 = arith.constant 81 : index
    %c0_39 = arith.constant 0 : index
    %53 = vector.load %arg7[%c81, %c0_39] : memref<672x8xbf16, #tpu.memory_space<vmem>>, vector<504x8xbf16>
    %c96 = arith.constant 96 : index
    %c0_40 = arith.constant 0 : index
    %54 = vector.load %arg2[%c96, %c0_40] : memref<216x16xbf16, #tpu.memory_space<vmem>>, vector<8x16xbf16>
    %cst_41 = arith.constant dense<0.000000e+00> : vector<504x16xf32>
    %55 = tpu.matmul %53, %54, %cst_41 {dimension_numbers = #tpu.dot_dimension_numbers<[1], [0], [0], [1], [0, 0, 1, 1], [], []>} : vector<504x8xbf16>, vector<8x16xbf16>, vector<504x16xf32> -> vector<504x16xf32>
    %56 = arith.addf %52, %55 : vector<504x16xf32>
    %c82 = arith.constant 82 : index
    %c0_42 = arith.constant 0 : index
    %57 = vector.load %arg7[%c82, %c0_42] : memref<672x8xbf16, #tpu.memory_space<vmem>>, vector<504x8xbf16>
    %c104 = arith.constant 104 : index
    %c0_43 = arith.constant 0 : index
    %58 = vector.load %arg2[%c104, %c0_43] : memref<216x16xbf16, #tpu.memory_space<vmem>>, vector<8x16xbf16>
    %cst_44 = arith.constant dense<0.000000e+00> : vector<504x16xf32>
    %59 = tpu.matmul %57, %58, %cst_44 {dimension_numbers = #tpu.dot_dimension_numbers<[1], [0], [0], [1], [0, 0, 1, 1], [], []>} : vector<504x8xbf16>, vector<8x16xbf16>, vector<504x16xf32> -> vector<504x16xf32>
    %60 = arith.addf %56, %59 : vector<504x16xf32>
    %c83 = arith.constant 83 : index
    %c0_45 = arith.constant 0 : index
    %61 = vector.load %arg7[%c83, %c0_45] : memref<672x8xbf16, #tpu.memory_space<vmem>>, vector<504x8xbf16>
    %c112 = arith.constant 112 : index
    %c0_46 = arith.constant 0 : index
    %62 = vector.load %arg2[%c112, %c0_46] : memref<216x16xbf16, #tpu.memory_space<vmem>>, vector<8x16xbf16>
    %cst_47 = arith.constant dense<0.000000e+00> : vector<504x16xf32>
    %63 = tpu.matmul %61, %62, %cst_47 {dimension_numbers = #tpu.dot_dimension_numbers<[1], [0], [0], [1], [0, 0, 1, 1], [], []>} : vector<504x8xbf16>, vector<8x16xbf16>, vector<504x16xf32> -> vector<504x16xf32>
    %64 = arith.addf %60, %63 : vector<504x16xf32>
    %c90 = arith.constant 90 : index
    %c0_48 = arith.constant 0 : index
    %65 = vector.load %arg7[%c90, %c0_48] : memref<672x8xbf16, #tpu.memory_space<vmem>>, vector<504x8xbf16>
    %c120 = arith.constant 120 : index
    %c0_49 = arith.constant 0 : index
    %66 = vector.load %arg2[%c120, %c0_49] : memref<216x16xbf16, #tpu.memory_space<vmem>>, vector<8x16xbf16>
    %cst_50 = arith.constant dense<0.000000e+00> : vector<504x16xf32>
    %67 = tpu.matmul %65, %66, %cst_50 {dimension_numbers = #tpu.dot_dimension_numbers<[1], [0], [0], [1], [0, 0, 1, 1], [], []>} : vector<504x8xbf16>, vector<8x16xbf16>, vector<504x16xf32> -> vector<504x16xf32>
    %68 = arith.addf %64, %67 : vector<504x16xf32>
    %c91 = arith.constant 91 : index
    %c0_51 = arith.constant 0 : index
    %69 = vector.load %arg7[%c91, %c0_51] : memref<672x8xbf16, #tpu.memory_space<vmem>>, vector<504x8xbf16>
    %c128 = arith.constant 128 : index
    %c0_52 = arith.constant 0 : index
    %70 = vector.load %arg2[%c128, %c0_52] : memref<216x16xbf16, #tpu.memory_space<vmem>>, vector<8x16xbf16>
    %cst_53 = arith.constant dense<0.000000e+00> : vector<504x16xf32>
    %71 = tpu.matmul %69, %70, %cst_53 {dimension_numbers = #tpu.dot_dimension_numbers<[1], [0], [0], [1], [0, 0, 1, 1], [], []>} : vector<504x8xbf16>, vector<8x16xbf16>, vector<504x16xf32> -> vector<504x16xf32>
    %72 = arith.addf %68, %71 : vector<504x16xf32>
    %c92 = arith.constant 92 : index
    %c0_54 = arith.constant 0 : index
    %73 = vector.load %arg7[%c92, %c0_54] : memref<672x8xbf16, #tpu.memory_space<vmem>>, vector<504x8xbf16>
    %c136 = arith.constant 136 : index
    %c0_55 = arith.constant 0 : index
    %74 = vector.load %arg2[%c136, %c0_55] : memref<216x16xbf16, #tpu.memory_space<vmem>>, vector<8x16xbf16>
    %cst_56 = arith.constant dense<0.000000e+00> : vector<504x16xf32>
    %75 = tpu.matmul %73, %74, %cst_56 {dimension_numbers = #tpu.dot_dimension_numbers<[1], [0], [0], [1], [0, 0, 1, 1], [], []>} : vector<504x8xbf16>, vector<8x16xbf16>, vector<504x16xf32> -> vector<504x16xf32>
    %76 = arith.addf %72, %75 : vector<504x16xf32>
    %c144 = arith.constant 144 : index
    %c0_57 = arith.constant 0 : index
    %77 = vector.load %arg7[%c144, %c0_57] : memref<672x8xbf16, #tpu.memory_space<vmem>>, vector<504x8xbf16>
    %c144_58 = arith.constant 144 : index
    %c0_59 = arith.constant 0 : index
    %78 = vector.load %arg2[%c144_58, %c0_59] : memref<216x16xbf16, #tpu.memory_space<vmem>>, vector<8x16xbf16>
    %cst_60 = arith.constant dense<0.000000e+00> : vector<504x16xf32>
    %79 = tpu.matmul %77, %78, %cst_60 {dimension_numbers = #tpu.dot_dimension_numbers<[1], [0], [0], [1], [0, 0, 1, 1], [], []>} : vector<504x8xbf16>, vector<8x16xbf16>, vector<504x16xf32> -> vector<504x16xf32>
    %80 = arith.addf %76, %79 : vector<504x16xf32>
    %c145 = arith.constant 145 : index
    %c0_61 = arith.constant 0 : index
    %81 = vector.load %arg7[%c145, %c0_61] : memref<672x8xbf16, #tpu.memory_space<vmem>>, vector<504x8xbf16>
    %c152 = arith.constant 152 : index
    %c0_62 = arith.constant 0 : index
    %82 = vector.load %arg2[%c152, %c0_62] : memref<216x16xbf16, #tpu.memory_space<vmem>>, vector<8x16xbf16>
    %cst_63 = arith.constant dense<0.000000e+00> : vector<504x16xf32>
    %83 = tpu.matmul %81, %82, %cst_63 {dimension_numbers = #tpu.dot_dimension_numbers<[1], [0], [0], [1], [0, 0, 1, 1], [], []>} : vector<504x8xbf16>, vector<8x16xbf16>, vector<504x16xf32> -> vector<504x16xf32>
    %84 = arith.addf %80, %83 : vector<504x16xf32>
    %c146 = arith.constant 146 : index
    %c0_64 = arith.constant 0 : index
    %85 = vector.load %arg7[%c146, %c0_64] : memref<672x8xbf16, #tpu.memory_space<vmem>>, vector<504x8xbf16>
    %c160 = arith.constant 160 : index
    %c0_65 = arith.constant 0 : index
    %86 = vector.load %arg2[%c160, %c0_65] : memref<216x16xbf16, #tpu.memory_space<vmem>>, vector<8x16xbf16>
    %cst_66 = arith.constant dense<0.000000e+00> : vector<504x16xf32>
    %87 = tpu.matmul %85, %86, %cst_66 {dimension_numbers = #tpu.dot_dimension_numbers<[1], [0], [0], [1], [0, 0, 1, 1], [], []>} : vector<504x8xbf16>, vector<8x16xbf16>, vector<504x16xf32> -> vector<504x16xf32>
    %88 = arith.addf %84, %87 : vector<504x16xf32>
    %c153 = arith.constant 153 : index
    %c0_67 = arith.constant 0 : index
    %89 = vector.load %arg7[%c153, %c0_67] : memref<672x8xbf16, #tpu.memory_space<vmem>>, vector<504x8xbf16>
    %c168 = arith.constant 168 : index
    %c0_68 = arith.constant 0 : index
    %90 = vector.load %arg2[%c168, %c0_68] : memref<216x16xbf16, #tpu.memory_space<vmem>>, vector<8x16xbf16>
    %cst_69 = arith.constant dense<0.000000e+00> : vector<504x16xf32>
    %91 = tpu.matmul %89, %90, %cst_69 {dimension_numbers = #tpu.dot_dimension_numbers<[1], [0], [0], [1], [0, 0, 1, 1], [], []>} : vector<504x8xbf16>, vector<8x16xbf16>, vector<504x16xf32> -> vector<504x16xf32>
    %92 = arith.addf %88, %91 : vector<504x16xf32>
    %c154 = arith.constant 154 : index
    %c0_70 = arith.constant 0 : index
    %93 = vector.load %arg7[%c154, %c0_70] : memref<672x8xbf16, #tpu.memory_space<vmem>>, vector<504x8xbf16>
    %c176 = arith.constant 176 : index
    %c0_71 = arith.constant 0 : index
    %94 = vector.load %arg2[%c176, %c0_71] : memref<216x16xbf16, #tpu.memory_space<vmem>>, vector<8x16xbf16>
    %cst_72 = arith.constant dense<0.000000e+00> : vector<504x16xf32>
    %95 = tpu.matmul %93, %94, %cst_72 {dimension_numbers = #tpu.dot_dimension_numbers<[1], [0], [0], [1], [0, 0, 1, 1], [], []>} : vector<504x8xbf16>, vector<8x16xbf16>, vector<504x16xf32> -> vector<504x16xf32>
    %96 = arith.addf %92, %95 : vector<504x16xf32>
    %c155 = arith.constant 155 : index
    %c0_73 = arith.constant 0 : index
    %97 = vector.load %arg7[%c155, %c0_73] : memref<672x8xbf16, #tpu.memory_space<vmem>>, vector<504x8xbf16>
    %c184 = arith.constant 184 : index
    %c0_74 = arith.constant 0 : index
    %98 = vector.load %arg2[%c184, %c0_74] : memref<216x16xbf16, #tpu.memory_space<vmem>>, vector<8x16xbf16>
    %cst_75 = arith.constant dense<0.000000e+00> : vector<504x16xf32>
    %99 = tpu.matmul %97, %98, %cst_75 {dimension_numbers = #tpu.dot_dimension_numbers<[1], [0], [0], [1], [0, 0, 1, 1], [], []>} : vector<504x8xbf16>, vector<8x16xbf16>, vector<504x16xf32> -> vector<504x16xf32>
    %100 = arith.addf %96, %99 : vector<504x16xf32>
    %c162 = arith.constant 162 : index
    %c0_76 = arith.constant 0 : index
    %101 = vector.load %arg7[%c162, %c0_76] : memref<672x8xbf16, #tpu.memory_space<vmem>>, vector<504x8xbf16>
    %c192 = arith.constant 192 : index
    %c0_77 = arith.constant 0 : index
    %102 = vector.load %arg2[%c192, %c0_77] : memref<216x16xbf16, #tpu.memory_space<vmem>>, vector<8x16xbf16>
    %cst_78 = arith.constant dense<0.000000e+00> : vector<504x16xf32>
    %103 = tpu.matmul %101, %102, %cst_78 {dimension_numbers = #tpu.dot_dimension_numbers<[1], [0], [0], [1], [0, 0, 1, 1], [], []>} : vector<504x8xbf16>, vector<8x16xbf16>, vector<504x16xf32> -> vector<504x16xf32>
    %104 = arith.addf %100, %103 : vector<504x16xf32>
    %c163 = arith.constant 163 : index
    %c0_79 = arith.constant 0 : index
    %105 = vector.load %arg7[%c163, %c0_79] : memref<672x8xbf16, #tpu.memory_space<vmem>>, vector<504x8xbf16>
    %c200 = arith.constant 200 : index
    %c0_80 = arith.constant 0 : index
    %106 = vector.load %arg2[%c200, %c0_80] : memref<216x16xbf16, #tpu.memory_space<vmem>>, vector<8x16xbf16>
    %cst_81 = arith.constant dense<0.000000e+00> : vector<504x16xf32>
    %107 = tpu.matmul %105, %106, %cst_81 {dimension_numbers = #tpu.dot_dimension_numbers<[1], [0], [0], [1], [0, 0, 1, 1], [], []>} : vector<504x8xbf16>, vector<8x16xbf16>, vector<504x16xf32> -> vector<504x16xf32>
    %108 = arith.addf %104, %107 : vector<504x16xf32>
    %c164 = arith.constant 164 : index
    %c0_82 = arith.constant 0 : index
    %109 = vector.load %arg7[%c164, %c0_82] : memref<672x8xbf16, #tpu.memory_space<vmem>>, vector<504x8xbf16>
    %c208 = arith.constant 208 : index
    %c0_83 = arith.constant 0 : index
    %110 = vector.load %arg2[%c208, %c0_83] : memref<216x16xbf16, #tpu.memory_space<vmem>>, vector<8x16xbf16>
    %cst_84 = arith.constant dense<0.000000e+00> : vector<504x16xf32>
    %111 = tpu.matmul %109, %110, %cst_84 {dimension_numbers = #tpu.dot_dimension_numbers<[1], [0], [0], [1], [0, 0, 1, 1], [], []>} : vector<504x8xbf16>, vector<8x16xbf16>, vector<504x16xf32> -> vector<504x16xf32>
    %112 = arith.addf %108, %111 : vector<504x16xf32>
    %c0_85 = arith.constant 0 : index
    %c0_86 = arith.constant 0 : index
    %113 = vector.load %arg3[%c0_85, %c0_86] : memref<1x16xf32, #tpu.memory_space<vmem>>, vector<1x16xf32>
    %114 = vector.broadcast %113 : vector<1x16xf32> to vector<504x16xf32>
    %115 = arith.mulf %112, %114 : vector<504x16xf32>
    %c0_87 = arith.constant 0 : index
    %c0_88 = arith.constant 0 : index
    %116 = vector.load %arg4[%c0_87, %c0_88] : memref<1x16xf32, #tpu.memory_space<vmem>>, vector<1x16xf32>
    %117 = vector.broadcast %116 : vector<1x16xf32> to vector<504x16xf32>
    %118 = arith.addf %115, %117 : vector<504x16xf32>
    %c0_89 = arith.constant 0 : index
    %c0_90 = arith.constant 0 : index
    %119 = vector.load %arg5[%c0_89, %c0_90] : memref<504x16xbf16, #tpu.memory_space<vmem>>, vector<504x16xbf16>
    %120 = arith.extf %119 : vector<504x16xbf16> to vector<504x16xf32>
    %121 = arith.addf %118, %120 : vector<504x16xf32>
    %cst_91 = arith.constant 0.000000e+00 : f32
    %122 = vector.broadcast %cst_91 : f32 to vector<504x16xf32>
    %123 = arith.maximumf %121, %122 : vector<504x16xf32>
    %124 = arith.truncf %123 : vector<504x16xf32> to vector<504x16xbf16>
    %c0_92 = arith.constant 0 : index
    %c0_93 = arith.constant 0 : index
    %125 = vector.load %arg6[%c0_92, %c0_93] : memref<504x16xbf16, #tpu.memory_space<vmem>>, vector<504x16xbf16>
    tpu.vector_store %arg6[%c0_92, %c0_93], %124 {strides = array<i32>} : memref<504x16xbf16, #tpu.memory_space<vmem>>, vector<504x16xbf16>,
    return
  }
  func.func @transform_1(%arg0: i32) -> (i32, i32) {
    %c0_i32 = arith.constant 0 : i32
    %c0_i32_0 = arith.constant 0 : i32
    %c0_i32_1 = arith.constant 0 : i32
    return %c0_i32, %c0_i32_0 : i32, i32
  }
  func.func @transform_2(%arg0: i32) -> (i32, i32) {
    %c0_i32 = arith.constant 0 : i32
    %c0_i32_0 = arith.constant 0 : i32
    %c0_i32_1 = arith.constant 0 : i32
    return %c0_i32, %c0_i32_0 : i32, i32
  }
  func.func @transform_3(%arg0: i32) -> (i32, i32) {
    %c0_i32 = arith.constant 0 : i32
    %c0_i32_0 = arith.constant 0 : i32
    %c0_i32_1 = arith.constant 0 : i32
    return %c0_i32, %c0_i32_0 : i32, i32
  }
  func.func @transform_4(%arg0: i32) -> (i32, i32) {
    %c0_i32 = arith.constant 0 : i32
    %c0_i32_0 = arith.constant 0 : i32
    return %arg0, %c0_i32 : i32, i32
  }
  func.func @transform_5(%arg0: i32) -> (i32, i32) {
    %c0_i32 = arith.constant 0 : i32
    %c0_i32_0 = arith.constant 0 : i32
    return %arg0, %c0_i32 : i32, i32
  }
}

</mosaic_0001>

<llo_original>
// kernel: tpu_custom_call.1
$region0: #{tpu_custom_call.1}
  #allocation0 [shape = 'u32[]', space=smem, size = 0x4, offset = 0x4, fixed_abs, tag = 'smem constant byte address 0x4 - core index']
  #allocation1 [shape = 'u32[72,128]{1,0:T(1,128)}', space=vmem, size = 0x9000, scoped, tag = 'internal scratch']
  #allocation2 [shape = 'bf16[672,8]{1,0:T(8,128)(2,1)}', space=vmem, size = 0x2a000, scoped, tag = 'scratch operand']
  #allocation3 [shape = 's32[1]{0}', space=sflag, size = 0x4, scoped, tag = 'scratch operand']
  #allocation4 [shape = 's32[]', space=sflag, size = 0x4, offset = 0, fixed_abs, tag = 'sflag constant byte address 0x0 - dummy sync flag']
  %s0 = inlined_call_operand.vmem [shape: bf16[672,8], index: 0, kind: input, shape index: {}]
  %s1 = inlined_call_operand.vmem [shape: bf16[216,16], index: 1, kind: input, shape index: {}]
  %s2 = inlined_call_operand.vmem [shape: f32[1,16], index: 2, kind: input, shape index: {}]
  %s3 = inlined_call_operand.vmem [shape: f32[1,16], index: 3, kind: input, shape index: {}]
  %s4 = inlined_call_operand.vmem [shape: bf16[504,16], index: 4, kind: input, shape index: {}]
  %s5 = inlined_call_operand.vmem [shape: bf16[504,16], index: 5, kind: output, shape index: {}]
  %s6 = sld [smem:[#allocation0]]
  $region45: #{tpu_custom_call.1} parent=0
    _
  %s8 = ssub.s32 1, %s6
  %s9 = scalar_select 0, %s8, %s6
  // Predicated region
  $region2: #{tpu_custom_call.1} parent=0 // pred_check
    _
  $region3: #{tpu_custom_call.1} parent=0 // pred_check_branch
    %11 = sbr.rel (0) target = $region5
  $region4: #{tpu_custom_call.1} parent=0 // pred_region
    _
  $region5: #{tpu_custom_call.1} parent=0 // pred_fallthru
    _
  // Predicated region
  $region6: #{tpu_custom_call.1} parent=0 // pred_check
    _
  $region7: #{tpu_custom_call.1} parent=0 // pred_check_branch
    %13 = sbr.rel (0) target = $region9
  $region8: #{tpu_custom_call.1} parent=0 // pred_region
    _
  $region9: #{tpu_custom_call.1} parent=0 // pred_fallthru
    _
  // Predicated region
  $region10: #{tpu_custom_call.1} parent=0 // pred_check
    _
  $region11: #{tpu_custom_call.1} parent=0 // pred_check_branch
    %15 = sbr.rel (0) target = $region13
  $region12: #{tpu_custom_call.1} parent=0 // pred_region
    _
  $region13: #{tpu_custom_call.1} parent=0 // pred_fallthru
    _
  // Predicated region
  $region14: #{tpu_custom_call.1} parent=0 // pred_check
    _
  $region15: #{tpu_custom_call.1} parent=0 // pred_check_branch
    %17 = sbr.rel (0) target = $region17
  $region16: #{tpu_custom_call.1} parent=0 // pred_region
    _
  $region17: #{tpu_custom_call.1} parent=0 // pred_fallthru
    _
  %s19 = smul.u32 0, 504
  %s20 = sshra.s32 %s19, 3
  %s21 = sand.u32 %s19, 7
  %s22 = smul.addr %s20, 4
  %s23 = scalar_lea.vmem %s0, %s22
  // Predicated region
  $region18: #{tpu_custom_call.1} parent=0 // pred_check
    _
  $region19: #{tpu_custom_call.1} parent=0 // pred_check_branch
    %25 = sbr.rel (0) target = $region21
  $region20: #{tpu_custom_call.1} parent=0 // pred_region
    loop: start=0, step=1, limit=1
    $region22: #{tpu_custom_call.1} parent=20 // loop_pre_header
      _
    $region23: #{tpu_custom_call.1} parent=20 // loop_header
      %s27 = sphi 0, %s31
      %p28 = scmp.ge.s32.totalorder %s27, 1
      %s32 = sphi %s23, %s23
      %s33 = sphi [#allocation2], [#allocation2]
    $region24: #{tpu_custom_call.1} parent=20 // loop_header_branch
      %30 = sbr.rel (%p28) target = $region28
    $region25: #{tpu_custom_call.1} parent=20 // loop_body
      %v34 = vld [vmem:[%s32] sm:$0xff]
      %35 = vst [vmem:[%s33] sm:$0xff] %v34
      %v36 = vld [vmem:[%s32 + $0x8] sm:$0xff]
      %37 = vst [vmem:[%s33 + $0x8] sm:$0xff] %v36
      %v38 = vld [vmem:[%s32 + $0x10] sm:$0xff]
      %39 = vst [vmem:[%s33 + $0x10] sm:$0xff] %v38
      %v40 = vld [vmem:[%s32 + $0x18] sm:$0xff]
      %41 = vst [vmem:[%s33 + $0x18] sm:$0xff] %v40
      %v42 = vld [vmem:[%s32 + $0x20] sm:$0xff]
      %43 = vst [vmem:[%s33 + $0x20] sm:$0xff] %v42
      %v44 = vld [vmem:[%s32 + $0x28] sm:$0xff]
      %45 = vst [vmem:[%s33 + $0x28] sm:$0xff] %v44
      %v46 = vld [vmem:[%s32 + $0x30] sm:$0xff]
      %47 = vst [vmem:[%s33 + $0x30] sm:$0xff] %v46
      %v48 = vld [vmem:[%s32 + $0x38] sm:$0xff]
      %49 = vst [vmem:[%s33 + $0x38] sm:$0xff] %v48
      %v50 = vld [vmem:[%s32 + $0x40] sm:$0xff]
      %51 = vst [vmem:[%s33 + $0x40] sm:$0xff] %v50
      %v52 = vld [vmem:[%s32 + $0x48] sm:$0xff]
      %53 = vst [vmem:[%s33 + $0x48] sm:$0xff] %v52
      %v54 = vld [vmem:[%s32 + $0x50] sm:$0xff]
      %55 = vst [vmem:[%s33 + $0x50] sm:$0xff] %v54
      %v56 = vld [vmem:[%s32 + $0x58] sm:$0xff]
      %57 = vst [vmem:[%s33 + $0x58] sm:$0xff] %v56
      %v58 = vld [vmem:[%s32 + $0x60] sm:$0xff]
      %59 = vst [vmem:[%s33 + $0x60] sm:$0xff] %v58
      %v60 = vld [vmem:[%s32 + $0x68] sm:$0xff]
      %61 = vst [vmem:[%s33 + $0x68] sm:$0xff] %v60
      %v62 = vld [vmem:[%s32 + $0x70] sm:$0xff]
      %63 = vst [vmem:[%s33 + $0x70] sm:$0xff] %v62
      %v64 = vld [vmem:[%s32 + $0x78] sm:$0xff]
      %65 = vst [vmem:[%s33 + $0x78] sm:$0xff] %v64
      %v66 = vld [vmem:[%s32 + $0x80] sm:$0xff]
      %67 = vst [vmem:[%s33 + $0x80] sm:$0xff] %v66
      %v68 = vld [vmem:[%s32 + $0x88] sm:$0xff]
      %69 = vst [vmem:[%s33 + $0x88] sm:$0xff] %v68
      %v70 = vld [vmem:[%s32 + $0x90] sm:$0xff]
      %71 = vst [vmem:[%s33 + $0x90] sm:$0xff] %v70
      %v72 = vld [vmem:[%s32 + $0x98] sm:$0xff]
      %73 = vst [vmem:[%s33 + $0x98] sm:$0xff] %v72
      %v74 = vld [vmem:[%s32 + $0xa0] sm:$0xff]
      %75 = vst [vmem:[%s33 + $0xa0] sm:$0xff] %v74
      %v76 = vld [vmem:[%s32 + $0xa8] sm:$0xff]
      %77 = vst [vmem:[%s33 + $0xa8] sm:$0xff] %v76
      %v78 = vld [vmem:[%s32 + $0xb0] sm:$0xff]
      %79 = vst [vmem:[%s33 + $0xb0] sm:$0xff] %v78
      %v80 = vld [vmem:[%s32 + $0xb8] sm:$0xff]
      %81 = vst [vmem:[%s33 + $0xb8] sm:$0xff] %v80
      %v82 = vld [vmem:[%s32 + $0xc0] sm:$0xff]
      %83 = vst [vmem:[%s33 + $0xc0] sm:$0xff] %v82
      %v84 = vld [vmem:[%s32 + $0xc8] sm:$0xff]
      %85 = vst [vmem:[%s33 + $0xc8] sm:$0xff] %v84
      %v86 = vld [vmem:[%s32 + $0xd0] sm:$0xff]
      %87 = vst [vmem:[%s33 + $0xd0] sm:$0xff] %v86
      %v88 = vld [vmem:[%s32 + $0xd8] sm:$0xff]
      %89 = vst [vmem:[%s33 + $0xd8] sm:$0xff] %v88
      %v90 = vld [vmem:[%s32 + $0xe0] sm:$0xff]
      %91 = vst [vmem:[%s33 + $0xe0] sm:$0xff] %v90
      %v92 = vld [vmem:[%s32 + $0xe8] sm:$0xff]
      %93 = vst [vmem:[%s33 + $0xe8] sm:$0xff] %v92
      %v94 = vld [vmem:[%s32 + $0xf0] sm:$0xff]
      %95 = vst [vmem:[%s33 + $0xf0] sm:$0xff] %v94
      %v96 = vld [vmem:[%s32 + $0xf8] sm:$0xff]
      %97 = vst [vmem:[%s33 + $0xf8] sm:$0xff] %v96
      %v98 = vld [vmem:[%s32 + $0x100] sm:$0xff]
      %99 = vst [vmem:[%s33 + $0x100] sm:$0xff] %v98
      %v100 = vld [vmem:[%s32 + $0x108] sm:$0xff]
      %101 = vst [vmem:[%s33 + $0x108] sm:$0xff] %v100
      %v102 = vld [vmem:[%s32 + $0x110] sm:$0xff]
      %103 = vst [vmem:[%s33 + $0x110] sm:$0xff] %v102
      %v104 = vld [vmem:[%s32 + $0x118] sm:$0xff]
      %105 = vst [vmem:[%s33 + $0x118] sm:$0xff] %v104
      %v106 = vld [vmem:[%s32 + $0x120] sm:$0xff]
      %107 = vst [vmem:[%s33 + $0x120] sm:$0xff] %v106
      %v108 = vld [vmem:[%s32 + $0x128] sm:$0xff]
      %109 = vst [vmem:[%s33 + $0x128] sm:$0xff] %v108
      %v110 = vld [vmem:[%s32 + $0x130] sm:$0xff]
      %111 = vst [vmem:[%s33 + $0x130] sm:$0xff] %v110
      %v112 = vld [vmem:[%s32 + $0x138] sm:$0xff]
      %113 = vst [vmem:[%s33 + $0x138] sm:$0xff] %v112
      %v114 = vld [vmem:[%s32 + $0x140] sm:$0xff]
      %115 = vst [vmem:[%s33 + $0x140] sm:$0xff] %v114
      %v116 = vld [vmem:[%s32 + $0x148] sm:$0xff]
      %117 = vst [vmem:[%s33 + $0x148] sm:$0xff] %v116
    $region26: #{tpu_custom_call.1} parent=20 // loop_footer
      %s31 = sadd.s32 1, %s27
    $region27: #{tpu_custom_call.1} parent=20 // loop_footer_branch
      %26 = sbr.rel target = $region23
    $region28: #{tpu_custom_call.1} parent=20 // loop_exit
      _
  $region21: #{tpu_custom_call.1} parent=0 // pred_fallthru
    _
  // Predicated region
  $region29: #{tpu_custom_call.1} parent=0 // pred_check
    _
  $region30: #{tpu_custom_call.1} parent=0 // pred_check_branch
    %119 = sbr.rel target = $region32
  $region31: #{tpu_custom_call.1} parent=0 // pred_region
    _
  $region32: #{tpu_custom_call.1} parent=0 // pred_fallthru
    _
  // Predicated region
  $region33: #{tpu_custom_call.1} parent=0 // pred_check
    _
  $region34: #{tpu_custom_call.1} parent=0 // pred_check_branch
    %122 = sbr.rel (0) target = $region36
  $region35: #{tpu_custom_call.1} parent=0 // pred_region
    %123 = vsyncadd [#allocation3], 5376
  $region36: #{tpu_custom_call.1} parent=0 // pred_fallthru
    _
  %s124 = smul.u32 4, 84
  %s125 = smul.u32 %s124, 1
  %s126 = sshll.u32 %s125, 4
  %127 = dma.done [#allocation3], %s126
  %v128 = vld [vmem:[#allocation2] sm:$0xf]
  %v129 = vld [vmem:[#allocation2 + $0x4] sm:$0xf]
  %v130 = vld [vmem:[#allocation2 + $0x8] sm:$0xf]
  %v131 = vld [vmem:[#allocation2 + $0xc] sm:$0xf]
  %v132 = vld [vmem:[#allocation2 + $0x10] sm:$0xf]
  %v133 = vld [vmem:[#allocation2 + $0x14] sm:$0xf]
  %v134 = vld [vmem:[#allocation2 + $0x18] sm:$0xf]
  %v135 = vld [vmem:[#allocation2 + $0x1c] sm:$0xf]
  %v136 = vld [vmem:[#allocation2 + $0x20] sm:$0xf]
  %v137 = vld [vmem:[#allocation2 + $0x24] sm:$0xf]
  %v138 = vld [vmem:[#allocation2 + $0x28] sm:$0xf]
  %v139 = vld [vmem:[#allocation2 + $0x2c] sm:$0xf]
  %v140 = vld [vmem:[#allocation2 + $0x30] sm:$0xf]
  %v141 = vld [vmem:[#allocation2 + $0x34] sm:$0xf]
  %v142 = vld [vmem:[#allocation2 + $0x38] sm:$0xf]
  %v143 = vld [vmem:[#allocation2 + $0x3c] sm:$0xf]
  %v144 = vld [vmem:[#allocation2 + $0x40] sm:$0xf]
  %v145 = vld [vmem:[#allocation2 + $0x44] sm:$0xf]
  %v146 = vld [vmem:[#allocation2 + $0x48] sm:$0xf]
  %v147 = vld [vmem:[#allocation2 + $0x4c] sm:$0xf]
  %v148 = vld [vmem:[#allocation2 + $0x50] sm:$0xf]
  %v149 = vld [vmem:[#allocation2 + $0x54] sm:$0xf]
  %v150 = vld [vmem:[#allocation2 + $0x58] sm:$0xf]
  %v151 = vld [vmem:[#allocation2 + $0x5c] sm:$0xf]
  %v152 = vld [vmem:[#allocation2 + $0x60] sm:$0xf]
  %v153 = vld [vmem:[#allocation2 + $0x64] sm:$0xf]
  %v154 = vld [vmem:[#allocation2 + $0x68] sm:$0xf]
  %v155 = vld [vmem:[#allocation2 + $0x6c] sm:$0xf]
  %v156 = vld [vmem:[#allocation2 + $0x70] sm:$0xf]
  %v157 = vld [vmem:[#allocation2 + $0x74] sm:$0xf]
  %v158 = vld [vmem:[#allocation2 + $0x78] sm:$0xf]
  %v159 = vld [vmem:[#allocation2 + $0x7c] sm:$0xf]
  %v160 = vld [vmem:[#allocation2 + $0x80] sm:$0xf]
  %v161 = vld [vmem:[#allocation2 + $0x84] sm:$0xf]
  %v162 = vld [vmem:[#allocation2 + $0x88] sm:$0xf]
  %v163 = vld [vmem:[#allocation2 + $0x8c] sm:$0xf]
  %v164 = vld [vmem:[#allocation2 + $0x90] sm:$0xf]
  %v165 = vld [vmem:[#allocation2 + $0x94] sm:$0xf]
  %v166 = vld [vmem:[#allocation2 + $0x98] sm:$0xf]
  %v167 = vld [vmem:[#allocation2 + $0x9c] sm:$0xf]
  %v168 = vld [vmem:[#allocation2 + $0xa0] sm:$0xf]
  %v169 = vld [vmem:[#allocation2 + $0xa4] sm:$0xf]
  %v170 = vld [vmem:[#allocation2 + $0xa8] sm:$0xf]
  %v171 = vld [vmem:[#allocation2 + $0xac] sm:$0xf]
  %v172 = vld [vmem:[#allocation2 + $0xb0] sm:$0xf]
  %v173 = vld [vmem:[#allocation2 + $0xb4] sm:$0xf]
  %v174 = vld [vmem:[#allocation2 + $0xb8] sm:$0xf]
  %v175 = vld [vmem:[#allocation2 + $0xbc] sm:$0xf]
  %v176 = vld [vmem:[#allocation2 + $0xc0] sm:$0xf]
  %v177 = vld [vmem:[#allocation2 + $0xc4] sm:$0xf]
  %v178 = vld [vmem:[#allocation2 + $0xc8] sm:$0xf]
  %v179 = vld [vmem:[#allocation2 + $0xcc] sm:$0xf]
  %v180 = vld [vmem:[#allocation2 + $0xd0] sm:$0xf]
  %v181 = vld [vmem:[#allocation2 + $0xd4] sm:$0xf]
  %v182 = vld [vmem:[#allocation2 + $0xd8] sm:$0xf]
  %v183 = vld [vmem:[#allocation2 + $0xdc] sm:$0xf]
  %v184 = vld [vmem:[#allocation2 + $0xe0] sm:$0xf]
  %v185 = vld [vmem:[#allocation2 + $0xe4] sm:$0xf]
  %v186 = vld [vmem:[#allocation2 + $0xe8] sm:$0xf]
  %v187 = vld [vmem:[#allocation2 + $0xec] sm:$0xf]
  %v188 = vld [vmem:[#allocation2 + $0xf0] sm:$0xf]
  %v189 = vld [vmem:[#allocation2 + $0xf4] sm:$0xf]
  %v190 = vld [vmem:[#allocation2 + $0xf8] sm:$0xf]
  %v191 = vld [vmem:[%s1] sm:$0xf]
  %v192 = vld [vmem:[#allocation2 + $0xfc] sm:$0x1]
  %v193 = vld [vmem:[%s1 + $0x4] sm:$0xf]
  %v258 = vunpack.c.l.b16 %v128
  %v259 = vunpack.c.l.b16 %v129
  %v260 = vunpack.c.l.b16 %v130
  %v261 = vunpack.c.l.b16 %v131
  %v262 = vunpack.c.l.b16 %v132
  %v263 = vunpack.c.l.b16 %v133
  %v264 = vunpack.c.l.b16 %v134
  %v265 = vunpack.c.l.b16 %v135
  %v266 = vunpack.c.l.b16 %v136
  %v267 = vunpack.c.l.b16 %v137
  %v268 = vunpack.c.l.b16 %v138
  %v269 = vunpack.c.l.b16 %v139
  %v270 = vunpack.c.l.b16 %v140
  %v271 = vunpack.c.l.b16 %v141
  %v272 = vunpack.c.l.b16 %v142
  %v273 = vunpack.c.l.b16 %v143
  %v274 = vunpack.c.l.b16 %v144
  %v275 = vunpack.c.l.b16 %v145
  %v276 = vunpack.c.l.b16 %v146
  %v277 = vunpack.c.l.b16 %v147
  %v278 = vunpack.c.l.b16 %v148
  %v279 = vunpack.c.l.b16 %v149
  %v280 = vunpack.c.l.b16 %v150
  %v281 = vunpack.c.l.b16 %v151
  %v282 = vunpack.c.l.b16 %v152
  %v283 = vunpack.c.l.b16 %v153
  %v284 = vunpack.c.l.b16 %v154
  %v285 = vunpack.c.l.b16 %v155
  %v286 = vunpack.c.l.b16 %v156
  %v287 = vunpack.c.l.b16 %v157
  %v288 = vunpack.c.l.b16 %v158
  %v289 = vunpack.c.l.b16 %v159
  %v290 = vunpack.c.l.b16 %v160
  %v291 = vunpack.c.l.b16 %v161
  %v292 = vunpack.c.l.b16 %v162
  %v293 = vunpack.c.l.b16 %v163
  %v294 = vunpack.c.l.b16 %v164
  %v295 = vunpack.c.l.b16 %v165
  %v296 = vunpack.c.l.b16 %v166
  %v297 = vunpack.c.l.b16 %v167
  %v298 = vunpack.c.l.b16 %v168
  %v299 = vunpack.c.l.b16 %v169
  %v300 = vunpack.c.l.b16 %v170
  %v301 = vunpack.c.l.b16 %v171
  %v302 = vunpack.c.l.b16 %v172
  %v303 = vunpack.c.l.b16 %v173
  %v304 = vunpack.c.l.b16 %v174
  %v305 = vunpack.c.l.b16 %v175
  %v306 = vunpack.c.l.b16 %v176
  %v307 = vunpack.c.l.b16 %v177
  %v308 = vunpack.c.l.b16 %v178
  %v309 = vunpack.c.l.b16 %v179
  %v310 = vunpack.c.l.b16 %v180
  %v311 = vunpack.c.l.b16 %v181
  %v312 = vunpack.c.l.b16 %v182
  %v313 = vunpack.c.l.b16 %v183
  %v314 = vunpack.c.l.b16 %v184
  %v315 = vunpack.c.l.b16 %v185
  %v316 = vunpack.c.l.b16 %v186
  %v317 = vunpack.c.l.b16 %v187
  %v318 = vunpack.c.l.b16 %v188
  %v319 = vunpack.c.l.b16 %v189
  %v320 = vunpack.c.l.b16 %v190
  %v321 = vunpack.c.l.b16 %v192
  %v322 = vpack.c.b16 %v259, %v258
  %v323 = vpack.c.b16 %v261, %v260
  %v324 = vpack.c.b16 %v263, %v262
  %v325 = vpack.c.b16 %v265, %v264
  %v326 = vpack.c.b16 %v267, %v266
  %v327 = vpack.c.b16 %v269, %v268
  %v328 = vpack.c.b16 %v271, %v270
  %v329 = vpack.c.b16 %v273, %v272
  %v330 = vpack.c.b16 %v275, %v274
  %v331 = vpack.c.b16 %v277, %v276
  %v332 = vpack.c.b16 %v279, %v278
  %v333 = vpack.c.b16 %v281, %v280
  %v334 = vpack.c.b16 %v283, %v282
  %v335 = vpack.c.b16 %v285, %v284
  %v336 = vpack.c.b16 %v287, %v286
  %v337 = vpack.c.b16 %v289, %v288
  %v338 = vpack.c.b16 %v291, %v290
  %v339 = vpack.c.b16 %v293, %v292
  %v340 = vpack.c.b16 %v295, %v294
  %v341 = vpack.c.b16 %v297, %v296
  %v342 = vpack.c.b16 %v299, %v298
  %v343 = vpack.c.b16 %v301, %v300
  %v344 = vpack.c.b16 %v303, %v302
  %v345 = vpack.c.b16 %v305, %v304
  %v346 = vpack.c.b16 %v307, %v306
  %v347 = vpack.c.b16 %v309, %v308
  %v348 = vpack.c.b16 %v311, %v310
  %v349 = vpack.c.b16 %v313, %v312
  %v350 = vpack.c.b16 %v315, %v314
  %v351 = vpack.c.b16 %v317, %v316
  %v352 = vpack.c.b16 %v319, %v318
  %v353 = vpack.c.b16 %v321, %v320
  %vm354 = vsmask.f32 7424
  %v356 = vshrl.u32 %v322, 16
  %v358 = vshll.u32 %v322, 16
  %v360 = vrot.slane %v358, 1
  %v361 = vor.u32 %v356, %v360
  %v363 = vshll.u32 %v323, 16
  %v365 = vrot.slane %v363, 1
  %v366 = vsel %vm354, %v361, %v365
  %v367 = vshrl.u32 %v323, 16
  %v369 = vor.u32 %v367, %v365
  %v371 = vshll.u32 %v324, 16
  %v373 = vrot.slane %v371, 1
  %v374 = vsel %vm354, %v369, %v373
  %v375 = vshrl.u32 %v324, 16
  %v377 = vor.u32 %v375, %v373
  %v379 = vshll.u32 %v325, 16
  %v381 = vrot.slane %v379, 1
  %v382 = vsel %vm354, %v377, %v381
  %v383 = vshrl.u32 %v325, 16
  %v385 = vor.u32 %v383, %v381
  %v387 = vshll.u32 %v326, 16
  %v389 = vrot.slane %v387, 1
  %v390 = vsel %vm354, %v385, %v389
  %v391 = vshrl.u32 %v326, 16
  %v393 = vor.u32 %v391, %v389
  %v395 = vshll.u32 %v327, 16
  %v397 = vrot.slane %v395, 1
  %v398 = vsel %vm354, %v393, %v397
  %v399 = vshrl.u32 %v327, 16
  %v401 = vor.u32 %v399, %v397
  %v403 = vshll.u32 %v328, 16
  %v405 = vrot.slane %v403, 1
  %v406 = vsel %vm354, %v401, %v405
  %v407 = vshrl.u32 %v328, 16
  %v409 = vor.u32 %v407, %v405
  %v411 = vshll.u32 %v329, 16
  %v413 = vrot.slane %v411, 1
  %v414 = vsel %vm354, %v409, %v413
  %v415 = vshrl.u32 %v329, 16
  %v417 = vor.u32 %v415, %v413
  %v419 = vshll.u32 %v330, 16
  %v421 = vrot.slane %v419, 1
  %v422 = vsel %vm354, %v417, %v421
  %v423 = vshrl.u32 %v330, 16
  %v425 = vor.u32 %v423, %v421
  %v427 = vshll.u32 %v331, 16
  %v429 = vrot.slane %v427, 1
  %v430 = vsel %vm354, %v425, %v429
  %v431 = vshrl.u32 %v331, 16
  %v433 = vor.u32 %v431, %v429
  %v435 = vshll.u32 %v332, 16
  %v437 = vrot.slane %v435, 1
  %v438 = vsel %vm354, %v433, %v437
  %v439 = vshrl.u32 %v332, 16
  %v441 = vor.u32 %v439, %v437
  %v443 = vshll.u32 %v333, 16
  %v445 = vrot.slane %v443, 1
  %v446 = vsel %vm354, %v441, %v445
  %v447 = vshrl.u32 %v333, 16
  %v449 = vor.u32 %v447, %v445
  %v451 = vshll.u32 %v334, 16
  %v453 = vrot.slane %v451, 1
  %v454 = vsel %vm354, %v449, %v453
  %v455 = vshrl.u32 %v334, 16
  %v457 = vor.u32 %v455, %v453
  %v459 = vshll.u32 %v335, 16
  %v461 = vrot.slane %v459, 1
  %v462 = vsel %vm354, %v457, %v461
  %v463 = vshrl.u32 %v335, 16
  %v465 = vor.u32 %v463, %v461
  %v467 = vshll.u32 %v336, 16
  %v469 = vrot.slane %v467, 1
  %v470 = vsel %vm354, %v465, %v469
  %v471 = vshrl.u32 %v336, 16
  %v473 = vor.u32 %v471, %v469
  %v475 = vshll.u32 %v337, 16
  %v477 = vrot.slane %v475, 1
  %v478 = vsel %vm354, %v473, %v477
  %v479 = vshrl.u32 %v337, 16
  %v481 = vor.u32 %v479, %v477
  %v483 = vshll.u32 %v338, 16
  %v485 = vrot.slane %v483, 1
  %v486 = vsel %vm354, %v481, %v485
  %v487 = vshrl.u32 %v338, 16
  %v489 = vor.u32 %v487, %v485
  %v491 = vshll.u32 %v339, 16
  %v493 = vrot.slane %v491, 1
  %v494 = vsel %vm354, %v489, %v493
  %v495 = vshrl.u32 %v339, 16
  %v497 = vor.u32 %v495, %v493
  %v499 = vshll.u32 %v340, 16
  %v501 = vrot.slane %v499, 1
  %v502 = vsel %vm354, %v497, %v501
  %v503 = vshrl.u32 %v340, 16
  %v505 = vor.u32 %v503, %v501
  %v507 = vshll.u32 %v341, 16
  %v509 = vrot.slane %v507, 1
  %v510 = vsel %vm354, %v505, %v509
  %v511 = vshrl.u32 %v341, 16
  %v513 = vor.u32 %v511, %v509
  %v515 = vshll.u32 %v342, 16
  %v517 = vrot.slane %v515, 1
  %v518 = vsel %vm354, %v513, %v517
  %v519 = vshrl.u32 %v342, 16
  %v521 = vor.u32 %v519, %v517
  %v523 = vshll.u32 %v343, 16
  %v525 = vrot.slane %v523, 1
  %v526 = vsel %vm354, %v521, %v525
  %v527 = vshrl.u32 %v343, 16
  %v529 = vor.u32 %v527, %v525
  %v531 = vshll.u32 %v344, 16
  %v533 = vrot.slane %v531, 1
  %v534 = vsel %vm354, %v529, %v533
  %v535 = vshrl.u32 %v344, 16
  %v537 = vor.u32 %v535, %v533
  %v539 = vshll.u32 %v345, 16
  %v541 = vrot.slane %v539, 1
  %v542 = vsel %vm354, %v537, %v541
  %v543 = vshrl.u32 %v345, 16
  %v545 = vor.u32 %v543, %v541
  %v547 = vshll.u32 %v346, 16
  %v549 = vrot.slane %v547, 1
  %v550 = vsel %vm354, %v545, %v549
  %v551 = vshrl.u32 %v346, 16
  %v553 = vor.u32 %v551, %v549
  %v555 = vshll.u32 %v347, 16
  %v557 = vrot.slane %v555, 1
  %v558 = vsel %vm354, %v553, %v557
  %v559 = vshrl.u32 %v347, 16
  %v561 = vor.u32 %v559, %v557
  %v563 = vshll.u32 %v348, 16
  %v565 = vrot.slane %v563, 1
  %v566 = vsel %vm354, %v561, %v565
  %v567 = vshrl.u32 %v348, 16
  %v569 = vor.u32 %v567, %v565
  %v571 = vshll.u32 %v349, 16
  %v573 = vrot.slane %v571, 1
  %v574 = vsel %vm354, %v569, %v573
  %v575 = vshrl.u32 %v349, 16
  %v577 = vor.u32 %v575, %v573
  %v579 = vshll.u32 %v350, 16
  %v581 = vrot.slane %v579, 1
  %v582 = vsel %vm354, %v577, %v581
  %v583 = vshrl.u32 %v350, 16
  %v585 = vor.u32 %v583, %v581
  %v587 = vshll.u32 %v351, 16
  %v589 = vrot.slane %v587, 1
  %v590 = vsel %vm354, %v585, %v589
  %v591 = vshrl.u32 %v351, 16
  %v593 = vor.u32 %v591, %v589
  %v595 = vshll.u32 %v352, 16
  %v597 = vrot.slane %v595, 1
  %v598 = vsel %vm354, %v593, %v597
  %v599 = vshrl.u32 %v352, 16
  %v601 = vor.u32 %v599, %v597
  %v603 = vshll.u32 %v353, 16
  %v605 = vrot.slane %v603, 1
  %v606 = vsel %vm354, %v601, %v605
  %v607 = vshrl.u32 %v353, 16
  %v609 = vor.u32 %v607, %v605
  %vm610 = vcmask 64512
  %v612 = vsel %vm610, %v366, 0
  %v615 = vsel %vm610, %v374, 0
  %v618 = vsel %vm610, %v382, 0
  %v621 = vsel %vm610, %v390, 0
  %v624 = vsel %vm610, %v398, 0
  %v627 = vsel %vm610, %v406, 0
  %v630 = vsel %vm610, %v414, 0
  %v633 = vsel %vm610, %v422, 0
  %v636 = vsel %vm610, %v430, 0
  %v639 = vsel %vm610, %v438, 0
  %v642 = vsel %vm610, %v446, 0
  %v645 = vsel %vm610, %v454, 0
  %v648 = vsel %vm610, %v462, 0
  %v651 = vsel %vm610, %v470, 0
  %v654 = vsel %vm610, %v478, 0
  %v657 = vsel %vm610, %v486, 0
  %v660 = vsel %vm610, %v494, 0
  %v663 = vsel %vm610, %v502, 0
  %v666 = vsel %vm610, %v510, 0
  %v669 = vsel %vm610, %v518, 0
  %v672 = vsel %vm610, %v526, 0
  %v675 = vsel %vm610, %v534, 0
  %v678 = vsel %vm610, %v542, 0
  %v681 = vsel %vm610, %v550, 0
  %v684 = vsel %vm610, %v558, 0
  %v687 = vsel %vm610, %v566, 0
  %v690 = vsel %vm610, %v574, 0
  %v693 = vsel %vm610, %v582, 0
  %v696 = vsel %vm610, %v590, 0
  %v699 = vsel %vm610, %v598, 0
  %v702 = vsel %vm610, %v606, 0
  %v705 = vsel %vm610, %v609, 0
  %vm707 = vcmask 1043456
  %v709 = vsel %vm707, %v193, 0
  %711 = vmatpush.bf16.msra.mxu0 0
  %712 = vmatpush.bf16.msra.mxu0 0
  %713 = vmatpush.bf16.msra.mxu0 0
  %714 = vmatpush.bf16.msra.mxu0 0
  %715 = vmatpush.bf16.msra.mxu0 0
  %716 = vmatpush.bf16.msra.mxu0 0
  %717 = vmatpush.bf16.msra.mxu0 0
  %718 = vmatpush.bf16.msra.mxu0 %v709
  %719 = vmatmul.bf16.gmra.mxu0 %v612
  %v720 = vpop.f32.mrf.mxu0
  %v721 = vadd.f32 0.0, %v720
  %v722 = vpop.f32.mrf.mxu0
  %v723 = vadd.f32 0.0, %v722
  %724 = vmatmul.bf16.gmra.mxu0 %v615
  %v725 = vpop.f32.mrf.mxu0
  %v726 = vadd.f32 0.0, %v725
  %v727 = vpop.f32.mrf.mxu0
  %v728 = vadd.f32 0.0, %v727
  %729 = vmatmul.bf16.gmra.mxu0 %v618
  %v730 = vpop.f32.mrf.mxu0
  %v731 = vadd.f32 0.0, %v730
  %v732 = vpop.f32.mrf.mxu0
  %v733 = vadd.f32 0.0, %v732
  %734 = vmatmul.bf16.gmra.mxu0 %v621
  %v735 = vpop.f32.mrf.mxu0
  %v736 = vadd.f32 0.0, %v735
  %v737 = vpop.f32.mrf.mxu0
  %v738 = vadd.f32 0.0, %v737
  %739 = vmatmul.bf16.gmra.mxu0 %v624
  %v740 = vpop.f32.mrf.mxu0
  %v741 = vadd.f32 0.0, %v740
  %v742 = vpop.f32.mrf.mxu0
  %v743 = vadd.f32 0.0, %v742
  %744 = vmatmul.bf16.gmra.mxu0 %v627
  %v745 = vpop.f32.mrf.mxu0
  %v746 = vadd.f32 0.0, %v745
  %v747 = vpop.f32.mrf.mxu0
  %v748 = vadd.f32 0.0, %v747
  %749 = vmatmul.bf16.gmra.mxu0 %v630
  %v750 = vpop.f32.mrf.mxu0
  %v751 = vadd.f32 0.0, %v750
  %v752 = vpop.f32.mrf.mxu0
  %v753 = vadd.f32 0.0, %v752
  %754 = vmatmul.bf16.gmra.mxu0 %v633
  %v755 = vpop.f32.mrf.mxu0
  %v756 = vadd.f32 0.0, %v755
  %v757 = vpop.f32.mrf.mxu0
  %v758 = vadd.f32 0.0, %v757
  %759 = vmatmul.bf16.gmra.mxu0 %v636
  %v760 = vpop.f32.mrf.mxu0
  %v761 = vadd.f32 0.0, %v760
  %v762 = vpop.f32.mrf.mxu0
  %v763 = vadd.f32 0.0, %v762
  %764 = vmatmul.bf16.gmra.mxu0 %v639
  %v765 = vpop.f32.mrf.mxu0
  %v766 = vadd.f32 0.0, %v765
  %v767 = vpop.f32.mrf.mxu0
  %v768 = vadd.f32 0.0, %v767
  %769 = vmatmul.bf16.gmra.mxu0 %v642
  %v770 = vpop.f32.mrf.mxu0
  %v771 = vadd.f32 0.0, %v770
  %v772 = vpop.f32.mrf.mxu0
  %v773 = vadd.f32 0.0, %v772
  %774 = vmatmul.bf16.gmra.mxu0 %v645
  %v775 = vpop.f32.mrf.mxu0
  %v776 = vadd.f32 0.0, %v775
  %v777 = vpop.f32.mrf.mxu0
  %v778 = vadd.f32 0.0, %v777
  %779 = vmatmul.bf16.gmra.mxu0 %v648
  %v780 = vpop.f32.mrf.mxu0
  %v781 = vadd.f32 0.0, %v780
  %v782 = vpop.f32.mrf.mxu0
  %v783 = vadd.f32 0.0, %v782
  %784 = vmatmul.bf16.gmra.mxu0 %v651
  %v785 = vpop.f32.mrf.mxu0
  %v786 = vadd.f32 0.0, %v785
  %v787 = vpop.f32.mrf.mxu0
  %v788 = vadd.f32 0.0, %v787
  %789 = vmatmul.bf16.gmra.mxu0 %v654
  %v790 = vpop.f32.mrf.mxu0
  %v791 = vadd.f32 0.0, %v790
  %v792 = vpop.f32.mrf.mxu0
  %v793 = vadd.f32 0.0, %v792
  %794 = vmatmul.bf16.gmra.mxu0 %v657
  %v795 = vpop.f32.mrf.mxu0
  %v796 = vadd.f32 0.0, %v795
  %v797 = vpop.f32.mrf.mxu0
  %v798 = vadd.f32 0.0, %v797
  %799 = vmatmul.bf16.gmra.mxu0 %v660
  %v800 = vpop.f32.mrf.mxu0
  %v801 = vadd.f32 0.0, %v800
  %v802 = vpop.f32.mrf.mxu0
  %v803 = vadd.f32 0.0, %v802
  %804 = vmatmul.bf16.gmra.mxu0 %v663
  %v805 = vpop.f32.mrf.mxu0
  %v806 = vadd.f32 0.0, %v805
  %v807 = vpop.f32.mrf.mxu0
  %v808 = vadd.f32 0.0, %v807
  %809 = vmatmul.bf16.gmra.mxu0 %v666
  %v810 = vpop.f32.mrf.mxu0
  %v811 = vadd.f32 0.0, %v810
  %v812 = vpop.f32.mrf.mxu0
  %v813 = vadd.f32 0.0, %v812
  %814 = vmatmul.bf16.gmra.mxu0 %v669
  %v815 = vpop.f32.mrf.mxu0
  %v816 = vadd.f32 0.0, %v815
  %v817 = vpop.f32.mrf.mxu0
  %v818 = vadd.f32 0.0, %v817
  %819 = vmatmul.bf16.gmra.mxu0 %v672
  %v820 = vpop.f32.mrf.mxu0
  %v821 = vadd.f32 0.0, %v820
  %v822 = vpop.f32.mrf.mxu0
  %v823 = vadd.f32 0.0, %v822
  %824 = vmatmul.bf16.gmra.mxu0 %v675
  %v825 = vpop.f32.mrf.mxu0
  %v826 = vadd.f32 0.0, %v825
  %v827 = vpop.f32.mrf.mxu0
  %v828 = vadd.f32 0.0, %v827
  %829 = vmatmul.bf16.gmra.mxu0 %v678
  %v830 = vpop.f32.mrf.mxu0
  %v831 = vadd.f32 0.0, %v830
  %v832 = vpop.f32.mrf.mxu0
  %v833 = vadd.f32 0.0, %v832
  %834 = vmatmul.bf16.gmra.mxu0 %v681
  %v835 = vpop.f32.mrf.mxu0
  %v836 = vadd.f32 0.0, %v835
  %v837 = vpop.f32.mrf.mxu0
  %v838 = vadd.f32 0.0, %v837
  %839 = vmatmul.bf16.gmra.mxu0 %v684
  %v840 = vpop.f32.mrf.mxu0
  %v841 = vadd.f32 0.0, %v840
  %v842 = vpop.f32.mrf.mxu0
  %v843 = vadd.f32 0.0, %v842
  %844 = vmatmul.bf16.gmra.mxu0 %v687
  %v845 = vpop.f32.mrf.mxu0
  %v846 = vadd.f32 0.0, %v845
  %v847 = vpop.f32.mrf.mxu0
  %v848 = vadd.f32 0.0, %v847
  %849 = vmatmul.bf16.gmra.mxu0 %v690
  %v850 = vpop.f32.mrf.mxu0
  %v851 = vadd.f32 0.0, %v850
  %v852 = vpop.f32.mrf.mxu0
  %v853 = vadd.f32 0.0, %v852
  %854 = vmatmul.bf16.gmra.mxu0 %v693
  %v855 = vpop.f32.mrf.mxu0
  %v856 = vadd.f32 0.0, %v855
  %v857 = vpop.f32.mrf.mxu0
  %v858 = vadd.f32 0.0, %v857
  %859 = vmatmul.bf16.gmra.mxu0 %v696
  %v860 = vpop.f32.mrf.mxu0
  %v861 = vadd.f32 0.0, %v860
  %v862 = vpop.f32.mrf.mxu0
  %v863 = vadd.f32 0.0, %v862
  %864 = vmatmul.bf16.gmra.mxu0 %v699
  %v865 = vpop.f32.mrf.mxu0
  %v866 = vadd.f32 0.0, %v865
  %v867 = vpop.f32.mrf.mxu0
  %v868 = vadd.f32 0.0, %v867
  %869 = vmatmul.bf16.gmra.mxu0 %v702
  %v870 = vpop.f32.mrf.mxu0
  %v871 = vadd.f32 0.0, %v870
  %v872 = vpop.f32.mrf.mxu0
  %v873 = vadd.f32 0.0, %v872
  %874 = vmatmul.bf16.gmra.mxu0 %v705
  %v875 = vpop.f32.mrf.mxu0
  %v876 = vadd.f32 0.0, %v875
  %v877 = vpop.f32.mrf.mxu0
  %878 = vdwg.mxu0
  %v879 = vpack.c.b16 %v320, %v320
  %v880 = vsel %vm610, %v322, 0
  %v882 = vsel %vm610, %v323, 0
  %v884 = vsel %vm610, %v324, 0
  %v886 = vsel %vm610, %v325, 0
  %v888 = vsel %vm610, %v326, 0
  %v890 = vsel %vm610, %v327, 0
  %v892 = vsel %vm610, %v328, 0
  %v894 = vsel %vm610, %v329, 0
  %v896 = vsel %vm610, %v330, 0
  %v898 = vsel %vm610, %v331, 0
  %v900 = vsel %vm610, %v332, 0
  %v902 = vsel %vm610, %v333, 0
  %v904 = vsel %vm610, %v334, 0
  %v906 = vsel %vm610, %v335, 0
  %v908 = vsel %vm610, %v336, 0
  %v910 = vsel %vm610, %v337, 0
  %v912 = vsel %vm610, %v338, 0
  %v914 = vsel %vm610, %v339, 0
  %v916 = vsel %vm610, %v340, 0
  %v918 = vsel %vm610, %v341, 0
  %v920 = vsel %vm610, %v342, 0
  %v922 = vsel %vm610, %v343, 0
  %v924 = vsel %vm610, %v344, 0
  %v926 = vsel %vm610, %v345, 0
  %v928 = vsel %vm610, %v346, 0
  %v930 = vsel %vm610, %v347, 0
  %v932 = vsel %vm610, %v348, 0
  %v934 = vsel %vm610, %v349, 0
  %v936 = vsel %vm610, %v350, 0
  %v938 = vsel %vm610, %v351, 0
  %v940 = vsel %vm610, %v352, 0
  %v943 = vsel %vm610, %v879, 0
  %v946 = vsel %vm707, %v191, 0
  %948 = vmatpush.bf16.msra.mxu0 0
  %949 = vmatpush.bf16.msra.mxu0 0
  %950 = vmatpush.bf16.msra.mxu0 0
  %951 = vmatpush.bf16.msra.mxu0 0
  %952 = vmatpush.bf16.msra.mxu0 0
  %953 = vmatpush.bf16.msra.mxu0 0
  %954 = vmatpush.bf16.msra.mxu0 0
  %955 = vmatpush.bf16.msra.mxu0 %v946
  %956 = vmatmul.bf16.gmra.mxu0 %v880
  %v957 = vpop.f32.mrf.mxu0
  %v958 = vadd.f32 %v721, %v957
  %v959 = vpop.f32.mrf.mxu0
  %v960 = vadd.f32 %v723, %v959
  %961 = vmatmul.bf16.gmra.mxu0 %v882
  %v962 = vpop.f32.mrf.mxu0
  %v963 = vadd.f32 %v726, %v962
  %v964 = vpop.f32.mrf.mxu0
  %v965 = vadd.f32 %v728, %v964
  %966 = vmatmul.bf16.gmra.mxu0 %v884
  %v967 = vpop.f32.mrf.mxu0
  %v968 = vadd.f32 %v731, %v967
  %v969 = vpop.f32.mrf.mxu0
  %v970 = vadd.f32 %v733, %v969
  %971 = vmatmul.bf16.gmra.mxu0 %v886
  %v972 = vpop.f32.mrf.mxu0
  %v973 = vadd.f32 %v736, %v972
  %v974 = vpop.f32.mrf.mxu0
  %v975 = vadd.f32 %v738, %v974
  %976 = vmatmul.bf16.gmra.mxu0 %v888
  %v977 = vpop.f32.mrf.mxu0
  %v978 = vadd.f32 %v741, %v977
  %v979 = vpop.f32.mrf.mxu0
  %v980 = vadd.f32 %v743, %v979
  %981 = vmatmul.bf16.gmra.mxu0 %v890
  %v982 = vpop.f32.mrf.mxu0
  %v983 = vadd.f32 %v746, %v982
  %v984 = vpop.f32.mrf.mxu0
  %v985 = vadd.f32 %v748, %v984
  %986 = vmatmul.bf16.gmra.mxu0 %v892
  %v987 = vpop.f32.mrf.mxu0
  %v988 = vadd.f32 %v751, %v987
  %v989 = vpop.f32.mrf.mxu0
  %v990 = vadd.f32 %v753, %v989
  %991 = vmatmul.bf16.gmra.mxu0 %v894
  %v992 = vpop.f32.mrf.mxu0
  %v993 = vadd.f32 %v756, %v992
  %v994 = vpop.f32.mrf.mxu0
  %v995 = vadd.f32 %v758, %v994
  %996 = vmatmul.bf16.gmra.mxu0 %v896
  %v997 = vpop.f32.mrf.mxu0
  %v998 = vadd.f32 %v761, %v997
  %v999 = vpop.f32.mrf.mxu0
  %v1000 = vadd.f32 %v763, %v999
  %1001 = vmatmul.bf16.gmra.mxu0 %v898
  %v1002 = vpop.f32.mrf.mxu0
  %v1003 = vadd.f32 %v766, %v1002
  %v1004 = vpop.f32.mrf.mxu0
  %v1005 = vadd.f32 %v768, %v1004
  %1006 = vmatmul.bf16.gmra.mxu0 %v900
  %v1007 = vpop.f32.mrf.mxu0
  %v1008 = vadd.f32 %v771, %v1007
  %v1009 = vpop.f32.mrf.mxu0
  %v1010 = vadd.f32 %v773, %v1009
  %1011 = vmatmul.bf16.gmra.mxu0 %v902
  %v1012 = vpop.f32.mrf.mxu0
  %v1013 = vadd.f32 %v776, %v1012
  %v1014 = vpop.f32.mrf.mxu0
  %v1015 = vadd.f32 %v778, %v1014
  %1016 = vmatmul.bf16.gmra.mxu0 %v904
  %v1017 = vpop.f32.mrf.mxu0
  %v1018 = vadd.f32 %v781, %v1017
  %v1019 = vpop.f32.mrf.mxu0
  %v1020 = vadd.f32 %v783, %v1019
  %1021 = vmatmul.bf16.gmra.mxu0 %v906
  %v1022 = vpop.f32.mrf.mxu0
  %v1023 = vadd.f32 %v786, %v1022
  %v1024 = vpop.f32.mrf.mxu0
  %v1025 = vadd.f32 %v788, %v1024
  %1026 = vmatmul.bf16.gmra.mxu0 %v908
  %v1027 = vpop.f32.mrf.mxu0
  %v1028 = vadd.f32 %v791, %v1027
  %v1029 = vpop.f32.mrf.mxu0
  %v1030 = vadd.f32 %v793, %v1029
  %1031 = vmatmul.bf16.gmra.mxu0 %v910
  %v1032 = vpop.f32.mrf.mxu0
  %v1033 = vadd.f32 %v796, %v1032
  %v1034 = vpop.f32.mrf.mxu0
  %v1035 = vadd.f32 %v798, %v1034
  %1036 = vmatmul.bf16.gmra.mxu0 %v912
  %v1037 = vpop.f32.mrf.mxu0
  %v1038 = vadd.f32 %v801, %v1037
  %v1039 = vpop.f32.mrf.mxu0
  %v1040 = vadd.f32 %v803, %v1039
  %1041 = vmatmul.bf16.gmra.mxu0 %v914
  %v1042 = vpop.f32.mrf.mxu0
  %v1043 = vadd.f32 %v806, %v1042
  %v1044 = vpop.f32.mrf.mxu0
  %v1045 = vadd.f32 %v808, %v1044
  %1046 = vmatmul.bf16.gmra.mxu0 %v916
  %v1047 = vpop.f32.mrf.mxu0
  %v1048 = vadd.f32 %v811, %v1047
  %v1049 = vpop.f32.mrf.mxu0
  %v1050 = vadd.f32 %v813, %v1049
  %1051 = vmatmul.bf16.gmra.mxu0 %v918
  %v1052 = vpop.f32.mrf.mxu0
  %v1053 = vadd.f32 %v816, %v1052
  %v1054 = vpop.f32.mrf.mxu0
  %v1055 = vadd.f32 %v818, %v1054
  %1056 = vmatmul.bf16.gmra.mxu0 %v920
  %v1057 = vpop.f32.mrf.mxu0
  %v1058 = vadd.f32 %v821, %v1057
  %v1059 = vpop.f32.mrf.mxu0
  %v1060 = vadd.f32 %v823, %v1059
  %1061 = vmatmul.bf16.gmra.mxu0 %v922
  %v1062 = vpop.f32.mrf.mxu0
  %v1063 = vadd.f32 %v826, %v1062
  %v1064 = vpop.f32.mrf.mxu0
  %v1065 = vadd.f32 %v828, %v1064
  %1066 = vmatmul.bf16.gmra.mxu0 %v924
  %v1067 = vpop.f32.mrf.mxu0
  %v1068 = vadd.f32 %v831, %v1067
  %v1069 = vpop.f32.mrf.mxu0
  %v1070 = vadd.f32 %v833, %v1069
  %1071 = vmatmul.bf16.gmra.mxu0 %v926
  %v1072 = vpop.f32.mrf.mxu0
  %v1073 = vadd.f32 %v836, %v1072
  %v1074 = vpop.f32.mrf.mxu0
  %v1075 = vadd.f32 %v838, %v1074
  %1076 = vmatmul.bf16.gmra.mxu0 %v928
  %v1077 = vpop.f32.mrf.mxu0
  %v1078 = vadd.f32 %v841, %v1077
  %v1079 = vpop.f32.mrf.mxu0
  %v1080 = vadd.f32 %v843, %v1079
  %1081 = vmatmul.bf16.gmra.mxu0 %v930
  %v1082 = vpop.f32.mrf.mxu0
  %v1083 = vadd.f32 %v846, %v1082
  %v1084 = vpop.f32.mrf.mxu0
  %v1085 = vadd.f32 %v848, %v1084
  %1086 = vmatmul.bf16.gmra.mxu0 %v932
  %v1087 = vpop.f32.mrf.mxu0
  %v1088 = vadd.f32 %v851, %v1087
  %v1089 = vpop.f32.mrf.mxu0
  %v1090 = vadd.f32 %v853, %v1089
  %1091 = vmatmul.bf16.gmra.mxu0 %v934
  %v1092 = vpop.f32.mrf.mxu0
  %v1093 = vadd.f32 %v856, %v1092
  %v1094 = vpop.f32.mrf.mxu0
  %v1095 = vadd.f32 %v858, %v1094
  %1096 = vmatmul.bf16.gmra.mxu0 %v936
  %v1097 = vpop.f32.mrf.mxu0
  %v1098 = vadd.f32 %v861, %v1097
  %v1099 = vpop.f32.mrf.mxu0
  %v1100 = vadd.f32 %v863, %v1099
  %1101 = vmatmul.bf16.gmra.mxu0 %v938
  %v1102 = vpop.f32.mrf.mxu0
  %v1103 = vadd.f32 %v866, %v1102
  %v1104 = vpop.f32.mrf.mxu0
  %v1105 = vadd.f32 %v868, %v1104
  %1106 = vmatmul.bf16.gmra.mxu0 %v940
  %v1107 = vpop.f32.mrf.mxu0
  %v1108 = vadd.f32 %v871, %v1107
  %v1109 = vpop.f32.mrf.mxu0
  %v1110 = vadd.f32 %v873, %v1109
  %1111 = vmatmul.bf16.gmra.mxu0 %v943
  %v1112 = vpop.f32.mrf.mxu0
  %v1113 = vadd.f32 %v876, %v1112
  %v1114 = vpop.f32.mrf.mxu0
  %1115 = vdwg.mxu0
  %v1116 = vld [vmem:[#allocation2] sm:$0xe]
  %v1117 = vld [vmem:[%s1 + $0x8] sm:$0xf]
  %v1119 = vunpack.c.l.b16 %v1116
  %v1120 = vpack.c.b16 %v259, %v1119
  %vm1121 = vcmask 1046528
  %v1122 = vrot.slane %v1120, 1
  %v1123 = vrot.slane %v323, 1
  %v1124 = vsel %vm1121, %v1122, %v1123
  %v1125 = vrot.slane %v324, 1
  %v1126 = vsel %vm1121, %v1123, %v1125
  %v1127 = vrot.slane %v325, 1
  %v1128 = vsel %vm1121, %v1125, %v1127
  %v1129 = vrot.slane %v326, 1
  %v1130 = vsel %vm1121, %v1127, %v1129
  %v1131 = vrot.slane %v327, 1
  %v1132 = vsel %vm1121, %v1129, %v1131
  %v1133 = vrot.slane %v328, 1
  %v1134 = vsel %vm1121, %v1131, %v1133
  %v1135 = vrot.slane %v329, 1
  %v1136 = vsel %vm1121, %v1133, %v1135
  %v1137 = vrot.slane %v330, 1
  %v1138 = vsel %vm1121, %v1135, %v1137
  %v1139 = vrot.slane %v331, 1
  %v1140 = vsel %vm1121, %v1137, %v1139
  %v1141 = vrot.slane %v332, 1
  %v1142 = vsel %vm1121, %v1139, %v1141
  %v1143 = vrot.slane %v333, 1
  %v1144 = vsel %vm1121, %v1141, %v1143
  %v1145 = vrot.slane %v334, 1
  %v1146 = vsel %vm1121, %v1143, %v1145
  %v1147 = vrot.slane %v335, 1
  %v1148 = vsel %vm1121, %v1145, %v1147
  %v1149 = vrot.slane %v336, 1
  %v1150 = vsel %vm1121, %v1147, %v1149
  %v1151 = vrot.slane %v337, 1
  %v1152 = vsel %vm1121, %v1149, %v1151
  %v1153 = vrot.slane %v338, 1
  %v1154 = vsel %vm1121, %v1151, %v1153
  %v1155 = vrot.slane %v339, 1
  %v1156 = vsel %vm1121, %v1153, %v1155
  %v1157 = vrot.slane %v340, 1
  %v1158 = vsel %vm1121, %v1155, %v1157
  %v1159 = vrot.slane %v341, 1
  %v1160 = vsel %vm1121, %v1157, %v1159
  %v1161 = vrot.slane %v342, 1
  %v1162 = vsel %vm1121, %v1159, %v1161
  %v1163 = vrot.slane %v343, 1
  %v1164 = vsel %vm1121, %v1161, %v1163
  %v1165 = vrot.slane %v344, 1
  %v1166 = vsel %vm1121, %v1163, %v1165
  %v1167 = vrot.slane %v345, 1
  %v1168 = vsel %vm1121, %v1165, %v1167
  %v1169 = vrot.slane %v346, 1
  %v1170 = vsel %vm1121, %v1167, %v1169
  %v1171 = vrot.slane %v347, 1
  %v1172 = vsel %vm1121, %v1169, %v1171
  %v1173 = vrot.slane %v348, 1
  %v1174 = vsel %vm1121, %v1171, %v1173
  %v1175 = vrot.slane %v349, 1
  %v1176 = vsel %vm1121, %v1173, %v1175
  %v1177 = vrot.slane %v350, 1
  %v1178 = vsel %vm1121, %v1175, %v1177
  %v1179 = vrot.slane %v351, 1
  %v1180 = vsel %vm1121, %v1177, %v1179
  %v1181 = vrot.slane %v352, 1
  %v1182 = vsel %vm1121, %v1179, %v1181
  %v1183 = vrot.slane %v353, 1
  %v1184 = vsel %vm1121, %v1181, %v1183
  %v1186 = vsel %vm610, %v1124, 0
  %v1189 = vsel %vm610, %v1126, 0
  %v1192 = vsel %vm610, %v1128, 0
  %v1195 = vsel %vm610, %v1130, 0
  %v1198 = vsel %vm610, %v1132, 0
  %v1201 = vsel %vm610, %v1134, 0
  %v1204 = vsel %vm610, %v1136, 0
  %v1207 = vsel %vm610, %v1138, 0
  %v1210 = vsel %vm610, %v1140, 0
  %v1213 = vsel %vm610, %v1142, 0
  %v1216 = vsel %vm610, %v1144, 0
  %v1219 = vsel %vm610, %v1146, 0
  %v1222 = vsel %vm610, %v1148, 0
  %v1225 = vsel %vm610, %v1150, 0
  %v1228 = vsel %vm610, %v1152, 0
  %v1231 = vsel %vm610, %v1154, 0
  %v1234 = vsel %vm610, %v1156, 0
  %v1237 = vsel %vm610, %v1158, 0
  %v1240 = vsel %vm610, %v1160, 0
  %v1243 = vsel %vm610, %v1162, 0
  %v1246 = vsel %vm610, %v1164, 0
  %v1249 = vsel %vm610, %v1166, 0
  %v1252 = vsel %vm610, %v1168, 0
  %v1255 = vsel %vm610, %v1170, 0
  %v1258 = vsel %vm610, %v1172, 0
  %v1261 = vsel %vm610, %v1174, 0
  %v1264 = vsel %vm610, %v1176, 0
  %v1267 = vsel %vm610, %v1178, 0
  %v1270 = vsel %vm610, %v1180, 0
  %v1273 = vsel %vm610, %v1182, 0
  %v1276 = vsel %vm610, %v1184, 0
  %v1279 = vsel %vm610, %v1183, 0
  %v1282 = vsel %vm707, %v1117, 0
  %1284 = vmatpush.bf16.msra.mxu0 0
  %1285 = vmatpush.bf16.msra.mxu0 0
  %1286 = vmatpush.bf16.msra.mxu0 0
  %1287 = vmatpush.bf16.msra.mxu0 0
  %1288 = vmatpush.bf16.msra.mxu0 0
  %1289 = vmatpush.bf16.msra.mxu0 0
  %1290 = vmatpush.bf16.msra.mxu0 0
  %1291 = vmatpush.bf16.msra.mxu0 %v1282
  %1292 = vmatmul.bf16.gmra.mxu0 %v1186
  %v1293 = vpop.f32.mrf.mxu0
  %v1294 = vadd.f32 0.0, %v1293
  %v1295 = vpop.f32.mrf.mxu0
  %v1296 = vadd.f32 0.0, %v1295
  %1297 = vmatmul.bf16.gmra.mxu0 %v1189
  %v1298 = vpop.f32.mrf.mxu0
  %v1299 = vadd.f32 0.0, %v1298
  %v1300 = vpop.f32.mrf.mxu0
  %v1301 = vadd.f32 0.0, %v1300
  %1302 = vmatmul.bf16.gmra.mxu0 %v1192
  %v1303 = vpop.f32.mrf.mxu0
  %v1304 = vadd.f32 0.0, %v1303
  %v1305 = vpop.f32.mrf.mxu0
  %v1306 = vadd.f32 0.0, %v1305
  %1307 = vmatmul.bf16.gmra.mxu0 %v1195
  %v1308 = vpop.f32.mrf.mxu0
  %v1309 = vadd.f32 0.0, %v1308
  %v1310 = vpop.f32.mrf.mxu0
  %v1311 = vadd.f32 0.0, %v1310
  %1312 = vmatmul.bf16.gmra.mxu0 %v1198
  %v1313 = vpop.f32.mrf.mxu0
  %v1314 = vadd.f32 0.0, %v1313
  %v1315 = vpop.f32.mrf.mxu0
  %v1316 = vadd.f32 0.0, %v1315
  %1317 = vmatmul.bf16.gmra.mxu0 %v1201
  %v1318 = vpop.f32.mrf.mxu0
  %v1319 = vadd.f32 0.0, %v1318
  %v1320 = vpop.f32.mrf.mxu0
  %v1321 = vadd.f32 0.0, %v1320
  %1322 = vmatmul.bf16.gmra.mxu0 %v1204
  %v1323 = vpop.f32.mrf.mxu0
  %v1324 = vadd.f32 0.0, %v1323
  %v1325 = vpop.f32.mrf.mxu0
  %v1326 = vadd.f32 0.0, %v1325
  %1327 = vmatmul.bf16.gmra.mxu0 %v1207
  %v1328 = vpop.f32.mrf.mxu0
  %v1329 = vadd.f32 0.0, %v1328
  %v1330 = vpop.f32.mrf.mxu0
  %v1331 = vadd.f32 0.0, %v1330
  %1332 = vmatmul.bf16.gmra.mxu0 %v1210
  %v1333 = vpop.f32.mrf.mxu0
  %v1334 = vadd.f32 0.0, %v1333
  %v1335 = vpop.f32.mrf.mxu0
  %v1336 = vadd.f32 0.0, %v1335
  %1337 = vmatmul.bf16.gmra.mxu0 %v1213
  %v1338 = vpop.f32.mrf.mxu0
  %v1339 = vadd.f32 0.0, %v1338
  %v1340 = vpop.f32.mrf.mxu0
  %v1341 = vadd.f32 0.0, %v1340
  %1342 = vmatmul.bf16.gmra.mxu0 %v1216
  %v1343 = vpop.f32.mrf.mxu0
  %v1344 = vadd.f32 0.0, %v1343
  %v1345 = vpop.f32.mrf.mxu0
  %v1346 = vadd.f32 0.0, %v1345
  %1347 = vmatmul.bf16.gmra.mxu0 %v1219
  %v1348 = vpop.f32.mrf.mxu0
  %v1349 = vadd.f32 0.0, %v1348
  %v1350 = vpop.f32.mrf.mxu0
  %v1351 = vadd.f32 0.0, %v1350
  %1352 = vmatmul.bf16.gmra.mxu0 %v1222
  %v1353 = vpop.f32.mrf.mxu0
  %v1354 = vadd.f32 0.0, %v1353
  %v1355 = vpop.f32.mrf.mxu0
  %v1356 = vadd.f32 0.0, %v1355
  %1357 = vmatmul.bf16.gmra.mxu0 %v1225
  %v1358 = vpop.f32.mrf.mxu0
  %v1359 = vadd.f32 0.0, %v1358
  %v1360 = vpop.f32.mrf.mxu0
  %v1361 = vadd.f32 0.0, %v1360
  %1362 = vmatmul.bf16.gmra.mxu0 %v1228
  %v1363 = vpop.f32.mrf.mxu0
  %v1364 = vadd.f32 0.0, %v1363
  %v1365 = vpop.f32.mrf.mxu0
  %v1366 = vadd.f32 0.0, %v1365
  %1367 = vmatmul.bf16.gmra.mxu0 %v1231
  %v1368 = vpop.f32.mrf.mxu0
  %v1369 = vadd.f32 0.0, %v1368
  %v1370 = vpop.f32.mrf.mxu0
  %v1371 = vadd.f32 0.0, %v1370
  %1372 = vmatmul.bf16.gmra.mxu0 %v1234
  %v1373 = vpop.f32.mrf.mxu0
  %v1374 = vadd.f32 0.0, %v1373
  %v1375 = vpop.f32.mrf.mxu0
  %v1376 = vadd.f32 0.0, %v1375
  %1377 = vmatmul.bf16.gmra.mxu0 %v1237
  %v1378 = vpop.f32.mrf.mxu0
  %v1379 = vadd.f32 0.0, %v1378
  %v1380 = vpop.f32.mrf.mxu0
  %v1381 = vadd.f32 0.0, %v1380
  %1382 = vmatmul.bf16.gmra.mxu0 %v1240
  %v1383 = vpop.f32.mrf.mxu0
  %v1384 = vadd.f32 0.0, %v1383
  %v1385 = vpop.f32.mrf.mxu0
  %v1386 = vadd.f32 0.0, %v1385
  %1387 = vmatmul.bf16.gmra.mxu0 %v1243
  %v1388 = vpop.f32.mrf.mxu0
  %v1389 = vadd.f32 0.0, %v1388
  %v1390 = vpop.f32.mrf.mxu0
  %v1391 = vadd.f32 0.0, %v1390
  %1392 = vmatmul.bf16.gmra.mxu0 %v1246
  %v1393 = vpop.f32.mrf.mxu0
  %v1394 = vadd.f32 0.0, %v1393
  %v1395 = vpop.f32.mrf.mxu0
  %v1396 = vadd.f32 0.0, %v1395
  %1397 = vmatmul.bf16.gmra.mxu0 %v1249
  %v1398 = vpop.f32.mrf.mxu0
  %v1399 = vadd.f32 0.0, %v1398
  %v1400 = vpop.f32.mrf.mxu0
  %v1401 = vadd.f32 0.0, %v1400
  %1402 = vmatmul.bf16.gmra.mxu0 %v1252
  %v1403 = vpop.f32.mrf.mxu0
  %v1404 = vadd.f32 0.0, %v1403
  %v1405 = vpop.f32.mrf.mxu0
  %v1406 = vadd.f32 0.0, %v1405
  %1407 = vmatmul.bf16.gmra.mxu0 %v1255
  %v1408 = vpop.f32.mrf.mxu0
  %v1409 = vadd.f32 0.0, %v1408
  %v1410 = vpop.f32.mrf.mxu0
  %v1411 = vadd.f32 0.0, %v1410
  %1412 = vmatmul.bf16.gmra.mxu0 %v1258
  %v1413 = vpop.f32.mrf.mxu0
  %v1414 = vadd.f32 0.0, %v1413
  %v1415 = vpop.f32.mrf.mxu0
  %v1416 = vadd.f32 0.0, %v1415
  %1417 = vmatmul.bf16.gmra.mxu0 %v1261
  %v1418 = vpop.f32.mrf.mxu0
  %v1419 = vadd.f32 0.0, %v1418
  %v1420 = vpop.f32.mrf.mxu0
  %v1421 = vadd.f32 0.0, %v1420
  %1422 = vmatmul.bf16.gmra.mxu0 %v1264
  %v1423 = vpop.f32.mrf.mxu0
  %v1424 = vadd.f32 0.0, %v1423
  %v1425 = vpop.f32.mrf.mxu0
  %v1426 = vadd.f32 0.0, %v1425
  %1427 = vmatmul.bf16.gmra.mxu0 %v1267
  %v1428 = vpop.f32.mrf.mxu0
  %v1429 = vadd.f32 0.0, %v1428
  %v1430 = vpop.f32.mrf.mxu0
  %v1431 = vadd.f32 0.0, %v1430
  %1432 = vmatmul.bf16.gmra.mxu0 %v1270
  %v1433 = vpop.f32.mrf.mxu0
  %v1434 = vadd.f32 0.0, %v1433
  %v1435 = vpop.f32.mrf.mxu0
  %v1436 = vadd.f32 0.0, %v1435
  %1437 = vmatmul.bf16.gmra.mxu0 %v1273
  %v1438 = vpop.f32.mrf.mxu0
  %v1439 = vadd.f32 0.0, %v1438
  %v1440 = vpop.f32.mrf.mxu0
  %v1441 = vadd.f32 0.0, %v1440
  %1442 = vmatmul.bf16.gmra.mxu0 %v1276
  %v1443 = vpop.f32.mrf.mxu0
  %v1444 = vadd.f32 0.0, %v1443
  %v1445 = vpop.f32.mrf.mxu0
  %v1446 = vadd.f32 0.0, %v1445
  %1447 = vmatmul.bf16.gmra.mxu0 %v1279
  %v1448 = vpop.f32.mrf.mxu0
  %v1449 = vadd.f32 0.0, %v1448
  %v1450 = vpop.f32.mrf.mxu0
  %1451 = vdwg.mxu0
  %v1452 = vadd.f32 %v958, %v1294
  %v1453 = vadd.f32 %v960, %v1296
  %v1454 = vadd.f32 %v963, %v1299
  %v1455 = vadd.f32 %v965, %v1301
  %v1456 = vadd.f32 %v968, %v1304
  %v1457 = vadd.f32 %v970, %v1306
  %v1458 = vadd.f32 %v973, %v1309
  %v1459 = vadd.f32 %v975, %v1311
  %v1460 = vadd.f32 %v978, %v1314
  %v1461 = vadd.f32 %v980, %v1316
  %v1462 = vadd.f32 %v983, %v1319
  %v1463 = vadd.f32 %v985, %v1321
  %v1464 = vadd.f32 %v988, %v1324
  %v1465 = vadd.f32 %v990, %v1326
  %v1466 = vadd.f32 %v993, %v1329
  %v1467 = vadd.f32 %v995, %v1331
  %v1468 = vadd.f32 %v998, %v1334
  %v1469 = vadd.f32 %v1000, %v1336
  %v1470 = vadd.f32 %v1003, %v1339
  %v1471 = vadd.f32 %v1005, %v1341
  %v1472 = vadd.f32 %v1008, %v1344
  %v1473 = vadd.f32 %v1010, %v1346
  %v1474 = vadd.f32 %v1013, %v1349
  %v1475 = vadd.f32 %v1015, %v1351
  %v1476 = vadd.f32 %v1018, %v1354
  %v1477 = vadd.f32 %v1020, %v1356
  %v1478 = vadd.f32 %v1023, %v1359
  %v1479 = vadd.f32 %v1025, %v1361
  %v1480 = vadd.f32 %v1028, %v1364
  %v1481 = vadd.f32 %v1030, %v1366
  %v1482 = vadd.f32 %v1033, %v1369
  %v1483 = vadd.f32 %v1035, %v1371
  %v1484 = vadd.f32 %v1038, %v1374
  %v1485 = vadd.f32 %v1040, %v1376
  %v1486 = vadd.f32 %v1043, %v1379
  %v1487 = vadd.f32 %v1045, %v1381
  %v1488 = vadd.f32 %v1048, %v1384
  %v1489 = vadd.f32 %v1050, %v1386
  %v1490 = vadd.f32 %v1053, %v1389
  %v1491 = vadd.f32 %v1055, %v1391
  %v1492 = vadd.f32 %v1058, %v1394
  %v1493 = vadd.f32 %v1060, %v1396
  %v1494 = vadd.f32 %v1063, %v1399
  %v1495 = vadd.f32 %v1065, %v1401
  %v1496 = vadd.f32 %v1068, %v1404
  %v1497 = vadd.f32 %v1070, %v1406
  %v1498 = vadd.f32 %v1073, %v1409
  %v1499 = vadd.f32 %v1075, %v1411
  %v1500 = vadd.f32 %v1078, %v1414
  %v1501 = vadd.f32 %v1080, %v1416
  %v1502 = vadd.f32 %v1083, %v1419
  %v1503 = vadd.f32 %v1085, %v1421
  %v1504 = vadd.f32 %v1088, %v1424
  %v1505 = vadd.f32 %v1090, %v1426
  %v1506 = vadd.f32 %v1093, %v1429
  %v1507 = vadd.f32 %v1095, %v1431
  %v1508 = vadd.f32 %v1098, %v1434
  %v1509 = vadd.f32 %v1100, %v1436
  %v1510 = vadd.f32 %v1103, %v1439
  %v1511 = vadd.f32 %v1105, %v1441
  %v1512 = vadd.f32 %v1108, %v1444
  %v1513 = vadd.f32 %v1110, %v1446
  %v1514 = vadd.f32 %v1113, %v1449
  %v1515 = vld [vmem:[#allocation2 + $0x4] sm:$0xf]
  %v1516 = vld [vmem:[#allocation2 + $0x8] sm:$0xf]
  %v1517 = vld [vmem:[#allocation2 + $0xc] sm:$0xf]
  %v1518 = vld [vmem:[#allocation2 + $0x10] sm:$0xf]
  %v1519 = vld [vmem:[#allocation2 + $0x14] sm:$0xf]
  %v1520 = vld [vmem:[#allocation2 + $0x18] sm:$0xf]
  %v1521 = vld [vmem:[#allocation2 + $0x1c] sm:$0xf]
  %v1522 = vld [vmem:[#allocation2 + $0x20] sm:$0xf]
  %v1523 = vld [vmem:[#allocation2 + $0x24] sm:$0xf]
  %v1524 = vld [vmem:[#allocation2 + $0x28] sm:$0xf]
  %v1525 = vld [vmem:[#allocation2 + $0x2c] sm:$0xf]
  %v1526 = vld [vmem:[#allocation2 + $0x30] sm:$0xf]
  %v1527 = vld [vmem:[#allocation2 + $0x34] sm:$0xf]
  %v1528 = vld [vmem:[#allocation2 + $0x38] sm:$0xf]
  %v1529 = vld [vmem:[#allocation2 + $0x3c] sm:$0xf]
  %v1530 = vld [vmem:[#allocation2 + $0x40] sm:$0xf]
  %v1531 = vld [vmem:[#allocation2 + $0x44] sm:$0xf]
  %v1532 = vld [vmem:[#allocation2 + $0x48] sm:$0xf]
  %v1533 = vld [vmem:[#allocation2 + $0x4c] sm:$0xf]
  %v1534 = vld [vmem:[#allocation2 + $0x50] sm:$0xf]
  %v1535 = vld [vmem:[#allocation2 + $0x54] sm:$0xf]
  %v1536 = vld [vmem:[#allocation2 + $0x58] sm:$0xf]
  %v1537 = vld [vmem:[#allocation2 + $0x5c] sm:$0xf]
  %v1538 = vld [vmem:[#allocation2 + $0x60] sm:$0xf]
  %v1539 = vld [vmem:[#allocation2 + $0x64] sm:$0xf]
  %v1540 = vld [vmem:[#allocation2 + $0x68] sm:$0xf]
  %v1541 = vld [vmem:[#allocation2 + $0x6c] sm:$0xf]
  %v1542 = vld [vmem:[#allocation2 + $0x70] sm:$0xf]
  %v1543 = vld [vmem:[#allocation2 + $0x74] sm:$0xf]
  %v1544 = vld [vmem:[#allocation2 + $0x78] sm:$0xf]
  %v1545 = vld [vmem:[#allocation2 + $0x7c] sm:$0xf]
  %v1546 = vld [vmem:[#allocation2 + $0x80] sm:$0xf]
  %v1547 = vld [vmem:[#allocation2 + $0x84] sm:$0xf]
  %v1548 = vld [vmem:[#allocation2 + $0x88] sm:$0xf]
  %v1549 = vld [vmem:[#allocation2 + $0x8c] sm:$0xf]
  %v1550 = vld [vmem:[#allocation2 + $0x90] sm:$0xf]
  %v1551 = vld [vmem:[#allocation2 + $0x94] sm:$0xf]
  %v1552 = vld [vmem:[#allocation2 + $0x98] sm:$0xf]
  %v1553 = vld [vmem:[#allocation2 + $0x9c] sm:$0xf]
  %v1554 = vld [vmem:[#allocation2 + $0xa0] sm:$0xf]
  %v1555 = vld [vmem:[#allocation2 + $0xa4] sm:$0xf]
  %v1556 = vld [vmem:[#allocation2 + $0xa8] sm:$0xf]
  %v1557 = vld [vmem:[#allocation2 + $0xac] sm:$0xf]
  %v1558 = vld [vmem:[#allocation2 + $0xb0] sm:$0xf]
  %v1559 = vld [vmem:[#allocation2 + $0xb4] sm:$0xf]
  %v1560 = vld [vmem:[#allocation2 + $0xb8] sm:$0xf]
  %v1561 = vld [vmem:[#allocation2 + $0xbc] sm:$0xf]
  %v1562 = vld [vmem:[#allocation2 + $0xc0] sm:$0xf]
  %v1563 = vld [vmem:[#allocation2 + $0xc4] sm:$0xf]
  %v1564 = vld [vmem:[#allocation2 + $0xc8] sm:$0xf]
  %v1565 = vld [vmem:[#allocation2 + $0xcc] sm:$0xf]
  %v1566 = vld [vmem:[#allocation2 + $0xd0] sm:$0xf]
  %v1567 = vld [vmem:[#allocation2 + $0xd4] sm:$0xf]
  %v1568 = vld [vmem:[#allocation2 + $0xd8] sm:$0xf]
  %v1569 = vld [vmem:[#allocation2 + $0xdc] sm:$0xf]
  %v1570 = vld [vmem:[#allocation2 + $0xe0] sm:$0xf]
  %v1571 = vld [vmem:[#allocation2 + $0xe4] sm:$0xf]
  %v1572 = vld [vmem:[#allocation2 + $0xe8] sm:$0xf]
  %v1573 = vld [vmem:[#allocation2 + $0xec] sm:$0xf]
  %v1574 = vld [vmem:[#allocation2 + $0xf0] sm:$0xf]
  %v1575 = vld [vmem:[#allocation2 + $0xf4] sm:$0xf]
  %v1576 = vld [vmem:[#allocation2 + $0xf8] sm:$0xf]
  %v1577 = vld [vmem:[#allocation2 + $0xfc] sm:$0xf]
  %v1578 = vld [vmem:[#allocation2 + $0x100] sm:$0x1]
  %v1579 = vld [vmem:[%s1 + $0xc] sm:$0xf]
  %v1644 = vunpack.c.l.b16 %v1515
  %v1645 = vunpack.c.l.b16 %v1516
  %v1646 = vunpack.c.l.b16 %v1517
  %v1647 = vunpack.c.l.b16 %v1518
  %v1648 = vunpack.c.l.b16 %v1519
  %v1649 = vunpack.c.l.b16 %v1520
  %v1650 = vunpack.c.l.b16 %v1521
  %v1651 = vunpack.c.l.b16 %v1522
  %v1652 = vunpack.c.l.b16 %v1523
  %v1653 = vunpack.c.l.b16 %v1524
  %v1654 = vunpack.c.l.b16 %v1525
  %v1655 = vunpack.c.l.b16 %v1526
  %v1656 = vunpack.c.l.b16 %v1527
  %v1657 = vunpack.c.l.b16 %v1528
  %v1658 = vunpack.c.l.b16 %v1529
  %v1659 = vunpack.c.l.b16 %v1530
  %v1660 = vunpack.c.l.b16 %v1531
  %v1661 = vunpack.c.l.b16 %v1532
  %v1662 = vunpack.c.l.b16 %v1533
  %v1663 = vunpack.c.l.b16 %v1534
  %v1664 = vunpack.c.l.b16 %v1535
  %v1665 = vunpack.c.l.b16 %v1536
  %v1666 = vunpack.c.l.b16 %v1537
  %v1667 = vunpack.c.l.b16 %v1538
  %v1668 = vunpack.c.l.b16 %v1539
  %v1669 = vunpack.c.l.b16 %v1540
  %v1670 = vunpack.c.l.b16 %v1541
  %v1671 = vunpack.c.l.b16 %v1542
  %v1672 = vunpack.c.l.b16 %v1543
  %v1673 = vunpack.c.l.b16 %v1544
  %v1674 = vunpack.c.l.b16 %v1545
  %v1675 = vunpack.c.l.b16 %v1546
  %v1676 = vunpack.c.l.b16 %v1547
  %v1677 = vunpack.c.l.b16 %v1548
  %v1678 = vunpack.c.l.b16 %v1549
  %v1679 = vunpack.c.l.b16 %v1550
  %v1680 = vunpack.c.l.b16 %v1551
  %v1681 = vunpack.c.l.b16 %v1552
  %v1682 = vunpack.c.l.b16 %v1553
  %v1683 = vunpack.c.l.b16 %v1554
  %v1684 = vunpack.c.l.b16 %v1555
  %v1685 = vunpack.c.l.b16 %v1556
  %v1686 = vunpack.c.l.b16 %v1557
  %v1687 = vunpack.c.l.b16 %v1558
  %v1688 = vunpack.c.l.b16 %v1559
  %v1689 = vunpack.c.l.b16 %v1560
  %v1690 = vunpack.c.l.b16 %v1561
  %v1691 = vunpack.c.l.b16 %v1562
  %v1692 = vunpack.c.l.b16 %v1563
  %v1693 = vunpack.c.l.b16 %v1564
  %v1694 = vunpack.c.l.b16 %v1565
  %v1695 = vunpack.c.l.b16 %v1566
  %v1696 = vunpack.c.l.b16 %v1567
  %v1697 = vunpack.c.l.b16 %v1568
  %v1698 = vunpack.c.l.b16 %v1569
  %v1699 = vunpack.c.l.b16 %v1570
  %v1700 = vunpack.c.l.b16 %v1571
  %v1701 = vunpack.c.l.b16 %v1572
  %v1702 = vunpack.c.l.b16 %v1573
  %v1703 = vunpack.c.l.b16 %v1574
  %v1704 = vunpack.c.l.b16 %v1575
  %v1705 = vunpack.c.l.b16 %v1576
  %v1706 = vunpack.c.l.b16 %v1577
  %v1707 = vunpack.c.l.b16 %v1578
  %v1708 = vpack.c.b16 %v1645, %v1644
  %v1709 = vpack.c.b16 %v1647, %v1646
  %v1710 = vpack.c.b16 %v1649, %v1648
  %v1711 = vpack.c.b16 %v1651, %v1650
  %v1712 = vpack.c.b16 %v1653, %v1652
  %v1713 = vpack.c.b16 %v1655, %v1654
  %v1714 = vpack.c.b16 %v1657, %v1656
  %v1715 = vpack.c.b16 %v1659, %v1658
  %v1716 = vpack.c.b16 %v1661, %v1660
  %v1717 = vpack.c.b16 %v1663, %v1662
  %v1718 = vpack.c.b16 %v1665, %v1664
  %v1719 = vpack.c.b16 %v1667, %v1666
  %v1720 = vpack.c.b16 %v1669, %v1668
  %v1721 = vpack.c.b16 %v1671, %v1670
  %v1722 = vpack.c.b16 %v1673, %v1672
  %v1723 = vpack.c.b16 %v1675, %v1674
  %v1724 = vpack.c.b16 %v1677, %v1676
  %v1725 = vpack.c.b16 %v1679, %v1678
  %v1726 = vpack.c.b16 %v1681, %v1680
  %v1727 = vpack.c.b16 %v1683, %v1682
  %v1728 = vpack.c.b16 %v1685, %v1684
  %v1729 = vpack.c.b16 %v1687, %v1686
  %v1730 = vpack.c.b16 %v1689, %v1688
  %v1731 = vpack.c.b16 %v1691, %v1690
  %v1732 = vpack.c.b16 %v1693, %v1692
  %v1733 = vpack.c.b16 %v1695, %v1694
  %v1734 = vpack.c.b16 %v1697, %v1696
  %v1735 = vpack.c.b16 %v1699, %v1698
  %v1736 = vpack.c.b16 %v1701, %v1700
  %v1737 = vpack.c.b16 %v1703, %v1702
  %v1738 = vpack.c.b16 %v1705, %v1704
  %v1739 = vpack.c.b16 %v1707, %v1706
  %v1741 = vshrl.u32 %v1708, 16
  %v1743 = vshll.u32 %v1708, 16
  %v1745 = vrot.slane %v1743, 1
  %v1746 = vor.u32 %v1741, %v1745
  %v1748 = vshll.u32 %v1709, 16
  %v1750 = vrot.slane %v1748, 1
  %v1751 = vsel %vm354, %v1746, %v1750
  %v1752 = vshrl.u32 %v1709, 16
  %v1754 = vor.u32 %v1752, %v1750
  %v1756 = vshll.u32 %v1710, 16
  %v1758 = vrot.slane %v1756, 1
  %v1759 = vsel %vm354, %v1754, %v1758
  %v1760 = vshrl.u32 %v1710, 16
  %v1762 = vor.u32 %v1760, %v1758
  %v1764 = vshll.u32 %v1711, 16
  %v1766 = vrot.slane %v1764, 1
  %v1767 = vsel %vm354, %v1762, %v1766
  %v1768 = vshrl.u32 %v1711, 16
  %v1770 = vor.u32 %v1768, %v1766
  %v1772 = vshll.u32 %v1712, 16
  %v1774 = vrot.slane %v1772, 1
  %v1775 = vsel %vm354, %v1770, %v1774
  %v1776 = vshrl.u32 %v1712, 16
  %v1778 = vor.u32 %v1776, %v1774
  %v1780 = vshll.u32 %v1713, 16
  %v1782 = vrot.slane %v1780, 1
  %v1783 = vsel %vm354, %v1778, %v1782
  %v1784 = vshrl.u32 %v1713, 16
  %v1786 = vor.u32 %v1784, %v1782
  %v1788 = vshll.u32 %v1714, 16
  %v1790 = vrot.slane %v1788, 1
  %v1791 = vsel %vm354, %v1786, %v1790
  %v1792 = vshrl.u32 %v1714, 16
  %v1794 = vor.u32 %v1792, %v1790
  %v1796 = vshll.u32 %v1715, 16
  %v1798 = vrot.slane %v1796, 1
  %v1799 = vsel %vm354, %v1794, %v1798
  %v1800 = vshrl.u32 %v1715, 16
  %v1802 = vor.u32 %v1800, %v1798
  %v1804 = vshll.u32 %v1716, 16
  %v1806 = vrot.slane %v1804, 1
  %v1807 = vsel %vm354, %v1802, %v1806
  %v1808 = vshrl.u32 %v1716, 16
  %v1810 = vor.u32 %v1808, %v1806
  %v1812 = vshll.u32 %v1717, 16
  %v1814 = vrot.slane %v1812, 1
  %v1815 = vsel %vm354, %v1810, %v1814
  %v1816 = vshrl.u32 %v1717, 16
  %v1818 = vor.u32 %v1816, %v1814
  %v1820 = vshll.u32 %v1718, 16
  %v1822 = vrot.slane %v1820, 1
  %v1823 = vsel %vm354, %v1818, %v1822
  %v1824 = vshrl.u32 %v1718, 16
  %v1826 = vor.u32 %v1824, %v1822
  %v1828 = vshll.u32 %v1719, 16
  %v1830 = vrot.slane %v1828, 1
  %v1831 = vsel %vm354, %v1826, %v1830
  %v1832 = vshrl.u32 %v1719, 16
  %v1834 = vor.u32 %v1832, %v1830
  %v1836 = vshll.u32 %v1720, 16
  %v1838 = vrot.slane %v1836, 1
  %v1839 = vsel %vm354, %v1834, %v1838
  %v1840 = vshrl.u32 %v1720, 16
  %v1842 = vor.u32 %v1840, %v1838
  %v1844 = vshll.u32 %v1721, 16
  %v1846 = vrot.slane %v1844, 1
  %v1847 = vsel %vm354, %v1842, %v1846
  %v1848 = vshrl.u32 %v1721, 16
  %v1850 = vor.u32 %v1848, %v1846
  %v1852 = vshll.u32 %v1722, 16
  %v1854 = vrot.slane %v1852, 1
  %v1855 = vsel %vm354, %v1850, %v1854
  %v1856 = vshrl.u32 %v1722, 16
  %v1858 = vor.u32 %v1856, %v1854
  %v1860 = vshll.u32 %v1723, 16
  %v1862 = vrot.slane %v1860, 1
  %v1863 = vsel %vm354, %v1858, %v1862
  %v1864 = vshrl.u32 %v1723, 16
  %v1866 = vor.u32 %v1864, %v1862
  %v1868 = vshll.u32 %v1724, 16
  %v1870 = vrot.slane %v1868, 1
  %v1871 = vsel %vm354, %v1866, %v1870
  %v1872 = vshrl.u32 %v1724, 16
  %v1874 = vor.u32 %v1872, %v1870
  %v1876 = vshll.u32 %v1725, 16
  %v1878 = vrot.slane %v1876, 1
  %v1879 = vsel %vm354, %v1874, %v1878
  %v1880 = vshrl.u32 %v1725, 16
  %v1882 = vor.u32 %v1880, %v1878
  %v1884 = vshll.u32 %v1726, 16
  %v1886 = vrot.slane %v1884, 1
  %v1887 = vsel %vm354, %v1882, %v1886
  %v1888 = vshrl.u32 %v1726, 16
  %v1890 = vor.u32 %v1888, %v1886
  %v1892 = vshll.u32 %v1727, 16
  %v1894 = vrot.slane %v1892, 1
  %v1895 = vsel %vm354, %v1890, %v1894
  %v1896 = vshrl.u32 %v1727, 16
  %v1898 = vor.u32 %v1896, %v1894
  %v1900 = vshll.u32 %v1728, 16
  %v1902 = vrot.slane %v1900, 1
  %v1903 = vsel %vm354, %v1898, %v1902
  %v1904 = vshrl.u32 %v1728, 16
  %v1906 = vor.u32 %v1904, %v1902
  %v1908 = vshll.u32 %v1729, 16
  %v1910 = vrot.slane %v1908, 1
  %v1911 = vsel %vm354, %v1906, %v1910
  %v1912 = vshrl.u32 %v1729, 16
  %v1914 = vor.u32 %v1912, %v1910
  %v1916 = vshll.u32 %v1730, 16
  %v1918 = vrot.slane %v1916, 1
  %v1919 = vsel %vm354, %v1914, %v1918
  %v1920 = vshrl.u32 %v1730, 16
  %v1922 = vor.u32 %v1920, %v1918
  %v1924 = vshll.u32 %v1731, 16
  %v1926 = vrot.slane %v1924, 1
  %v1927 = vsel %vm354, %v1922, %v1926
  %v1928 = vshrl.u32 %v1731, 16
  %v1930 = vor.u32 %v1928, %v1926
  %v1932 = vshll.u32 %v1732, 16
  %v1934 = vrot.slane %v1932, 1
  %v1935 = vsel %vm354, %v1930, %v1934
  %v1936 = vshrl.u32 %v1732, 16
  %v1938 = vor.u32 %v1936, %v1934
  %v1940 = vshll.u32 %v1733, 16
  %v1942 = vrot.slane %v1940, 1
  %v1943 = vsel %vm354, %v1938, %v1942
  %v1944 = vshrl.u32 %v1733, 16
  %v1946 = vor.u32 %v1944, %v1942
  %v1948 = vshll.u32 %v1734, 16
  %v1950 = vrot.slane %v1948, 1
  %v1951 = vsel %vm354, %v1946, %v1950
  %v1952 = vshrl.u32 %v1734, 16
  %v1954 = vor.u32 %v1952, %v1950
  %v1956 = vshll.u32 %v1735, 16
  %v1958 = vrot.slane %v1956, 1
  %v1959 = vsel %vm354, %v1954, %v1958
  %v1960 = vshrl.u32 %v1735, 16
  %v1962 = vor.u32 %v1960, %v1958
  %v1964 = vshll.u32 %v1736, 16
  %v1966 = vrot.slane %v1964, 1
  %v1967 = vsel %vm354, %v1962, %v1966
  %v1968 = vshrl.u32 %v1736, 16
  %v1970 = vor.u32 %v1968, %v1966
  %v1972 = vshll.u32 %v1737, 16
  %v1974 = vrot.slane %v1972, 1
  %v1975 = vsel %vm354, %v1970, %v1974
  %v1976 = vshrl.u32 %v1737, 16
  %v1978 = vor.u32 %v1976, %v1974
  %v1980 = vshll.u32 %v1738, 16
  %v1982 = vrot.slane %v1980, 1
  %v1983 = vsel %vm354, %v1978, %v1982
  %v1984 = vshrl.u32 %v1738, 16
  %v1986 = vor.u32 %v1984, %v1982
  %v1988 = vshll.u32 %v1739, 16
  %v1990 = vrot.slane %v1988, 1
  %v1991 = vsel %vm354, %v1986, %v1990
  %v1992 = vshrl.u32 %v1739, 16
  %v1994 = vor.u32 %v1992, %v1990
  %v1996 = vsel %vm610, %v1751, 0
  %v1999 = vsel %vm610, %v1759, 0
  %v2002 = vsel %vm610, %v1767, 0
  %v2005 = vsel %vm610, %v1775, 0
  %v2008 = vsel %vm610, %v1783, 0
  %v2011 = vsel %vm610, %v1791, 0
  %v2014 = vsel %vm610, %v1799, 0
  %v2017 = vsel %vm610, %v1807, 0
  %v2020 = vsel %vm610, %v1815, 0
  %v2023 = vsel %vm610, %v1823, 0
  %v2026 = vsel %vm610, %v1831, 0
  %v2029 = vsel %vm610, %v1839, 0
  %v2032 = vsel %vm610, %v1847, 0
  %v2035 = vsel %vm610, %v1855, 0
  %v2038 = vsel %vm610, %v1863, 0
  %v2041 = vsel %vm610, %v1871, 0
  %v2044 = vsel %vm610, %v1879, 0
  %v2047 = vsel %vm610, %v1887, 0
  %v2050 = vsel %vm610, %v1895, 0
  %v2053 = vsel %vm610, %v1903, 0
  %v2056 = vsel %vm610, %v1911, 0
  %v2059 = vsel %vm610, %v1919, 0
  %v2062 = vsel %vm610, %v1927, 0
  %v2065 = vsel %vm610, %v1935, 0
  %v2068 = vsel %vm610, %v1943, 0
  %v2071 = vsel %vm610, %v1951, 0
  %v2074 = vsel %vm610, %v1959, 0
  %v2077 = vsel %vm610, %v1967, 0
  %v2080 = vsel %vm610, %v1975, 0
  %v2083 = vsel %vm610, %v1983, 0
  %v2086 = vsel %vm610, %v1991, 0
  %v2089 = vsel %vm610, %v1994, 0
  %v2092 = vsel %vm707, %v1579, 0
  %2094 = vmatpush.bf16.msra.mxu0 0
  %2095 = vmatpush.bf16.msra.mxu0 0
  %2096 = vmatpush.bf16.msra.mxu0 0
  %2097 = vmatpush.bf16.msra.mxu0 0
  %2098 = vmatpush.bf16.msra.mxu0 0
  %2099 = vmatpush.bf16.msra.mxu0 0
  %2100 = vmatpush.bf16.msra.mxu0 0
  %2101 = vmatpush.bf16.msra.mxu0 %v2092
  %2102 = vmatmul.bf16.gmra.mxu0 %v1996
  %v2103 = vpop.f32.mrf.mxu0
  %v2104 = vadd.f32 0.0, %v2103
  %v2105 = vpop.f32.mrf.mxu0
  %v2106 = vadd.f32 0.0, %v2105
  %2107 = vmatmul.bf16.gmra.mxu0 %v1999
  %v2108 = vpop.f32.mrf.mxu0
  %v2109 = vadd.f32 0.0, %v2108
  %v2110 = vpop.f32.mrf.mxu0
  %v2111 = vadd.f32 0.0, %v2110
  %2112 = vmatmul.bf16.gmra.mxu0 %v2002
  %v2113 = vpop.f32.mrf.mxu0
  %v2114 = vadd.f32 0.0, %v2113
  %v2115 = vpop.f32.mrf.mxu0
  %v2116 = vadd.f32 0.0, %v2115
  %2117 = vmatmul.bf16.gmra.mxu0 %v2005
  %v2118 = vpop.f32.mrf.mxu0
  %v2119 = vadd.f32 0.0, %v2118
  %v2120 = vpop.f32.mrf.mxu0
  %v2121 = vadd.f32 0.0, %v2120
  %2122 = vmatmul.bf16.gmra.mxu0 %v2008
  %v2123 = vpop.f32.mrf.mxu0
  %v2124 = vadd.f32 0.0, %v2123
  %v2125 = vpop.f32.mrf.mxu0
  %v2126 = vadd.f32 0.0, %v2125
  %2127 = vmatmul.bf16.gmra.mxu0 %v2011
  %v2128 = vpop.f32.mrf.mxu0
  %v2129 = vadd.f32 0.0, %v2128
  %v2130 = vpop.f32.mrf.mxu0
  %v2131 = vadd.f32 0.0, %v2130
  %2132 = vmatmul.bf16.gmra.mxu0 %v2014
  %v2133 = vpop.f32.mrf.mxu0
  %v2134 = vadd.f32 0.0, %v2133
  %v2135 = vpop.f32.mrf.mxu0
  %v2136 = vadd.f32 0.0, %v2135
  %2137 = vmatmul.bf16.gmra.mxu0 %v2017
  %v2138 = vpop.f32.mrf.mxu0
  %v2139 = vadd.f32 0.0, %v2138
  %v2140 = vpop.f32.mrf.mxu0
  %v2141 = vadd.f32 0.0, %v2140
  %2142 = vmatmul.bf16.gmra.mxu0 %v2020
  %v2143 = vpop.f32.mrf.mxu0
  %v2144 = vadd.f32 0.0, %v2143
  %v2145 = vpop.f32.mrf.mxu0
  %v2146 = vadd.f32 0.0, %v2145
  %2147 = vmatmul.bf16.gmra.mxu0 %v2023
  %v2148 = vpop.f32.mrf.mxu0
  %v2149 = vadd.f32 0.0, %v2148
  %v2150 = vpop.f32.mrf.mxu0
  %v2151 = vadd.f32 0.0, %v2150
  %2152 = vmatmul.bf16.gmra.mxu0 %v2026
  %v2153 = vpop.f32.mrf.mxu0
  %v2154 = vadd.f32 0.0, %v2153
  %v2155 = vpop.f32.mrf.mxu0
  %v2156 = vadd.f32 0.0, %v2155
  %2157 = vmatmul.bf16.gmra.mxu0 %v2029
  %v2158 = vpop.f32.mrf.mxu0
  %v2159 = vadd.f32 0.0, %v2158
  %v2160 = vpop.f32.mrf.mxu0
  %v2161 = vadd.f32 0.0, %v2160
  %2162 = vmatmul.bf16.gmra.mxu0 %v2032
  %v2163 = vpop.f32.mrf.mxu0
  %v2164 = vadd.f32 0.0, %v2163
  %v2165 = vpop.f32.mrf.mxu0
  %v2166 = vadd.f32 0.0, %v2165
  %2167 = vmatmul.bf16.gmra.mxu0 %v2035
  %v2168 = vpop.f32.mrf.mxu0
  %v2169 = vadd.f32 0.0, %v2168
  %v2170 = vpop.f32.mrf.mxu0
  %v2171 = vadd.f32 0.0, %v2170
  %2172 = vmatmul.bf16.gmra.mxu0 %v2038
  %v2173 = vpop.f32.mrf.mxu0
  %v2174 = vadd.f32 0.0, %v2173
  %v2175 = vpop.f32.mrf.mxu0
  %v2176 = vadd.f32 0.0, %v2175
  %2177 = vmatmul.bf16.gmra.mxu0 %v2041
  %v2178 = vpop.f32.mrf.mxu0
  %v2179 = vadd.f32 0.0, %v2178
  %v2180 = vpop.f32.mrf.mxu0
  %v2181 = vadd.f32 0.0, %v2180
  %2182 = vmatmul.bf16.gmra.mxu0 %v2044
  %v2183 = vpop.f32.mrf.mxu0
  %v2184 = vadd.f32 0.0, %v2183
  %v2185 = vpop.f32.mrf.mxu0
  %v2186 = vadd.f32 0.0, %v2185
  %2187 = vmatmul.bf16.gmra.mxu0 %v2047
  %v2188 = vpop.f32.mrf.mxu0
  %v2189 = vadd.f32 0.0, %v2188
  %v2190 = vpop.f32.mrf.mxu0
  %v2191 = vadd.f32 0.0, %v2190
  %2192 = vmatmul.bf16.gmra.mxu0 %v2050
  %v2193 = vpop.f32.mrf.mxu0
  %v2194 = vadd.f32 0.0, %v2193
  %v2195 = vpop.f32.mrf.mxu0
  %v2196 = vadd.f32 0.0, %v2195
  %2197 = vmatmul.bf16.gmra.mxu0 %v2053
  %v2198 = vpop.f32.mrf.mxu0
  %v2199 = vadd.f32 0.0, %v2198
  %v2200 = vpop.f32.mrf.mxu0
  %v2201 = vadd.f32 0.0, %v2200
  %2202 = vmatmul.bf16.gmra.mxu0 %v2056
  %v2203 = vpop.f32.mrf.mxu0
  %v2204 = vadd.f32 0.0, %v2203
  %v2205 = vpop.f32.mrf.mxu0
  %v2206 = vadd.f32 0.0, %v2205
  %2207 = vmatmul.bf16.gmra.mxu0 %v2059
  %v2208 = vpop.f32.mrf.mxu0
  %v2209 = vadd.f32 0.0, %v2208
  %v2210 = vpop.f32.mrf.mxu0
  %v2211 = vadd.f32 0.0, %v2210
  %2212 = vmatmul.bf16.gmra.mxu0 %v2062
  %v2213 = vpop.f32.mrf.mxu0
  %v2214 = vadd.f32 0.0, %v2213
  %v2215 = vpop.f32.mrf.mxu0
  %v2216 = vadd.f32 0.0, %v2215
  %2217 = vmatmul.bf16.gmra.mxu0 %v2065
  %v2218 = vpop.f32.mrf.mxu0
  %v2219 = vadd.f32 0.0, %v2218
  %v2220 = vpop.f32.mrf.mxu0
  %v2221 = vadd.f32 0.0, %v2220
  %2222 = vmatmul.bf16.gmra.mxu0 %v2068
  %v2223 = vpop.f32.mrf.mxu0
  %v2224 = vadd.f32 0.0, %v2223
  %v2225 = vpop.f32.mrf.mxu0
  %v2226 = vadd.f32 0.0, %v2225
  %2227 = vmatmul.bf16.gmra.mxu0 %v2071
  %v2228 = vpop.f32.mrf.mxu0
  %v2229 = vadd.f32 0.0, %v2228
  %v2230 = vpop.f32.mrf.mxu0
  %v2231 = vadd.f32 0.0, %v2230
  %2232 = vmatmul.bf16.gmra.mxu0 %v2074
  %v2233 = vpop.f32.mrf.mxu0
  %v2234 = vadd.f32 0.0, %v2233
  %v2235 = vpop.f32.mrf.mxu0
  %v2236 = vadd.f32 0.0, %v2235
  %2237 = vmatmul.bf16.gmra.mxu0 %v2077
  %v2238 = vpop.f32.mrf.mxu0
  %v2239 = vadd.f32 0.0, %v2238
  %v2240 = vpop.f32.mrf.mxu0
  %v2241 = vadd.f32 0.0, %v2240
  %2242 = vmatmul.bf16.gmra.mxu0 %v2080
  %v2243 = vpop.f32.mrf.mxu0
  %v2244 = vadd.f32 0.0, %v2243
  %v2245 = vpop.f32.mrf.mxu0
  %v2246 = vadd.f32 0.0, %v2245
  %2247 = vmatmul.bf16.gmra.mxu0 %v2083
  %v2248 = vpop.f32.mrf.mxu0
  %v2249 = vadd.f32 0.0, %v2248
  %v2250 = vpop.f32.mrf.mxu0
  %v2251 = vadd.f32 0.0, %v2250
  %2252 = vmatmul.bf16.gmra.mxu0 %v2086
  %v2253 = vpop.f32.mrf.mxu0
  %v2254 = vadd.f32 0.0, %v2253
  %v2255 = vpop.f32.mrf.mxu0
  %v2256 = vadd.f32 0.0, %v2255
  %2257 = vmatmul.bf16.gmra.mxu0 %v2089
  %v2258 = vpop.f32.mrf.mxu0
  %v2259 = vadd.f32 0.0, %v2258
  %v2260 = vpop.f32.mrf.mxu0
  %2261 = vdwg.mxu0
  %v2262 = vadd.f32 %v1452, %v2104
  %v2263 = vadd.f32 %v1453, %v2106
  %v2264 = vadd.f32 %v1454, %v2109
  %v2265 = vadd.f32 %v1455, %v2111
  %v2266 = vadd.f32 %v1456, %v2114
  %v2267 = vadd.f32 %v1457, %v2116
  %v2268 = vadd.f32 %v1458, %v2119
  %v2269 = vadd.f32 %v1459, %v2121
  %v2270 = vadd.f32 %v1460, %v2124
  %v2271 = vadd.f32 %v1461, %v2126
  %v2272 = vadd.f32 %v1462, %v2129
  %v2273 = vadd.f32 %v1463, %v2131
  %v2274 = vadd.f32 %v1464, %v2134
  %v2275 = vadd.f32 %v1465, %v2136
  %v2276 = vadd.f32 %v1466, %v2139
  %v2277 = vadd.f32 %v1467, %v2141
  %v2278 = vadd.f32 %v1468, %v2144
  %v2279 = vadd.f32 %v1469, %v2146
  %v2280 = vadd.f32 %v1470, %v2149
  %v2281 = vadd.f32 %v1471, %v2151
  %v2282 = vadd.f32 %v1472, %v2154
  %v2283 = vadd.f32 %v1473, %v2156
  %v2284 = vadd.f32 %v1474, %v2159
  %v2285 = vadd.f32 %v1475, %v2161
  %v2286 = vadd.f32 %v1476, %v2164
  %v2287 = vadd.f32 %v1477, %v2166
  %v2288 = vadd.f32 %v1478, %v2169
  %v2289 = vadd.f32 %v1479, %v2171
  %v2290 = vadd.f32 %v1480, %v2174
  %v2291 = vadd.f32 %v1481, %v2176
  %v2292 = vadd.f32 %v1482, %v2179
  %v2293 = vadd.f32 %v1483, %v2181
  %v2294 = vadd.f32 %v1484, %v2184
  %v2295 = vadd.f32 %v1485, %v2186
  %v2296 = vadd.f32 %v1486, %v2189
  %v2297 = vadd.f32 %v1487, %v2191
  %v2298 = vadd.f32 %v1488, %v2194
  %v2299 = vadd.f32 %v1489, %v2196
  %v2300 = vadd.f32 %v1490, %v2199
  %v2301 = vadd.f32 %v1491, %v2201
  %v2302 = vadd.f32 %v1492, %v2204
  %v2303 = vadd.f32 %v1493, %v2206
  %v2304 = vadd.f32 %v1494, %v2209
  %v2305 = vadd.f32 %v1495, %v2211
  %v2306 = vadd.f32 %v1496, %v2214
  %v2307 = vadd.f32 %v1497, %v2216
  %v2308 = vadd.f32 %v1498, %v2219
  %v2309 = vadd.f32 %v1499, %v2221
  %v2310 = vadd.f32 %v1500, %v2224
  %v2311 = vadd.f32 %v1501, %v2226
  %v2312 = vadd.f32 %v1502, %v2229
  %v2313 = vadd.f32 %v1503, %v2231
  %v2314 = vadd.f32 %v1504, %v2234
  %v2315 = vadd.f32 %v1505, %v2236
  %v2316 = vadd.f32 %v1506, %v2239
  %v2317 = vadd.f32 %v1507, %v2241
  %v2318 = vadd.f32 %v1508, %v2244
  %v2319 = vadd.f32 %v1509, %v2246
  %v2320 = vadd.f32 %v1510, %v2249
  %v2321 = vadd.f32 %v1511, %v2251
  %v2322 = vadd.f32 %v1512, %v2254
  %v2323 = vadd.f32 %v1513, %v2256
  %v2324 = vadd.f32 %v1514, %v2259
  %v2325 = vld [vmem:[#allocation2 + $0x4] sm:$0xe]
  %v2326 = vld [vmem:[%s1 + $0x10] sm:$0xf]
  %v2328 = vunpack.c.l.b16 %v2325
  %v2329 = vpack.c.b16 %v1645, %v2328
  %v2330 = vrot.slane %v2329, 1
  %v2331 = vrot.slane %v1709, 1
  %v2332 = vsel %vm1121, %v2330, %v2331
  %v2333 = vrot.slane %v1710, 1
  %v2334 = vsel %vm1121, %v2331, %v2333
  %v2335 = vrot.slane %v1711, 1
  %v2336 = vsel %vm1121, %v2333, %v2335
  %v2337 = vrot.slane %v1712, 1
  %v2338 = vsel %vm1121, %v2335, %v2337
  %v2339 = vrot.slane %v1713, 1
  %v2340 = vsel %vm1121, %v2337, %v2339
  %v2341 = vrot.slane %v1714, 1
  %v2342 = vsel %vm1121, %v2339, %v2341
  %v2343 = vrot.slane %v1715, 1
  %v2344 = vsel %vm1121, %v2341, %v2343
  %v2345 = vrot.slane %v1716, 1
  %v2346 = vsel %vm1121, %v2343, %v2345
  %v2347 = vrot.slane %v1717, 1
  %v2348 = vsel %vm1121, %v2345, %v2347
  %v2349 = vrot.slane %v1718, 1
  %v2350 = vsel %vm1121, %v2347, %v2349
  %v2351 = vrot.slane %v1719, 1
  %v2352 = vsel %vm1121, %v2349, %v2351
  %v2353 = vrot.slane %v1720, 1
  %v2354 = vsel %vm1121, %v2351, %v2353
  %v2355 = vrot.slane %v1721, 1
  %v2356 = vsel %vm1121, %v2353, %v2355
  %v2357 = vrot.slane %v1722, 1
  %v2358 = vsel %vm1121, %v2355, %v2357
  %v2359 = vrot.slane %v1723, 1
  %v2360 = vsel %vm1121, %v2357, %v2359
  %v2361 = vrot.slane %v1724, 1
  %v2362 = vsel %vm1121, %v2359, %v2361
  %v2363 = vrot.slane %v1725, 1
  %v2364 = vsel %vm1121, %v2361, %v2363
  %v2365 = vrot.slane %v1726, 1
  %v2366 = vsel %vm1121, %v2363, %v2365
  %v2367 = vrot.slane %v1727, 1
  %v2368 = vsel %vm1121, %v2365, %v2367
  %v2369 = vrot.slane %v1728, 1
  %v2370 = vsel %vm1121, %v2367, %v2369
  %v2371 = vrot.slane %v1729, 1
  %v2372 = vsel %vm1121, %v2369, %v2371
  %v2373 = vrot.slane %v1730, 1
  %v2374 = vsel %vm1121, %v2371, %v2373
  %v2375 = vrot.slane %v1731, 1
  %v2376 = vsel %vm1121, %v2373, %v2375
  %v2377 = vrot.slane %v1732, 1
  %v2378 = vsel %vm1121, %v2375, %v2377
  %v2379 = vrot.slane %v1733, 1
  %v2380 = vsel %vm1121, %v2377, %v2379
  %v2381 = vrot.slane %v1734, 1
  %v2382 = vsel %vm1121, %v2379, %v2381
  %v2383 = vrot.slane %v1735, 1
  %v2384 = vsel %vm1121, %v2381, %v2383
  %v2385 = vrot.slane %v1736, 1
  %v2386 = vsel %vm1121, %v2383, %v2385
  %v2387 = vrot.slane %v1737, 1
  %v2388 = vsel %vm1121, %v2385, %v2387
  %v2389 = vrot.slane %v1738, 1
  %v2390 = vsel %vm1121, %v2387, %v2389
  %v2391 = vrot.slane %v1739, 1
  %v2392 = vsel %vm1121, %v2389, %v2391
  %v2394 = vsel %vm610, %v2332, 0
  %v2397 = vsel %vm610, %v2334, 0
  %v2400 = vsel %vm610, %v2336, 0
  %v2403 = vsel %vm610, %v2338, 0
  %v2406 = vsel %vm610, %v2340, 0
  %v2409 = vsel %vm610, %v2342, 0
  %v2412 = vsel %vm610, %v2344, 0
  %v2415 = vsel %vm610, %v2346, 0
  %v2418 = vsel %vm610, %v2348, 0
  %v2421 = vsel %vm610, %v2350, 0
  %v2424 = vsel %vm610, %v2352, 0
  %v2427 = vsel %vm610, %v2354, 0
  %v2430 = vsel %vm610, %v2356, 0
  %v2433 = vsel %vm610, %v2358, 0
  %v2436 = vsel %vm610, %v2360, 0
  %v2439 = vsel %vm610, %v2362, 0
  %v2442 = vsel %vm610, %v2364, 0
  %v2445 = vsel %vm610, %v2366, 0
  %v2448 = vsel %vm610, %v2368, 0
  %v2451 = vsel %vm610, %v2370, 0
  %v2454 = vsel %vm610, %v2372, 0
  %v2457 = vsel %vm610, %v2374, 0
  %v2460 = vsel %vm610, %v2376, 0
  %v2463 = vsel %vm610, %v2378, 0
  %v2466 = vsel %vm610, %v2380, 0
  %v2469 = vsel %vm610, %v2382, 0
  %v2472 = vsel %vm610, %v2384, 0
  %v2475 = vsel %vm610, %v2386, 0
  %v2478 = vsel %vm610, %v2388, 0
  %v2481 = vsel %vm610, %v2390, 0
  %v2484 = vsel %vm610, %v2392, 0
  %v2487 = vsel %vm610, %v2391, 0
  %v2490 = vsel %vm707, %v2326, 0
  %2492 = vmatpush.bf16.msra.mxu0 0
  %2493 = vmatpush.bf16.msra.mxu0 0
  %2494 = vmatpush.bf16.msra.mxu0 0
  %2495 = vmatpush.bf16.msra.mxu0 0
  %2496 = vmatpush.bf16.msra.mxu0 0
  %2497 = vmatpush.bf16.msra.mxu0 0
  %2498 = vmatpush.bf16.msra.mxu0 0
  %2499 = vmatpush.bf16.msra.mxu0 %v2490
  %2500 = vmatmul.bf16.gmra.mxu0 %v2394
  %v2501 = vpop.f32.mrf.mxu0
  %v2502 = vadd.f32 0.0, %v2501
  %v2503 = vpop.f32.mrf.mxu0
  %v2504 = vadd.f32 0.0, %v2503
  %2505 = vmatmul.bf16.gmra.mxu0 %v2397
  %v2506 = vpop.f32.mrf.mxu0
  %v2507 = vadd.f32 0.0, %v2506
  %v2508 = vpop.f32.mrf.mxu0
  %v2509 = vadd.f32 0.0, %v2508
  %2510 = vmatmul.bf16.gmra.mxu0 %v2400
  %v2511 = vpop.f32.mrf.mxu0
  %v2512 = vadd.f32 0.0, %v2511
  %v2513 = vpop.f32.mrf.mxu0
  %v2514 = vadd.f32 0.0, %v2513
  %2515 = vmatmul.bf16.gmra.mxu0 %v2403
  %v2516 = vpop.f32.mrf.mxu0
  %v2517 = vadd.f32 0.0, %v2516
  %v2518 = vpop.f32.mrf.mxu0
  %v2519 = vadd.f32 0.0, %v2518
  %2520 = vmatmul.bf16.gmra.mxu0 %v2406
  %v2521 = vpop.f32.mrf.mxu0
  %v2522 = vadd.f32 0.0, %v2521
  %v2523 = vpop.f32.mrf.mxu0
  %v2524 = vadd.f32 0.0, %v2523
  %2525 = vmatmul.bf16.gmra.mxu0 %v2409
  %v2526 = vpop.f32.mrf.mxu0
  %v2527 = vadd.f32 0.0, %v2526
  %v2528 = vpop.f32.mrf.mxu0
  %v2529 = vadd.f32 0.0, %v2528
  %2530 = vmatmul.bf16.gmra.mxu0 %v2412
  %v2531 = vpop.f32.mrf.mxu0
  %v2532 = vadd.f32 0.0, %v2531
  %v2533 = vpop.f32.mrf.mxu0
  %v2534 = vadd.f32 0.0, %v2533
  %2535 = vmatmul.bf16.gmra.mxu0 %v2415
  %v2536 = vpop.f32.mrf.mxu0
  %v2537 = vadd.f32 0.0, %v2536
  %v2538 = vpop.f32.mrf.mxu0
  %v2539 = vadd.f32 0.0, %v2538
  %2540 = vmatmul.bf16.gmra.mxu0 %v2418
  %v2541 = vpop.f32.mrf.mxu0
  %v2542 = vadd.f32 0.0, %v2541
  %v2543 = vpop.f32.mrf.mxu0
  %v2544 = vadd.f32 0.0, %v2543
  %2545 = vmatmul.bf16.gmra.mxu0 %v2421
  %v2546 = vpop.f32.mrf.mxu0
  %v2547 = vadd.f32 0.0, %v2546
  %v2548 = vpop.f32.mrf.mxu0
  %v2549 = vadd.f32 0.0, %v2548
  %2550 = vmatmul.bf16.gmra.mxu0 %v2424
  %v2551 = vpop.f32.mrf.mxu0
  %v2552 = vadd.f32 0.0, %v2551
  %v2553 = vpop.f32.mrf.mxu0
  %v2554 = vadd.f32 0.0, %v2553
  %2555 = vmatmul.bf16.gmra.mxu0 %v2427
  %v2556 = vpop.f32.mrf.mxu0
  %v2557 = vadd.f32 0.0, %v2556
  %v2558 = vpop.f32.mrf.mxu0
  %v2559 = vadd.f32 0.0, %v2558
  %2560 = vmatmul.bf16.gmra.mxu0 %v2430
  %v2561 = vpop.f32.mrf.mxu0
  %v2562 = vadd.f32 0.0, %v2561
  %v2563 = vpop.f32.mrf.mxu0
  %v2564 = vadd.f32 0.0, %v2563
  %2565 = vmatmul.bf16.gmra.mxu0 %v2433
  %v2566 = vpop.f32.mrf.mxu0
  %v2567 = vadd.f32 0.0, %v2566
  %v2568 = vpop.f32.mrf.mxu0
  %v2569 = vadd.f32 0.0, %v2568
  %2570 = vmatmul.bf16.gmra.mxu0 %v2436
  %v2571 = vpop.f32.mrf.mxu0
  %v2572 = vadd.f32 0.0, %v2571
  %v2573 = vpop.f32.mrf.mxu0
  %v2574 = vadd.f32 0.0, %v2573
  %2575 = vmatmul.bf16.gmra.mxu0 %v2439
  %v2576 = vpop.f32.mrf.mxu0
  %v2577 = vadd.f32 0.0, %v2576
  %v2578 = vpop.f32.mrf.mxu0
  %v2579 = vadd.f32 0.0, %v2578
  %2580 = vmatmul.bf16.gmra.mxu0 %v2442
  %v2581 = vpop.f32.mrf.mxu0
  %v2582 = vadd.f32 0.0, %v2581
  %v2583 = vpop.f32.mrf.mxu0
  %v2584 = vadd.f32 0.0, %v2583
  %2585 = vmatmul.bf16.gmra.mxu0 %v2445
  %v2586 = vpop.f32.mrf.mxu0
  %v2587 = vadd.f32 0.0, %v2586
  %v2588 = vpop.f32.mrf.mxu0
  %v2589 = vadd.f32 0.0, %v2588
  %2590 = vmatmul.bf16.gmra.mxu0 %v2448
  %v2591 = vpop.f32.mrf.mxu0
  %v2592 = vadd.f32 0.0, %v2591
  %v2593 = vpop.f32.mrf.mxu0
  %v2594 = vadd.f32 0.0, %v2593
  %2595 = vmatmul.bf16.gmra.mxu0 %v2451
  %v2596 = vpop.f32.mrf.mxu0
  %v2597 = vadd.f32 0.0, %v2596
  %v2598 = vpop.f32.mrf.mxu0
  %v2599 = vadd.f32 0.0, %v2598
  %2600 = vmatmul.bf16.gmra.mxu0 %v2454
  %v2601 = vpop.f32.mrf.mxu0
  %v2602 = vadd.f32 0.0, %v2601
  %v2603 = vpop.f32.mrf.mxu0
  %v2604 = vadd.f32 0.0, %v2603
  %2605 = vmatmul.bf16.gmra.mxu0 %v2457
  %v2606 = vpop.f32.mrf.mxu0
  %v2607 = vadd.f32 0.0, %v2606
  %v2608 = vpop.f32.mrf.mxu0
  %v2609 = vadd.f32 0.0, %v2608
  %2610 = vmatmul.bf16.gmra.mxu0 %v2460
  %v2611 = vpop.f32.mrf.mxu0
  %v2612 = vadd.f32 0.0, %v2611
  %v2613 = vpop.f32.mrf.mxu0
  %v2614 = vadd.f32 0.0, %v2613
  %2615 = vmatmul.bf16.gmra.mxu0 %v2463
  %v2616 = vpop.f32.mrf.mxu0
  %v2617 = vadd.f32 0.0, %v2616
  %v2618 = vpop.f32.mrf.mxu0
  %v2619 = vadd.f32 0.0, %v2618
  %2620 = vmatmul.bf16.gmra.mxu0 %v2466
  %v2621 = vpop.f32.mrf.mxu0
  %v2622 = vadd.f32 0.0, %v2621
  %v2623 = vpop.f32.mrf.mxu0
  %v2624 = vadd.f32 0.0, %v2623
  %2625 = vmatmul.bf16.gmra.mxu0 %v2469
  %v2626 = vpop.f32.mrf.mxu0
  %v2627 = vadd.f32 0.0, %v2626
  %v2628 = vpop.f32.mrf.mxu0
  %v2629 = vadd.f32 0.0, %v2628
  %2630 = vmatmul.bf16.gmra.mxu0 %v2472
  %v2631 = vpop.f32.mrf.mxu0
  %v2632 = vadd.f32 0.0, %v2631
  %v2633 = vpop.f32.mrf.mxu0
  %v2634 = vadd.f32 0.0, %v2633
  %2635 = vmatmul.bf16.gmra.mxu0 %v2475
  %v2636 = vpop.f32.mrf.mxu0
  %v2637 = vadd.f32 0.0, %v2636
  %v2638 = vpop.f32.mrf.mxu0
  %v2639 = vadd.f32 0.0, %v2638
  %2640 = vmatmul.bf16.gmra.mxu0 %v2478
  %v2641 = vpop.f32.mrf.mxu0
  %v2642 = vadd.f32 0.0, %v2641
  %v2643 = vpop.f32.mrf.mxu0
  %v2644 = vadd.f32 0.0, %v2643
  %2645 = vmatmul.bf16.gmra.mxu0 %v2481
  %v2646 = vpop.f32.mrf.mxu0
  %v2647 = vadd.f32 0.0, %v2646
  %v2648 = vpop.f32.mrf.mxu0
  %v2649 = vadd.f32 0.0, %v2648
  %2650 = vmatmul.bf16.gmra.mxu0 %v2484
  %v2651 = vpop.f32.mrf.mxu0
  %v2652 = vadd.f32 0.0, %v2651
  %v2653 = vpop.f32.mrf.mxu0
  %v2654 = vadd.f32 0.0, %v2653
  %2655 = vmatmul.bf16.gmra.mxu0 %v2487
  %v2656 = vpop.f32.mrf.mxu0
  %v2657 = vadd.f32 0.0, %v2656
  %v2658 = vpop.f32.mrf.mxu0
  %2659 = vdwg.mxu0
  %v2660 = vadd.f32 %v2262, %v2502
  %v2661 = vadd.f32 %v2263, %v2504
  %v2662 = vadd.f32 %v2264, %v2507
  %v2663 = vadd.f32 %v2265, %v2509
  %v2664 = vadd.f32 %v2266, %v2512
  %v2665 = vadd.f32 %v2267, %v2514
  %v2666 = vadd.f32 %v2268, %v2517
  %v2667 = vadd.f32 %v2269, %v2519
  %v2668 = vadd.f32 %v2270, %v2522
  %v2669 = vadd.f32 %v2271, %v2524
  %v2670 = vadd.f32 %v2272, %v2527
  %v2671 = vadd.f32 %v2273, %v2529
  %v2672 = vadd.f32 %v2274, %v2532
  %v2673 = vadd.f32 %v2275, %v2534
  %v2674 = vadd.f32 %v2276, %v2537
  %v2675 = vadd.f32 %v2277, %v2539
  %v2676 = vadd.f32 %v2278, %v2542
  %v2677 = vadd.f32 %v2279, %v2544
  %v2678 = vadd.f32 %v2280, %v2547
  %v2679 = vadd.f32 %v2281, %v2549
  %v2680 = vadd.f32 %v2282, %v2552
  %v2681 = vadd.f32 %v2283, %v2554
  %v2682 = vadd.f32 %v2284, %v2557
  %v2683 = vadd.f32 %v2285, %v2559
  %v2684 = vadd.f32 %v2286, %v2562
  %v2685 = vadd.f32 %v2287, %v2564
  %v2686 = vadd.f32 %v2288, %v2567
  %v2687 = vadd.f32 %v2289, %v2569
  %v2688 = vadd.f32 %v2290, %v2572
  %v2689 = vadd.f32 %v2291, %v2574
  %v2690 = vadd.f32 %v2292, %v2577
  %v2691 = vadd.f32 %v2293, %v2579
  %v2692 = vadd.f32 %v2294, %v2582
  %v2693 = vadd.f32 %v2295, %v2584
  %v2694 = vadd.f32 %v2296, %v2587
  %v2695 = vadd.f32 %v2297, %v2589
  %v2696 = vadd.f32 %v2298, %v2592
  %v2697 = vadd.f32 %v2299, %v2594
  %v2698 = vadd.f32 %v2300, %v2597
  %v2699 = vadd.f32 %v2301, %v2599
  %v2700 = vadd.f32 %v2302, %v2602
  %v2701 = vadd.f32 %v2303, %v2604
  %v2702 = vadd.f32 %v2304, %v2607
  %v2703 = vadd.f32 %v2305, %v2609
  %v2704 = vadd.f32 %v2306, %v2612
  %v2705 = vadd.f32 %v2307, %v2614
  %v2706 = vadd.f32 %v2308, %v2617
  %v2707 = vadd.f32 %v2309, %v2619
  %v2708 = vadd.f32 %v2310, %v2622
  %v2709 = vadd.f32 %v2311, %v2624
  %v2710 = vadd.f32 %v2312, %v2627
  %v2711 = vadd.f32 %v2313, %v2629
  %v2712 = vadd.f32 %v2314, %v2632
  %v2713 = vadd.f32 %v2315, %v2634
  %v2714 = vadd.f32 %v2316, %v2637
  %v2715 = vadd.f32 %v2317, %v2639
  %v2716 = vadd.f32 %v2318, %v2642
  %v2717 = vadd.f32 %v2319, %v2644
  %v2718 = vadd.f32 %v2320, %v2647
  %v2719 = vadd.f32 %v2321, %v2649
  %v2720 = vadd.f32 %v2322, %v2652
  %v2721 = vadd.f32 %v2323, %v2654
  %v2722 = vadd.f32 %v2324, %v2657
  %v2723 = vld [vmem:[#allocation2 + $0x100] sm:$0x3]
  %v2724 = vld [vmem:[%s1 + $0x14] sm:$0xf]
  %v2726 = vunpack.c.l.b16 %v2723
  %v2727 = vpack.c.b16 %v2726, %v1706
  %vm2728 = vsmask.f32 6400
  %v2730 = vshrl.u32 %v2329, 16
  %v2732 = vrot.slane %v2730, 1
  %v2733 = vshll.u32 %v2329, 16
  %v2735 = vrot.slane %v2733, 2
  %v2736 = vor.u32 %v2732, %v2735
  %v2737 = vrot.slane %v1752, 1
  %v2738 = vrot.slane %v1748, 2
  %v2739 = vor.u32 %v2737, %v2738
  %v2740 = vsel %vm2728, %v2736, %v2739
  %v2741 = vrot.slane %v1760, 1
  %v2742 = vrot.slane %v1756, 2
  %v2743 = vor.u32 %v2741, %v2742
  %v2744 = vsel %vm2728, %v2739, %v2743
  %v2745 = vrot.slane %v1768, 1
  %v2746 = vrot.slane %v1764, 2
  %v2747 = vor.u32 %v2745, %v2746
  %v2748 = vsel %vm2728, %v2743, %v2747
  %v2749 = vrot.slane %v1776, 1
  %v2750 = vrot.slane %v1772, 2
  %v2751 = vor.u32 %v2749, %v2750
  %v2752 = vsel %vm2728, %v2747, %v2751
  %v2753 = vrot.slane %v1784, 1
  %v2754 = vrot.slane %v1780, 2
  %v2755 = vor.u32 %v2753, %v2754
  %v2756 = vsel %vm2728, %v2751, %v2755
  %v2757 = vrot.slane %v1792, 1
  %v2758 = vrot.slane %v1788, 2
  %v2759 = vor.u32 %v2757, %v2758
  %v2760 = vsel %vm2728, %v2755, %v2759
  %v2761 = vrot.slane %v1800, 1
  %v2762 = vrot.slane %v1796, 2
  %v2763 = vor.u32 %v2761, %v2762
  %v2764 = vsel %vm2728, %v2759, %v2763
  %v2765 = vrot.slane %v1808, 1
  %v2766 = vrot.slane %v1804, 2
  %v2767 = vor.u32 %v2765, %v2766
  %v2768 = vsel %vm2728, %v2763, %v2767
  %v2769 = vrot.slane %v1816, 1
  %v2770 = vrot.slane %v1812, 2
  %v2771 = vor.u32 %v2769, %v2770
  %v2772 = vsel %vm2728, %v2767, %v2771
  %v2773 = vrot.slane %v1824, 1
  %v2774 = vrot.slane %v1820, 2
  %v2775 = vor.u32 %v2773, %v2774
  %v2776 = vsel %vm2728, %v2771, %v2775
  %v2777 = vrot.slane %v1832, 1
  %v2778 = vrot.slane %v1828, 2
  %v2779 = vor.u32 %v2777, %v2778
  %v2780 = vsel %vm2728, %v2775, %v2779
  %v2781 = vrot.slane %v1840, 1
  %v2782 = vrot.slane %v1836, 2
  %v2783 = vor.u32 %v2781, %v2782
  %v2784 = vsel %vm2728, %v2779, %v2783
  %v2785 = vrot.slane %v1848, 1
  %v2786 = vrot.slane %v1844, 2
  %v2787 = vor.u32 %v2785, %v2786
  %v2788 = vsel %vm2728, %v2783, %v2787
  %v2789 = vrot.slane %v1856, 1
  %v2790 = vrot.slane %v1852, 2
  %v2791 = vor.u32 %v2789, %v2790
  %v2792 = vsel %vm2728, %v2787, %v2791
  %v2793 = vrot.slane %v1864, 1
  %v2794 = vrot.slane %v1860, 2
  %v2795 = vor.u32 %v2793, %v2794
  %v2796 = vsel %vm2728, %v2791, %v2795
  %v2797 = vrot.slane %v1872, 1
  %v2798 = vrot.slane %v1868, 2
  %v2799 = vor.u32 %v2797, %v2798
  %v2800 = vsel %vm2728, %v2795, %v2799
  %v2801 = vrot.slane %v1880, 1
  %v2802 = vrot.slane %v1876, 2
  %v2803 = vor.u32 %v2801, %v2802
  %v2804 = vsel %vm2728, %v2799, %v2803
  %v2805 = vrot.slane %v1888, 1
  %v2806 = vrot.slane %v1884, 2
  %v2807 = vor.u32 %v2805, %v2806
  %v2808 = vsel %vm2728, %v2803, %v2807
  %v2809 = vrot.slane %v1896, 1
  %v2810 = vrot.slane %v1892, 2
  %v2811 = vor.u32 %v2809, %v2810
  %v2812 = vsel %vm2728, %v2807, %v2811
  %v2813 = vrot.slane %v1904, 1
  %v2814 = vrot.slane %v1900, 2
  %v2815 = vor.u32 %v2813, %v2814
  %v2816 = vsel %vm2728, %v2811, %v2815
  %v2817 = vrot.slane %v1912, 1
  %v2818 = vrot.slane %v1908, 2
  %v2819 = vor.u32 %v2817, %v2818
  %v2820 = vsel %vm2728, %v2815, %v2819
  %v2821 = vrot.slane %v1920, 1
  %v2822 = vrot.slane %v1916, 2
  %v2823 = vor.u32 %v2821, %v2822
  %v2824 = vsel %vm2728, %v2819, %v2823
  %v2825 = vrot.slane %v1928, 1
  %v2826 = vrot.slane %v1924, 2
  %v2827 = vor.u32 %v2825, %v2826
  %v2828 = vsel %vm2728, %v2823, %v2827
  %v2829 = vrot.slane %v1936, 1
  %v2830 = vrot.slane %v1932, 2
  %v2831 = vor.u32 %v2829, %v2830
  %v2832 = vsel %vm2728, %v2827, %v2831
  %v2833 = vrot.slane %v1944, 1
  %v2834 = vrot.slane %v1940, 2
  %v2835 = vor.u32 %v2833, %v2834
  %v2836 = vsel %vm2728, %v2831, %v2835
  %v2837 = vrot.slane %v1952, 1
  %v2838 = vrot.slane %v1948, 2
  %v2839 = vor.u32 %v2837, %v2838
  %v2840 = vsel %vm2728, %v2835, %v2839
  %v2841 = vrot.slane %v1960, 1
  %v2842 = vrot.slane %v1956, 2
  %v2843 = vor.u32 %v2841, %v2842
  %v2844 = vsel %vm2728, %v2839, %v2843
  %v2845 = vrot.slane %v1968, 1
  %v2846 = vrot.slane %v1964, 2
  %v2847 = vor.u32 %v2845, %v2846
  %v2848 = vsel %vm2728, %v2843, %v2847
  %v2849 = vrot.slane %v1976, 1
  %v2850 = vrot.slane %v1972, 2
  %v2851 = vor.u32 %v2849, %v2850
  %v2852 = vsel %vm2728, %v2847, %v2851
  %v2853 = vrot.slane %v1984, 1
  %v2854 = vrot.slane %v1980, 2
  %v2855 = vor.u32 %v2853, %v2854
  %v2856 = vsel %vm2728, %v2851, %v2855
  %v2858 = vshrl.u32 %v2727, 16
  %v2860 = vrot.slane %v2858, 1
  %v2861 = vshll.u32 %v2727, 16
  %v2863 = vrot.slane %v2861, 2
  %v2864 = vor.u32 %v2860, %v2863
  %v2865 = vsel %vm2728, %v2855, %v2864
  %v2867 = vsel %vm610, %v2740, 0
  %v2870 = vsel %vm610, %v2744, 0
  %v2873 = vsel %vm610, %v2748, 0
  %v2876 = vsel %vm610, %v2752, 0
  %v2879 = vsel %vm610, %v2756, 0
  %v2882 = vsel %vm610, %v2760, 0
  %v2885 = vsel %vm610, %v2764, 0
  %v2888 = vsel %vm610, %v2768, 0
  %v2891 = vsel %vm610, %v2772, 0
  %v2894 = vsel %vm610, %v2776, 0
  %v2897 = vsel %vm610, %v2780, 0
  %v2900 = vsel %vm610, %v2784, 0
  %v2903 = vsel %vm610, %v2788, 0
  %v2906 = vsel %vm610, %v2792, 0
  %v2909 = vsel %vm610, %v2796, 0
  %v2912 = vsel %vm610, %v2800, 0
  %v2915 = vsel %vm610, %v2804, 0
  %v2918 = vsel %vm610, %v2808, 0
  %v2921 = vsel %vm610, %v2812, 0
  %v2924 = vsel %vm610, %v2816, 0
  %v2927 = vsel %vm610, %v2820, 0
  %v2930 = vsel %vm610, %v2824, 0
  %v2933 = vsel %vm610, %v2828, 0
  %v2936 = vsel %vm610, %v2832, 0
  %v2939 = vsel %vm610, %v2836, 0
  %v2942 = vsel %vm610, %v2840, 0
  %v2945 = vsel %vm610, %v2844, 0
  %v2948 = vsel %vm610, %v2848, 0
  %v2951 = vsel %vm610, %v2852, 0
  %v2954 = vsel %vm610, %v2856, 0
  %v2957 = vsel %vm610, %v2865, 0
  %v2960 = vsel %vm610, %v2864, 0
  %v2963 = vsel %vm707, %v2724, 0
  %2965 = vmatpush.bf16.msra.mxu0 0
  %2966 = vmatpush.bf16.msra.mxu0 0
  %2967 = vmatpush.bf16.msra.mxu0 0
  %2968 = vmatpush.bf16.msra.mxu0 0
  %2969 = vmatpush.bf16.msra.mxu0 0
  %2970 = vmatpush.bf16.msra.mxu0 0
  %2971 = vmatpush.bf16.msra.mxu0 0
  %2972 = vmatpush.bf16.msra.mxu0 %v2963
  %2973 = vmatmul.bf16.gmra.mxu0 %v2867
  %v2974 = vpop.f32.mrf.mxu0
  %v2975 = vadd.f32 0.0, %v2974
  %v2976 = vpop.f32.mrf.mxu0
  %v2977 = vadd.f32 0.0, %v2976
  %2978 = vmatmul.bf16.gmra.mxu0 %v2870
  %v2979 = vpop.f32.mrf.mxu0
  %v2980 = vadd.f32 0.0, %v2979
  %v2981 = vpop.f32.mrf.mxu0
  %v2982 = vadd.f32 0.0, %v2981
  %2983 = vmatmul.bf16.gmra.mxu0 %v2873
  %v2984 = vpop.f32.mrf.mxu0
  %v2985 = vadd.f32 0.0, %v2984
  %v2986 = vpop.f32.mrf.mxu0
  %v2987 = vadd.f32 0.0, %v2986
  %2988 = vmatmul.bf16.gmra.mxu0 %v2876
  %v2989 = vpop.f32.mrf.mxu0
  %v2990 = vadd.f32 0.0, %v2989
  %v2991 = vpop.f32.mrf.mxu0
  %v2992 = vadd.f32 0.0, %v2991
  %2993 = vmatmul.bf16.gmra.mxu0 %v2879
  %v2994 = vpop.f32.mrf.mxu0
  %v2995 = vadd.f32 0.0, %v2994
  %v2996 = vpop.f32.mrf.mxu0
  %v2997 = vadd.f32 0.0, %v2996
  %2998 = vmatmul.bf16.gmra.mxu0 %v2882
  %v2999 = vpop.f32.mrf.mxu0
  %v3000 = vadd.f32 0.0, %v2999
  %v3001 = vpop.f32.mrf.mxu0
  %v3002 = vadd.f32 0.0, %v3001
  %3003 = vmatmul.bf16.gmra.mxu0 %v2885
  %v3004 = vpop.f32.mrf.mxu0
  %v3005 = vadd.f32 0.0, %v3004
  %v3006 = vpop.f32.mrf.mxu0
  %v3007 = vadd.f32 0.0, %v3006
  %3008 = vmatmul.bf16.gmra.mxu0 %v2888
  %v3009 = vpop.f32.mrf.mxu0
  %v3010 = vadd.f32 0.0, %v3009
  %v3011 = vpop.f32.mrf.mxu0
  %v3012 = vadd.f32 0.0, %v3011
  %3013 = vmatmul.bf16.gmra.mxu0 %v2891
  %v3014 = vpop.f32.mrf.mxu0
  %v3015 = vadd.f32 0.0, %v3014
  %v3016 = vpop.f32.mrf.mxu0
  %v3017 = vadd.f32 0.0, %v3016
  %3018 = vmatmul.bf16.gmra.mxu0 %v2894
  %v3019 = vpop.f32.mrf.mxu0
  %v3020 = vadd.f32 0.0, %v3019
  %v3021 = vpop.f32.mrf.mxu0
  %v3022 = vadd.f32 0.0, %v3021
  %3023 = vmatmul.bf16.gmra.mxu0 %v2897
  %v3024 = vpop.f32.mrf.mxu0
  %v3025 = vadd.f32 0.0, %v3024
  %v3026 = vpop.f32.mrf.mxu0
  %v3027 = vadd.f32 0.0, %v3026
  %3028 = vmatmul.bf16.gmra.mxu0 %v2900
  %v3029 = vpop.f32.mrf.mxu0
  %v3030 = vadd.f32 0.0, %v3029
  %v3031 = vpop.f32.mrf.mxu0
  %v3032 = vadd.f32 0.0, %v3031
  %3033 = vmatmul.bf16.gmra.mxu0 %v2903
  %v3034 = vpop.f32.mrf.mxu0
  %v3035 = vadd.f32 0.0, %v3034
  %v3036 = vpop.f32.mrf.mxu0
  %v3037 = vadd.f32 0.0, %v3036
  %3038 = vmatmul.bf16.gmra.mxu0 %v2906
  %v3039 = vpop.f32.mrf.mxu0
  %v3040 = vadd.f32 0.0, %v3039
  %v3041 = vpop.f32.mrf.mxu0
  %v3042 = vadd.f32 0.0, %v3041
  %3043 = vmatmul.bf16.gmra.mxu0 %v2909
  %v3044 = vpop.f32.mrf.mxu0
  %v3045 = vadd.f32 0.0, %v3044
  %v3046 = vpop.f32.mrf.mxu0
  %v3047 = vadd.f32 0.0, %v3046
  %3048 = vmatmul.bf16.gmra.mxu0 %v2912
  %v3049 = vpop.f32.mrf.mxu0
  %v3050 = vadd.f32 0.0, %v3049
  %v3051 = vpop.f32.mrf.mxu0
  %v3052 = vadd.f32 0.0, %v3051
  %3053 = vmatmul.bf16.gmra.mxu0 %v2915
  %v3054 = vpop.f32.mrf.mxu0
  %v3055 = vadd.f32 0.0, %v3054
  %v3056 = vpop.f32.mrf.mxu0
  %v3057 = vadd.f32 0.0, %v3056
  %3058 = vmatmul.bf16.gmra.mxu0 %v2918
  %v3059 = vpop.f32.mrf.mxu0
  %v3060 = vadd.f32 0.0, %v3059
  %v3061 = vpop.f32.mrf.mxu0
  %v3062 = vadd.f32 0.0, %v3061
  %3063 = vmatmul.bf16.gmra.mxu0 %v2921
  %v3064 = vpop.f32.mrf.mxu0
  %v3065 = vadd.f32 0.0, %v3064
  %v3066 = vpop.f32.mrf.mxu0
  %v3067 = vadd.f32 0.0, %v3066
  %3068 = vmatmul.bf16.gmra.mxu0 %v2924
  %v3069 = vpop.f32.mrf.mxu0
  %v3070 = vadd.f32 0.0, %v3069
  %v3071 = vpop.f32.mrf.mxu0
  %v3072 = vadd.f32 0.0, %v3071
  %3073 = vmatmul.bf16.gmra.mxu0 %v2927
  %v3074 = vpop.f32.mrf.mxu0
  %v3075 = vadd.f32 0.0, %v3074
  %v3076 = vpop.f32.mrf.mxu0
  %v3077 = vadd.f32 0.0, %v3076
  %3078 = vmatmul.bf16.gmra.mxu0 %v2930
  %v3079 = vpop.f32.mrf.mxu0
  %v3080 = vadd.f32 0.0, %v3079
  %v3081 = vpop.f32.mrf.mxu0
  %v3082 = vadd.f32 0.0, %v3081
  %3083 = vmatmul.bf16.gmra.mxu0 %v2933
  %v3084 = vpop.f32.mrf.mxu0
  %v3085 = vadd.f32 0.0, %v3084
  %v3086 = vpop.f32.mrf.mxu0
  %v3087 = vadd.f32 0.0, %v3086
  %3088 = vmatmul.bf16.gmra.mxu0 %v2936
  %v3089 = vpop.f32.mrf.mxu0
  %v3090 = vadd.f32 0.0, %v3089
  %v3091 = vpop.f32.mrf.mxu0
  %v3092 = vadd.f32 0.0, %v3091
  %3093 = vmatmul.bf16.gmra.mxu0 %v2939
  %v3094 = vpop.f32.mrf.mxu0
  %v3095 = vadd.f32 0.0, %v3094
  %v3096 = vpop.f32.mrf.mxu0
  %v3097 = vadd.f32 0.0, %v3096
  %3098 = vmatmul.bf16.gmra.mxu0 %v2942
  %v3099 = vpop.f32.mrf.mxu0
  %v3100 = vadd.f32 0.0, %v3099
  %v3101 = vpop.f32.mrf.mxu0
  %v3102 = vadd.f32 0.0, %v3101
  %3103 = vmatmul.bf16.gmra.mxu0 %v2945
  %v3104 = vpop.f32.mrf.mxu0
  %v3105 = vadd.f32 0.0, %v3104
  %v3106 = vpop.f32.mrf.mxu0
  %v3107 = vadd.f32 0.0, %v3106
  %3108 = vmatmul.bf16.gmra.mxu0 %v2948
  %v3109 = vpop.f32.mrf.mxu0
  %v3110 = vadd.f32 0.0, %v3109
  %v3111 = vpop.f32.mrf.mxu0
  %v3112 = vadd.f32 0.0, %v3111
  %3113 = vmatmul.bf16.gmra.mxu0 %v2951
  %v3114 = vpop.f32.mrf.mxu0
  %v3115 = vadd.f32 0.0, %v3114
  %v3116 = vpop.f32.mrf.mxu0
  %v3117 = vadd.f32 0.0, %v3116
  %3118 = vmatmul.bf16.gmra.mxu0 %v2954
  %v3119 = vpop.f32.mrf.mxu0
  %v3120 = vadd.f32 0.0, %v3119
  %v3121 = vpop.f32.mrf.mxu0
  %v3122 = vadd.f32 0.0, %v3121
  %3123 = vmatmul.bf16.gmra.mxu0 %v2957
  %v3124 = vpop.f32.mrf.mxu0
  %v3125 = vadd.f32 0.0, %v3124
  %v3126 = vpop.f32.mrf.mxu0
  %v3127 = vadd.f32 0.0, %v3126
  %3128 = vmatmul.bf16.gmra.mxu0 %v2960
  %v3129 = vpop.f32.mrf.mxu0
  %v3130 = vadd.f32 0.0, %v3129
  %v3131 = vpop.f32.mrf.mxu0
  %3132 = vdwg.mxu0
  %v3133 = vadd.f32 %v2660, %v2975
  %v3134 = vadd.f32 %v2661, %v2977
  %v3135 = vadd.f32 %v2662, %v2980
  %v3136 = vadd.f32 %v2663, %v2982
  %v3137 = vadd.f32 %v2664, %v2985
  %v3138 = vadd.f32 %v2665, %v2987
  %v3139 = vadd.f32 %v2666, %v2990
  %v3140 = vadd.f32 %v2667, %v2992
  %v3141 = vadd.f32 %v2668, %v2995
  %v3142 = vadd.f32 %v2669, %v2997
  %v3143 = vadd.f32 %v2670, %v3000
  %v3144 = vadd.f32 %v2671, %v3002
  %v3145 = vadd.f32 %v2672, %v3005
  %v3146 = vadd.f32 %v2673, %v3007
  %v3147 = vadd.f32 %v2674, %v3010
  %v3148 = vadd.f32 %v2675, %v3012
  %v3149 = vadd.f32 %v2676, %v3015
  %v3150 = vadd.f32 %v2677, %v3017
  %v3151 = vadd.f32 %v2678, %v3020
  %v3152 = vadd.f32 %v2679, %v3022
  %v3153 = vadd.f32 %v2680, %v3025
  %v3154 = vadd.f32 %v2681, %v3027
  %v3155 = vadd.f32 %v2682, %v3030
  %v3156 = vadd.f32 %v2683, %v3032
  %v3157 = vadd.f32 %v2684, %v3035
  %v3158 = vadd.f32 %v2685, %v3037
  %v3159 = vadd.f32 %v2686, %v3040
  %v3160 = vadd.f32 %v2687, %v3042
  %v3161 = vadd.f32 %v2688, %v3045
  %v3162 = vadd.f32 %v2689, %v3047
  %v3163 = vadd.f32 %v2690, %v3050
  %v3164 = vadd.f32 %v2691, %v3052
  %v3165 = vadd.f32 %v2692, %v3055
  %v3166 = vadd.f32 %v2693, %v3057
  %v3167 = vadd.f32 %v2694, %v3060
  %v3168 = vadd.f32 %v2695, %v3062
  %v3169 = vadd.f32 %v2696, %v3065
  %v3170 = vadd.f32 %v2697, %v3067
  %v3171 = vadd.f32 %v2698, %v3070
  %v3172 = vadd.f32 %v2699, %v3072
  %v3173 = vadd.f32 %v2700, %v3075
  %v3174 = vadd.f32 %v2701, %v3077
  %v3175 = vadd.f32 %v2702, %v3080
  %v3176 = vadd.f32 %v2703, %v3082
  %v3177 = vadd.f32 %v2704, %v3085
  %v3178 = vadd.f32 %v2705, %v3087
  %v3179 = vadd.f32 %v2706, %v3090
  %v3180 = vadd.f32 %v2707, %v3092
  %v3181 = vadd.f32 %v2708, %v3095
  %v3182 = vadd.f32 %v2709, %v3097
  %v3183 = vadd.f32 %v2710, %v3100
  %v3184 = vadd.f32 %v2711, %v3102
  %v3185 = vadd.f32 %v2712, %v3105
  %v3186 = vadd.f32 %v2713, %v3107
  %v3187 = vadd.f32 %v2714, %v3110
  %v3188 = vadd.f32 %v2715, %v3112
  %v3189 = vadd.f32 %v2716, %v3115
  %v3190 = vadd.f32 %v2717, %v3117
  %v3191 = vadd.f32 %v2718, %v3120
  %v3192 = vadd.f32 %v2719, %v3122
  %v3193 = vadd.f32 %v2720, %v3125
  %v3194 = vadd.f32 %v2721, %v3127
  %v3195 = vadd.f32 %v2722, %v3130
  %v3196 = vld [vmem:[#allocation2 + $0x8] sm:$0xe]
  %v3197 = vld [vmem:[#allocation2 + $0xc] sm:$0xf]
  %v3198 = vld [vmem:[#allocation2 + $0x10] sm:$0xf]
  %v3199 = vld [vmem:[#allocation2 + $0x14] sm:$0xf]
  %v3200 = vld [vmem:[#allocation2 + $0x18] sm:$0xf]
  %v3201 = vld [vmem:[#allocation2 + $0x1c] sm:$0xf]
  %v3202 = vld [vmem:[#allocation2 + $0x20] sm:$0xf]
  %v3203 = vld [vmem:[#allocation2 + $0x24] sm:$0xf]
  %v3204 = vld [vmem:[#allocation2 + $0x28] sm:$0xf]
  %v3205 = vld [vmem:[#allocation2 + $0x2c] sm:$0xf]
  %v3206 = vld [vmem:[#allocation2 + $0x30] sm:$0xf]
  %v3207 = vld [vmem:[#allocation2 + $0x34] sm:$0xf]
  %v3208 = vld [vmem:[#allocation2 + $0x38] sm:$0xf]
  %v3209 = vld [vmem:[#allocation2 + $0x3c] sm:$0xf]
  %v3210 = vld [vmem:[#allocation2 + $0x40] sm:$0xf]
  %v3211 = vld [vmem:[#allocation2 + $0x44] sm:$0xf]
  %v3212 = vld [vmem:[#allocation2 + $0x48] sm:$0xf]
  %v3213 = vld [vmem:[#allocation2 + $0x4c] sm:$0xf]
  %v3214 = vld [vmem:[#allocation2 + $0x50] sm:$0xf]
  %v3215 = vld [vmem:[#allocation2 + $0x54] sm:$0xf]
  %v3216 = vld [vmem:[#allocation2 + $0x58] sm:$0xf]
  %v3217 = vld [vmem:[#allocation2 + $0x5c] sm:$0xf]
  %v3218 = vld [vmem:[#allocation2 + $0x60] sm:$0xf]
  %v3219 = vld [vmem:[#allocation2 + $0x64] sm:$0xf]
  %v3220 = vld [vmem:[#allocation2 + $0x68] sm:$0xf]
  %v3221 = vld [vmem:[#allocation2 + $0x6c] sm:$0xf]
  %v3222 = vld [vmem:[#allocation2 + $0x70] sm:$0xf]
  %v3223 = vld [vmem:[#allocation2 + $0x74] sm:$0xf]
  %v3224 = vld [vmem:[#allocation2 + $0x78] sm:$0xf]
  %v3225 = vld [vmem:[#allocation2 + $0x7c] sm:$0xf]
  %v3226 = vld [vmem:[#allocation2 + $0x80] sm:$0xf]
  %v3227 = vld [vmem:[#allocation2 + $0x84] sm:$0xf]
  %v3228 = vld [vmem:[#allocation2 + $0x88] sm:$0xf]
  %v3229 = vld [vmem:[#allocation2 + $0x8c] sm:$0xf]
  %v3230 = vld [vmem:[#allocation2 + $0x90] sm:$0xf]
  %v3231 = vld [vmem:[#allocation2 + $0x94] sm:$0xf]
  %v3232 = vld [vmem:[#allocation2 + $0x98] sm:$0xf]
  %v3233 = vld [vmem:[#allocation2 + $0x9c] sm:$0xf]
  %v3234 = vld [vmem:[#allocation2 + $0xa0] sm:$0xf]
  %v3235 = vld [vmem:[#allocation2 + $0xa4] sm:$0xf]
  %v3236 = vld [vmem:[#allocation2 + $0xa8] sm:$0xf]
  %v3237 = vld [vmem:[#allocation2 + $0xac] sm:$0xf]
  %v3238 = vld [vmem:[#allocation2 + $0xb0] sm:$0xf]
  %v3239 = vld [vmem:[#allocation2 + $0xb4] sm:$0xf]
  %v3240 = vld [vmem:[#allocation2 + $0xb8] sm:$0xf]
  %v3241 = vld [vmem:[#allocation2 + $0xbc] sm:$0xf]
  %v3242 = vld [vmem:[#allocation2 + $0xc0] sm:$0xf]
  %v3243 = vld [vmem:[#allocation2 + $0xc4] sm:$0xf]
  %v3244 = vld [vmem:[#allocation2 + $0xc8] sm:$0xf]
  %v3245 = vld [vmem:[#allocation2 + $0xcc] sm:$0xf]
  %v3246 = vld [vmem:[#allocation2 + $0xd0] sm:$0xf]
  %v3247 = vld [vmem:[#allocation2 + $0xd4] sm:$0xf]
  %v3248 = vld [vmem:[#allocation2 + $0xd8] sm:$0xf]
  %v3249 = vld [vmem:[#allocation2 + $0xdc] sm:$0xf]
  %v3250 = vld [vmem:[#allocation2 + $0xe0] sm:$0xf]
  %v3251 = vld [vmem:[#allocation2 + $0xe4] sm:$0xf]
  %v3252 = vld [vmem:[#allocation2 + $0xe8] sm:$0xf]
  %v3253 = vld [vmem:[#allocation2 + $0xec] sm:$0xf]
  %v3254 = vld [vmem:[#allocation2 + $0xf0] sm:$0xf]
  %v3255 = vld [vmem:[#allocation2 + $0xf4] sm:$0xf]
  %v3256 = vld [vmem:[#allocation2 + $0xf8] sm:$0xf]
  %v3257 = vld [vmem:[#allocation2 + $0xfc] sm:$0xf]
  %v3258 = vld [vmem:[#allocation2 + $0x100] sm:$0xf]
  %v3259 = vld [vmem:[#allocation2 + $0x104] sm:$0x1]
  %v3260 = vld [vmem:[%s1 + $0x18] sm:$0xf]
  %v3325 = vunpack.c.l.b16 %v3196
  %v3326 = vunpack.c.l.b16 %v3197
  %v3327 = vunpack.c.l.b16 %v3198
  %v3328 = vunpack.c.l.b16 %v3199
  %v3329 = vunpack.c.l.b16 %v3200
  %v3330 = vunpack.c.l.b16 %v3201
  %v3331 = vunpack.c.l.b16 %v3202
  %v3332 = vunpack.c.l.b16 %v3203
  %v3333 = vunpack.c.l.b16 %v3204
  %v3334 = vunpack.c.l.b16 %v3205
  %v3335 = vunpack.c.l.b16 %v3206
  %v3336 = vunpack.c.l.b16 %v3207
  %v3337 = vunpack.c.l.b16 %v3208
  %v3338 = vunpack.c.l.b16 %v3209
  %v3339 = vunpack.c.l.b16 %v3210
  %v3340 = vunpack.c.l.b16 %v3211
  %v3341 = vunpack.c.l.b16 %v3212
  %v3342 = vunpack.c.l.b16 %v3213
  %v3343 = vunpack.c.l.b16 %v3214
  %v3344 = vunpack.c.l.b16 %v3215
  %v3345 = vunpack.c.l.b16 %v3216
  %v3346 = vunpack.c.l.b16 %v3217
  %v3347 = vunpack.c.l.b16 %v3218
  %v3348 = vunpack.c.l.b16 %v3219
  %v3349 = vunpack.c.l.b16 %v3220
  %v3350 = vunpack.c.l.b16 %v3221
  %v3351 = vunpack.c.l.b16 %v3222
  %v3352 = vunpack.c.l.b16 %v3223
  %v3353 = vunpack.c.l.b16 %v3224
  %v3354 = vunpack.c.l.b16 %v3225
  %v3355 = vunpack.c.l.b16 %v3226
  %v3356 = vunpack.c.l.b16 %v3227
  %v3357 = vunpack.c.l.b16 %v3228
  %v3358 = vunpack.c.l.b16 %v3229
  %v3359 = vunpack.c.l.b16 %v3230
  %v3360 = vunpack.c.l.b16 %v3231
  %v3361 = vunpack.c.l.b16 %v3232
  %v3362 = vunpack.c.l.b16 %v3233
  %v3363 = vunpack.c.l.b16 %v3234
  %v3364 = vunpack.c.l.b16 %v3235
  %v3365 = vunpack.c.l.b16 %v3236
  %v3366 = vunpack.c.l.b16 %v3237
  %v3367 = vunpack.c.l.b16 %v3238
  %v3368 = vunpack.c.l.b16 %v3239
  %v3369 = vunpack.c.l.b16 %v3240
  %v3370 = vunpack.c.l.b16 %v3241
  %v3371 = vunpack.c.l.b16 %v3242
  %v3372 = vunpack.c.l.b16 %v3243
  %v3373 = vunpack.c.l.b16 %v3244
  %v3374 = vunpack.c.l.b16 %v3245
  %v3375 = vunpack.c.l.b16 %v3246
  %v3376 = vunpack.c.l.b16 %v3247
  %v3377 = vunpack.c.l.b16 %v3248
  %v3378 = vunpack.c.l.b16 %v3249
  %v3379 = vunpack.c.l.b16 %v3250
  %v3380 = vunpack.c.l.b16 %v3251
  %v3381 = vunpack.c.l.b16 %v3252
  %v3382 = vunpack.c.l.b16 %v3253
  %v3383 = vunpack.c.l.b16 %v3254
  %v3384 = vunpack.c.l.b16 %v3255
  %v3385 = vunpack.c.l.b16 %v3256
  %v3386 = vunpack.c.l.b16 %v3257
  %v3387 = vunpack.c.l.b16 %v3258
  %v3388 = vunpack.c.l.b16 %v3259
  %v3389 = vpack.c.b16 %v3326, %v3325
  %v3390 = vpack.c.b16 %v3328, %v3327
  %v3391 = vpack.c.b16 %v3330, %v3329
  %v3392 = vpack.c.b16 %v3332, %v3331
  %v3393 = vpack.c.b16 %v3334, %v3333
  %v3394 = vpack.c.b16 %v3336, %v3335
  %v3395 = vpack.c.b16 %v3338, %v3337
  %v3396 = vpack.c.b16 %v3340, %v3339
  %v3397 = vpack.c.b16 %v3342, %v3341
  %v3398 = vpack.c.b16 %v3344, %v3343
  %v3399 = vpack.c.b16 %v3346, %v3345
  %v3400 = vpack.c.b16 %v3348, %v3347
  %v3401 = vpack.c.b16 %v3350, %v3349
  %v3402 = vpack.c.b16 %v3352, %v3351
  %v3403 = vpack.c.b16 %v3354, %v3353
  %v3404 = vpack.c.b16 %v3356, %v3355
  %v3405 = vpack.c.b16 %v3358, %v3357
  %v3406 = vpack.c.b16 %v3360, %v3359
  %v3407 = vpack.c.b16 %v3362, %v3361
  %v3408 = vpack.c.b16 %v3364, %v3363
  %v3409 = vpack.c.b16 %v3366, %v3365
  %v3410 = vpack.c.b16 %v3368, %v3367
  %v3411 = vpack.c.b16 %v3370, %v3369
  %v3412 = vpack.c.b16 %v3372, %v3371
  %v3413 = vpack.c.b16 %v3374, %v3373
  %v3414 = vpack.c.b16 %v3376, %v3375
  %v3415 = vpack.c.b16 %v3378, %v3377
  %v3416 = vpack.c.b16 %v3380, %v3379
  %v3417 = vpack.c.b16 %v3382, %v3381
  %v3418 = vpack.c.b16 %v3384, %v3383
  %v3419 = vpack.c.b16 %v3386, %v3385
  %v3420 = vpack.c.b16 %v3388, %v3387
  %v3421 = vrot.slane %v3389, 1
  %v3422 = vrot.slane %v3390, 1
  %v3423 = vsel %vm1121, %v3421, %v3422
  %v3424 = vrot.slane %v3391, 1
  %v3425 = vsel %vm1121, %v3422, %v3424
  %v3426 = vrot.slane %v3392, 1
  %v3427 = vsel %vm1121, %v3424, %v3426
  %v3428 = vrot.slane %v3393, 1
  %v3429 = vsel %vm1121, %v3426, %v3428
  %v3430 = vrot.slane %v3394, 1
  %v3431 = vsel %vm1121, %v3428, %v3430
  %v3432 = vrot.slane %v3395, 1
  %v3433 = vsel %vm1121, %v3430, %v3432
  %v3434 = vrot.slane %v3396, 1
  %v3435 = vsel %vm1121, %v3432, %v3434
  %v3436 = vrot.slane %v3397, 1
  %v3437 = vsel %vm1121, %v3434, %v3436
  %v3438 = vrot.slane %v3398, 1
  %v3439 = vsel %vm1121, %v3436, %v3438
  %v3440 = vrot.slane %v3399, 1
  %v3441 = vsel %vm1121, %v3438, %v3440
  %v3442 = vrot.slane %v3400, 1
  %v3443 = vsel %vm1121, %v3440, %v3442
  %v3444 = vrot.slane %v3401, 1
  %v3445 = vsel %vm1121, %v3442, %v3444
  %v3446 = vrot.slane %v3402, 1
  %v3447 = vsel %vm1121, %v3444, %v3446
  %v3448 = vrot.slane %v3403, 1
  %v3449 = vsel %vm1121, %v3446, %v3448
  %v3450 = vrot.slane %v3404, 1
  %v3451 = vsel %vm1121, %v3448, %v3450
  %v3452 = vrot.slane %v3405, 1
  %v3453 = vsel %vm1121, %v3450, %v3452
  %v3454 = vrot.slane %v3406, 1
  %v3455 = vsel %vm1121, %v3452, %v3454
  %v3456 = vrot.slane %v3407, 1
  %v3457 = vsel %vm1121, %v3454, %v3456
  %v3458 = vrot.slane %v3408, 1
  %v3459 = vsel %vm1121, %v3456, %v3458
  %v3460 = vrot.slane %v3409, 1
  %v3461 = vsel %vm1121, %v3458, %v3460
  %v3462 = vrot.slane %v3410, 1
  %v3463 = vsel %vm1121, %v3460, %v3462
  %v3464 = vrot.slane %v3411, 1
  %v3465 = vsel %vm1121, %v3462, %v3464
  %v3466 = vrot.slane %v3412, 1
  %v3467 = vsel %vm1121, %v3464, %v3466
  %v3468 = vrot.slane %v3413, 1
  %v3469 = vsel %vm1121, %v3466, %v3468
  %v3470 = vrot.slane %v3414, 1
  %v3471 = vsel %vm1121, %v3468, %v3470
  %v3472 = vrot.slane %v3415, 1
  %v3473 = vsel %vm1121, %v3470, %v3472
  %v3474 = vrot.slane %v3416, 1
  %v3475 = vsel %vm1121, %v3472, %v3474
  %v3476 = vrot.slane %v3417, 1
  %v3477 = vsel %vm1121, %v3474, %v3476
  %v3478 = vrot.slane %v3418, 1
  %v3479 = vsel %vm1121, %v3476, %v3478
  %v3480 = vrot.slane %v3419, 1
  %v3481 = vsel %vm1121, %v3478, %v3480
  %v3482 = vrot.slane %v3420, 1
  %v3483 = vsel %vm1121, %v3480, %v3482
  %v3485 = vsel %vm610, %v3423, 0
  %v3488 = vsel %vm610, %v3425, 0
  %v3491 = vsel %vm610, %v3427, 0
  %v3494 = vsel %vm610, %v3429, 0
  %v3497 = vsel %vm610, %v3431, 0
  %v3500 = vsel %vm610, %v3433, 0
  %v3503 = vsel %vm610, %v3435, 0
  %v3506 = vsel %vm610, %v3437, 0
  %v3509 = vsel %vm610, %v3439, 0
  %v3512 = vsel %vm610, %v3441, 0
  %v3515 = vsel %vm610, %v3443, 0
  %v3518 = vsel %vm610, %v3445, 0
  %v3521 = vsel %vm610, %v3447, 0
  %v3524 = vsel %vm610, %v3449, 0
  %v3527 = vsel %vm610, %v3451, 0
  %v3530 = vsel %vm610, %v3453, 0
  %v3533 = vsel %vm610, %v3455, 0
  %v3536 = vsel %vm610, %v3457, 0
  %v3539 = vsel %vm610, %v3459, 0
  %v3542 = vsel %vm610, %v3461, 0
  %v3545 = vsel %vm610, %v3463, 0
  %v3548 = vsel %vm610, %v3465, 0
  %v3551 = vsel %vm610, %v3467, 0
  %v3554 = vsel %vm610, %v3469, 0
  %v3557 = vsel %vm610, %v3471, 0
  %v3560 = vsel %vm610, %v3473, 0
  %v3563 = vsel %vm610, %v3475, 0
  %v3566 = vsel %vm610, %v3477, 0
  %v3569 = vsel %vm610, %v3479, 0
  %v3572 = vsel %vm610, %v3481, 0
  %v3575 = vsel %vm610, %v3483, 0
  %v3578 = vsel %vm610, %v3482, 0
  %v3581 = vsel %vm707, %v3260, 0
  %3583 = vmatpush.bf16.msra.mxu0 0
  %3584 = vmatpush.bf16.msra.mxu0 0
  %3585 = vmatpush.bf16.msra.mxu0 0
  %3586 = vmatpush.bf16.msra.mxu0 0
  %3587 = vmatpush.bf16.msra.mxu0 0
  %3588 = vmatpush.bf16.msra.mxu0 0
  %3589 = vmatpush.bf16.msra.mxu0 0
  %3590 = vmatpush.bf16.msra.mxu0 %v3581
  %3591 = vmatmul.bf16.gmra.mxu0 %v3485
  %v3592 = vpop.f32.mrf.mxu0
  %v3593 = vadd.f32 0.0, %v3592
  %v3594 = vpop.f32.mrf.mxu0
  %v3595 = vadd.f32 0.0, %v3594
  %3596 = vmatmul.bf16.gmra.mxu0 %v3488
  %v3597 = vpop.f32.mrf.mxu0
  %v3598 = vadd.f32 0.0, %v3597
  %v3599 = vpop.f32.mrf.mxu0
  %v3600 = vadd.f32 0.0, %v3599
  %3601 = vmatmul.bf16.gmra.mxu0 %v3491
  %v3602 = vpop.f32.mrf.mxu0
  %v3603 = vadd.f32 0.0, %v3602
  %v3604 = vpop.f32.mrf.mxu0
  %v3605 = vadd.f32 0.0, %v3604
  %3606 = vmatmul.bf16.gmra.mxu0 %v3494
  %v3607 = vpop.f32.mrf.mxu0
  %v3608 = vadd.f32 0.0, %v3607
  %v3609 = vpop.f32.mrf.mxu0
  %v3610 = vadd.f32 0.0, %v3609
  %3611 = vmatmul.bf16.gmra.mxu0 %v3497
  %v3612 = vpop.f32.mrf.mxu0
  %v3613 = vadd.f32 0.0, %v3612
  %v3614 = vpop.f32.mrf.mxu0
  %v3615 = vadd.f32 0.0, %v3614
  %3616 = vmatmul.bf16.gmra.mxu0 %v3500
  %v3617 = vpop.f32.mrf.mxu0
  %v3618 = vadd.f32 0.0, %v3617
  %v3619 = vpop.f32.mrf.mxu0
  %v3620 = vadd.f32 0.0, %v3619
  %3621 = vmatmul.bf16.gmra.mxu0 %v3503
  %v3622 = vpop.f32.mrf.mxu0
  %v3623 = vadd.f32 0.0, %v3622
  %v3624 = vpop.f32.mrf.mxu0
  %v3625 = vadd.f32 0.0, %v3624
  %3626 = vmatmul.bf16.gmra.mxu0 %v3506
  %v3627 = vpop.f32.mrf.mxu0
  %v3628 = vadd.f32 0.0, %v3627
  %v3629 = vpop.f32.mrf.mxu0
  %v3630 = vadd.f32 0.0, %v3629
  %3631 = vmatmul.bf16.gmra.mxu0 %v3509
  %v3632 = vpop.f32.mrf.mxu0
  %v3633 = vadd.f32 0.0, %v3632
  %v3634 = vpop.f32.mrf.mxu0
  %v3635 = vadd.f32 0.0, %v3634
  %3636 = vmatmul.bf16.gmra.mxu0 %v3512
  %v3637 = vpop.f32.mrf.mxu0
  %v3638 = vadd.f32 0.0, %v3637
  %v3639 = vpop.f32.mrf.mxu0
  %v3640 = vadd.f32 0.0, %v3639
  %3641 = vmatmul.bf16.gmra.mxu0 %v3515
  %v3642 = vpop.f32.mrf.mxu0
  %v3643 = vadd.f32 0.0, %v3642
  %v3644 = vpop.f32.mrf.mxu0
  %v3645 = vadd.f32 0.0, %v3644
  %3646 = vmatmul.bf16.gmra.mxu0 %v3518
  %v3647 = vpop.f32.mrf.mxu0
  %v3648 = vadd.f32 0.0, %v3647
  %v3649 = vpop.f32.mrf.mxu0
  %v3650 = vadd.f32 0.0, %v3649
  %3651 = vmatmul.bf16.gmra.mxu0 %v3521
  %v3652 = vpop.f32.mrf.mxu0
  %v3653 = vadd.f32 0.0, %v3652
  %v3654 = vpop.f32.mrf.mxu0
  %v3655 = vadd.f32 0.0, %v3654
  %3656 = vmatmul.bf16.gmra.mxu0 %v3524
  %v3657 = vpop.f32.mrf.mxu0
  %v3658 = vadd.f32 0.0, %v3657
  %v3659 = vpop.f32.mrf.mxu0
  %v3660 = vadd.f32 0.0, %v3659
  %3661 = vmatmul.bf16.gmra.mxu0 %v3527
  %v3662 = vpop.f32.mrf.mxu0
  %v3663 = vadd.f32 0.0, %v3662
  %v3664 = vpop.f32.mrf.mxu0
  %v3665 = vadd.f32 0.0, %v3664
  %3666 = vmatmul.bf16.gmra.mxu0 %v3530
  %v3667 = vpop.f32.mrf.mxu0
  %v3668 = vadd.f32 0.0, %v3667
  %v3669 = vpop.f32.mrf.mxu0
  %v3670 = vadd.f32 0.0, %v3669
  %3671 = vmatmul.bf16.gmra.mxu0 %v3533
  %v3672 = vpop.f32.mrf.mxu0
  %v3673 = vadd.f32 0.0, %v3672
  %v3674 = vpop.f32.mrf.mxu0
  %v3675 = vadd.f32 0.0, %v3674
  %3676 = vmatmul.bf16.gmra.mxu0 %v3536
  %v3677 = vpop.f32.mrf.mxu0
  %v3678 = vadd.f32 0.0, %v3677
  %v3679 = vpop.f32.mrf.mxu0
  %v3680 = vadd.f32 0.0, %v3679
  %3681 = vmatmul.bf16.gmra.mxu0 %v3539
  %v3682 = vpop.f32.mrf.mxu0
  %v3683 = vadd.f32 0.0, %v3682
  %v3684 = vpop.f32.mrf.mxu0
  %v3685 = vadd.f32 0.0, %v3684
  %3686 = vmatmul.bf16.gmra.mxu0 %v3542
  %v3687 = vpop.f32.mrf.mxu0
  %v3688 = vadd.f32 0.0, %v3687
  %v3689 = vpop.f32.mrf.mxu0
  %v3690 = vadd.f32 0.0, %v3689
  %3691 = vmatmul.bf16.gmra.mxu0 %v3545
  %v3692 = vpop.f32.mrf.mxu0
  %v3693 = vadd.f32 0.0, %v3692
  %v3694 = vpop.f32.mrf.mxu0
  %v3695 = vadd.f32 0.0, %v3694
  %3696 = vmatmul.bf16.gmra.mxu0 %v3548
  %v3697 = vpop.f32.mrf.mxu0
  %v3698 = vadd.f32 0.0, %v3697
  %v3699 = vpop.f32.mrf.mxu0
  %v3700 = vadd.f32 0.0, %v3699
  %3701 = vmatmul.bf16.gmra.mxu0 %v3551
  %v3702 = vpop.f32.mrf.mxu0
  %v3703 = vadd.f32 0.0, %v3702
  %v3704 = vpop.f32.mrf.mxu0
  %v3705 = vadd.f32 0.0, %v3704
  %3706 = vmatmul.bf16.gmra.mxu0 %v3554
  %v3707 = vpop.f32.mrf.mxu0
  %v3708 = vadd.f32 0.0, %v3707
  %v3709 = vpop.f32.mrf.mxu0
  %v3710 = vadd.f32 0.0, %v3709
  %3711 = vmatmul.bf16.gmra.mxu0 %v3557
  %v3712 = vpop.f32.mrf.mxu0
  %v3713 = vadd.f32 0.0, %v3712
  %v3714 = vpop.f32.mrf.mxu0
  %v3715 = vadd.f32 0.0, %v3714
  %3716 = vmatmul.bf16.gmra.mxu0 %v3560
  %v3717 = vpop.f32.mrf.mxu0
  %v3718 = vadd.f32 0.0, %v3717
  %v3719 = vpop.f32.mrf.mxu0
  %v3720 = vadd.f32 0.0, %v3719
  %3721 = vmatmul.bf16.gmra.mxu0 %v3563
  %v3722 = vpop.f32.mrf.mxu0
  %v3723 = vadd.f32 0.0, %v3722
  %v3724 = vpop.f32.mrf.mxu0
  %v3725 = vadd.f32 0.0, %v3724
  %3726 = vmatmul.bf16.gmra.mxu0 %v3566
  %v3727 = vpop.f32.mrf.mxu0
  %v3728 = vadd.f32 0.0, %v3727
  %v3729 = vpop.f32.mrf.mxu0
  %v3730 = vadd.f32 0.0, %v3729
  %3731 = vmatmul.bf16.gmra.mxu0 %v3569
  %v3732 = vpop.f32.mrf.mxu0
  %v3733 = vadd.f32 0.0, %v3732
  %v3734 = vpop.f32.mrf.mxu0
  %v3735 = vadd.f32 0.0, %v3734
  %3736 = vmatmul.bf16.gmra.mxu0 %v3572
  %v3737 = vpop.f32.mrf.mxu0
  %v3738 = vadd.f32 0.0, %v3737
  %v3739 = vpop.f32.mrf.mxu0
  %v3740 = vadd.f32 0.0, %v3739
  %3741 = vmatmul.bf16.gmra.mxu0 %v3575
  %v3742 = vpop.f32.mrf.mxu0
  %v3743 = vadd.f32 0.0, %v3742
  %v3744 = vpop.f32.mrf.mxu0
  %v3745 = vadd.f32 0.0, %v3744
  %3746 = vmatmul.bf16.gmra.mxu0 %v3578
  %v3747 = vpop.f32.mrf.mxu0
  %v3748 = vadd.f32 0.0, %v3747
  %v3749 = vpop.f32.mrf.mxu0
  %3750 = vdwg.mxu0
  %v3751 = vadd.f32 %v3133, %v3593
  %v3752 = vadd.f32 %v3134, %v3595
  %v3753 = vadd.f32 %v3135, %v3598
  %v3754 = vadd.f32 %v3136, %v3600
  %v3755 = vadd.f32 %v3137, %v3603
  %v3756 = vadd.f32 %v3138, %v3605
  %v3757 = vadd.f32 %v3139, %v3608
  %v3758 = vadd.f32 %v3140, %v3610
  %v3759 = vadd.f32 %v3141, %v3613
  %v3760 = vadd.f32 %v3142, %v3615
  %v3761 = vadd.f32 %v3143, %v3618
  %v3762 = vadd.f32 %v3144, %v3620
  %v3763 = vadd.f32 %v3145, %v3623
  %v3764 = vadd.f32 %v3146, %v3625
  %v3765 = vadd.f32 %v3147, %v3628
  %v3766 = vadd.f32 %v3148, %v3630
  %v3767 = vadd.f32 %v3149, %v3633
  %v3768 = vadd.f32 %v3150, %v3635
  %v3769 = vadd.f32 %v3151, %v3638
  %v3770 = vadd.f32 %v3152, %v3640
  %v3771 = vadd.f32 %v3153, %v3643
  %v3772 = vadd.f32 %v3154, %v3645
  %v3773 = vadd.f32 %v3155, %v3648
  %v3774 = vadd.f32 %v3156, %v3650
  %v3775 = vadd.f32 %v3157, %v3653
  %v3776 = vadd.f32 %v3158, %v3655
  %v3777 = vadd.f32 %v3159, %v3658
  %v3778 = vadd.f32 %v3160, %v3660
  %v3779 = vadd.f32 %v3161, %v3663
  %v3780 = vadd.f32 %v3162, %v3665
  %v3781 = vadd.f32 %v3163, %v3668
  %v3782 = vadd.f32 %v3164, %v3670
  %v3783 = vadd.f32 %v3165, %v3673
  %v3784 = vadd.f32 %v3166, %v3675
  %v3785 = vadd.f32 %v3167, %v3678
  %v3786 = vadd.f32 %v3168, %v3680
  %v3787 = vadd.f32 %v3169, %v3683
  %v3788 = vadd.f32 %v3170, %v3685
  %v3789 = vadd.f32 %v3171, %v3688
  %v3790 = vadd.f32 %v3172, %v3690
  %v3791 = vadd.f32 %v3173, %v3693
  %v3792 = vadd.f32 %v3174, %v3695
  %v3793 = vadd.f32 %v3175, %v3698
  %v3794 = vadd.f32 %v3176, %v3700
  %v3795 = vadd.f32 %v3177, %v3703
  %v3796 = vadd.f32 %v3178, %v3705
  %v3797 = vadd.f32 %v3179, %v3708
  %v3798 = vadd.f32 %v3180, %v3710
  %v3799 = vadd.f32 %v3181, %v3713
  %v3800 = vadd.f32 %v3182, %v3715
  %v3801 = vadd.f32 %v3183, %v3718
  %v3802 = vadd.f32 %v3184, %v3720
  %v3803 = vadd.f32 %v3185, %v3723
  %v3804 = vadd.f32 %v3186, %v3725
  %v3805 = vadd.f32 %v3187, %v3728
  %v3806 = vadd.f32 %v3188, %v3730
  %v3807 = vadd.f32 %v3189, %v3733
  %v3808 = vadd.f32 %v3190, %v3735
  %v3809 = vadd.f32 %v3191, %v3738
  %v3810 = vadd.f32 %v3192, %v3740
  %v3811 = vadd.f32 %v3193, %v3743
  %v3812 = vadd.f32 %v3194, %v3745
  %v3813 = vadd.f32 %v3195, %v3748
  %v3814 = vld [vmem:[#allocation2 + $0x104] sm:$0x3]
  %v3815 = vld [vmem:[%s1 + $0x1c] sm:$0xf]
  %v3817 = vunpack.c.l.b16 %v3814
  %v3818 = vpack.c.b16 %v3817, %v3387
  %v3820 = vshrl.u32 %v3389, 16
  %v3822 = vrot.slane %v3820, 1
  %v3823 = vshll.u32 %v3389, 16
  %v3825 = vrot.slane %v3823, 2
  %v3826 = vor.u32 %v3822, %v3825
  %v3828 = vshrl.u32 %v3390, 16
  %v3830 = vrot.slane %v3828, 1
  %v3831 = vshll.u32 %v3390, 16
  %v3833 = vrot.slane %v3831, 2
  %v3834 = vor.u32 %v3830, %v3833
  %v3835 = vsel %vm2728, %v3826, %v3834
  %v3837 = vshrl.u32 %v3391, 16
  %v3839 = vrot.slane %v3837, 1
  %v3840 = vshll.u32 %v3391, 16
  %v3842 = vrot.slane %v3840, 2
  %v3843 = vor.u32 %v3839, %v3842
  %v3844 = vsel %vm2728, %v3834, %v3843
  %v3846 = vshrl.u32 %v3392, 16
  %v3848 = vrot.slane %v3846, 1
  %v3849 = vshll.u32 %v3392, 16
  %v3851 = vrot.slane %v3849, 2
  %v3852 = vor.u32 %v3848, %v3851
  %v3853 = vsel %vm2728, %v3843, %v3852
  %v3855 = vshrl.u32 %v3393, 16
  %v3857 = vrot.slane %v3855, 1
  %v3858 = vshll.u32 %v3393, 16
  %v3860 = vrot.slane %v3858, 2
  %v3861 = vor.u32 %v3857, %v3860
  %v3862 = vsel %vm2728, %v3852, %v3861
  %v3864 = vshrl.u32 %v3394, 16
  %v3866 = vrot.slane %v3864, 1
  %v3867 = vshll.u32 %v3394, 16
  %v3869 = vrot.slane %v3867, 2
  %v3870 = vor.u32 %v3866, %v3869
  %v3871 = vsel %vm2728, %v3861, %v3870
  %v3873 = vshrl.u32 %v3395, 16
  %v3875 = vrot.slane %v3873, 1
  %v3876 = vshll.u32 %v3395, 16
  %v3878 = vrot.slane %v3876, 2
  %v3879 = vor.u32 %v3875, %v3878
  %v3880 = vsel %vm2728, %v3870, %v3879
  %v3882 = vshrl.u32 %v3396, 16
  %v3884 = vrot.slane %v3882, 1
  %v3885 = vshll.u32 %v3396, 16
  %v3887 = vrot.slane %v3885, 2
  %v3888 = vor.u32 %v3884, %v3887
  %v3889 = vsel %vm2728, %v3879, %v3888
  %v3891 = vshrl.u32 %v3397, 16
  %v3893 = vrot.slane %v3891, 1
  %v3894 = vshll.u32 %v3397, 16
  %v3896 = vrot.slane %v3894, 2
  %v3897 = vor.u32 %v3893, %v3896
  %v3898 = vsel %vm2728, %v3888, %v3897
  %v3900 = vshrl.u32 %v3398, 16
  %v3902 = vrot.slane %v3900, 1
  %v3903 = vshll.u32 %v3398, 16
  %v3905 = vrot.slane %v3903, 2
  %v3906 = vor.u32 %v3902, %v3905
  %v3907 = vsel %vm2728, %v3897, %v3906
  %v3909 = vshrl.u32 %v3399, 16
  %v3911 = vrot.slane %v3909, 1
  %v3912 = vshll.u32 %v3399, 16
  %v3914 = vrot.slane %v3912, 2
  %v3915 = vor.u32 %v3911, %v3914
  %v3916 = vsel %vm2728, %v3906, %v3915
  %v3918 = vshrl.u32 %v3400, 16
  %v3920 = vrot.slane %v3918, 1
  %v3921 = vshll.u32 %v3400, 16
  %v3923 = vrot.slane %v3921, 2
  %v3924 = vor.u32 %v3920, %v3923
  %v3925 = vsel %vm2728, %v3915, %v3924
  %v3927 = vshrl.u32 %v3401, 16
  %v3929 = vrot.slane %v3927, 1
  %v3930 = vshll.u32 %v3401, 16
  %v3932 = vrot.slane %v3930, 2
  %v3933 = vor.u32 %v3929, %v3932
  %v3934 = vsel %vm2728, %v3924, %v3933
  %v3936 = vshrl.u32 %v3402, 16
  %v3938 = vrot.slane %v3936, 1
  %v3939 = vshll.u32 %v3402, 16
  %v3941 = vrot.slane %v3939, 2
  %v3942 = vor.u32 %v3938, %v3941
  %v3943 = vsel %vm2728, %v3933, %v3942
  %v3945 = vshrl.u32 %v3403, 16
  %v3947 = vrot.slane %v3945, 1
  %v3948 = vshll.u32 %v3403, 16
  %v3950 = vrot.slane %v3948, 2
  %v3951 = vor.u32 %v3947, %v3950
  %v3952 = vsel %vm2728, %v3942, %v3951
  %v3954 = vshrl.u32 %v3404, 16
  %v3956 = vrot.slane %v3954, 1
  %v3957 = vshll.u32 %v3404, 16
  %v3959 = vrot.slane %v3957, 2
  %v3960 = vor.u32 %v3956, %v3959
  %v3961 = vsel %vm2728, %v3951, %v3960
  %v3963 = vshrl.u32 %v3405, 16
  %v3965 = vrot.slane %v3963, 1
  %v3966 = vshll.u32 %v3405, 16
  %v3968 = vrot.slane %v3966, 2
  %v3969 = vor.u32 %v3965, %v3968
  %v3970 = vsel %vm2728, %v3960, %v3969
  %v3972 = vshrl.u32 %v3406, 16
  %v3974 = vrot.slane %v3972, 1
  %v3975 = vshll.u32 %v3406, 16
  %v3977 = vrot.slane %v3975, 2
  %v3978 = vor.u32 %v3974, %v3977
  %v3979 = vsel %vm2728, %v3969, %v3978
  %v3981 = vshrl.u32 %v3407, 16
  %v3983 = vrot.slane %v3981, 1
  %v3984 = vshll.u32 %v3407, 16
  %v3986 = vrot.slane %v3984, 2
  %v3987 = vor.u32 %v3983, %v3986
  %v3988 = vsel %vm2728, %v3978, %v3987
  %v3990 = vshrl.u32 %v3408, 16
  %v3992 = vrot.slane %v3990, 1
  %v3993 = vshll.u32 %v3408, 16
  %v3995 = vrot.slane %v3993, 2
  %v3996 = vor.u32 %v3992, %v3995
  %v3997 = vsel %vm2728, %v3987, %v3996
  %v3999 = vshrl.u32 %v3409, 16
  %v4001 = vrot.slane %v3999, 1
  %v4002 = vshll.u32 %v3409, 16
  %v4004 = vrot.slane %v4002, 2
  %v4005 = vor.u32 %v4001, %v4004
  %v4006 = vsel %vm2728, %v3996, %v4005
  %v4008 = vshrl.u32 %v3410, 16
  %v4010 = vrot.slane %v4008, 1
  %v4011 = vshll.u32 %v3410, 16
  %v4013 = vrot.slane %v4011, 2
  %v4014 = vor.u32 %v4010, %v4013
  %v4015 = vsel %vm2728, %v4005, %v4014
  %v4017 = vshrl.u32 %v3411, 16
  %v4019 = vrot.slane %v4017, 1
  %v4020 = vshll.u32 %v3411, 16
  %v4022 = vrot.slane %v4020, 2
  %v4023 = vor.u32 %v4019, %v4022
  %v4024 = vsel %vm2728, %v4014, %v4023
  %v4026 = vshrl.u32 %v3412, 16
  %v4028 = vrot.slane %v4026, 1
  %v4029 = vshll.u32 %v3412, 16
  %v4031 = vrot.slane %v4029, 2
  %v4032 = vor.u32 %v4028, %v4031
  %v4033 = vsel %vm2728, %v4023, %v4032
  %v4035 = vshrl.u32 %v3413, 16
  %v4037 = vrot.slane %v4035, 1
  %v4038 = vshll.u32 %v3413, 16
  %v4040 = vrot.slane %v4038, 2
  %v4041 = vor.u32 %v4037, %v4040
  %v4042 = vsel %vm2728, %v4032, %v4041
  %v4044 = vshrl.u32 %v3414, 16
  %v4046 = vrot.slane %v4044, 1
  %v4047 = vshll.u32 %v3414, 16
  %v4049 = vrot.slane %v4047, 2
  %v4050 = vor.u32 %v4046, %v4049
  %v4051 = vsel %vm2728, %v4041, %v4050
  %v4053 = vshrl.u32 %v3415, 16
  %v4055 = vrot.slane %v4053, 1
  %v4056 = vshll.u32 %v3415, 16
  %v4058 = vrot.slane %v4056, 2
  %v4059 = vor.u32 %v4055, %v4058
  %v4060 = vsel %vm2728, %v4050, %v4059
  %v4062 = vshrl.u32 %v3416, 16
  %v4064 = vrot.slane %v4062, 1
  %v4065 = vshll.u32 %v3416, 16
  %v4067 = vrot.slane %v4065, 2
  %v4068 = vor.u32 %v4064, %v4067
  %v4069 = vsel %vm2728, %v4059, %v4068
  %v4071 = vshrl.u32 %v3417, 16
  %v4073 = vrot.slane %v4071, 1
  %v4074 = vshll.u32 %v3417, 16
  %v4076 = vrot.slane %v4074, 2
  %v4077 = vor.u32 %v4073, %v4076
  %v4078 = vsel %vm2728, %v4068, %v4077
  %v4080 = vshrl.u32 %v3418, 16
  %v4082 = vrot.slane %v4080, 1
  %v4083 = vshll.u32 %v3418, 16
  %v4085 = vrot.slane %v4083, 2
  %v4086 = vor.u32 %v4082, %v4085
  %v4087 = vsel %vm2728, %v4077, %v4086
  %v4089 = vshrl.u32 %v3419, 16
  %v4091 = vrot.slane %v4089, 1
  %v4092 = vshll.u32 %v3419, 16
  %v4094 = vrot.slane %v4092, 2
  %v4095 = vor.u32 %v4091, %v4094
  %v4096 = vsel %vm2728, %v4086, %v4095
  %v4098 = vshrl.u32 %v3818, 16
  %v4100 = vrot.slane %v4098, 1
  %v4101 = vshll.u32 %v3818, 16
  %v4103 = vrot.slane %v4101, 2
  %v4104 = vor.u32 %v4100, %v4103
  %v4105 = vsel %vm2728, %v4095, %v4104
  %v4107 = vsel %vm610, %v3835, 0
  %v4110 = vsel %vm610, %v3844, 0
  %v4113 = vsel %vm610, %v3853, 0
  %v4116 = vsel %vm610, %v3862, 0
  %v4119 = vsel %vm610, %v3871, 0
  %v4122 = vsel %vm610, %v3880, 0
  %v4125 = vsel %vm610, %v3889, 0
  %v4128 = vsel %vm610, %v3898, 0
  %v4131 = vsel %vm610, %v3907, 0
  %v4134 = vsel %vm610, %v3916, 0
  %v4137 = vsel %vm610, %v3925, 0
  %v4140 = vsel %vm610, %v3934, 0
  %v4143 = vsel %vm610, %v3943, 0
  %v4146 = vsel %vm610, %v3952, 0
  %v4149 = vsel %vm610, %v3961, 0
  %v4152 = vsel %vm610, %v3970, 0
  %v4155 = vsel %vm610, %v3979, 0
  %v4158 = vsel %vm610, %v3988, 0
  %v4161 = vsel %vm610, %v3997, 0
  %v4164 = vsel %vm610, %v4006, 0
  %v4167 = vsel %vm610, %v4015, 0
  %v4170 = vsel %vm610, %v4024, 0
  %v4173 = vsel %vm610, %v4033, 0
  %v4176 = vsel %vm610, %v4042, 0
  %v4179 = vsel %vm610, %v4051, 0
  %v4182 = vsel %vm610, %v4060, 0
  %v4185 = vsel %vm610, %v4069, 0
  %v4188 = vsel %vm610, %v4078, 0
  %v4191 = vsel %vm610, %v4087, 0
  %v4194 = vsel %vm610, %v4096, 0
  %v4197 = vsel %vm610, %v4105, 0
  %v4200 = vsel %vm610, %v4104, 0
  %v4203 = vsel %vm707, %v3815, 0
  %4205 = vmatpush.bf16.msra.mxu0 0
  %4206 = vmatpush.bf16.msra.mxu0 0
  %4207 = vmatpush.bf16.msra.mxu0 0
  %4208 = vmatpush.bf16.msra.mxu0 0
  %4209 = vmatpush.bf16.msra.mxu0 0
  %4210 = vmatpush.bf16.msra.mxu0 0
  %4211 = vmatpush.bf16.msra.mxu0 0
  %4212 = vmatpush.bf16.msra.mxu0 %v4203
  %4213 = vmatmul.bf16.gmra.mxu0 %v4107
  %v4214 = vpop.f32.mrf.mxu0
  %v4215 = vadd.f32 0.0, %v4214
  %v4216 = vpop.f32.mrf.mxu0
  %v4217 = vadd.f32 0.0, %v4216
  %4218 = vmatmul.bf16.gmra.mxu0 %v4110
  %v4219 = vpop.f32.mrf.mxu0
  %v4220 = vadd.f32 0.0, %v4219
  %v4221 = vpop.f32.mrf.mxu0
  %v4222 = vadd.f32 0.0, %v4221
  %4223 = vmatmul.bf16.gmra.mxu0 %v4113
  %v4224 = vpop.f32.mrf.mxu0
  %v4225 = vadd.f32 0.0, %v4224
  %v4226 = vpop.f32.mrf.mxu0
  %v4227 = vadd.f32 0.0, %v4226
  %4228 = vmatmul.bf16.gmra.mxu0 %v4116
  %v4229 = vpop.f32.mrf.mxu0
  %v4230 = vadd.f32 0.0, %v4229
  %v4231 = vpop.f32.mrf.mxu0
  %v4232 = vadd.f32 0.0, %v4231
  %4233 = vmatmul.bf16.gmra.mxu0 %v4119
  %v4234 = vpop.f32.mrf.mxu0
  %v4235 = vadd.f32 0.0, %v4234
  %v4236 = vpop.f32.mrf.mxu0
  %v4237 = vadd.f32 0.0, %v4236
  %4238 = vmatmul.bf16.gmra.mxu0 %v4122
  %v4239 = vpop.f32.mrf.mxu0
  %v4240 = vadd.f32 0.0, %v4239
  %v4241 = vpop.f32.mrf.mxu0
  %v4242 = vadd.f32 0.0, %v4241
  %4243 = vmatmul.bf16.gmra.mxu0 %v4125
  %v4244 = vpop.f32.mrf.mxu0
  %v4245 = vadd.f32 0.0, %v4244
  %v4246 = vpop.f32.mrf.mxu0
  %v4247 = vadd.f32 0.0, %v4246
  %4248 = vmatmul.bf16.gmra.mxu0 %v4128
  %v4249 = vpop.f32.mrf.mxu0
  %v4250 = vadd.f32 0.0, %v4249
  %v4251 = vpop.f32.mrf.mxu0
  %v4252 = vadd.f32 0.0, %v4251
  %4253 = vmatmul.bf16.gmra.mxu0 %v4131
  %v4254 = vpop.f32.mrf.mxu0
  %v4255 = vadd.f32 0.0, %v4254
  %v4256 = vpop.f32.mrf.mxu0
  %v4257 = vadd.f32 0.0, %v4256
  %4258 = vmatmul.bf16.gmra.mxu0 %v4134
  %v4259 = vpop.f32.mrf.mxu0
  %v4260 = vadd.f32 0.0, %v4259
  %v4261 = vpop.f32.mrf.mxu0
  %v4262 = vadd.f32 0.0, %v4261
  %4263 = vmatmul.bf16.gmra.mxu0 %v4137
  %v4264 = vpop.f32.mrf.mxu0
  %v4265 = vadd.f32 0.0, %v4264
  %v4266 = vpop.f32.mrf.mxu0
  %v4267 = vadd.f32 0.0, %v4266
  %4268 = vmatmul.bf16.gmra.mxu0 %v4140
  %v4269 = vpop.f32.mrf.mxu0
  %v4270 = vadd.f32 0.0, %v4269
  %v4271 = vpop.f32.mrf.mxu0
  %v4272 = vadd.f32 0.0, %v4271
  %4273 = vmatmul.bf16.gmra.mxu0 %v4143
  %v4274 = vpop.f32.mrf.mxu0
  %v4275 = vadd.f32 0.0, %v4274
  %v4276 = vpop.f32.mrf.mxu0
  %v4277 = vadd.f32 0.0, %v4276
  %4278 = vmatmul.bf16.gmra.mxu0 %v4146
  %v4279 = vpop.f32.mrf.mxu0
  %v4280 = vadd.f32 0.0, %v4279
  %v4281 = vpop.f32.mrf.mxu0
  %v4282 = vadd.f32 0.0, %v4281
  %4283 = vmatmul.bf16.gmra.mxu0 %v4149
  %v4284 = vpop.f32.mrf.mxu0
  %v4285 = vadd.f32 0.0, %v4284
  %v4286 = vpop.f32.mrf.mxu0
  %v4287 = vadd.f32 0.0, %v4286
  %4288 = vmatmul.bf16.gmra.mxu0 %v4152
  %v4289 = vpop.f32.mrf.mxu0
  %v4290 = vadd.f32 0.0, %v4289
  %v4291 = vpop.f32.mrf.mxu0
  %v4292 = vadd.f32 0.0, %v4291
  %4293 = vmatmul.bf16.gmra.mxu0 %v4155
  %v4294 = vpop.f32.mrf.mxu0
  %v4295 = vadd.f32 0.0, %v4294
  %v4296 = vpop.f32.mrf.mxu0
  %v4297 = vadd.f32 0.0, %v4296
  %4298 = vmatmul.bf16.gmra.mxu0 %v4158
  %v4299 = vpop.f32.mrf.mxu0
  %v4300 = vadd.f32 0.0, %v4299
  %v4301 = vpop.f32.mrf.mxu0
  %v4302 = vadd.f32 0.0, %v4301
  %4303 = vmatmul.bf16.gmra.mxu0 %v4161
  %v4304 = vpop.f32.mrf.mxu0
  %v4305 = vadd.f32 0.0, %v4304
  %v4306 = vpop.f32.mrf.mxu0
  %v4307 = vadd.f32 0.0, %v4306
  %4308 = vmatmul.bf16.gmra.mxu0 %v4164
  %v4309 = vpop.f32.mrf.mxu0
  %v4310 = vadd.f32 0.0, %v4309
  %v4311 = vpop.f32.mrf.mxu0
  %v4312 = vadd.f32 0.0, %v4311
  %4313 = vmatmul.bf16.gmra.mxu0 %v4167
  %v4314 = vpop.f32.mrf.mxu0
  %v4315 = vadd.f32 0.0, %v4314
  %v4316 = vpop.f32.mrf.mxu0
  %v4317 = vadd.f32 0.0, %v4316
  %4318 = vmatmul.bf16.gmra.mxu0 %v4170
  %v4319 = vpop.f32.mrf.mxu0
  %v4320 = vadd.f32 0.0, %v4319
  %v4321 = vpop.f32.mrf.mxu0
  %v4322 = vadd.f32 0.0, %v4321
  %4323 = vmatmul.bf16.gmra.mxu0 %v4173
  %v4324 = vpop.f32.mrf.mxu0
  %v4325 = vadd.f32 0.0, %v4324
  %v4326 = vpop.f32.mrf.mxu0
  %v4327 = vadd.f32 0.0, %v4326
  %4328 = vmatmul.bf16.gmra.mxu0 %v4176
  %v4329 = vpop.f32.mrf.mxu0
  %v4330 = vadd.f32 0.0, %v4329
  %v4331 = vpop.f32.mrf.mxu0
  %v4332 = vadd.f32 0.0, %v4331
  %4333 = vmatmul.bf16.gmra.mxu0 %v4179
  %v4334 = vpop.f32.mrf.mxu0
  %v4335 = vadd.f32 0.0, %v4334
  %v4336 = vpop.f32.mrf.mxu0
  %v4337 = vadd.f32 0.0, %v4336
  %4338 = vmatmul.bf16.gmra.mxu0 %v4182
  %v4339 = vpop.f32.mrf.mxu0
  %v4340 = vadd.f32 0.0, %v4339
  %v4341 = vpop.f32.mrf.mxu0
  %v4342 = vadd.f32 0.0, %v4341
  %4343 = vmatmul.bf16.gmra.mxu0 %v4185
  %v4344 = vpop.f32.mrf.mxu0
  %v4345 = vadd.f32 0.0, %v4344
  %v4346 = vpop.f32.mrf.mxu0
  %v4347 = vadd.f32 0.0, %v4346
  %4348 = vmatmul.bf16.gmra.mxu0 %v4188
  %v4349 = vpop.f32.mrf.mxu0
  %v4350 = vadd.f32 0.0, %v4349
  %v4351 = vpop.f32.mrf.mxu0
  %v4352 = vadd.f32 0.0, %v4351
  %4353 = vmatmul.bf16.gmra.mxu0 %v4191
  %v4354 = vpop.f32.mrf.mxu0
  %v4355 = vadd.f32 0.0, %v4354
  %v4356 = vpop.f32.mrf.mxu0
  %v4357 = vadd.f32 0.0, %v4356
  %4358 = vmatmul.bf16.gmra.mxu0 %v4194
  %v4359 = vpop.f32.mrf.mxu0
  %v4360 = vadd.f32 0.0, %v4359
  %v4361 = vpop.f32.mrf.mxu0
  %v4362 = vadd.f32 0.0, %v4361
  %4363 = vmatmul.bf16.gmra.mxu0 %v4197
  %v4364 = vpop.f32.mrf.mxu0
  %v4365 = vadd.f32 0.0, %v4364
  %v4366 = vpop.f32.mrf.mxu0
  %v4367 = vadd.f32 0.0, %v4366
  %4368 = vmatmul.bf16.gmra.mxu0 %v4200
  %v4369 = vpop.f32.mrf.mxu0
  %v4370 = vadd.f32 0.0, %v4369
  %v4371 = vpop.f32.mrf.mxu0
  %4372 = vdwg.mxu0
  %v4373 = vadd.f32 %v3751, %v4215
  %v4374 = vadd.f32 %v3752, %v4217
  %v4375 = vadd.f32 %v3753, %v4220
  %v4376 = vadd.f32 %v3754, %v4222
  %v4377 = vadd.f32 %v3755, %v4225
  %v4378 = vadd.f32 %v3756, %v4227
  %v4379 = vadd.f32 %v3757, %v4230
  %v4380 = vadd.f32 %v3758, %v4232
  %v4381 = vadd.f32 %v3759, %v4235
  %v4382 = vadd.f32 %v3760, %v4237
  %v4383 = vadd.f32 %v3761, %v4240
  %v4384 = vadd.f32 %v3762, %v4242
  %v4385 = vadd.f32 %v3763, %v4245
  %v4386 = vadd.f32 %v3764, %v4247
  %v4387 = vadd.f32 %v3765, %v4250
  %v4388 = vadd.f32 %v3766, %v4252
  %v4389 = vadd.f32 %v3767, %v4255
  %v4390 = vadd.f32 %v3768, %v4257
  %v4391 = vadd.f32 %v3769, %v4260
  %v4392 = vadd.f32 %v3770, %v4262
  %v4393 = vadd.f32 %v3771, %v4265
  %v4394 = vadd.f32 %v3772, %v4267
  %v4395 = vadd.f32 %v3773, %v4270
  %v4396 = vadd.f32 %v3774, %v4272
  %v4397 = vadd.f32 %v3775, %v4275
  %v4398 = vadd.f32 %v3776, %v4277
  %v4399 = vadd.f32 %v3777, %v4280
  %v4400 = vadd.f32 %v3778, %v4282
  %v4401 = vadd.f32 %v3779, %v4285
  %v4402 = vadd.f32 %v3780, %v4287
  %v4403 = vadd.f32 %v3781, %v4290
  %v4404 = vadd.f32 %v3782, %v4292
  %v4405 = vadd.f32 %v3783, %v4295
  %v4406 = vadd.f32 %v3784, %v4297
  %v4407 = vadd.f32 %v3785, %v4300
  %v4408 = vadd.f32 %v3786, %v4302
  %v4409 = vadd.f32 %v3787, %v4305
  %v4410 = vadd.f32 %v3788, %v4307
  %v4411 = vadd.f32 %v3789, %v4310
  %v4412 = vadd.f32 %v3790, %v4312
  %v4413 = vadd.f32 %v3791, %v4315
  %v4414 = vadd.f32 %v3792, %v4317
  %v4415 = vadd.f32 %v3793, %v4320
  %v4416 = vadd.f32 %v3794, %v4322
  %v4417 = vadd.f32 %v3795, %v4325
  %v4418 = vadd.f32 %v3796, %v4327
  %v4419 = vadd.f32 %v3797, %v4330
  %v4420 = vadd.f32 %v3798, %v4332
  %v4421 = vadd.f32 %v3799, %v4335
  %v4422 = vadd.f32 %v3800, %v4337
  %v4423 = vadd.f32 %v3801, %v4340
  %v4424 = vadd.f32 %v3802, %v4342
  %v4425 = vadd.f32 %v3803, %v4345
  %v4426 = vadd.f32 %v3804, %v4347
  %v4427 = vadd.f32 %v3805, %v4350
  %v4428 = vadd.f32 %v3806, %v4352
  %v4429 = vadd.f32 %v3807, %v4355
  %v4430 = vadd.f32 %v3808, %v4357
  %v4431 = vadd.f32 %v3809, %v4360
  %v4432 = vadd.f32 %v3810, %v4362
  %v4433 = vadd.f32 %v3811, %v4365
  %v4434 = vadd.f32 %v3812, %v4367
  %v4435 = vadd.f32 %v3813, %v4370
  %v4436 = vld [vmem:[#allocation2 + $0x8] sm:$0xc]
  %v4437 = vld [vmem:[%s1 + $0x20] sm:$0xf]
  %v4439 = vunpack.c.l.b16 %v4436
  %v4440 = vpack.c.b16 %v3326, %v4439
  %vm4441 = vcmask 1045504
  %v4442 = vrot.slane %v4440, 2
  %v4443 = vrot.slane %v3390, 2
  %v4444 = vsel %vm4441, %v4442, %v4443
  %v4445 = vrot.slane %v3391, 2
  %v4446 = vsel %vm4441, %v4443, %v4445
  %v4447 = vrot.slane %v3392, 2
  %v4448 = vsel %vm4441, %v4445, %v4447
  %v4449 = vrot.slane %v3393, 2
  %v4450 = vsel %vm4441, %v4447, %v4449
  %v4451 = vrot.slane %v3394, 2
  %v4452 = vsel %vm4441, %v4449, %v4451
  %v4453 = vrot.slane %v3395, 2
  %v4454 = vsel %vm4441, %v4451, %v4453
  %v4455 = vrot.slane %v3396, 2
  %v4456 = vsel %vm4441, %v4453, %v4455
  %v4457 = vrot.slane %v3397, 2
  %v4458 = vsel %vm4441, %v4455, %v4457
  %v4459 = vrot.slane %v3398, 2
  %v4460 = vsel %vm4441, %v4457, %v4459
  %v4461 = vrot.slane %v3399, 2
  %v4462 = vsel %vm4441, %v4459, %v4461
  %v4463 = vrot.slane %v3400, 2
  %v4464 = vsel %vm4441, %v4461, %v4463
  %v4465 = vrot.slane %v3401, 2
  %v4466 = vsel %vm4441, %v4463, %v4465
  %v4467 = vrot.slane %v3402, 2
  %v4468 = vsel %vm4441, %v4465, %v4467
  %v4469 = vrot.slane %v3403, 2
  %v4470 = vsel %vm4441, %v4467, %v4469
  %v4471 = vrot.slane %v3404, 2
  %v4472 = vsel %vm4441, %v4469, %v4471
  %v4473 = vrot.slane %v3405, 2
  %v4474 = vsel %vm4441, %v4471, %v4473
  %v4475 = vrot.slane %v3406, 2
  %v4476 = vsel %vm4441, %v4473, %v4475
  %v4477 = vrot.slane %v3407, 2
  %v4478 = vsel %vm4441, %v4475, %v4477
  %v4479 = vrot.slane %v3408, 2
  %v4480 = vsel %vm4441, %v4477, %v4479
  %v4481 = vrot.slane %v3409, 2
  %v4482 = vsel %vm4441, %v4479, %v4481
  %v4483 = vrot.slane %v3410, 2
  %v4484 = vsel %vm4441, %v4481, %v4483
  %v4485 = vrot.slane %v3411, 2
  %v4486 = vsel %vm4441, %v4483, %v4485
  %v4487 = vrot.slane %v3412, 2
  %v4488 = vsel %vm4441, %v4485, %v4487
  %v4489 = vrot.slane %v3413, 2
  %v4490 = vsel %vm4441, %v4487, %v4489
  %v4491 = vrot.slane %v3414, 2
  %v4492 = vsel %vm4441, %v4489, %v4491
  %v4493 = vrot.slane %v3415, 2
  %v4494 = vsel %vm4441, %v4491, %v4493
  %v4495 = vrot.slane %v3416, 2
  %v4496 = vsel %vm4441, %v4493, %v4495
  %v4497 = vrot.slane %v3417, 2
  %v4498 = vsel %vm4441, %v4495, %v4497
  %v4499 = vrot.slane %v3418, 2
  %v4500 = vsel %vm4441, %v4497, %v4499
  %v4501 = vrot.slane %v3419, 2
  %v4502 = vsel %vm4441, %v4499, %v4501
  %v4503 = vrot.slane %v3818, 2
  %v4504 = vsel %vm4441, %v4501, %v4503
  %v4506 = vsel %vm610, %v4444, 0
  %v4509 = vsel %vm610, %v4446, 0
  %v4512 = vsel %vm610, %v4448, 0
  %v4515 = vsel %vm610, %v4450, 0
  %v4518 = vsel %vm610, %v4452, 0
  %v4521 = vsel %vm610, %v4454, 0
  %v4524 = vsel %vm610, %v4456, 0
  %v4527 = vsel %vm610, %v4458, 0
  %v4530 = vsel %vm610, %v4460, 0
  %v4533 = vsel %vm610, %v4462, 0
  %v4536 = vsel %vm610, %v4464, 0
  %v4539 = vsel %vm610, %v4466, 0
  %v4542 = vsel %vm610, %v4468, 0
  %v4545 = vsel %vm610, %v4470, 0
  %v4548 = vsel %vm610, %v4472, 0
  %v4551 = vsel %vm610, %v4474, 0
  %v4554 = vsel %vm610, %v4476, 0
  %v4557 = vsel %vm610, %v4478, 0
  %v4560 = vsel %vm610, %v4480, 0
  %v4563 = vsel %vm610, %v4482, 0
  %v4566 = vsel %vm610, %v4484, 0
  %v4569 = vsel %vm610, %v4486, 0
  %v4572 = vsel %vm610, %v4488, 0
  %v4575 = vsel %vm610, %v4490, 0
  %v4578 = vsel %vm610, %v4492, 0
  %v4581 = vsel %vm610, %v4494, 0
  %v4584 = vsel %vm610, %v4496, 0
  %v4587 = vsel %vm610, %v4498, 0
  %v4590 = vsel %vm610, %v4500, 0
  %v4593 = vsel %vm610, %v4502, 0
  %v4596 = vsel %vm610, %v4504, 0
  %v4599 = vsel %vm610, %v4503, 0
  %v4602 = vsel %vm707, %v4437, 0
  %4604 = vmatpush.bf16.msra.mxu0 0
  %4605 = vmatpush.bf16.msra.mxu0 0
  %4606 = vmatpush.bf16.msra.mxu0 0
  %4607 = vmatpush.bf16.msra.mxu0 0
  %4608 = vmatpush.bf16.msra.mxu0 0
  %4609 = vmatpush.bf16.msra.mxu0 0
  %4610 = vmatpush.bf16.msra.mxu0 0
  %4611 = vmatpush.bf16.msra.mxu0 %v4602
  %4612 = vmatmul.bf16.gmra.mxu0 %v4506
  %v4613 = vpop.f32.mrf.mxu0
  %v4614 = vadd.f32 0.0, %v4613
  %v4615 = vpop.f32.mrf.mxu0
  %v4616 = vadd.f32 0.0, %v4615
  %4617 = vmatmul.bf16.gmra.mxu0 %v4509
  %v4618 = vpop.f32.mrf.mxu0
  %v4619 = vadd.f32 0.0, %v4618
  %v4620 = vpop.f32.mrf.mxu0
  %v4621 = vadd.f32 0.0, %v4620
  %4622 = vmatmul.bf16.gmra.mxu0 %v4512
  %v4623 = vpop.f32.mrf.mxu0
  %v4624 = vadd.f32 0.0, %v4623
  %v4625 = vpop.f32.mrf.mxu0
  %v4626 = vadd.f32 0.0, %v4625
  %4627 = vmatmul.bf16.gmra.mxu0 %v4515
  %v4628 = vpop.f32.mrf.mxu0
  %v4629 = vadd.f32 0.0, %v4628
  %v4630 = vpop.f32.mrf.mxu0
  %v4631 = vadd.f32 0.0, %v4630
  %4632 = vmatmul.bf16.gmra.mxu0 %v4518
  %v4633 = vpop.f32.mrf.mxu0
  %v4634 = vadd.f32 0.0, %v4633
  %v4635 = vpop.f32.mrf.mxu0
  %v4636 = vadd.f32 0.0, %v4635
  %4637 = vmatmul.bf16.gmra.mxu0 %v4521
  %v4638 = vpop.f32.mrf.mxu0
  %v4639 = vadd.f32 0.0, %v4638
  %v4640 = vpop.f32.mrf.mxu0
  %v4641 = vadd.f32 0.0, %v4640
  %4642 = vmatmul.bf16.gmra.mxu0 %v4524
  %v4643 = vpop.f32.mrf.mxu0
  %v4644 = vadd.f32 0.0, %v4643
  %v4645 = vpop.f32.mrf.mxu0
  %v4646 = vadd.f32 0.0, %v4645
  %4647 = vmatmul.bf16.gmra.mxu0 %v4527
  %v4648 = vpop.f32.mrf.mxu0
  %v4649 = vadd.f32 0.0, %v4648
  %v4650 = vpop.f32.mrf.mxu0
  %v4651 = vadd.f32 0.0, %v4650
  %4652 = vmatmul.bf16.gmra.mxu0 %v4530
  %v4653 = vpop.f32.mrf.mxu0
  %v4654 = vadd.f32 0.0, %v4653
  %v4655 = vpop.f32.mrf.mxu0
  %v4656 = vadd.f32 0.0, %v4655
  %4657 = vmatmul.bf16.gmra.mxu0 %v4533
  %v4658 = vpop.f32.mrf.mxu0
  %v4659 = vadd.f32 0.0, %v4658
  %v4660 = vpop.f32.mrf.mxu0
  %v4661 = vadd.f32 0.0, %v4660
  %4662 = vmatmul.bf16.gmra.mxu0 %v4536
  %v4663 = vpop.f32.mrf.mxu0
  %v4664 = vadd.f32 0.0, %v4663
  %v4665 = vpop.f32.mrf.mxu0
  %v4666 = vadd.f32 0.0, %v4665
  %4667 = vmatmul.bf16.gmra.mxu0 %v4539
  %v4668 = vpop.f32.mrf.mxu0
  %v4669 = vadd.f32 0.0, %v4668
  %v4670 = vpop.f32.mrf.mxu0
  %v4671 = vadd.f32 0.0, %v4670
  %4672 = vmatmul.bf16.gmra.mxu0 %v4542
  %v4673 = vpop.f32.mrf.mxu0
  %v4674 = vadd.f32 0.0, %v4673
  %v4675 = vpop.f32.mrf.mxu0
  %v4676 = vadd.f32 0.0, %v4675
  %4677 = vmatmul.bf16.gmra.mxu0 %v4545
  %v4678 = vpop.f32.mrf.mxu0
  %v4679 = vadd.f32 0.0, %v4678
  %v4680 = vpop.f32.mrf.mxu0
  %v4681 = vadd.f32 0.0, %v4680
  %4682 = vmatmul.bf16.gmra.mxu0 %v4548
  %v4683 = vpop.f32.mrf.mxu0
  %v4684 = vadd.f32 0.0, %v4683
  %v4685 = vpop.f32.mrf.mxu0
  %v4686 = vadd.f32 0.0, %v4685
  %4687 = vmatmul.bf16.gmra.mxu0 %v4551
  %v4688 = vpop.f32.mrf.mxu0
  %v4689 = vadd.f32 0.0, %v4688
  %v4690 = vpop.f32.mrf.mxu0
  %v4691 = vadd.f32 0.0, %v4690
  %4692 = vmatmul.bf16.gmra.mxu0 %v4554
  %v4693 = vpop.f32.mrf.mxu0
  %v4694 = vadd.f32 0.0, %v4693
  %v4695 = vpop.f32.mrf.mxu0
  %v4696 = vadd.f32 0.0, %v4695
  %4697 = vmatmul.bf16.gmra.mxu0 %v4557
  %v4698 = vpop.f32.mrf.mxu0
  %v4699 = vadd.f32 0.0, %v4698
  %v4700 = vpop.f32.mrf.mxu0
  %v4701 = vadd.f32 0.0, %v4700
  %4702 = vmatmul.bf16.gmra.mxu0 %v4560
  %v4703 = vpop.f32.mrf.mxu0
  %v4704 = vadd.f32 0.0, %v4703
  %v4705 = vpop.f32.mrf.mxu0
  %v4706 = vadd.f32 0.0, %v4705
  %4707 = vmatmul.bf16.gmra.mxu0 %v4563
  %v4708 = vpop.f32.mrf.mxu0
  %v4709 = vadd.f32 0.0, %v4708
  %v4710 = vpop.f32.mrf.mxu0
  %v4711 = vadd.f32 0.0, %v4710
  %4712 = vmatmul.bf16.gmra.mxu0 %v4566
  %v4713 = vpop.f32.mrf.mxu0
  %v4714 = vadd.f32 0.0, %v4713
  %v4715 = vpop.f32.mrf.mxu0
  %v4716 = vadd.f32 0.0, %v4715
  %4717 = vmatmul.bf16.gmra.mxu0 %v4569
  %v4718 = vpop.f32.mrf.mxu0
  %v4719 = vadd.f32 0.0, %v4718
  %v4720 = vpop.f32.mrf.mxu0
  %v4721 = vadd.f32 0.0, %v4720
  %4722 = vmatmul.bf16.gmra.mxu0 %v4572
  %v4723 = vpop.f32.mrf.mxu0
  %v4724 = vadd.f32 0.0, %v4723
  %v4725 = vpop.f32.mrf.mxu0
  %v4726 = vadd.f32 0.0, %v4725
  %4727 = vmatmul.bf16.gmra.mxu0 %v4575
  %v4728 = vpop.f32.mrf.mxu0
  %v4729 = vadd.f32 0.0, %v4728
  %v4730 = vpop.f32.mrf.mxu0
  %v4731 = vadd.f32 0.0, %v4730
  %4732 = vmatmul.bf16.gmra.mxu0 %v4578
  %v4733 = vpop.f32.mrf.mxu0
  %v4734 = vadd.f32 0.0, %v4733
  %v4735 = vpop.f32.mrf.mxu0
  %v4736 = vadd.f32 0.0, %v4735
  %4737 = vmatmul.bf16.gmra.mxu0 %v4581
  %v4738 = vpop.f32.mrf.mxu0
  %v4739 = vadd.f32 0.0, %v4738
  %v4740 = vpop.f32.mrf.mxu0
  %v4741 = vadd.f32 0.0, %v4740
  %4742 = vmatmul.bf16.gmra.mxu0 %v4584
  %v4743 = vpop.f32.mrf.mxu0
  %v4744 = vadd.f32 0.0, %v4743
  %v4745 = vpop.f32.mrf.mxu0
  %v4746 = vadd.f32 0.0, %v4745
  %4747 = vmatmul.bf16.gmra.mxu0 %v4587
  %v4748 = vpop.f32.mrf.mxu0
  %v4749 = vadd.f32 0.0, %v4748
  %v4750 = vpop.f32.mrf.mxu0
  %v4751 = vadd.f32 0.0, %v4750
  %4752 = vmatmul.bf16.gmra.mxu0 %v4590
  %v4753 = vpop.f32.mrf.mxu0
  %v4754 = vadd.f32 0.0, %v4753
  %v4755 = vpop.f32.mrf.mxu0
  %v4756 = vadd.f32 0.0, %v4755
  %4757 = vmatmul.bf16.gmra.mxu0 %v4593
  %v4758 = vpop.f32.mrf.mxu0
  %v4759 = vadd.f32 0.0, %v4758
  %v4760 = vpop.f32.mrf.mxu0
  %v4761 = vadd.f32 0.0, %v4760
  %4762 = vmatmul.bf16.gmra.mxu0 %v4596
  %v4763 = vpop.f32.mrf.mxu0
  %v4764 = vadd.f32 0.0, %v4763
  %v4765 = vpop.f32.mrf.mxu0
  %v4766 = vadd.f32 0.0, %v4765
  %4767 = vmatmul.bf16.gmra.mxu0 %v4599
  %v4768 = vpop.f32.mrf.mxu0
  %v4769 = vadd.f32 0.0, %v4768
  %v4770 = vpop.f32.mrf.mxu0
  %4771 = vdwg.mxu0
  %v4772 = vadd.f32 %v4373, %v4614
  %v4773 = vadd.f32 %v4374, %v4616
  %v4774 = vadd.f32 %v4375, %v4619
  %v4775 = vadd.f32 %v4376, %v4621
  %v4776 = vadd.f32 %v4377, %v4624
  %v4777 = vadd.f32 %v4378, %v4626
  %v4778 = vadd.f32 %v4379, %v4629
  %v4779 = vadd.f32 %v4380, %v4631
  %v4780 = vadd.f32 %v4381, %v4634
  %v4781 = vadd.f32 %v4382, %v4636
  %v4782 = vadd.f32 %v4383, %v4639
  %v4783 = vadd.f32 %v4384, %v4641
  %v4784 = vadd.f32 %v4385, %v4644
  %v4785 = vadd.f32 %v4386, %v4646
  %v4786 = vadd.f32 %v4387, %v4649
  %v4787 = vadd.f32 %v4388, %v4651
  %v4788 = vadd.f32 %v4389, %v4654
  %v4789 = vadd.f32 %v4390, %v4656
  %v4790 = vadd.f32 %v4391, %v4659
  %v4791 = vadd.f32 %v4392, %v4661
  %v4792 = vadd.f32 %v4393, %v4664
  %v4793 = vadd.f32 %v4394, %v4666
  %v4794 = vadd.f32 %v4395, %v4669
  %v4795 = vadd.f32 %v4396, %v4671
  %v4796 = vadd.f32 %v4397, %v4674
  %v4797 = vadd.f32 %v4398, %v4676
  %v4798 = vadd.f32 %v4399, %v4679
  %v4799 = vadd.f32 %v4400, %v4681
  %v4800 = vadd.f32 %v4401, %v4684
  %v4801 = vadd.f32 %v4402, %v4686
  %v4802 = vadd.f32 %v4403, %v4689
  %v4803 = vadd.f32 %v4404, %v4691
  %v4804 = vadd.f32 %v4405, %v4694
  %v4805 = vadd.f32 %v4406, %v4696
  %v4806 = vadd.f32 %v4407, %v4699
  %v4807 = vadd.f32 %v4408, %v4701
  %v4808 = vadd.f32 %v4409, %v4704
  %v4809 = vadd.f32 %v4410, %v4706
  %v4810 = vadd.f32 %v4411, %v4709
  %v4811 = vadd.f32 %v4412, %v4711
  %v4812 = vadd.f32 %v4413, %v4714
  %v4813 = vadd.f32 %v4414, %v4716
  %v4814 = vadd.f32 %v4415, %v4719
  %v4815 = vadd.f32 %v4416, %v4721
  %v4816 = vadd.f32 %v4417, %v4724
  %v4817 = vadd.f32 %v4418, %v4726
  %v4818 = vadd.f32 %v4419, %v4729
  %v4819 = vadd.f32 %v4420, %v4731
  %v4820 = vadd.f32 %v4421, %v4734
  %v4821 = vadd.f32 %v4422, %v4736
  %v4822 = vadd.f32 %v4423, %v4739
  %v4823 = vadd.f32 %v4424, %v4741
  %v4824 = vadd.f32 %v4425, %v4744
  %v4825 = vadd.f32 %v4426, %v4746
  %v4826 = vadd.f32 %v4427, %v4749
  %v4827 = vadd.f32 %v4428, %v4751
  %v4828 = vadd.f32 %v4429, %v4754
  %v4829 = vadd.f32 %v4430, %v4756
  %v4830 = vadd.f32 %v4431, %v4759
  %v4831 = vadd.f32 %v4432, %v4761
  %v4832 = vadd.f32 %v4433, %v4764
  %v4833 = vadd.f32 %v4434, %v4766
  %v4834 = vadd.f32 %v4435, %v4769
  %v4835 = vld [vmem:[#allocation2 + $0x24] sm:$0xf]
  %v4836 = vld [vmem:[#allocation2 + $0x28] sm:$0xf]
  %v4837 = vld [vmem:[#allocation2 + $0x2c] sm:$0xf]
  %v4838 = vld [vmem:[#allocation2 + $0x30] sm:$0xf]
  %v4839 = vld [vmem:[#allocation2 + $0x34] sm:$0xf]
  %v4840 = vld [vmem:[#allocation2 + $0x38] sm:$0xf]
  %v4841 = vld [vmem:[#allocation2 + $0x3c] sm:$0xf]
  %v4842 = vld [vmem:[#allocation2 + $0x40] sm:$0xf]
  %v4843 = vld [vmem:[#allocation2 + $0x44] sm:$0xf]
  %v4844 = vld [vmem:[#allocation2 + $0x48] sm:$0xf]
  %v4845 = vld [vmem:[#allocation2 + $0x4c] sm:$0xf]
  %v4846 = vld [vmem:[#allocation2 + $0x50] sm:$0xf]
  %v4847 = vld [vmem:[#allocation2 + $0x54] sm:$0xf]
  %v4848 = vld [vmem:[#allocation2 + $0x58] sm:$0xf]
  %v4849 = vld [vmem:[#allocation2 + $0x5c] sm:$0xf]
  %v4850 = vld [vmem:[#allocation2 + $0x60] sm:$0xf]
  %v4851 = vld [vmem:[#allocation2 + $0x64] sm:$0xf]
  %v4852 = vld [vmem:[#allocation2 + $0x68] sm:$0xf]
  %v4853 = vld [vmem:[#allocation2 + $0x6c] sm:$0xf]
  %v4854 = vld [vmem:[#allocation2 + $0x70] sm:$0xf]
  %v4855 = vld [vmem:[#allocation2 + $0x74] sm:$0xf]
  %v4856 = vld [vmem:[#allocation2 + $0x78] sm:$0xf]
  %v4857 = vld [vmem:[#allocation2 + $0x7c] sm:$0xf]
  %v4858 = vld [vmem:[#allocation2 + $0x80] sm:$0xf]
  %v4859 = vld [vmem:[#allocation2 + $0x84] sm:$0xf]
  %v4860 = vld [vmem:[#allocation2 + $0x88] sm:$0xf]
  %v4861 = vld [vmem:[#allocation2 + $0x8c] sm:$0xf]
  %v4862 = vld [vmem:[#allocation2 + $0x90] sm:$0xf]
  %v4863 = vld [vmem:[#allocation2 + $0x94] sm:$0xf]
  %v4864 = vld [vmem:[#allocation2 + $0x98] sm:$0xf]
  %v4865 = vld [vmem:[#allocation2 + $0x9c] sm:$0xf]
  %v4866 = vld [vmem:[#allocation2 + $0xa0] sm:$0xf]
  %v4867 = vld [vmem:[#allocation2 + $0xa4] sm:$0xf]
  %v4868 = vld [vmem:[#allocation2 + $0xa8] sm:$0xf]
  %v4869 = vld [vmem:[#allocation2 + $0xac] sm:$0xf]
  %v4870 = vld [vmem:[#allocation2 + $0xb0] sm:$0xf]
  %v4871 = vld [vmem:[#allocation2 + $0xb4] sm:$0xf]
  %v4872 = vld [vmem:[#allocation2 + $0xb8] sm:$0xf]
  %v4873 = vld [vmem:[#allocation2 + $0xbc] sm:$0xf]
  %v4874 = vld [vmem:[#allocation2 + $0xc0] sm:$0xf]
  %v4875 = vld [vmem:[#allocation2 + $0xc4] sm:$0xf]
  %v4876 = vld [vmem:[#allocation2 + $0xc8] sm:$0xf]
  %v4877 = vld [vmem:[#allocation2 + $0xcc] sm:$0xf]
  %v4878 = vld [vmem:[#allocation2 + $0xd0] sm:$0xf]
  %v4879 = vld [vmem:[#allocation2 + $0xd4] sm:$0xf]
  %v4880 = vld [vmem:[#allocation2 + $0xd8] sm:$0xf]
  %v4881 = vld [vmem:[#allocation2 + $0xdc] sm:$0xf]
  %v4882 = vld [vmem:[#allocation2 + $0xe0] sm:$0xf]
  %v4883 = vld [vmem:[#allocation2 + $0xe4] sm:$0xf]
  %v4884 = vld [vmem:[#allocation2 + $0xe8] sm:$0xf]
  %v4885 = vld [vmem:[#allocation2 + $0xec] sm:$0xf]
  %v4886 = vld [vmem:[#allocation2 + $0xf0] sm:$0xf]
  %v4887 = vld [vmem:[#allocation2 + $0xf4] sm:$0xf]
  %v4888 = vld [vmem:[#allocation2 + $0xf8] sm:$0xf]
  %v4889 = vld [vmem:[#allocation2 + $0xfc] sm:$0xf]
  %v4890 = vld [vmem:[#allocation2 + $0x100] sm:$0xf]
  %v4891 = vld [vmem:[#allocation2 + $0x104] sm:$0xf]
  %v4892 = vld [vmem:[#allocation2 + $0x108] sm:$0xf]
  %v4893 = vld [vmem:[#allocation2 + $0x10c] sm:$0xf]
  %v4894 = vld [vmem:[#allocation2 + $0x110] sm:$0xf]
  %v4895 = vld [vmem:[#allocation2 + $0x114] sm:$0xf]
  %v4896 = vld [vmem:[#allocation2 + $0x118] sm:$0xf]
  %v4897 = vld [vmem:[#allocation2 + $0x11c] sm:$0xf]
  %v4898 = vld [vmem:[%s1 + $0x24] sm:$0xf]
  %v4962 = vunpack.c.l.b16 %v4835
  %v4963 = vunpack.c.l.b16 %v4836
  %v4964 = vunpack.c.l.b16 %v4837
  %v4965 = vunpack.c.l.b16 %v4838
  %v4966 = vunpack.c.l.b16 %v4839
  %v4967 = vunpack.c.l.b16 %v4840
  %v4968 = vunpack.c.l.b16 %v4841
  %v4969 = vunpack.c.l.b16 %v4842
  %v4970 = vunpack.c.l.b16 %v4843
  %v4971 = vunpack.c.l.b16 %v4844
  %v4972 = vunpack.c.l.b16 %v4845
  %v4973 = vunpack.c.l.b16 %v4846
  %v4974 = vunpack.c.l.b16 %v4847
  %v4975 = vunpack.c.l.b16 %v4848
  %v4976 = vunpack.c.l.b16 %v4849
  %v4977 = vunpack.c.l.b16 %v4850
  %v4978 = vunpack.c.l.b16 %v4851
  %v4979 = vunpack.c.l.b16 %v4852
  %v4980 = vunpack.c.l.b16 %v4853
  %v4981 = vunpack.c.l.b16 %v4854
  %v4982 = vunpack.c.l.b16 %v4855
  %v4983 = vunpack.c.l.b16 %v4856
  %v4984 = vunpack.c.l.b16 %v4857
  %v4985 = vunpack.c.l.b16 %v4858
  %v4986 = vunpack.c.l.b16 %v4859
  %v4987 = vunpack.c.l.b16 %v4860
  %v4988 = vunpack.c.l.b16 %v4861
  %v4989 = vunpack.c.l.b16 %v4862
  %v4990 = vunpack.c.l.b16 %v4863
  %v4991 = vunpack.c.l.b16 %v4864
  %v4992 = vunpack.c.l.b16 %v4865
  %v4993 = vunpack.c.l.b16 %v4866
  %v4994 = vunpack.c.l.b16 %v4867
  %v4995 = vunpack.c.l.b16 %v4868
  %v4996 = vunpack.c.l.b16 %v4869
  %v4997 = vunpack.c.l.b16 %v4870
  %v4998 = vunpack.c.l.b16 %v4871
  %v4999 = vunpack.c.l.b16 %v4872
  %v5000 = vunpack.c.l.b16 %v4873
  %v5001 = vunpack.c.l.b16 %v4874
  %v5002 = vunpack.c.l.b16 %v4875
  %v5003 = vunpack.c.l.b16 %v4876
  %v5004 = vunpack.c.l.b16 %v4877
  %v5005 = vunpack.c.l.b16 %v4878
  %v5006 = vunpack.c.l.b16 %v4879
  %v5007 = vunpack.c.l.b16 %v4880
  %v5008 = vunpack.c.l.b16 %v4881
  %v5009 = vunpack.c.l.b16 %v4882
  %v5010 = vunpack.c.l.b16 %v4883
  %v5011 = vunpack.c.l.b16 %v4884
  %v5012 = vunpack.c.l.b16 %v4885
  %v5013 = vunpack.c.l.b16 %v4886
  %v5014 = vunpack.c.l.b16 %v4887
  %v5015 = vunpack.c.l.b16 %v4888
  %v5016 = vunpack.c.l.b16 %v4889
  %v5017 = vunpack.c.l.b16 %v4890
  %v5018 = vunpack.c.l.b16 %v4891
  %v5019 = vunpack.c.l.b16 %v4892
  %v5020 = vunpack.c.l.b16 %v4893
  %v5021 = vunpack.c.l.b16 %v4894
  %v5022 = vunpack.c.l.b16 %v4895
  %v5023 = vunpack.c.l.b16 %v4896
  %v5024 = vunpack.c.l.b16 %v4897
  %v5025 = vpack.c.b16 %v4963, %v4962
  %v5026 = vpack.c.b16 %v4965, %v4964
  %v5027 = vpack.c.b16 %v4967, %v4966
  %v5028 = vpack.c.b16 %v4969, %v4968
  %v5029 = vpack.c.b16 %v4971, %v4970
  %v5030 = vpack.c.b16 %v4973, %v4972
  %v5031 = vpack.c.b16 %v4975, %v4974
  %v5032 = vpack.c.b16 %v4977, %v4976
  %v5033 = vpack.c.b16 %v4979, %v4978
  %v5034 = vpack.c.b16 %v4981, %v4980
  %v5035 = vpack.c.b16 %v4983, %v4982
  %v5036 = vpack.c.b16 %v4985, %v4984
  %v5037 = vpack.c.b16 %v4987, %v4986
  %v5038 = vpack.c.b16 %v4989, %v4988
  %v5039 = vpack.c.b16 %v4991, %v4990
  %v5040 = vpack.c.b16 %v4993, %v4992
  %v5041 = vpack.c.b16 %v4995, %v4994
  %v5042 = vpack.c.b16 %v4997, %v4996
  %v5043 = vpack.c.b16 %v4999, %v4998
  %v5044 = vpack.c.b16 %v5001, %v5000
  %v5045 = vpack.c.b16 %v5003, %v5002
  %v5046 = vpack.c.b16 %v5005, %v5004
  %v5047 = vpack.c.b16 %v5007, %v5006
  %v5048 = vpack.c.b16 %v5009, %v5008
  %v5049 = vpack.c.b16 %v5011, %v5010
  %v5050 = vpack.c.b16 %v5013, %v5012
  %v5051 = vpack.c.b16 %v5015, %v5014
  %v5052 = vpack.c.b16 %v5017, %v5016
  %v5053 = vpack.c.b16 %v5019, %v5018
  %v5054 = vpack.c.b16 %v5021, %v5020
  %v5055 = vpack.c.b16 %v5023, %v5022
  %v5056 = vpack.c.b16 %v5024, %v5024
  %v5058 = vsel %vm610, %v5025, 0
  %v5061 = vsel %vm610, %v5026, 0
  %v5064 = vsel %vm610, %v5027, 0
  %v5067 = vsel %vm610, %v5028, 0
  %v5070 = vsel %vm610, %v5029, 0
  %v5073 = vsel %vm610, %v5030, 0
  %v5076 = vsel %vm610, %v5031, 0
  %v5079 = vsel %vm610, %v5032, 0
  %v5082 = vsel %vm610, %v5033, 0
  %v5085 = vsel %vm610, %v5034, 0
  %v5088 = vsel %vm610, %v5035, 0
  %v5091 = vsel %vm610, %v5036, 0
  %v5094 = vsel %vm610, %v5037, 0
  %v5097 = vsel %vm610, %v5038, 0
  %v5100 = vsel %vm610, %v5039, 0
  %v5103 = vsel %vm610, %v5040, 0
  %v5106 = vsel %vm610, %v5041, 0
  %v5109 = vsel %vm610, %v5042, 0
  %v5112 = vsel %vm610, %v5043, 0
  %v5115 = vsel %vm610, %v5044, 0
  %v5118 = vsel %vm610, %v5045, 0
  %v5121 = vsel %vm610, %v5046, 0
  %v5124 = vsel %vm610, %v5047, 0
  %v5127 = vsel %vm610, %v5048, 0
  %v5130 = vsel %vm610, %v5049, 0
  %v5133 = vsel %vm610, %v5050, 0
  %v5136 = vsel %vm610, %v5051, 0
  %v5139 = vsel %vm610, %v5052, 0
  %v5142 = vsel %vm610, %v5053, 0
  %v5145 = vsel %vm610, %v5054, 0
  %v5148 = vsel %vm610, %v5055, 0
  %v5151 = vsel %vm610, %v5056, 0
  %v5154 = vsel %vm707, %v4898, 0
  %5156 = vmatpush.bf16.msra.mxu0 0
  %5157 = vmatpush.bf16.msra.mxu0 0
  %5158 = vmatpush.bf16.msra.mxu0 0
  %5159 = vmatpush.bf16.msra.mxu0 0
  %5160 = vmatpush.bf16.msra.mxu0 0
  %5161 = vmatpush.bf16.msra.mxu0 0
  %5162 = vmatpush.bf16.msra.mxu0 0
  %5163 = vmatpush.bf16.msra.mxu0 %v5154
  %5164 = vmatmul.bf16.gmra.mxu0 %v5058
  %v5165 = vpop.f32.mrf.mxu0
  %v5166 = vadd.f32 0.0, %v5165
  %v5167 = vpop.f32.mrf.mxu0
  %v5168 = vadd.f32 0.0, %v5167
  %5169 = vmatmul.bf16.gmra.mxu0 %v5061
  %v5170 = vpop.f32.mrf.mxu0
  %v5171 = vadd.f32 0.0, %v5170
  %v5172 = vpop.f32.mrf.mxu0
  %v5173 = vadd.f32 0.0, %v5172
  %5174 = vmatmul.bf16.gmra.mxu0 %v5064
  %v5175 = vpop.f32.mrf.mxu0
  %v5176 = vadd.f32 0.0, %v5175
  %v5177 = vpop.f32.mrf.mxu0
  %v5178 = vadd.f32 0.0, %v5177
  %5179 = vmatmul.bf16.gmra.mxu0 %v5067
  %v5180 = vpop.f32.mrf.mxu0
  %v5181 = vadd.f32 0.0, %v5180
  %v5182 = vpop.f32.mrf.mxu0
  %v5183 = vadd.f32 0.0, %v5182
  %5184 = vmatmul.bf16.gmra.mxu0 %v5070
  %v5185 = vpop.f32.mrf.mxu0
  %v5186 = vadd.f32 0.0, %v5185
  %v5187 = vpop.f32.mrf.mxu0
  %v5188 = vadd.f32 0.0, %v5187
  %5189 = vmatmul.bf16.gmra.mxu0 %v5073
  %v5190 = vpop.f32.mrf.mxu0
  %v5191 = vadd.f32 0.0, %v5190
  %v5192 = vpop.f32.mrf.mxu0
  %v5193 = vadd.f32 0.0, %v5192
  %5194 = vmatmul.bf16.gmra.mxu0 %v5076
  %v5195 = vpop.f32.mrf.mxu0
  %v5196 = vadd.f32 0.0, %v5195
  %v5197 = vpop.f32.mrf.mxu0
  %v5198 = vadd.f32 0.0, %v5197
  %5199 = vmatmul.bf16.gmra.mxu0 %v5079
  %v5200 = vpop.f32.mrf.mxu0
  %v5201 = vadd.f32 0.0, %v5200
  %v5202 = vpop.f32.mrf.mxu0
  %v5203 = vadd.f32 0.0, %v5202
  %5204 = vmatmul.bf16.gmra.mxu0 %v5082
  %v5205 = vpop.f32.mrf.mxu0
  %v5206 = vadd.f32 0.0, %v5205
  %v5207 = vpop.f32.mrf.mxu0
  %v5208 = vadd.f32 0.0, %v5207
  %5209 = vmatmul.bf16.gmra.mxu0 %v5085
  %v5210 = vpop.f32.mrf.mxu0
  %v5211 = vadd.f32 0.0, %v5210
  %v5212 = vpop.f32.mrf.mxu0
  %v5213 = vadd.f32 0.0, %v5212
  %5214 = vmatmul.bf16.gmra.mxu0 %v5088
  %v5215 = vpop.f32.mrf.mxu0
  %v5216 = vadd.f32 0.0, %v5215
  %v5217 = vpop.f32.mrf.mxu0
  %v5218 = vadd.f32 0.0, %v5217
  %5219 = vmatmul.bf16.gmra.mxu0 %v5091
  %v5220 = vpop.f32.mrf.mxu0
  %v5221 = vadd.f32 0.0, %v5220
  %v5222 = vpop.f32.mrf.mxu0
  %v5223 = vadd.f32 0.0, %v5222
  %5224 = vmatmul.bf16.gmra.mxu0 %v5094
  %v5225 = vpop.f32.mrf.mxu0
  %v5226 = vadd.f32 0.0, %v5225
  %v5227 = vpop.f32.mrf.mxu0
  %v5228 = vadd.f32 0.0, %v5227
  %5229 = vmatmul.bf16.gmra.mxu0 %v5097
  %v5230 = vpop.f32.mrf.mxu0
  %v5231 = vadd.f32 0.0, %v5230
  %v5232 = vpop.f32.mrf.mxu0
  %v5233 = vadd.f32 0.0, %v5232
  %5234 = vmatmul.bf16.gmra.mxu0 %v5100
  %v5235 = vpop.f32.mrf.mxu0
  %v5236 = vadd.f32 0.0, %v5235
  %v5237 = vpop.f32.mrf.mxu0
  %v5238 = vadd.f32 0.0, %v5237
  %5239 = vmatmul.bf16.gmra.mxu0 %v5103
  %v5240 = vpop.f32.mrf.mxu0
  %v5241 = vadd.f32 0.0, %v5240
  %v5242 = vpop.f32.mrf.mxu0
  %v5243 = vadd.f32 0.0, %v5242
  %5244 = vmatmul.bf16.gmra.mxu0 %v5106
  %v5245 = vpop.f32.mrf.mxu0
  %v5246 = vadd.f32 0.0, %v5245
  %v5247 = vpop.f32.mrf.mxu0
  %v5248 = vadd.f32 0.0, %v5247
  %5249 = vmatmul.bf16.gmra.mxu0 %v5109
  %v5250 = vpop.f32.mrf.mxu0
  %v5251 = vadd.f32 0.0, %v5250
  %v5252 = vpop.f32.mrf.mxu0
  %v5253 = vadd.f32 0.0, %v5252
  %5254 = vmatmul.bf16.gmra.mxu0 %v5112
  %v5255 = vpop.f32.mrf.mxu0
  %v5256 = vadd.f32 0.0, %v5255
  %v5257 = vpop.f32.mrf.mxu0
  %v5258 = vadd.f32 0.0, %v5257
  %5259 = vmatmul.bf16.gmra.mxu0 %v5115
  %v5260 = vpop.f32.mrf.mxu0
  %v5261 = vadd.f32 0.0, %v5260
  %v5262 = vpop.f32.mrf.mxu0
  %v5263 = vadd.f32 0.0, %v5262
  %5264 = vmatmul.bf16.gmra.mxu0 %v5118
  %v5265 = vpop.f32.mrf.mxu0
  %v5266 = vadd.f32 0.0, %v5265
  %v5267 = vpop.f32.mrf.mxu0
  %v5268 = vadd.f32 0.0, %v5267
  %5269 = vmatmul.bf16.gmra.mxu0 %v5121
  %v5270 = vpop.f32.mrf.mxu0
  %v5271 = vadd.f32 0.0, %v5270
  %v5272 = vpop.f32.mrf.mxu0
  %v5273 = vadd.f32 0.0, %v5272
  %5274 = vmatmul.bf16.gmra.mxu0 %v5124
  %v5275 = vpop.f32.mrf.mxu0
  %v5276 = vadd.f32 0.0, %v5275
  %v5277 = vpop.f32.mrf.mxu0
  %v5278 = vadd.f32 0.0, %v5277
  %5279 = vmatmul.bf16.gmra.mxu0 %v5127
  %v5280 = vpop.f32.mrf.mxu0
  %v5281 = vadd.f32 0.0, %v5280
  %v5282 = vpop.f32.mrf.mxu0
  %v5283 = vadd.f32 0.0, %v5282
  %5284 = vmatmul.bf16.gmra.mxu0 %v5130
  %v5285 = vpop.f32.mrf.mxu0
  %v5286 = vadd.f32 0.0, %v5285
  %v5287 = vpop.f32.mrf.mxu0
  %v5288 = vadd.f32 0.0, %v5287
  %5289 = vmatmul.bf16.gmra.mxu0 %v5133
  %v5290 = vpop.f32.mrf.mxu0
  %v5291 = vadd.f32 0.0, %v5290
  %v5292 = vpop.f32.mrf.mxu0
  %v5293 = vadd.f32 0.0, %v5292
  %5294 = vmatmul.bf16.gmra.mxu0 %v5136
  %v5295 = vpop.f32.mrf.mxu0
  %v5296 = vadd.f32 0.0, %v5295
  %v5297 = vpop.f32.mrf.mxu0
  %v5298 = vadd.f32 0.0, %v5297
  %5299 = vmatmul.bf16.gmra.mxu0 %v5139
  %v5300 = vpop.f32.mrf.mxu0
  %v5301 = vadd.f32 0.0, %v5300
  %v5302 = vpop.f32.mrf.mxu0
  %v5303 = vadd.f32 0.0, %v5302
  %5304 = vmatmul.bf16.gmra.mxu0 %v5142
  %v5305 = vpop.f32.mrf.mxu0
  %v5306 = vadd.f32 0.0, %v5305
  %v5307 = vpop.f32.mrf.mxu0
  %v5308 = vadd.f32 0.0, %v5307
  %5309 = vmatmul.bf16.gmra.mxu0 %v5145
  %v5310 = vpop.f32.mrf.mxu0
  %v5311 = vadd.f32 0.0, %v5310
  %v5312 = vpop.f32.mrf.mxu0
  %v5313 = vadd.f32 0.0, %v5312
  %5314 = vmatmul.bf16.gmra.mxu0 %v5148
  %v5315 = vpop.f32.mrf.mxu0
  %v5316 = vadd.f32 0.0, %v5315
  %v5317 = vpop.f32.mrf.mxu0
  %v5318 = vadd.f32 0.0, %v5317
  %5319 = vmatmul.bf16.gmra.mxu0 %v5151
  %v5320 = vpop.f32.mrf.mxu0
  %v5321 = vadd.f32 0.0, %v5320
  %v5322 = vpop.f32.mrf.mxu0
  %5323 = vdwg.mxu0
  %v5324 = vadd.f32 %v4772, %v5166
  %v5325 = vadd.f32 %v4773, %v5168
  %v5326 = vadd.f32 %v4774, %v5171
  %v5327 = vadd.f32 %v4775, %v5173
  %v5328 = vadd.f32 %v4776, %v5176
  %v5329 = vadd.f32 %v4777, %v5178
  %v5330 = vadd.f32 %v4778, %v5181
  %v5331 = vadd.f32 %v4779, %v5183
  %v5332 = vadd.f32 %v4780, %v5186
  %v5333 = vadd.f32 %v4781, %v5188
  %v5334 = vadd.f32 %v4782, %v5191
  %v5335 = vadd.f32 %v4783, %v5193
  %v5336 = vadd.f32 %v4784, %v5196
  %v5337 = vadd.f32 %v4785, %v5198
  %v5338 = vadd.f32 %v4786, %v5201
  %v5339 = vadd.f32 %v4787, %v5203
  %v5340 = vadd.f32 %v4788, %v5206
  %v5341 = vadd.f32 %v4789, %v5208
  %v5342 = vadd.f32 %v4790, %v5211
  %v5343 = vadd.f32 %v4791, %v5213
  %v5344 = vadd.f32 %v4792, %v5216
  %v5345 = vadd.f32 %v4793, %v5218
  %v5346 = vadd.f32 %v4794, %v5221
  %v5347 = vadd.f32 %v4795, %v5223
  %v5348 = vadd.f32 %v4796, %v5226
  %v5349 = vadd.f32 %v4797, %v5228
  %v5350 = vadd.f32 %v4798, %v5231
  %v5351 = vadd.f32 %v4799, %v5233
  %v5352 = vadd.f32 %v4800, %v5236
  %v5353 = vadd.f32 %v4801, %v5238
  %v5354 = vadd.f32 %v4802, %v5241
  %v5355 = vadd.f32 %v4803, %v5243
  %v5356 = vadd.f32 %v4804, %v5246
  %v5357 = vadd.f32 %v4805, %v5248
  %v5358 = vadd.f32 %v4806, %v5251
  %v5359 = vadd.f32 %v4807, %v5253
  %v5360 = vadd.f32 %v4808, %v5256
  %v5361 = vadd.f32 %v4809, %v5258
  %v5362 = vadd.f32 %v4810, %v5261
  %v5363 = vadd.f32 %v4811, %v5263
  %v5364 = vadd.f32 %v4812, %v5266
  %v5365 = vadd.f32 %v4813, %v5268
  %v5366 = vadd.f32 %v4814, %v5271
  %v5367 = vadd.f32 %v4815, %v5273
  %v5368 = vadd.f32 %v4816, %v5276
  %v5369 = vadd.f32 %v4817, %v5278
  %v5370 = vadd.f32 %v4818, %v5281
  %v5371 = vadd.f32 %v4819, %v5283
  %v5372 = vadd.f32 %v4820, %v5286
  %v5373 = vadd.f32 %v4821, %v5288
  %v5374 = vadd.f32 %v4822, %v5291
  %v5375 = vadd.f32 %v4823, %v5293
  %v5376 = vadd.f32 %v4824, %v5296
  %v5377 = vadd.f32 %v4825, %v5298
  %v5378 = vadd.f32 %v4826, %v5301
  %v5379 = vadd.f32 %v4827, %v5303
  %v5380 = vadd.f32 %v4828, %v5306
  %v5381 = vadd.f32 %v4829, %v5308
  %v5382 = vadd.f32 %v4830, %v5311
  %v5383 = vadd.f32 %v4831, %v5313
  %v5384 = vadd.f32 %v4832, %v5316
  %v5385 = vadd.f32 %v4833, %v5318
  %v5386 = vadd.f32 %v4834, %v5321
  %v5387 = vld [vmem:[#allocation2 + $0x24] sm:$0xf]
  %v5388 = vld [vmem:[#allocation2 + $0x28] sm:$0xf]
  %v5389 = vld [vmem:[#allocation2 + $0x2c] sm:$0xf]
  %v5390 = vld [vmem:[#allocation2 + $0x30] sm:$0xf]
  %v5391 = vld [vmem:[#allocation2 + $0x34] sm:$0xf]
  %v5392 = vld [vmem:[#allocation2 + $0x38] sm:$0xf]
  %v5393 = vld [vmem:[#allocation2 + $0x3c] sm:$0xf]
  %v5394 = vld [vmem:[#allocation2 + $0x40] sm:$0xf]
  %v5395 = vld [vmem:[#allocation2 + $0x44] sm:$0xf]
  %v5396 = vld [vmem:[#allocation2 + $0x48] sm:$0xf]
  %v5397 = vld [vmem:[#allocation2 + $0x4c] sm:$0xf]
  %v5398 = vld [vmem:[#allocation2 + $0x50] sm:$0xf]
  %v5399 = vld [vmem:[#allocation2 + $0x54] sm:$0xf]
  %v5400 = vld [vmem:[#allocation2 + $0x58] sm:$0xf]
  %v5401 = vld [vmem:[#allocation2 + $0x5c] sm:$0xf]
  %v5402 = vld [vmem:[#allocation2 + $0x60] sm:$0xf]
  %v5403 = vld [vmem:[#allocation2 + $0x64] sm:$0xf]
  %v5404 = vld [vmem:[#allocation2 + $0x68] sm:$0xf]
  %v5405 = vld [vmem:[#allocation2 + $0x6c] sm:$0xf]
  %v5406 = vld [vmem:[#allocation2 + $0x70] sm:$0xf]
  %v5407 = vld [vmem:[#allocation2 + $0x74] sm:$0xf]
  %v5408 = vld [vmem:[#allocation2 + $0x78] sm:$0xf]
  %v5409 = vld [vmem:[#allocation2 + $0x7c] sm:$0xf]
  %v5410 = vld [vmem:[#allocation2 + $0x80] sm:$0xf]
  %v5411 = vld [vmem:[#allocation2 + $0x84] sm:$0xf]
  %v5412 = vld [vmem:[#allocation2 + $0x88] sm:$0xf]
  %v5413 = vld [vmem:[#allocation2 + $0x8c] sm:$0xf]
  %v5414 = vld [vmem:[#allocation2 + $0x90] sm:$0xf]
  %v5415 = vld [vmem:[#allocation2 + $0x94] sm:$0xf]
  %v5416 = vld [vmem:[#allocation2 + $0x98] sm:$0xf]
  %v5417 = vld [vmem:[#allocation2 + $0x9c] sm:$0xf]
  %v5418 = vld [vmem:[#allocation2 + $0xa0] sm:$0xf]
  %v5419 = vld [vmem:[#allocation2 + $0xa4] sm:$0xf]
  %v5420 = vld [vmem:[#allocation2 + $0xa8] sm:$0xf]
  %v5421 = vld [vmem:[#allocation2 + $0xac] sm:$0xf]
  %v5422 = vld [vmem:[#allocation2 + $0xb0] sm:$0xf]
  %v5423 = vld [vmem:[#allocation2 + $0xb4] sm:$0xf]
  %v5424 = vld [vmem:[#allocation2 + $0xb8] sm:$0xf]
  %v5425 = vld [vmem:[#allocation2 + $0xbc] sm:$0xf]
  %v5426 = vld [vmem:[#allocation2 + $0xc0] sm:$0xf]
  %v5427 = vld [vmem:[#allocation2 + $0xc4] sm:$0xf]
  %v5428 = vld [vmem:[#allocation2 + $0xc8] sm:$0xf]
  %v5429 = vld [vmem:[#allocation2 + $0xcc] sm:$0xf]
  %v5430 = vld [vmem:[#allocation2 + $0xd0] sm:$0xf]
  %v5431 = vld [vmem:[#allocation2 + $0xd4] sm:$0xf]
  %v5432 = vld [vmem:[#allocation2 + $0xd8] sm:$0xf]
  %v5433 = vld [vmem:[#allocation2 + $0xdc] sm:$0xf]
  %v5434 = vld [vmem:[#allocation2 + $0xe0] sm:$0xf]
  %v5435 = vld [vmem:[#allocation2 + $0xe4] sm:$0xf]
  %v5436 = vld [vmem:[#allocation2 + $0xe8] sm:$0xf]
  %v5437 = vld [vmem:[#allocation2 + $0xec] sm:$0xf]
  %v5438 = vld [vmem:[#allocation2 + $0xf0] sm:$0xf]
  %v5439 = vld [vmem:[#allocation2 + $0xf4] sm:$0xf]
  %v5440 = vld [vmem:[#allocation2 + $0xf8] sm:$0xf]
  %v5441 = vld [vmem:[#allocation2 + $0xfc] sm:$0xf]
  %v5442 = vld [vmem:[#allocation2 + $0x100] sm:$0xf]
  %v5443 = vld [vmem:[#allocation2 + $0x104] sm:$0xf]
  %v5444 = vld [vmem:[#allocation2 + $0x108] sm:$0xf]
  %v5445 = vld [vmem:[#allocation2 + $0x10c] sm:$0xf]
  %v5446 = vld [vmem:[#allocation2 + $0x110] sm:$0xf]
  %v5447 = vld [vmem:[#allocation2 + $0x114] sm:$0xf]
  %v5448 = vld [vmem:[#allocation2 + $0x118] sm:$0xf]
  %v5449 = vld [vmem:[#allocation2 + $0x11c] sm:$0xf]
  %v5450 = vld [vmem:[#allocation2 + $0x120] sm:$0x1]
  %v5451 = vld [vmem:[%s1 + $0x28] sm:$0xf]
  %v5516 = vunpack.c.l.b16 %v5387
  %v5517 = vunpack.c.l.b16 %v5388
  %v5518 = vunpack.c.l.b16 %v5389
  %v5519 = vunpack.c.l.b16 %v5390
  %v5520 = vunpack.c.l.b16 %v5391
  %v5521 = vunpack.c.l.b16 %v5392
  %v5522 = vunpack.c.l.b16 %v5393
  %v5523 = vunpack.c.l.b16 %v5394
  %v5524 = vunpack.c.l.b16 %v5395
  %v5525 = vunpack.c.l.b16 %v5396
  %v5526 = vunpack.c.l.b16 %v5397
  %v5527 = vunpack.c.l.b16 %v5398
  %v5528 = vunpack.c.l.b16 %v5399
  %v5529 = vunpack.c.l.b16 %v5400
  %v5530 = vunpack.c.l.b16 %v5401
  %v5531 = vunpack.c.l.b16 %v5402
  %v5532 = vunpack.c.l.b16 %v5403
  %v5533 = vunpack.c.l.b16 %v5404
  %v5534 = vunpack.c.l.b16 %v5405
  %v5535 = vunpack.c.l.b16 %v5406
  %v5536 = vunpack.c.l.b16 %v5407
  %v5537 = vunpack.c.l.b16 %v5408
  %v5538 = vunpack.c.l.b16 %v5409
  %v5539 = vunpack.c.l.b16 %v5410
  %v5540 = vunpack.c.l.b16 %v5411
  %v5541 = vunpack.c.l.b16 %v5412
  %v5542 = vunpack.c.l.b16 %v5413
  %v5543 = vunpack.c.l.b16 %v5414
  %v5544 = vunpack.c.l.b16 %v5415
  %v5545 = vunpack.c.l.b16 %v5416
  %v5546 = vunpack.c.l.b16 %v5417
  %v5547 = vunpack.c.l.b16 %v5418
  %v5548 = vunpack.c.l.b16 %v5419
  %v5549 = vunpack.c.l.b16 %v5420
  %v5550 = vunpack.c.l.b16 %v5421
  %v5551 = vunpack.c.l.b16 %v5422
  %v5552 = vunpack.c.l.b16 %v5423
  %v5553 = vunpack.c.l.b16 %v5424
  %v5554 = vunpack.c.l.b16 %v5425
  %v5555 = vunpack.c.l.b16 %v5426
  %v5556 = vunpack.c.l.b16 %v5427
  %v5557 = vunpack.c.l.b16 %v5428
  %v5558 = vunpack.c.l.b16 %v5429
  %v5559 = vunpack.c.l.b16 %v5430
  %v5560 = vunpack.c.l.b16 %v5431
  %v5561 = vunpack.c.l.b16 %v5432
  %v5562 = vunpack.c.l.b16 %v5433
  %v5563 = vunpack.c.l.b16 %v5434
  %v5564 = vunpack.c.l.b16 %v5435
  %v5565 = vunpack.c.l.b16 %v5436
  %v5566 = vunpack.c.l.b16 %v5437
  %v5567 = vunpack.c.l.b16 %v5438
  %v5568 = vunpack.c.l.b16 %v5439
  %v5569 = vunpack.c.l.b16 %v5440
  %v5570 = vunpack.c.l.b16 %v5441
  %v5571 = vunpack.c.l.b16 %v5442
  %v5572 = vunpack.c.l.b16 %v5443
  %v5573 = vunpack.c.l.b16 %v5444
  %v5574 = vunpack.c.l.b16 %v5445
  %v5575 = vunpack.c.l.b16 %v5446
  %v5576 = vunpack.c.l.b16 %v5447
  %v5577 = vunpack.c.l.b16 %v5448
  %v5578 = vunpack.c.l.b16 %v5449
  %v5579 = vunpack.c.l.b16 %v5450
  %v5580 = vpack.c.b16 %v5517, %v5516
  %v5581 = vpack.c.b16 %v5519, %v5518
  %v5582 = vpack.c.b16 %v5521, %v5520
  %v5583 = vpack.c.b16 %v5523, %v5522
  %v5584 = vpack.c.b16 %v5525, %v5524
  %v5585 = vpack.c.b16 %v5527, %v5526
  %v5586 = vpack.c.b16 %v5529, %v5528
  %v5587 = vpack.c.b16 %v5531, %v5530
  %v5588 = vpack.c.b16 %v5533, %v5532
  %v5589 = vpack.c.b16 %v5535, %v5534
  %v5590 = vpack.c.b16 %v5537, %v5536
  %v5591 = vpack.c.b16 %v5539, %v5538
  %v5592 = vpack.c.b16 %v5541, %v5540
  %v5593 = vpack.c.b16 %v5543, %v5542
  %v5594 = vpack.c.b16 %v5545, %v5544
  %v5595 = vpack.c.b16 %v5547, %v5546
  %v5596 = vpack.c.b16 %v5549, %v5548
  %v5597 = vpack.c.b16 %v5551, %v5550
  %v5598 = vpack.c.b16 %v5553, %v5552
  %v5599 = vpack.c.b16 %v5555, %v5554
  %v5600 = vpack.c.b16 %v5557, %v5556
  %v5601 = vpack.c.b16 %v5559, %v5558
  %v5602 = vpack.c.b16 %v5561, %v5560
  %v5603 = vpack.c.b16 %v5563, %v5562
  %v5604 = vpack.c.b16 %v5565, %v5564
  %v5605 = vpack.c.b16 %v5567, %v5566
  %v5606 = vpack.c.b16 %v5569, %v5568
  %v5607 = vpack.c.b16 %v5571, %v5570
  %v5608 = vpack.c.b16 %v5573, %v5572
  %v5609 = vpack.c.b16 %v5575, %v5574
  %v5610 = vpack.c.b16 %v5577, %v5576
  %v5611 = vpack.c.b16 %v5579, %v5578
  %v5613 = vshrl.u32 %v5580, 16
  %v5615 = vshll.u32 %v5580, 16
  %v5617 = vrot.slane %v5615, 1
  %v5618 = vor.u32 %v5613, %v5617
  %v5620 = vshll.u32 %v5581, 16
  %v5622 = vrot.slane %v5620, 1
  %v5623 = vsel %vm354, %v5618, %v5622
  %v5624 = vshrl.u32 %v5581, 16
  %v5626 = vor.u32 %v5624, %v5622
  %v5628 = vshll.u32 %v5582, 16
  %v5630 = vrot.slane %v5628, 1
  %v5631 = vsel %vm354, %v5626, %v5630
  %v5632 = vshrl.u32 %v5582, 16
  %v5634 = vor.u32 %v5632, %v5630
  %v5636 = vshll.u32 %v5583, 16
  %v5638 = vrot.slane %v5636, 1
  %v5639 = vsel %vm354, %v5634, %v5638
  %v5640 = vshrl.u32 %v5583, 16
  %v5642 = vor.u32 %v5640, %v5638
  %v5644 = vshll.u32 %v5584, 16
  %v5646 = vrot.slane %v5644, 1
  %v5647 = vsel %vm354, %v5642, %v5646
  %v5648 = vshrl.u32 %v5584, 16
  %v5650 = vor.u32 %v5648, %v5646
  %v5652 = vshll.u32 %v5585, 16
  %v5654 = vrot.slane %v5652, 1
  %v5655 = vsel %vm354, %v5650, %v5654
  %v5656 = vshrl.u32 %v5585, 16
  %v5658 = vor.u32 %v5656, %v5654
  %v5660 = vshll.u32 %v5586, 16
  %v5662 = vrot.slane %v5660, 1
  %v5663 = vsel %vm354, %v5658, %v5662
  %v5664 = vshrl.u32 %v5586, 16
  %v5666 = vor.u32 %v5664, %v5662
  %v5668 = vshll.u32 %v5587, 16
  %v5670 = vrot.slane %v5668, 1
  %v5671 = vsel %vm354, %v5666, %v5670
  %v5672 = vshrl.u32 %v5587, 16
  %v5674 = vor.u32 %v5672, %v5670
  %v5676 = vshll.u32 %v5588, 16
  %v5678 = vrot.slane %v5676, 1
  %v5679 = vsel %vm354, %v5674, %v5678
  %v5680 = vshrl.u32 %v5588, 16
  %v5682 = vor.u32 %v5680, %v5678
  %v5684 = vshll.u32 %v5589, 16
  %v5686 = vrot.slane %v5684, 1
  %v5687 = vsel %vm354, %v5682, %v5686
  %v5688 = vshrl.u32 %v5589, 16
  %v5690 = vor.u32 %v5688, %v5686
  %v5692 = vshll.u32 %v5590, 16
  %v5694 = vrot.slane %v5692, 1
  %v5695 = vsel %vm354, %v5690, %v5694
  %v5696 = vshrl.u32 %v5590, 16
  %v5698 = vor.u32 %v5696, %v5694
  %v5700 = vshll.u32 %v5591, 16
  %v5702 = vrot.slane %v5700, 1
  %v5703 = vsel %vm354, %v5698, %v5702
  %v5704 = vshrl.u32 %v5591, 16
  %v5706 = vor.u32 %v5704, %v5702
  %v5708 = vshll.u32 %v5592, 16
  %v5710 = vrot.slane %v5708, 1
  %v5711 = vsel %vm354, %v5706, %v5710
  %v5712 = vshrl.u32 %v5592, 16
  %v5714 = vor.u32 %v5712, %v5710
  %v5716 = vshll.u32 %v5593, 16
  %v5718 = vrot.slane %v5716, 1
  %v5719 = vsel %vm354, %v5714, %v5718
  %v5720 = vshrl.u32 %v5593, 16
  %v5722 = vor.u32 %v5720, %v5718
  %v5724 = vshll.u32 %v5594, 16
  %v5726 = vrot.slane %v5724, 1
  %v5727 = vsel %vm354, %v5722, %v5726
  %v5728 = vshrl.u32 %v5594, 16
  %v5730 = vor.u32 %v5728, %v5726
  %v5732 = vshll.u32 %v5595, 16
  %v5734 = vrot.slane %v5732, 1
  %v5735 = vsel %vm354, %v5730, %v5734
  %v5736 = vshrl.u32 %v5595, 16
  %v5738 = vor.u32 %v5736, %v5734
  %v5740 = vshll.u32 %v5596, 16
  %v5742 = vrot.slane %v5740, 1
  %v5743 = vsel %vm354, %v5738, %v5742
  %v5744 = vshrl.u32 %v5596, 16
  %v5746 = vor.u32 %v5744, %v5742
  %v5748 = vshll.u32 %v5597, 16
  %v5750 = vrot.slane %v5748, 1
  %v5751 = vsel %vm354, %v5746, %v5750
  %v5752 = vshrl.u32 %v5597, 16
  %v5754 = vor.u32 %v5752, %v5750
  %v5756 = vshll.u32 %v5598, 16
  %v5758 = vrot.slane %v5756, 1
  %v5759 = vsel %vm354, %v5754, %v5758
  %v5760 = vshrl.u32 %v5598, 16
  %v5762 = vor.u32 %v5760, %v5758
  %v5764 = vshll.u32 %v5599, 16
  %v5766 = vrot.slane %v5764, 1
  %v5767 = vsel %vm354, %v5762, %v5766
  %v5768 = vshrl.u32 %v5599, 16
  %v5770 = vor.u32 %v5768, %v5766
  %v5772 = vshll.u32 %v5600, 16
  %v5774 = vrot.slane %v5772, 1
  %v5775 = vsel %vm354, %v5770, %v5774
  %v5776 = vshrl.u32 %v5600, 16
  %v5778 = vor.u32 %v5776, %v5774
  %v5780 = vshll.u32 %v5601, 16
  %v5782 = vrot.slane %v5780, 1
  %v5783 = vsel %vm354, %v5778, %v5782
  %v5784 = vshrl.u32 %v5601, 16
  %v5786 = vor.u32 %v5784, %v5782
  %v5788 = vshll.u32 %v5602, 16
  %v5790 = vrot.slane %v5788, 1
  %v5791 = vsel %vm354, %v5786, %v5790
  %v5792 = vshrl.u32 %v5602, 16
  %v5794 = vor.u32 %v5792, %v5790
  %v5796 = vshll.u32 %v5603, 16
  %v5798 = vrot.slane %v5796, 1
  %v5799 = vsel %vm354, %v5794, %v5798
  %v5800 = vshrl.u32 %v5603, 16
  %v5802 = vor.u32 %v5800, %v5798
  %v5804 = vshll.u32 %v5604, 16
  %v5806 = vrot.slane %v5804, 1
  %v5807 = vsel %vm354, %v5802, %v5806
  %v5808 = vshrl.u32 %v5604, 16
  %v5810 = vor.u32 %v5808, %v5806
  %v5812 = vshll.u32 %v5605, 16
  %v5814 = vrot.slane %v5812, 1
  %v5815 = vsel %vm354, %v5810, %v5814
  %v5816 = vshrl.u32 %v5605, 16
  %v5818 = vor.u32 %v5816, %v5814
  %v5820 = vshll.u32 %v5606, 16
  %v5822 = vrot.slane %v5820, 1
  %v5823 = vsel %vm354, %v5818, %v5822
  %v5824 = vshrl.u32 %v5606, 16
  %v5826 = vor.u32 %v5824, %v5822
  %v5828 = vshll.u32 %v5607, 16
  %v5830 = vrot.slane %v5828, 1
  %v5831 = vsel %vm354, %v5826, %v5830
  %v5832 = vshrl.u32 %v5607, 16
  %v5834 = vor.u32 %v5832, %v5830
  %v5836 = vshll.u32 %v5608, 16
  %v5838 = vrot.slane %v5836, 1
  %v5839 = vsel %vm354, %v5834, %v5838
  %v5840 = vshrl.u32 %v5608, 16
  %v5842 = vor.u32 %v5840, %v5838
  %v5844 = vshll.u32 %v5609, 16
  %v5846 = vrot.slane %v5844, 1
  %v5847 = vsel %vm354, %v5842, %v5846
  %v5848 = vshrl.u32 %v5609, 16
  %v5850 = vor.u32 %v5848, %v5846
  %v5852 = vshll.u32 %v5610, 16
  %v5854 = vrot.slane %v5852, 1
  %v5855 = vsel %vm354, %v5850, %v5854
  %v5856 = vshrl.u32 %v5610, 16
  %v5858 = vor.u32 %v5856, %v5854
  %v5860 = vshll.u32 %v5611, 16
  %v5862 = vrot.slane %v5860, 1
  %v5863 = vsel %vm354, %v5858, %v5862
  %v5864 = vshrl.u32 %v5611, 16
  %v5866 = vor.u32 %v5864, %v5862
  %v5868 = vsel %vm610, %v5623, 0
  %v5871 = vsel %vm610, %v5631, 0
  %v5874 = vsel %vm610, %v5639, 0
  %v5877 = vsel %vm610, %v5647, 0
  %v5880 = vsel %vm610, %v5655, 0
  %v5883 = vsel %vm610, %v5663, 0
  %v5886 = vsel %vm610, %v5671, 0
  %v5889 = vsel %vm610, %v5679, 0
  %v5892 = vsel %vm610, %v5687, 0
  %v5895 = vsel %vm610, %v5695, 0
  %v5898 = vsel %vm610, %v5703, 0
  %v5901 = vsel %vm610, %v5711, 0
  %v5904 = vsel %vm610, %v5719, 0
  %v5907 = vsel %vm610, %v5727, 0
  %v5910 = vsel %vm610, %v5735, 0
  %v5913 = vsel %vm610, %v5743, 0
  %v5916 = vsel %vm610, %v5751, 0
  %v5919 = vsel %vm610, %v5759, 0
  %v5922 = vsel %vm610, %v5767, 0
  %v5925 = vsel %vm610, %v5775, 0
  %v5928 = vsel %vm610, %v5783, 0
  %v5931 = vsel %vm610, %v5791, 0
  %v5934 = vsel %vm610, %v5799, 0
  %v5937 = vsel %vm610, %v5807, 0
  %v5940 = vsel %vm610, %v5815, 0
  %v5943 = vsel %vm610, %v5823, 0
  %v5946 = vsel %vm610, %v5831, 0
  %v5949 = vsel %vm610, %v5839, 0
  %v5952 = vsel %vm610, %v5847, 0
  %v5955 = vsel %vm610, %v5855, 0
  %v5958 = vsel %vm610, %v5863, 0
  %v5961 = vsel %vm610, %v5866, 0
  %v5964 = vsel %vm707, %v5451, 0
  %5966 = vmatpush.bf16.msra.mxu0 0
  %5967 = vmatpush.bf16.msra.mxu0 0
  %5968 = vmatpush.bf16.msra.mxu0 0
  %5969 = vmatpush.bf16.msra.mxu0 0
  %5970 = vmatpush.bf16.msra.mxu0 0
  %5971 = vmatpush.bf16.msra.mxu0 0
  %5972 = vmatpush.bf16.msra.mxu0 0
  %5973 = vmatpush.bf16.msra.mxu0 %v5964
  %5974 = vmatmul.bf16.gmra.mxu0 %v5868
  %v5975 = vpop.f32.mrf.mxu0
  %v5976 = vadd.f32 0.0, %v5975
  %v5977 = vpop.f32.mrf.mxu0
  %v5978 = vadd.f32 0.0, %v5977
  %5979 = vmatmul.bf16.gmra.mxu0 %v5871
  %v5980 = vpop.f32.mrf.mxu0
  %v5981 = vadd.f32 0.0, %v5980
  %v5982 = vpop.f32.mrf.mxu0
  %v5983 = vadd.f32 0.0, %v5982
  %5984 = vmatmul.bf16.gmra.mxu0 %v5874
  %v5985 = vpop.f32.mrf.mxu0
  %v5986 = vadd.f32 0.0, %v5985
  %v5987 = vpop.f32.mrf.mxu0
  %v5988 = vadd.f32 0.0, %v5987
  %5989 = vmatmul.bf16.gmra.mxu0 %v5877
  %v5990 = vpop.f32.mrf.mxu0
  %v5991 = vadd.f32 0.0, %v5990
  %v5992 = vpop.f32.mrf.mxu0
  %v5993 = vadd.f32 0.0, %v5992
  %5994 = vmatmul.bf16.gmra.mxu0 %v5880
  %v5995 = vpop.f32.mrf.mxu0
  %v5996 = vadd.f32 0.0, %v5995
  %v5997 = vpop.f32.mrf.mxu0
  %v5998 = vadd.f32 0.0, %v5997
  %5999 = vmatmul.bf16.gmra.mxu0 %v5883
  %v6000 = vpop.f32.mrf.mxu0
  %v6001 = vadd.f32 0.0, %v6000
  %v6002 = vpop.f32.mrf.mxu0
  %v6003 = vadd.f32 0.0, %v6002
  %6004 = vmatmul.bf16.gmra.mxu0 %v5886
  %v6005 = vpop.f32.mrf.mxu0
  %v6006 = vadd.f32 0.0, %v6005
  %v6007 = vpop.f32.mrf.mxu0
  %v6008 = vadd.f32 0.0, %v6007
  %6009 = vmatmul.bf16.gmra.mxu0 %v5889
  %v6010 = vpop.f32.mrf.mxu0
  %v6011 = vadd.f32 0.0, %v6010
  %v6012 = vpop.f32.mrf.mxu0
  %v6013 = vadd.f32 0.0, %v6012
  %6014 = vmatmul.bf16.gmra.mxu0 %v5892
  %v6015 = vpop.f32.mrf.mxu0
  %v6016 = vadd.f32 0.0, %v6015
  %v6017 = vpop.f32.mrf.mxu0
  %v6018 = vadd.f32 0.0, %v6017
  %6019 = vmatmul.bf16.gmra.mxu0 %v5895
  %v6020 = vpop.f32.mrf.mxu0
  %v6021 = vadd.f32 0.0, %v6020
  %v6022 = vpop.f32.mrf.mxu0
  %v6023 = vadd.f32 0.0, %v6022
  %6024 = vmatmul.bf16.gmra.mxu0 %v5898
  %v6025 = vpop.f32.mrf.mxu0
  %v6026 = vadd.f32 0.0, %v6025
  %v6027 = vpop.f32.mrf.mxu0
  %v6028 = vadd.f32 0.0, %v6027
  %6029 = vmatmul.bf16.gmra.mxu0 %v5901
  %v6030 = vpop.f32.mrf.mxu0
  %v6031 = vadd.f32 0.0, %v6030
  %v6032 = vpop.f32.mrf.mxu0
  %v6033 = vadd.f32 0.0, %v6032
  %6034 = vmatmul.bf16.gmra.mxu0 %v5904
  %v6035 = vpop.f32.mrf.mxu0
  %v6036 = vadd.f32 0.0, %v6035
  %v6037 = vpop.f32.mrf.mxu0
  %v6038 = vadd.f32 0.0, %v6037
  %6039 = vmatmul.bf16.gmra.mxu0 %v5907
  %v6040 = vpop.f32.mrf.mxu0
  %v6041 = vadd.f32 0.0, %v6040
  %v6042 = vpop.f32.mrf.mxu0
  %v6043 = vadd.f32 0.0, %v6042
  %6044 = vmatmul.bf16.gmra.mxu0 %v5910
  %v6045 = vpop.f32.mrf.mxu0
  %v6046 = vadd.f32 0.0, %v6045
  %v6047 = vpop.f32.mrf.mxu0
  %v6048 = vadd.f32 0.0, %v6047
  %6049 = vmatmul.bf16.gmra.mxu0 %v5913
  %v6050 = vpop.f32.mrf.mxu0
  %v6051 = vadd.f32 0.0, %v6050
  %v6052 = vpop.f32.mrf.mxu0
  %v6053 = vadd.f32 0.0, %v6052
  %6054 = vmatmul.bf16.gmra.mxu0 %v5916
  %v6055 = vpop.f32.mrf.mxu0
  %v6056 = vadd.f32 0.0, %v6055
  %v6057 = vpop.f32.mrf.mxu0
  %v6058 = vadd.f32 0.0, %v6057
  %6059 = vmatmul.bf16.gmra.mxu0 %v5919
  %v6060 = vpop.f32.mrf.mxu0
  %v6061 = vadd.f32 0.0, %v6060
  %v6062 = vpop.f32.mrf.mxu0
  %v6063 = vadd.f32 0.0, %v6062
  %6064 = vmatmul.bf16.gmra.mxu0 %v5922
  %v6065 = vpop.f32.mrf.mxu0
  %v6066 = vadd.f32 0.0, %v6065
  %v6067 = vpop.f32.mrf.mxu0
  %v6068 = vadd.f32 0.0, %v6067
  %6069 = vmatmul.bf16.gmra.mxu0 %v5925
  %v6070 = vpop.f32.mrf.mxu0
  %v6071 = vadd.f32 0.0, %v6070
  %v6072 = vpop.f32.mrf.mxu0
  %v6073 = vadd.f32 0.0, %v6072
  %6074 = vmatmul.bf16.gmra.mxu0 %v5928
  %v6075 = vpop.f32.mrf.mxu0
  %v6076 = vadd.f32 0.0, %v6075
  %v6077 = vpop.f32.mrf.mxu0
  %v6078 = vadd.f32 0.0, %v6077
  %6079 = vmatmul.bf16.gmra.mxu0 %v5931
  %v6080 = vpop.f32.mrf.mxu0
  %v6081 = vadd.f32 0.0, %v6080
  %v6082 = vpop.f32.mrf.mxu0
  %v6083 = vadd.f32 0.0, %v6082
  %6084 = vmatmul.bf16.gmra.mxu0 %v5934
  %v6085 = vpop.f32.mrf.mxu0
  %v6086 = vadd.f32 0.0, %v6085
  %v6087 = vpop.f32.mrf.mxu0
  %v6088 = vadd.f32 0.0, %v6087
  %6089 = vmatmul.bf16.gmra.mxu0 %v5937
  %v6090 = vpop.f32.mrf.mxu0
  %v6091 = vadd.f32 0.0, %v6090
  %v6092 = vpop.f32.mrf.mxu0
  %v6093 = vadd.f32 0.0, %v6092
  %6094 = vmatmul.bf16.gmra.mxu0 %v5940
  %v6095 = vpop.f32.mrf.mxu0
  %v6096 = vadd.f32 0.0, %v6095
  %v6097 = vpop.f32.mrf.mxu0
  %v6098 = vadd.f32 0.0, %v6097
  %6099 = vmatmul.bf16.gmra.mxu0 %v5943
  %v6100 = vpop.f32.mrf.mxu0
  %v6101 = vadd.f32 0.0, %v6100
  %v6102 = vpop.f32.mrf.mxu0
  %v6103 = vadd.f32 0.0, %v6102
  %6104 = vmatmul.bf16.gmra.mxu0 %v5946
  %v6105 = vpop.f32.mrf.mxu0
  %v6106 = vadd.f32 0.0, %v6105
  %v6107 = vpop.f32.mrf.mxu0
  %v6108 = vadd.f32 0.0, %v6107
  %6109 = vmatmul.bf16.gmra.mxu0 %v5949
  %v6110 = vpop.f32.mrf.mxu0
  %v6111 = vadd.f32 0.0, %v6110
  %v6112 = vpop.f32.mrf.mxu0
  %v6113 = vadd.f32 0.0, %v6112
  %6114 = vmatmul.bf16.gmra.mxu0 %v5952
  %v6115 = vpop.f32.mrf.mxu0
  %v6116 = vadd.f32 0.0, %v6115
  %v6117 = vpop.f32.mrf.mxu0
  %v6118 = vadd.f32 0.0, %v6117
  %6119 = vmatmul.bf16.gmra.mxu0 %v5955
  %v6120 = vpop.f32.mrf.mxu0
  %v6121 = vadd.f32 0.0, %v6120
  %v6122 = vpop.f32.mrf.mxu0
  %v6123 = vadd.f32 0.0, %v6122
  %6124 = vmatmul.bf16.gmra.mxu0 %v5958
  %v6125 = vpop.f32.mrf.mxu0
  %v6126 = vadd.f32 0.0, %v6125
  %v6127 = vpop.f32.mrf.mxu0
  %v6128 = vadd.f32 0.0, %v6127
  %6129 = vmatmul.bf16.gmra.mxu0 %v5961
  %v6130 = vpop.f32.mrf.mxu0
  %v6131 = vadd.f32 0.0, %v6130
  %v6132 = vpop.f32.mrf.mxu0
  %6133 = vdwg.mxu0
  %v6134 = vadd.f32 %v5324, %v5976
  %v6135 = vadd.f32 %v5325, %v5978
  %v6136 = vadd.f32 %v5326, %v5981
  %v6137 = vadd.f32 %v5327, %v5983
  %v6138 = vadd.f32 %v5328, %v5986
  %v6139 = vadd.f32 %v5329, %v5988
  %v6140 = vadd.f32 %v5330, %v5991
  %v6141 = vadd.f32 %v5331, %v5993
  %v6142 = vadd.f32 %v5332, %v5996
  %v6143 = vadd.f32 %v5333, %v5998
  %v6144 = vadd.f32 %v5334, %v6001
  %v6145 = vadd.f32 %v5335, %v6003
  %v6146 = vadd.f32 %v5336, %v6006
  %v6147 = vadd.f32 %v5337, %v6008
  %v6148 = vadd.f32 %v5338, %v6011
  %v6149 = vadd.f32 %v5339, %v6013
  %v6150 = vadd.f32 %v5340, %v6016
  %v6151 = vadd.f32 %v5341, %v6018
  %v6152 = vadd.f32 %v5342, %v6021
  %v6153 = vadd.f32 %v5343, %v6023
  %v6154 = vadd.f32 %v5344, %v6026
  %v6155 = vadd.f32 %v5345, %v6028
  %v6156 = vadd.f32 %v5346, %v6031
  %v6157 = vadd.f32 %v5347, %v6033
  %v6158 = vadd.f32 %v5348, %v6036
  %v6159 = vadd.f32 %v5349, %v6038
  %v6160 = vadd.f32 %v5350, %v6041
  %v6161 = vadd.f32 %v5351, %v6043
  %v6162 = vadd.f32 %v5352, %v6046
  %v6163 = vadd.f32 %v5353, %v6048
  %v6164 = vadd.f32 %v5354, %v6051
  %v6165 = vadd.f32 %v5355, %v6053
  %v6166 = vadd.f32 %v5356, %v6056
  %v6167 = vadd.f32 %v5357, %v6058
  %v6168 = vadd.f32 %v5358, %v6061
  %v6169 = vadd.f32 %v5359, %v6063
  %v6170 = vadd.f32 %v5360, %v6066
  %v6171 = vadd.f32 %v5361, %v6068
  %v6172 = vadd.f32 %v5362, %v6071
  %v6173 = vadd.f32 %v5363, %v6073
  %v6174 = vadd.f32 %v5364, %v6076
  %v6175 = vadd.f32 %v5365, %v6078
  %v6176 = vadd.f32 %v5366, %v6081
  %v6177 = vadd.f32 %v5367, %v6083
  %v6178 = vadd.f32 %v5368, %v6086
  %v6179 = vadd.f32 %v5369, %v6088
  %v6180 = vadd.f32 %v5370, %v6091
  %v6181 = vadd.f32 %v5371, %v6093
  %v6182 = vadd.f32 %v5372, %v6096
  %v6183 = vadd.f32 %v5373, %v6098
  %v6184 = vadd.f32 %v5374, %v6101
  %v6185 = vadd.f32 %v5375, %v6103
  %v6186 = vadd.f32 %v5376, %v6106
  %v6187 = vadd.f32 %v5377, %v6108
  %v6188 = vadd.f32 %v5378, %v6111
  %v6189 = vadd.f32 %v5379, %v6113
  %v6190 = vadd.f32 %v5380, %v6116
  %v6191 = vadd.f32 %v5381, %v6118
  %v6192 = vadd.f32 %v5382, %v6121
  %v6193 = vadd.f32 %v5383, %v6123
  %v6194 = vadd.f32 %v5384, %v6126
  %v6195 = vadd.f32 %v5385, %v6128
  %v6196 = vadd.f32 %v5386, %v6131
  %v6197 = vld [vmem:[#allocation2 + $0x24] sm:$0xe]
  %v6198 = vld [vmem:[%s1 + $0x2c] sm:$0xf]
  %v6200 = vunpack.c.l.b16 %v6197
  %v6201 = vpack.c.b16 %v5517, %v6200
  %v6202 = vrot.slane %v6201, 1
  %v6203 = vrot.slane %v5581, 1
  %v6204 = vsel %vm1121, %v6202, %v6203
  %v6205 = vrot.slane %v5582, 1
  %v6206 = vsel %vm1121, %v6203, %v6205
  %v6207 = vrot.slane %v5583, 1
  %v6208 = vsel %vm1121, %v6205, %v6207
  %v6209 = vrot.slane %v5584, 1
  %v6210 = vsel %vm1121, %v6207, %v6209
  %v6211 = vrot.slane %v5585, 1
  %v6212 = vsel %vm1121, %v6209, %v6211
  %v6213 = vrot.slane %v5586, 1
  %v6214 = vsel %vm1121, %v6211, %v6213
  %v6215 = vrot.slane %v5587, 1
  %v6216 = vsel %vm1121, %v6213, %v6215
  %v6217 = vrot.slane %v5588, 1
  %v6218 = vsel %vm1121, %v6215, %v6217
  %v6219 = vrot.slane %v5589, 1
  %v6220 = vsel %vm1121, %v6217, %v6219
  %v6221 = vrot.slane %v5590, 1
  %v6222 = vsel %vm1121, %v6219, %v6221
  %v6223 = vrot.slane %v5591, 1
  %v6224 = vsel %vm1121, %v6221, %v6223
  %v6225 = vrot.slane %v5592, 1
  %v6226 = vsel %vm1121, %v6223, %v6225
  %v6227 = vrot.slane %v5593, 1
  %v6228 = vsel %vm1121, %v6225, %v6227
  %v6229 = vrot.slane %v5594, 1
  %v6230 = vsel %vm1121, %v6227, %v6229
  %v6231 = vrot.slane %v5595, 1
  %v6232 = vsel %vm1121, %v6229, %v6231
  %v6233 = vrot.slane %v5596, 1
  %v6234 = vsel %vm1121, %v6231, %v6233
  %v6235 = vrot.slane %v5597, 1
  %v6236 = vsel %vm1121, %v6233, %v6235
  %v6237 = vrot.slane %v5598, 1
  %v6238 = vsel %vm1121, %v6235, %v6237
  %v6239 = vrot.slane %v5599, 1
  %v6240 = vsel %vm1121, %v6237, %v6239
  %v6241 = vrot.slane %v5600, 1
  %v6242 = vsel %vm1121, %v6239, %v6241
  %v6243 = vrot.slane %v5601, 1
  %v6244 = vsel %vm1121, %v6241, %v6243
  %v6245 = vrot.slane %v5602, 1
  %v6246 = vsel %vm1121, %v6243, %v6245
  %v6247 = vrot.slane %v5603, 1
  %v6248 = vsel %vm1121, %v6245, %v6247
  %v6249 = vrot.slane %v5604, 1
  %v6250 = vsel %vm1121, %v6247, %v6249
  %v6251 = vrot.slane %v5605, 1
  %v6252 = vsel %vm1121, %v6249, %v6251
  %v6253 = vrot.slane %v5606, 1
  %v6254 = vsel %vm1121, %v6251, %v6253
  %v6255 = vrot.slane %v5607, 1
  %v6256 = vsel %vm1121, %v6253, %v6255
  %v6257 = vrot.slane %v5608, 1
  %v6258 = vsel %vm1121, %v6255, %v6257
  %v6259 = vrot.slane %v5609, 1
  %v6260 = vsel %vm1121, %v6257, %v6259
  %v6261 = vrot.slane %v5610, 1
  %v6262 = vsel %vm1121, %v6259, %v6261
  %v6263 = vrot.slane %v5611, 1
  %v6264 = vsel %vm1121, %v6261, %v6263
  %v6266 = vsel %vm610, %v6204, 0
  %v6269 = vsel %vm610, %v6206, 0
  %v6272 = vsel %vm610, %v6208, 0
  %v6275 = vsel %vm610, %v6210, 0
  %v6278 = vsel %vm610, %v6212, 0
  %v6281 = vsel %vm610, %v6214, 0
  %v6284 = vsel %vm610, %v6216, 0
  %v6287 = vsel %vm610, %v6218, 0
  %v6290 = vsel %vm610, %v6220, 0
  %v6293 = vsel %vm610, %v6222, 0
  %v6296 = vsel %vm610, %v6224, 0
  %v6299 = vsel %vm610, %v6226, 0
  %v6302 = vsel %vm610, %v6228, 0
  %v6305 = vsel %vm610, %v6230, 0
  %v6308 = vsel %vm610, %v6232, 0
  %v6311 = vsel %vm610, %v6234, 0
  %v6314 = vsel %vm610, %v6236, 0
  %v6317 = vsel %vm610, %v6238, 0
  %v6320 = vsel %vm610, %v6240, 0
  %v6323 = vsel %vm610, %v6242, 0
  %v6326 = vsel %vm610, %v6244, 0
  %v6329 = vsel %vm610, %v6246, 0
  %v6332 = vsel %vm610, %v6248, 0
  %v6335 = vsel %vm610, %v6250, 0
  %v6338 = vsel %vm610, %v6252, 0
  %v6341 = vsel %vm610, %v6254, 0
  %v6344 = vsel %vm610, %v6256, 0
  %v6347 = vsel %vm610, %v6258, 0
  %v6350 = vsel %vm610, %v6260, 0
  %v6353 = vsel %vm610, %v6262, 0
  %v6356 = vsel %vm610, %v6264, 0
  %v6359 = vsel %vm610, %v6263, 0
  %v6362 = vsel %vm707, %v6198, 0
  %6364 = vmatpush.bf16.msra.mxu0 0
  %6365 = vmatpush.bf16.msra.mxu0 0
  %6366 = vmatpush.bf16.msra.mxu0 0
  %6367 = vmatpush.bf16.msra.mxu0 0
  %6368 = vmatpush.bf16.msra.mxu0 0
  %6369 = vmatpush.bf16.msra.mxu0 0
  %6370 = vmatpush.bf16.msra.mxu0 0
  %6371 = vmatpush.bf16.msra.mxu0 %v6362
  %6372 = vmatmul.bf16.gmra.mxu0 %v6266
  %v6373 = vpop.f32.mrf.mxu0
  %v6374 = vadd.f32 0.0, %v6373
  %v6375 = vpop.f32.mrf.mxu0
  %v6376 = vadd.f32 0.0, %v6375
  %6377 = vmatmul.bf16.gmra.mxu0 %v6269
  %v6378 = vpop.f32.mrf.mxu0
  %v6379 = vadd.f32 0.0, %v6378
  %v6380 = vpop.f32.mrf.mxu0
  %v6381 = vadd.f32 0.0, %v6380
  %6382 = vmatmul.bf16.gmra.mxu0 %v6272
  %v6383 = vpop.f32.mrf.mxu0
  %v6384 = vadd.f32 0.0, %v6383
  %v6385 = vpop.f32.mrf.mxu0
  %v6386 = vadd.f32 0.0, %v6385
  %6387 = vmatmul.bf16.gmra.mxu0 %v6275
  %v6388 = vpop.f32.mrf.mxu0
  %v6389 = vadd.f32 0.0, %v6388
  %v6390 = vpop.f32.mrf.mxu0
  %v6391 = vadd.f32 0.0, %v6390
  %6392 = vmatmul.bf16.gmra.mxu0 %v6278
  %v6393 = vpop.f32.mrf.mxu0
  %v6394 = vadd.f32 0.0, %v6393
  %v6395 = vpop.f32.mrf.mxu0
  %v6396 = vadd.f32 0.0, %v6395
  %6397 = vmatmul.bf16.gmra.mxu0 %v6281
  %v6398 = vpop.f32.mrf.mxu0
  %v6399 = vadd.f32 0.0, %v6398
  %v6400 = vpop.f32.mrf.mxu0
  %v6401 = vadd.f32 0.0, %v6400
  %6402 = vmatmul.bf16.gmra.mxu0 %v6284
  %v6403 = vpop.f32.mrf.mxu0
  %v6404 = vadd.f32 0.0, %v6403
  %v6405 = vpop.f32.mrf.mxu0
  %v6406 = vadd.f32 0.0, %v6405
  %6407 = vmatmul.bf16.gmra.mxu0 %v6287
  %v6408 = vpop.f32.mrf.mxu0
  %v6409 = vadd.f32 0.0, %v6408
  %v6410 = vpop.f32.mrf.mxu0
  %v6411 = vadd.f32 0.0, %v6410
  %6412 = vmatmul.bf16.gmra.mxu0 %v6290
  %v6413 = vpop.f32.mrf.mxu0
  %v6414 = vadd.f32 0.0, %v6413
  %v6415 = vpop.f32.mrf.mxu0
  %v6416 = vadd.f32 0.0, %v6415
  %6417 = vmatmul.bf16.gmra.mxu0 %v6293
  %v6418 = vpop.f32.mrf.mxu0
  %v6419 = vadd.f32 0.0, %v6418
  %v6420 = vpop.f32.mrf.mxu0
  %v6421 = vadd.f32 0.0, %v6420
  %6422 = vmatmul.bf16.gmra.mxu0 %v6296
  %v6423 = vpop.f32.mrf.mxu0
  %v6424 = vadd.f32 0.0, %v6423
  %v6425 = vpop.f32.mrf.mxu0
  %v6426 = vadd.f32 0.0, %v6425
  %6427 = vmatmul.bf16.gmra.mxu0 %v6299
  %v6428 = vpop.f32.mrf.mxu0
  %v6429 = vadd.f32 0.0, %v6428
  %v6430 = vpop.f32.mrf.mxu0
  %v6431 = vadd.f32 0.0, %v6430
  %6432 = vmatmul.bf16.gmra.mxu0 %v6302
  %v6433 = vpop.f32.mrf.mxu0
  %v6434 = vadd.f32 0.0, %v6433
  %v6435 = vpop.f32.mrf.mxu0
  %v6436 = vadd.f32 0.0, %v6435
  %6437 = vmatmul.bf16.gmra.mxu0 %v6305
  %v6438 = vpop.f32.mrf.mxu0
  %v6439 = vadd.f32 0.0, %v6438
  %v6440 = vpop.f32.mrf.mxu0
  %v6441 = vadd.f32 0.0, %v6440
  %6442 = vmatmul.bf16.gmra.mxu0 %v6308
  %v6443 = vpop.f32.mrf.mxu0
  %v6444 = vadd.f32 0.0, %v6443
  %v6445 = vpop.f32.mrf.mxu0
  %v6446 = vadd.f32 0.0, %v6445
  %6447 = vmatmul.bf16.gmra.mxu0 %v6311
  %v6448 = vpop.f32.mrf.mxu0
  %v6449 = vadd.f32 0.0, %v6448
  %v6450 = vpop.f32.mrf.mxu0
  %v6451 = vadd.f32 0.0, %v6450
  %6452 = vmatmul.bf16.gmra.mxu0 %v6314
  %v6453 = vpop.f32.mrf.mxu0
  %v6454 = vadd.f32 0.0, %v6453
  %v6455 = vpop.f32.mrf.mxu0
  %v6456 = vadd.f32 0.0, %v6455
  %6457 = vmatmul.bf16.gmra.mxu0 %v6317
  %v6458 = vpop.f32.mrf.mxu0
  %v6459 = vadd.f32 0.0, %v6458
  %v6460 = vpop.f32.mrf.mxu0
  %v6461 = vadd.f32 0.0, %v6460
  %6462 = vmatmul.bf16.gmra.mxu0 %v6320
  %v6463 = vpop.f32.mrf.mxu0
  %v6464 = vadd.f32 0.0, %v6463
  %v6465 = vpop.f32.mrf.mxu0
  %v6466 = vadd.f32 0.0, %v6465
  %6467 = vmatmul.bf16.gmra.mxu0 %v6323
  %v6468 = vpop.f32.mrf.mxu0
  %v6469 = vadd.f32 0.0, %v6468
  %v6470 = vpop.f32.mrf.mxu0
  %v6471 = vadd.f32 0.0, %v6470
  %6472 = vmatmul.bf16.gmra.mxu0 %v6326
  %v6473 = vpop.f32.mrf.mxu0
  %v6474 = vadd.f32 0.0, %v6473
  %v6475 = vpop.f32.mrf.mxu0
  %v6476 = vadd.f32 0.0, %v6475
  %6477 = vmatmul.bf16.gmra.mxu0 %v6329
  %v6478 = vpop.f32.mrf.mxu0
  %v6479 = vadd.f32 0.0, %v6478
  %v6480 = vpop.f32.mrf.mxu0
  %v6481 = vadd.f32 0.0, %v6480
  %6482 = vmatmul.bf16.gmra.mxu0 %v6332
  %v6483 = vpop.f32.mrf.mxu0
  %v6484 = vadd.f32 0.0, %v6483
  %v6485 = vpop.f32.mrf.mxu0
  %v6486 = vadd.f32 0.0, %v6485
  %6487 = vmatmul.bf16.gmra.mxu0 %v6335
  %v6488 = vpop.f32.mrf.mxu0
  %v6489 = vadd.f32 0.0, %v6488
  %v6490 = vpop.f32.mrf.mxu0
  %v6491 = vadd.f32 0.0, %v6490
  %6492 = vmatmul.bf16.gmra.mxu0 %v6338
  %v6493 = vpop.f32.mrf.mxu0
  %v6494 = vadd.f32 0.0, %v6493
  %v6495 = vpop.f32.mrf.mxu0
  %v6496 = vadd.f32 0.0, %v6495
  %6497 = vmatmul.bf16.gmra.mxu0 %v6341
  %v6498 = vpop.f32.mrf.mxu0
  %v6499 = vadd.f32 0.0, %v6498
  %v6500 = vpop.f32.mrf.mxu0
  %v6501 = vadd.f32 0.0, %v6500
  %6502 = vmatmul.bf16.gmra.mxu0 %v6344
  %v6503 = vpop.f32.mrf.mxu0
  %v6504 = vadd.f32 0.0, %v6503
  %v6505 = vpop.f32.mrf.mxu0
  %v6506 = vadd.f32 0.0, %v6505
  %6507 = vmatmul.bf16.gmra.mxu0 %v6347
  %v6508 = vpop.f32.mrf.mxu0
  %v6509 = vadd.f32 0.0, %v6508
  %v6510 = vpop.f32.mrf.mxu0
  %v6511 = vadd.f32 0.0, %v6510
  %6512 = vmatmul.bf16.gmra.mxu0 %v6350
  %v6513 = vpop.f32.mrf.mxu0
  %v6514 = vadd.f32 0.0, %v6513
  %v6515 = vpop.f32.mrf.mxu0
  %v6516 = vadd.f32 0.0, %v6515
  %6517 = vmatmul.bf16.gmra.mxu0 %v6353
  %v6518 = vpop.f32.mrf.mxu0
  %v6519 = vadd.f32 0.0, %v6518
  %v6520 = vpop.f32.mrf.mxu0
  %v6521 = vadd.f32 0.0, %v6520
  %6522 = vmatmul.bf16.gmra.mxu0 %v6356
  %v6523 = vpop.f32.mrf.mxu0
  %v6524 = vadd.f32 0.0, %v6523
  %v6525 = vpop.f32.mrf.mxu0
  %v6526 = vadd.f32 0.0, %v6525
  %6527 = vmatmul.bf16.gmra.mxu0 %v6359
  %v6528 = vpop.f32.mrf.mxu0
  %v6529 = vadd.f32 0.0, %v6528
  %v6530 = vpop.f32.mrf.mxu0
  %6531 = vdwg.mxu0
  %v6532 = vadd.f32 %v6134, %v6374
  %v6533 = vadd.f32 %v6135, %v6376
  %v6534 = vadd.f32 %v6136, %v6379
  %v6535 = vadd.f32 %v6137, %v6381
  %v6536 = vadd.f32 %v6138, %v6384
  %v6537 = vadd.f32 %v6139, %v6386
  %v6538 = vadd.f32 %v6140, %v6389
  %v6539 = vadd.f32 %v6141, %v6391
  %v6540 = vadd.f32 %v6142, %v6394
  %v6541 = vadd.f32 %v6143, %v6396
  %v6542 = vadd.f32 %v6144, %v6399
  %v6543 = vadd.f32 %v6145, %v6401
  %v6544 = vadd.f32 %v6146, %v6404
  %v6545 = vadd.f32 %v6147, %v6406
  %v6546 = vadd.f32 %v6148, %v6409
  %v6547 = vadd.f32 %v6149, %v6411
  %v6548 = vadd.f32 %v6150, %v6414
  %v6549 = vadd.f32 %v6151, %v6416
  %v6550 = vadd.f32 %v6152, %v6419
  %v6551 = vadd.f32 %v6153, %v6421
  %v6552 = vadd.f32 %v6154, %v6424
  %v6553 = vadd.f32 %v6155, %v6426
  %v6554 = vadd.f32 %v6156, %v6429
  %v6555 = vadd.f32 %v6157, %v6431
  %v6556 = vadd.f32 %v6158, %v6434
  %v6557 = vadd.f32 %v6159, %v6436
  %v6558 = vadd.f32 %v6160, %v6439
  %v6559 = vadd.f32 %v6161, %v6441
  %v6560 = vadd.f32 %v6162, %v6444
  %v6561 = vadd.f32 %v6163, %v6446
  %v6562 = vadd.f32 %v6164, %v6449
  %v6563 = vadd.f32 %v6165, %v6451
  %v6564 = vadd.f32 %v6166, %v6454
  %v6565 = vadd.f32 %v6167, %v6456
  %v6566 = vadd.f32 %v6168, %v6459
  %v6567 = vadd.f32 %v6169, %v6461
  %v6568 = vadd.f32 %v6170, %v6464
  %v6569 = vadd.f32 %v6171, %v6466
  %v6570 = vadd.f32 %v6172, %v6469
  %v6571 = vadd.f32 %v6173, %v6471
  %v6572 = vadd.f32 %v6174, %v6474
  %v6573 = vadd.f32 %v6175, %v6476
  %v6574 = vadd.f32 %v6176, %v6479
  %v6575 = vadd.f32 %v6177, %v6481
  %v6576 = vadd.f32 %v6178, %v6484
  %v6577 = vadd.f32 %v6179, %v6486
  %v6578 = vadd.f32 %v6180, %v6489
  %v6579 = vadd.f32 %v6181, %v6491
  %v6580 = vadd.f32 %v6182, %v6494
  %v6581 = vadd.f32 %v6183, %v6496
  %v6582 = vadd.f32 %v6184, %v6499
  %v6583 = vadd.f32 %v6185, %v6501
  %v6584 = vadd.f32 %v6186, %v6504
  %v6585 = vadd.f32 %v6187, %v6506
  %v6586 = vadd.f32 %v6188, %v6509
  %v6587 = vadd.f32 %v6189, %v6511
  %v6588 = vadd.f32 %v6190, %v6514
  %v6589 = vadd.f32 %v6191, %v6516
  %v6590 = vadd.f32 %v6192, %v6519
  %v6591 = vadd.f32 %v6193, %v6521
  %v6592 = vadd.f32 %v6194, %v6524
  %v6593 = vadd.f32 %v6195, %v6526
  %v6594 = vadd.f32 %v6196, %v6529
  %v6595 = vld [vmem:[#allocation2 + $0x28] sm:$0xf]
  %v6596 = vld [vmem:[#allocation2 + $0x2c] sm:$0xf]
  %v6597 = vld [vmem:[#allocation2 + $0x30] sm:$0xf]
  %v6598 = vld [vmem:[#allocation2 + $0x34] sm:$0xf]
  %v6599 = vld [vmem:[#allocation2 + $0x38] sm:$0xf]
  %v6600 = vld [vmem:[#allocation2 + $0x3c] sm:$0xf]
  %v6601 = vld [vmem:[#allocation2 + $0x40] sm:$0xf]
  %v6602 = vld [vmem:[#allocation2 + $0x44] sm:$0xf]
  %v6603 = vld [vmem:[#allocation2 + $0x48] sm:$0xf]
  %v6604 = vld [vmem:[#allocation2 + $0x4c] sm:$0xf]
  %v6605 = vld [vmem:[#allocation2 + $0x50] sm:$0xf]
  %v6606 = vld [vmem:[#allocation2 + $0x54] sm:$0xf]
  %v6607 = vld [vmem:[#allocation2 + $0x58] sm:$0xf]
  %v6608 = vld [vmem:[#allocation2 + $0x5c] sm:$0xf]
  %v6609 = vld [vmem:[#allocation2 + $0x60] sm:$0xf]
  %v6610 = vld [vmem:[#allocation2 + $0x64] sm:$0xf]
  %v6611 = vld [vmem:[#allocation2 + $0x68] sm:$0xf]
  %v6612 = vld [vmem:[#allocation2 + $0x6c] sm:$0xf]
  %v6613 = vld [vmem:[#allocation2 + $0x70] sm:$0xf]
  %v6614 = vld [vmem:[#allocation2 + $0x74] sm:$0xf]
  %v6615 = vld [vmem:[#allocation2 + $0x78] sm:$0xf]
  %v6616 = vld [vmem:[#allocation2 + $0x7c] sm:$0xf]
  %v6617 = vld [vmem:[#allocation2 + $0x80] sm:$0xf]
  %v6618 = vld [vmem:[#allocation2 + $0x84] sm:$0xf]
  %v6619 = vld [vmem:[#allocation2 + $0x88] sm:$0xf]
  %v6620 = vld [vmem:[#allocation2 + $0x8c] sm:$0xf]
  %v6621 = vld [vmem:[#allocation2 + $0x90] sm:$0xf]
  %v6622 = vld [vmem:[#allocation2 + $0x94] sm:$0xf]
  %v6623 = vld [vmem:[#allocation2 + $0x98] sm:$0xf]
  %v6624 = vld [vmem:[#allocation2 + $0x9c] sm:$0xf]
  %v6625 = vld [vmem:[#allocation2 + $0xa0] sm:$0xf]
  %v6626 = vld [vmem:[#allocation2 + $0xa4] sm:$0xf]
  %v6627 = vld [vmem:[#allocation2 + $0xa8] sm:$0xf]
  %v6628 = vld [vmem:[#allocation2 + $0xac] sm:$0xf]
  %v6629 = vld [vmem:[#allocation2 + $0xb0] sm:$0xf]
  %v6630 = vld [vmem:[#allocation2 + $0xb4] sm:$0xf]
  %v6631 = vld [vmem:[#allocation2 + $0xb8] sm:$0xf]
  %v6632 = vld [vmem:[#allocation2 + $0xbc] sm:$0xf]
  %v6633 = vld [vmem:[#allocation2 + $0xc0] sm:$0xf]
  %v6634 = vld [vmem:[#allocation2 + $0xc4] sm:$0xf]
  %v6635 = vld [vmem:[#allocation2 + $0xc8] sm:$0xf]
  %v6636 = vld [vmem:[#allocation2 + $0xcc] sm:$0xf]
  %v6637 = vld [vmem:[#allocation2 + $0xd0] sm:$0xf]
  %v6638 = vld [vmem:[#allocation2 + $0xd4] sm:$0xf]
  %v6639 = vld [vmem:[#allocation2 + $0xd8] sm:$0xf]
  %v6640 = vld [vmem:[#allocation2 + $0xdc] sm:$0xf]
  %v6641 = vld [vmem:[#allocation2 + $0xe0] sm:$0xf]
  %v6642 = vld [vmem:[#allocation2 + $0xe4] sm:$0xf]
  %v6643 = vld [vmem:[#allocation2 + $0xe8] sm:$0xf]
  %v6644 = vld [vmem:[#allocation2 + $0xec] sm:$0xf]
  %v6645 = vld [vmem:[#allocation2 + $0xf0] sm:$0xf]
  %v6646 = vld [vmem:[#allocation2 + $0xf4] sm:$0xf]
  %v6647 = vld [vmem:[#allocation2 + $0xf8] sm:$0xf]
  %v6648 = vld [vmem:[#allocation2 + $0xfc] sm:$0xf]
  %v6649 = vld [vmem:[#allocation2 + $0x100] sm:$0xf]
  %v6650 = vld [vmem:[#allocation2 + $0x104] sm:$0xf]
  %v6651 = vld [vmem:[#allocation2 + $0x108] sm:$0xf]
  %v6652 = vld [vmem:[#allocation2 + $0x10c] sm:$0xf]
  %v6653 = vld [vmem:[#allocation2 + $0x110] sm:$0xf]
  %v6654 = vld [vmem:[#allocation2 + $0x114] sm:$0xf]
  %v6655 = vld [vmem:[#allocation2 + $0x118] sm:$0xf]
  %v6656 = vld [vmem:[#allocation2 + $0x11c] sm:$0xf]
  %v6657 = vld [vmem:[#allocation2 + $0x120] sm:$0xf]
  %v6658 = vld [vmem:[#allocation2 + $0x124] sm:$0x1]
  %v6659 = vld [vmem:[%s1 + $0x30] sm:$0xf]
  %v6724 = vunpack.c.l.b16 %v6595
  %v6725 = vunpack.c.l.b16 %v6596
  %v6726 = vunpack.c.l.b16 %v6597
  %v6727 = vunpack.c.l.b16 %v6598
  %v6728 = vunpack.c.l.b16 %v6599
  %v6729 = vunpack.c.l.b16 %v6600
  %v6730 = vunpack.c.l.b16 %v6601
  %v6731 = vunpack.c.l.b16 %v6602
  %v6732 = vunpack.c.l.b16 %v6603
  %v6733 = vunpack.c.l.b16 %v6604
  %v6734 = vunpack.c.l.b16 %v6605
  %v6735 = vunpack.c.l.b16 %v6606
  %v6736 = vunpack.c.l.b16 %v6607
  %v6737 = vunpack.c.l.b16 %v6608
  %v6738 = vunpack.c.l.b16 %v6609
  %v6739 = vunpack.c.l.b16 %v6610
  %v6740 = vunpack.c.l.b16 %v6611
  %v6741 = vunpack.c.l.b16 %v6612
  %v6742 = vunpack.c.l.b16 %v6613
  %v6743 = vunpack.c.l.b16 %v6614
  %v6744 = vunpack.c.l.b16 %v6615
  %v6745 = vunpack.c.l.b16 %v6616
  %v6746 = vunpack.c.l.b16 %v6617
  %v6747 = vunpack.c.l.b16 %v6618
  %v6748 = vunpack.c.l.b16 %v6619
  %v6749 = vunpack.c.l.b16 %v6620
  %v6750 = vunpack.c.l.b16 %v6621
  %v6751 = vunpack.c.l.b16 %v6622
  %v6752 = vunpack.c.l.b16 %v6623
  %v6753 = vunpack.c.l.b16 %v6624
  %v6754 = vunpack.c.l.b16 %v6625
  %v6755 = vunpack.c.l.b16 %v6626
  %v6756 = vunpack.c.l.b16 %v6627
  %v6757 = vunpack.c.l.b16 %v6628
  %v6758 = vunpack.c.l.b16 %v6629
  %v6759 = vunpack.c.l.b16 %v6630
  %v6760 = vunpack.c.l.b16 %v6631
  %v6761 = vunpack.c.l.b16 %v6632
  %v6762 = vunpack.c.l.b16 %v6633
  %v6763 = vunpack.c.l.b16 %v6634
  %v6764 = vunpack.c.l.b16 %v6635
  %v6765 = vunpack.c.l.b16 %v6636
  %v6766 = vunpack.c.l.b16 %v6637
  %v6767 = vunpack.c.l.b16 %v6638
  %v6768 = vunpack.c.l.b16 %v6639
  %v6769 = vunpack.c.l.b16 %v6640
  %v6770 = vunpack.c.l.b16 %v6641
  %v6771 = vunpack.c.l.b16 %v6642
  %v6772 = vunpack.c.l.b16 %v6643
  %v6773 = vunpack.c.l.b16 %v6644
  %v6774 = vunpack.c.l.b16 %v6645
  %v6775 = vunpack.c.l.b16 %v6646
  %v6776 = vunpack.c.l.b16 %v6647
  %v6777 = vunpack.c.l.b16 %v6648
  %v6778 = vunpack.c.l.b16 %v6649
  %v6779 = vunpack.c.l.b16 %v6650
  %v6780 = vunpack.c.l.b16 %v6651
  %v6781 = vunpack.c.l.b16 %v6652
  %v6782 = vunpack.c.l.b16 %v6653
  %v6783 = vunpack.c.l.b16 %v6654
  %v6784 = vunpack.c.l.b16 %v6655
  %v6785 = vunpack.c.l.b16 %v6656
  %v6786 = vunpack.c.l.b16 %v6657
  %v6787 = vunpack.c.l.b16 %v6658
  %v6788 = vpack.c.b16 %v6725, %v6724
  %v6789 = vpack.c.b16 %v6727, %v6726
  %v6790 = vpack.c.b16 %v6729, %v6728
  %v6791 = vpack.c.b16 %v6731, %v6730
  %v6792 = vpack.c.b16 %v6733, %v6732
  %v6793 = vpack.c.b16 %v6735, %v6734
  %v6794 = vpack.c.b16 %v6737, %v6736
  %v6795 = vpack.c.b16 %v6739, %v6738
  %v6796 = vpack.c.b16 %v6741, %v6740
  %v6797 = vpack.c.b16 %v6743, %v6742
  %v6798 = vpack.c.b16 %v6745, %v6744
  %v6799 = vpack.c.b16 %v6747, %v6746
  %v6800 = vpack.c.b16 %v6749, %v6748
  %v6801 = vpack.c.b16 %v6751, %v6750
  %v6802 = vpack.c.b16 %v6753, %v6752
  %v6803 = vpack.c.b16 %v6755, %v6754
  %v6804 = vpack.c.b16 %v6757, %v6756
  %v6805 = vpack.c.b16 %v6759, %v6758
  %v6806 = vpack.c.b16 %v6761, %v6760
  %v6807 = vpack.c.b16 %v6763, %v6762
  %v6808 = vpack.c.b16 %v6765, %v6764
  %v6809 = vpack.c.b16 %v6767, %v6766
  %v6810 = vpack.c.b16 %v6769, %v6768
  %v6811 = vpack.c.b16 %v6771, %v6770
  %v6812 = vpack.c.b16 %v6773, %v6772
  %v6813 = vpack.c.b16 %v6775, %v6774
  %v6814 = vpack.c.b16 %v6777, %v6776
  %v6815 = vpack.c.b16 %v6779, %v6778
  %v6816 = vpack.c.b16 %v6781, %v6780
  %v6817 = vpack.c.b16 %v6783, %v6782
  %v6818 = vpack.c.b16 %v6785, %v6784
  %v6819 = vpack.c.b16 %v6787, %v6786
  %v6821 = vshrl.u32 %v6788, 16
  %v6823 = vshll.u32 %v6788, 16
  %v6825 = vrot.slane %v6823, 1
  %v6826 = vor.u32 %v6821, %v6825
  %v6828 = vshll.u32 %v6789, 16
  %v6830 = vrot.slane %v6828, 1
  %v6831 = vsel %vm354, %v6826, %v6830
  %v6832 = vshrl.u32 %v6789, 16
  %v6834 = vor.u32 %v6832, %v6830
  %v6836 = vshll.u32 %v6790, 16
  %v6838 = vrot.slane %v6836, 1
  %v6839 = vsel %vm354, %v6834, %v6838
  %v6840 = vshrl.u32 %v6790, 16
  %v6842 = vor.u32 %v6840, %v6838
  %v6844 = vshll.u32 %v6791, 16
  %v6846 = vrot.slane %v6844, 1
  %v6847 = vsel %vm354, %v6842, %v6846
  %v6848 = vshrl.u32 %v6791, 16
  %v6850 = vor.u32 %v6848, %v6846
  %v6852 = vshll.u32 %v6792, 16
  %v6854 = vrot.slane %v6852, 1
  %v6855 = vsel %vm354, %v6850, %v6854
  %v6856 = vshrl.u32 %v6792, 16
  %v6858 = vor.u32 %v6856, %v6854
  %v6860 = vshll.u32 %v6793, 16
  %v6862 = vrot.slane %v6860, 1
  %v6863 = vsel %vm354, %v6858, %v6862
  %v6864 = vshrl.u32 %v6793, 16
  %v6866 = vor.u32 %v6864, %v6862
  %v6868 = vshll.u32 %v6794, 16
  %v6870 = vrot.slane %v6868, 1
  %v6871 = vsel %vm354, %v6866, %v6870
  %v6872 = vshrl.u32 %v6794, 16
  %v6874 = vor.u32 %v6872, %v6870
  %v6876 = vshll.u32 %v6795, 16
  %v6878 = vrot.slane %v6876, 1
  %v6879 = vsel %vm354, %v6874, %v6878
  %v6880 = vshrl.u32 %v6795, 16
  %v6882 = vor.u32 %v6880, %v6878
  %v6884 = vshll.u32 %v6796, 16
  %v6886 = vrot.slane %v6884, 1
  %v6887 = vsel %vm354, %v6882, %v6886
  %v6888 = vshrl.u32 %v6796, 16
  %v6890 = vor.u32 %v6888, %v6886
  %v6892 = vshll.u32 %v6797, 16
  %v6894 = vrot.slane %v6892, 1
  %v6895 = vsel %vm354, %v6890, %v6894
  %v6896 = vshrl.u32 %v6797, 16
  %v6898 = vor.u32 %v6896, %v6894
  %v6900 = vshll.u32 %v6798, 16
  %v6902 = vrot.slane %v6900, 1
  %v6903 = vsel %vm354, %v6898, %v6902
  %v6904 = vshrl.u32 %v6798, 16
  %v6906 = vor.u32 %v6904, %v6902
  %v6908 = vshll.u32 %v6799, 16
  %v6910 = vrot.slane %v6908, 1
  %v6911 = vsel %vm354, %v6906, %v6910
  %v6912 = vshrl.u32 %v6799, 16
  %v6914 = vor.u32 %v6912, %v6910
  %v6916 = vshll.u32 %v6800, 16
  %v6918 = vrot.slane %v6916, 1
  %v6919 = vsel %vm354, %v6914, %v6918
  %v6920 = vshrl.u32 %v6800, 16
  %v6922 = vor.u32 %v6920, %v6918
  %v6924 = vshll.u32 %v6801, 16
  %v6926 = vrot.slane %v6924, 1
  %v6927 = vsel %vm354, %v6922, %v6926
  %v6928 = vshrl.u32 %v6801, 16
  %v6930 = vor.u32 %v6928, %v6926
  %v6932 = vshll.u32 %v6802, 16
  %v6934 = vrot.slane %v6932, 1
  %v6935 = vsel %vm354, %v6930, %v6934
  %v6936 = vshrl.u32 %v6802, 16
  %v6938 = vor.u32 %v6936, %v6934
  %v6940 = vshll.u32 %v6803, 16
  %v6942 = vrot.slane %v6940, 1
  %v6943 = vsel %vm354, %v6938, %v6942
  %v6944 = vshrl.u32 %v6803, 16
  %v6946 = vor.u32 %v6944, %v6942
  %v6948 = vshll.u32 %v6804, 16
  %v6950 = vrot.slane %v6948, 1
  %v6951 = vsel %vm354, %v6946, %v6950
  %v6952 = vshrl.u32 %v6804, 16
  %v6954 = vor.u32 %v6952, %v6950
  %v6956 = vshll.u32 %v6805, 16
  %v6958 = vrot.slane %v6956, 1
  %v6959 = vsel %vm354, %v6954, %v6958
  %v6960 = vshrl.u32 %v6805, 16
  %v6962 = vor.u32 %v6960, %v6958
  %v6964 = vshll.u32 %v6806, 16
  %v6966 = vrot.slane %v6964, 1
  %v6967 = vsel %vm354, %v6962, %v6966
  %v6968 = vshrl.u32 %v6806, 16
  %v6970 = vor.u32 %v6968, %v6966
  %v6972 = vshll.u32 %v6807, 16
  %v6974 = vrot.slane %v6972, 1
  %v6975 = vsel %vm354, %v6970, %v6974
  %v6976 = vshrl.u32 %v6807, 16
  %v6978 = vor.u32 %v6976, %v6974
  %v6980 = vshll.u32 %v6808, 16
  %v6982 = vrot.slane %v6980, 1
  %v6983 = vsel %vm354, %v6978, %v6982
  %v6984 = vshrl.u32 %v6808, 16
  %v6986 = vor.u32 %v6984, %v6982
  %v6988 = vshll.u32 %v6809, 16
  %v6990 = vrot.slane %v6988, 1
  %v6991 = vsel %vm354, %v6986, %v6990
  %v6992 = vshrl.u32 %v6809, 16
  %v6994 = vor.u32 %v6992, %v6990
  %v6996 = vshll.u32 %v6810, 16
  %v6998 = vrot.slane %v6996, 1
  %v6999 = vsel %vm354, %v6994, %v6998
  %v7000 = vshrl.u32 %v6810, 16
  %v7002 = vor.u32 %v7000, %v6998
  %v7004 = vshll.u32 %v6811, 16
  %v7006 = vrot.slane %v7004, 1
  %v7007 = vsel %vm354, %v7002, %v7006
  %v7008 = vshrl.u32 %v6811, 16
  %v7010 = vor.u32 %v7008, %v7006
  %v7012 = vshll.u32 %v6812, 16
  %v7014 = vrot.slane %v7012, 1
  %v7015 = vsel %vm354, %v7010, %v7014
  %v7016 = vshrl.u32 %v6812, 16
  %v7018 = vor.u32 %v7016, %v7014
  %v7020 = vshll.u32 %v6813, 16
  %v7022 = vrot.slane %v7020, 1
  %v7023 = vsel %vm354, %v7018, %v7022
  %v7024 = vshrl.u32 %v6813, 16
  %v7026 = vor.u32 %v7024, %v7022
  %v7028 = vshll.u32 %v6814, 16
  %v7030 = vrot.slane %v7028, 1
  %v7031 = vsel %vm354, %v7026, %v7030
  %v7032 = vshrl.u32 %v6814, 16
  %v7034 = vor.u32 %v7032, %v7030
  %v7036 = vshll.u32 %v6815, 16
  %v7038 = vrot.slane %v7036, 1
  %v7039 = vsel %vm354, %v7034, %v7038
  %v7040 = vshrl.u32 %v6815, 16
  %v7042 = vor.u32 %v7040, %v7038
  %v7044 = vshll.u32 %v6816, 16
  %v7046 = vrot.slane %v7044, 1
  %v7047 = vsel %vm354, %v7042, %v7046
  %v7048 = vshrl.u32 %v6816, 16
  %v7050 = vor.u32 %v7048, %v7046
  %v7052 = vshll.u32 %v6817, 16
  %v7054 = vrot.slane %v7052, 1
  %v7055 = vsel %vm354, %v7050, %v7054
  %v7056 = vshrl.u32 %v6817, 16
  %v7058 = vor.u32 %v7056, %v7054
  %v7060 = vshll.u32 %v6818, 16
  %v7062 = vrot.slane %v7060, 1
  %v7063 = vsel %vm354, %v7058, %v7062
  %v7064 = vshrl.u32 %v6818, 16
  %v7066 = vor.u32 %v7064, %v7062
  %v7068 = vshll.u32 %v6819, 16
  %v7070 = vrot.slane %v7068, 1
  %v7071 = vsel %vm354, %v7066, %v7070
  %v7072 = vshrl.u32 %v6819, 16
  %v7074 = vor.u32 %v7072, %v7070
  %v7076 = vsel %vm610, %v6831, 0
  %v7079 = vsel %vm610, %v6839, 0
  %v7082 = vsel %vm610, %v6847, 0
  %v7085 = vsel %vm610, %v6855, 0
  %v7088 = vsel %vm610, %v6863, 0
  %v7091 = vsel %vm610, %v6871, 0
  %v7094 = vsel %vm610, %v6879, 0
  %v7097 = vsel %vm610, %v6887, 0
  %v7100 = vsel %vm610, %v6895, 0
  %v7103 = vsel %vm610, %v6903, 0
  %v7106 = vsel %vm610, %v6911, 0
  %v7109 = vsel %vm610, %v6919, 0
  %v7112 = vsel %vm610, %v6927, 0
  %v7115 = vsel %vm610, %v6935, 0
  %v7118 = vsel %vm610, %v6943, 0
  %v7121 = vsel %vm610, %v6951, 0
  %v7124 = vsel %vm610, %v6959, 0
  %v7127 = vsel %vm610, %v6967, 0
  %v7130 = vsel %vm610, %v6975, 0
  %v7133 = vsel %vm610, %v6983, 0
  %v7136 = vsel %vm610, %v6991, 0
  %v7139 = vsel %vm610, %v6999, 0
  %v7142 = vsel %vm610, %v7007, 0
  %v7145 = vsel %vm610, %v7015, 0
  %v7148 = vsel %vm610, %v7023, 0
  %v7151 = vsel %vm610, %v7031, 0
  %v7154 = vsel %vm610, %v7039, 0
  %v7157 = vsel %vm610, %v7047, 0
  %v7160 = vsel %vm610, %v7055, 0
  %v7163 = vsel %vm610, %v7063, 0
  %v7166 = vsel %vm610, %v7071, 0
  %v7169 = vsel %vm610, %v7074, 0
  %v7172 = vsel %vm707, %v6659, 0
  %7174 = vmatpush.bf16.msra.mxu0 0
  %7175 = vmatpush.bf16.msra.mxu0 0
  %7176 = vmatpush.bf16.msra.mxu0 0
  %7177 = vmatpush.bf16.msra.mxu0 0
  %7178 = vmatpush.bf16.msra.mxu0 0
  %7179 = vmatpush.bf16.msra.mxu0 0
  %7180 = vmatpush.bf16.msra.mxu0 0
  %7181 = vmatpush.bf16.msra.mxu0 %v7172
  %7182 = vmatmul.bf16.gmra.mxu0 %v7076
  %v7183 = vpop.f32.mrf.mxu0
  %v7184 = vadd.f32 0.0, %v7183
  %v7185 = vpop.f32.mrf.mxu0
  %v7186 = vadd.f32 0.0, %v7185
  %7187 = vmatmul.bf16.gmra.mxu0 %v7079
  %v7188 = vpop.f32.mrf.mxu0
  %v7189 = vadd.f32 0.0, %v7188
  %v7190 = vpop.f32.mrf.mxu0
  %v7191 = vadd.f32 0.0, %v7190
  %7192 = vmatmul.bf16.gmra.mxu0 %v7082
  %v7193 = vpop.f32.mrf.mxu0
  %v7194 = vadd.f32 0.0, %v7193
  %v7195 = vpop.f32.mrf.mxu0
  %v7196 = vadd.f32 0.0, %v7195
  %7197 = vmatmul.bf16.gmra.mxu0 %v7085
  %v7198 = vpop.f32.mrf.mxu0
  %v7199 = vadd.f32 0.0, %v7198
  %v7200 = vpop.f32.mrf.mxu0
  %v7201 = vadd.f32 0.0, %v7200
  %7202 = vmatmul.bf16.gmra.mxu0 %v7088
  %v7203 = vpop.f32.mrf.mxu0
  %v7204 = vadd.f32 0.0, %v7203
  %v7205 = vpop.f32.mrf.mxu0
  %v7206 = vadd.f32 0.0, %v7205
  %7207 = vmatmul.bf16.gmra.mxu0 %v7091
  %v7208 = vpop.f32.mrf.mxu0
  %v7209 = vadd.f32 0.0, %v7208
  %v7210 = vpop.f32.mrf.mxu0
  %v7211 = vadd.f32 0.0, %v7210
  %7212 = vmatmul.bf16.gmra.mxu0 %v7094
  %v7213 = vpop.f32.mrf.mxu0
  %v7214 = vadd.f32 0.0, %v7213
  %v7215 = vpop.f32.mrf.mxu0
  %v7216 = vadd.f32 0.0, %v7215
  %7217 = vmatmul.bf16.gmra.mxu0 %v7097
  %v7218 = vpop.f32.mrf.mxu0
  %v7219 = vadd.f32 0.0, %v7218
  %v7220 = vpop.f32.mrf.mxu0
  %v7221 = vadd.f32 0.0, %v7220
  %7222 = vmatmul.bf16.gmra.mxu0 %v7100
  %v7223 = vpop.f32.mrf.mxu0
  %v7224 = vadd.f32 0.0, %v7223
  %v7225 = vpop.f32.mrf.mxu0
  %v7226 = vadd.f32 0.0, %v7225
  %7227 = vmatmul.bf16.gmra.mxu0 %v7103
  %v7228 = vpop.f32.mrf.mxu0
  %v7229 = vadd.f32 0.0, %v7228
  %v7230 = vpop.f32.mrf.mxu0
  %v7231 = vadd.f32 0.0, %v7230
  %7232 = vmatmul.bf16.gmra.mxu0 %v7106
  %v7233 = vpop.f32.mrf.mxu0
  %v7234 = vadd.f32 0.0, %v7233
  %v7235 = vpop.f32.mrf.mxu0
  %v7236 = vadd.f32 0.0, %v7235
  %7237 = vmatmul.bf16.gmra.mxu0 %v7109
  %v7238 = vpop.f32.mrf.mxu0
  %v7239 = vadd.f32 0.0, %v7238
  %v7240 = vpop.f32.mrf.mxu0
  %v7241 = vadd.f32 0.0, %v7240
  %7242 = vmatmul.bf16.gmra.mxu0 %v7112
  %v7243 = vpop.f32.mrf.mxu0
  %v7244 = vadd.f32 0.0, %v7243
  %v7245 = vpop.f32.mrf.mxu0
  %v7246 = vadd.f32 0.0, %v7245
  %7247 = vmatmul.bf16.gmra.mxu0 %v7115
  %v7248 = vpop.f32.mrf.mxu0
  %v7249 = vadd.f32 0.0, %v7248
  %v7250 = vpop.f32.mrf.mxu0
  %v7251 = vadd.f32 0.0, %v7250
  %7252 = vmatmul.bf16.gmra.mxu0 %v7118
  %v7253 = vpop.f32.mrf.mxu0
  %v7254 = vadd.f32 0.0, %v7253
  %v7255 = vpop.f32.mrf.mxu0
  %v7256 = vadd.f32 0.0, %v7255
  %7257 = vmatmul.bf16.gmra.mxu0 %v7121
  %v7258 = vpop.f32.mrf.mxu0
  %v7259 = vadd.f32 0.0, %v7258
  %v7260 = vpop.f32.mrf.mxu0
  %v7261 = vadd.f32 0.0, %v7260
  %7262 = vmatmul.bf16.gmra.mxu0 %v7124
  %v7263 = vpop.f32.mrf.mxu0
  %v7264 = vadd.f32 0.0, %v7263
  %v7265 = vpop.f32.mrf.mxu0
  %v7266 = vadd.f32 0.0, %v7265
  %7267 = vmatmul.bf16.gmra.mxu0 %v7127
  %v7268 = vpop.f32.mrf.mxu0
  %v7269 = vadd.f32 0.0, %v7268
  %v7270 = vpop.f32.mrf.mxu0
  %v7271 = vadd.f32 0.0, %v7270
  %7272 = vmatmul.bf16.gmra.mxu0 %v7130
  %v7273 = vpop.f32.mrf.mxu0
  %v7274 = vadd.f32 0.0, %v7273
  %v7275 = vpop.f32.mrf.mxu0
  %v7276 = vadd.f32 0.0, %v7275
  %7277 = vmatmul.bf16.gmra.mxu0 %v7133
  %v7278 = vpop.f32.mrf.mxu0
  %v7279 = vadd.f32 0.0, %v7278
  %v7280 = vpop.f32.mrf.mxu0
  %v7281 = vadd.f32 0.0, %v7280
  %7282 = vmatmul.bf16.gmra.mxu0 %v7136
  %v7283 = vpop.f32.mrf.mxu0
  %v7284 = vadd.f32 0.0, %v7283
  %v7285 = vpop.f32.mrf.mxu0
  %v7286 = vadd.f32 0.0, %v7285
  %7287 = vmatmul.bf16.gmra.mxu0 %v7139
  %v7288 = vpop.f32.mrf.mxu0
  %v7289 = vadd.f32 0.0, %v7288
  %v7290 = vpop.f32.mrf.mxu0
  %v7291 = vadd.f32 0.0, %v7290
  %7292 = vmatmul.bf16.gmra.mxu0 %v7142
  %v7293 = vpop.f32.mrf.mxu0
  %v7294 = vadd.f32 0.0, %v7293
  %v7295 = vpop.f32.mrf.mxu0
  %v7296 = vadd.f32 0.0, %v7295
  %7297 = vmatmul.bf16.gmra.mxu0 %v7145
  %v7298 = vpop.f32.mrf.mxu0
  %v7299 = vadd.f32 0.0, %v7298
  %v7300 = vpop.f32.mrf.mxu0
  %v7301 = vadd.f32 0.0, %v7300
  %7302 = vmatmul.bf16.gmra.mxu0 %v7148
  %v7303 = vpop.f32.mrf.mxu0
  %v7304 = vadd.f32 0.0, %v7303
  %v7305 = vpop.f32.mrf.mxu0
  %v7306 = vadd.f32 0.0, %v7305
  %7307 = vmatmul.bf16.gmra.mxu0 %v7151
  %v7308 = vpop.f32.mrf.mxu0
  %v7309 = vadd.f32 0.0, %v7308
  %v7310 = vpop.f32.mrf.mxu0
  %v7311 = vadd.f32 0.0, %v7310
  %7312 = vmatmul.bf16.gmra.mxu0 %v7154
  %v7313 = vpop.f32.mrf.mxu0
  %v7314 = vadd.f32 0.0, %v7313
  %v7315 = vpop.f32.mrf.mxu0
  %v7316 = vadd.f32 0.0, %v7315
  %7317 = vmatmul.bf16.gmra.mxu0 %v7157
  %v7318 = vpop.f32.mrf.mxu0
  %v7319 = vadd.f32 0.0, %v7318
  %v7320 = vpop.f32.mrf.mxu0
  %v7321 = vadd.f32 0.0, %v7320
  %7322 = vmatmul.bf16.gmra.mxu0 %v7160
  %v7323 = vpop.f32.mrf.mxu0
  %v7324 = vadd.f32 0.0, %v7323
  %v7325 = vpop.f32.mrf.mxu0
  %v7326 = vadd.f32 0.0, %v7325
  %7327 = vmatmul.bf16.gmra.mxu0 %v7163
  %v7328 = vpop.f32.mrf.mxu0
  %v7329 = vadd.f32 0.0, %v7328
  %v7330 = vpop.f32.mrf.mxu0
  %v7331 = vadd.f32 0.0, %v7330
  %7332 = vmatmul.bf16.gmra.mxu0 %v7166
  %v7333 = vpop.f32.mrf.mxu0
  %v7334 = vadd.f32 0.0, %v7333
  %v7335 = vpop.f32.mrf.mxu0
  %v7336 = vadd.f32 0.0, %v7335
  %7337 = vmatmul.bf16.gmra.mxu0 %v7169
  %v7338 = vpop.f32.mrf.mxu0
  %v7339 = vadd.f32 0.0, %v7338
  %v7340 = vpop.f32.mrf.mxu0
  %7341 = vdwg.mxu0
  %v7342 = vadd.f32 %v6532, %v7184
  %v7343 = vadd.f32 %v6533, %v7186
  %v7344 = vadd.f32 %v6534, %v7189
  %v7345 = vadd.f32 %v6535, %v7191
  %v7346 = vadd.f32 %v6536, %v7194
  %v7347 = vadd.f32 %v6537, %v7196
  %v7348 = vadd.f32 %v6538, %v7199
  %v7349 = vadd.f32 %v6539, %v7201
  %v7350 = vadd.f32 %v6540, %v7204
  %v7351 = vadd.f32 %v6541, %v7206
  %v7352 = vadd.f32 %v6542, %v7209
  %v7353 = vadd.f32 %v6543, %v7211
  %v7354 = vadd.f32 %v6544, %v7214
  %v7355 = vadd.f32 %v6545, %v7216
  %v7356 = vadd.f32 %v6546, %v7219
  %v7357 = vadd.f32 %v6547, %v7221
  %v7358 = vadd.f32 %v6548, %v7224
  %v7359 = vadd.f32 %v6549, %v7226
  %v7360 = vadd.f32 %v6550, %v7229
  %v7361 = vadd.f32 %v6551, %v7231
  %v7362 = vadd.f32 %v6552, %v7234
  %v7363 = vadd.f32 %v6553, %v7236
  %v7364 = vadd.f32 %v6554, %v7239
  %v7365 = vadd.f32 %v6555, %v7241
  %v7366 = vadd.f32 %v6556, %v7244
  %v7367 = vadd.f32 %v6557, %v7246
  %v7368 = vadd.f32 %v6558, %v7249
  %v7369 = vadd.f32 %v6559, %v7251
  %v7370 = vadd.f32 %v6560, %v7254
  %v7371 = vadd.f32 %v6561, %v7256
  %v7372 = vadd.f32 %v6562, %v7259
  %v7373 = vadd.f32 %v6563, %v7261
  %v7374 = vadd.f32 %v6564, %v7264
  %v7375 = vadd.f32 %v6565, %v7266
  %v7376 = vadd.f32 %v6566, %v7269
  %v7377 = vadd.f32 %v6567, %v7271
  %v7378 = vadd.f32 %v6568, %v7274
  %v7379 = vadd.f32 %v6569, %v7276
  %v7380 = vadd.f32 %v6570, %v7279
  %v7381 = vadd.f32 %v6571, %v7281
  %v7382 = vadd.f32 %v6572, %v7284
  %v7383 = vadd.f32 %v6573, %v7286
  %v7384 = vadd.f32 %v6574, %v7289
  %v7385 = vadd.f32 %v6575, %v7291
  %v7386 = vadd.f32 %v6576, %v7294
  %v7387 = vadd.f32 %v6577, %v7296
  %v7388 = vadd.f32 %v6578, %v7299
  %v7389 = vadd.f32 %v6579, %v7301
  %v7390 = vadd.f32 %v6580, %v7304
  %v7391 = vadd.f32 %v6581, %v7306
  %v7392 = vadd.f32 %v6582, %v7309
  %v7393 = vadd.f32 %v6583, %v7311
  %v7394 = vadd.f32 %v6584, %v7314
  %v7395 = vadd.f32 %v6585, %v7316
  %v7396 = vadd.f32 %v6586, %v7319
  %v7397 = vadd.f32 %v6587, %v7321
  %v7398 = vadd.f32 %v6588, %v7324
  %v7399 = vadd.f32 %v6589, %v7326
  %v7400 = vadd.f32 %v6590, %v7329
  %v7401 = vadd.f32 %v6591, %v7331
  %v7402 = vadd.f32 %v6592, %v7334
  %v7403 = vadd.f32 %v6593, %v7336
  %v7404 = vadd.f32 %v6594, %v7339
  %v7405 = vld [vmem:[#allocation2 + $0x28] sm:$0xe]
  %v7406 = vld [vmem:[%s1 + $0x34] sm:$0xf]
  %v7408 = vunpack.c.l.b16 %v7405
  %v7409 = vpack.c.b16 %v6725, %v7408
  %v7410 = vrot.slane %v7409, 1
  %v7411 = vrot.slane %v6789, 1
  %v7412 = vsel %vm1121, %v7410, %v7411
  %v7413 = vrot.slane %v6790, 1
  %v7414 = vsel %vm1121, %v7411, %v7413
  %v7415 = vrot.slane %v6791, 1
  %v7416 = vsel %vm1121, %v7413, %v7415
  %v7417 = vrot.slane %v6792, 1
  %v7418 = vsel %vm1121, %v7415, %v7417
  %v7419 = vrot.slane %v6793, 1
  %v7420 = vsel %vm1121, %v7417, %v7419
  %v7421 = vrot.slane %v6794, 1
  %v7422 = vsel %vm1121, %v7419, %v7421
  %v7423 = vrot.slane %v6795, 1
  %v7424 = vsel %vm1121, %v7421, %v7423
  %v7425 = vrot.slane %v6796, 1
  %v7426 = vsel %vm1121, %v7423, %v7425
  %v7427 = vrot.slane %v6797, 1
  %v7428 = vsel %vm1121, %v7425, %v7427
  %v7429 = vrot.slane %v6798, 1
  %v7430 = vsel %vm1121, %v7427, %v7429
  %v7431 = vrot.slane %v6799, 1
  %v7432 = vsel %vm1121, %v7429, %v7431
  %v7433 = vrot.slane %v6800, 1
  %v7434 = vsel %vm1121, %v7431, %v7433
  %v7435 = vrot.slane %v6801, 1
  %v7436 = vsel %vm1121, %v7433, %v7435
  %v7437 = vrot.slane %v6802, 1
  %v7438 = vsel %vm1121, %v7435, %v7437
  %v7439 = vrot.slane %v6803, 1
  %v7440 = vsel %vm1121, %v7437, %v7439
  %v7441 = vrot.slane %v6804, 1
  %v7442 = vsel %vm1121, %v7439, %v7441
  %v7443 = vrot.slane %v6805, 1
  %v7444 = vsel %vm1121, %v7441, %v7443
  %v7445 = vrot.slane %v6806, 1
  %v7446 = vsel %vm1121, %v7443, %v7445
  %v7447 = vrot.slane %v6807, 1
  %v7448 = vsel %vm1121, %v7445, %v7447
  %v7449 = vrot.slane %v6808, 1
  %v7450 = vsel %vm1121, %v7447, %v7449
  %v7451 = vrot.slane %v6809, 1
  %v7452 = vsel %vm1121, %v7449, %v7451
  %v7453 = vrot.slane %v6810, 1
  %v7454 = vsel %vm1121, %v7451, %v7453
  %v7455 = vrot.slane %v6811, 1
  %v7456 = vsel %vm1121, %v7453, %v7455
  %v7457 = vrot.slane %v6812, 1
  %v7458 = vsel %vm1121, %v7455, %v7457
  %v7459 = vrot.slane %v6813, 1
  %v7460 = vsel %vm1121, %v7457, %v7459
  %v7461 = vrot.slane %v6814, 1
  %v7462 = vsel %vm1121, %v7459, %v7461
  %v7463 = vrot.slane %v6815, 1
  %v7464 = vsel %vm1121, %v7461, %v7463
  %v7465 = vrot.slane %v6816, 1
  %v7466 = vsel %vm1121, %v7463, %v7465
  %v7467 = vrot.slane %v6817, 1
  %v7468 = vsel %vm1121, %v7465, %v7467
  %v7469 = vrot.slane %v6818, 1
  %v7470 = vsel %vm1121, %v7467, %v7469
  %v7471 = vrot.slane %v6819, 1
  %v7472 = vsel %vm1121, %v7469, %v7471
  %v7474 = vsel %vm610, %v7412, 0
  %v7477 = vsel %vm610, %v7414, 0
  %v7480 = vsel %vm610, %v7416, 0
  %v7483 = vsel %vm610, %v7418, 0
  %v7486 = vsel %vm610, %v7420, 0
  %v7489 = vsel %vm610, %v7422, 0
  %v7492 = vsel %vm610, %v7424, 0
  %v7495 = vsel %vm610, %v7426, 0
  %v7498 = vsel %vm610, %v7428, 0
  %v7501 = vsel %vm610, %v7430, 0
  %v7504 = vsel %vm610, %v7432, 0
  %v7507 = vsel %vm610, %v7434, 0
  %v7510 = vsel %vm610, %v7436, 0
  %v7513 = vsel %vm610, %v7438, 0
  %v7516 = vsel %vm610, %v7440, 0
  %v7519 = vsel %vm610, %v7442, 0
  %v7522 = vsel %vm610, %v7444, 0
  %v7525 = vsel %vm610, %v7446, 0
  %v7528 = vsel %vm610, %v7448, 0
  %v7531 = vsel %vm610, %v7450, 0
  %v7534 = vsel %vm610, %v7452, 0
  %v7537 = vsel %vm610, %v7454, 0
  %v7540 = vsel %vm610, %v7456, 0
  %v7543 = vsel %vm610, %v7458, 0
  %v7546 = vsel %vm610, %v7460, 0
  %v7549 = vsel %vm610, %v7462, 0
  %v7552 = vsel %vm610, %v7464, 0
  %v7555 = vsel %vm610, %v7466, 0
  %v7558 = vsel %vm610, %v7468, 0
  %v7561 = vsel %vm610, %v7470, 0
  %v7564 = vsel %vm610, %v7472, 0
  %v7567 = vsel %vm610, %v7471, 0
  %v7570 = vsel %vm707, %v7406, 0
  %7572 = vmatpush.bf16.msra.mxu0 0
  %7573 = vmatpush.bf16.msra.mxu0 0
  %7574 = vmatpush.bf16.msra.mxu0 0
  %7575 = vmatpush.bf16.msra.mxu0 0
  %7576 = vmatpush.bf16.msra.mxu0 0
  %7577 = vmatpush.bf16.msra.mxu0 0
  %7578 = vmatpush.bf16.msra.mxu0 0
  %7579 = vmatpush.bf16.msra.mxu0 %v7570
  %7580 = vmatmul.bf16.gmra.mxu0 %v7474
  %v7581 = vpop.f32.mrf.mxu0
  %v7582 = vadd.f32 0.0, %v7581
  %v7583 = vpop.f32.mrf.mxu0
  %v7584 = vadd.f32 0.0, %v7583
  %7585 = vmatmul.bf16.gmra.mxu0 %v7477
  %v7586 = vpop.f32.mrf.mxu0
  %v7587 = vadd.f32 0.0, %v7586
  %v7588 = vpop.f32.mrf.mxu0
  %v7589 = vadd.f32 0.0, %v7588
  %7590 = vmatmul.bf16.gmra.mxu0 %v7480
  %v7591 = vpop.f32.mrf.mxu0
  %v7592 = vadd.f32 0.0, %v7591
  %v7593 = vpop.f32.mrf.mxu0
  %v7594 = vadd.f32 0.0, %v7593
  %7595 = vmatmul.bf16.gmra.mxu0 %v7483
  %v7596 = vpop.f32.mrf.mxu0
  %v7597 = vadd.f32 0.0, %v7596
  %v7598 = vpop.f32.mrf.mxu0
  %v7599 = vadd.f32 0.0, %v7598
  %7600 = vmatmul.bf16.gmra.mxu0 %v7486
  %v7601 = vpop.f32.mrf.mxu0
  %v7602 = vadd.f32 0.0, %v7601
  %v7603 = vpop.f32.mrf.mxu0
  %v7604 = vadd.f32 0.0, %v7603
  %7605 = vmatmul.bf16.gmra.mxu0 %v7489
  %v7606 = vpop.f32.mrf.mxu0
  %v7607 = vadd.f32 0.0, %v7606
  %v7608 = vpop.f32.mrf.mxu0
  %v7609 = vadd.f32 0.0, %v7608
  %7610 = vmatmul.bf16.gmra.mxu0 %v7492
  %v7611 = vpop.f32.mrf.mxu0
  %v7612 = vadd.f32 0.0, %v7611
  %v7613 = vpop.f32.mrf.mxu0
  %v7614 = vadd.f32 0.0, %v7613
  %7615 = vmatmul.bf16.gmra.mxu0 %v7495
  %v7616 = vpop.f32.mrf.mxu0
  %v7617 = vadd.f32 0.0, %v7616
  %v7618 = vpop.f32.mrf.mxu0
  %v7619 = vadd.f32 0.0, %v7618
  %7620 = vmatmul.bf16.gmra.mxu0 %v7498
  %v7621 = vpop.f32.mrf.mxu0
  %v7622 = vadd.f32 0.0, %v7621
  %v7623 = vpop.f32.mrf.mxu0
  %v7624 = vadd.f32 0.0, %v7623
  %7625 = vmatmul.bf16.gmra.mxu0 %v7501
  %v7626 = vpop.f32.mrf.mxu0
  %v7627 = vadd.f32 0.0, %v7626
  %v7628 = vpop.f32.mrf.mxu0
  %v7629 = vadd.f32 0.0, %v7628
  %7630 = vmatmul.bf16.gmra.mxu0 %v7504
  %v7631 = vpop.f32.mrf.mxu0
  %v7632 = vadd.f32 0.0, %v7631
  %v7633 = vpop.f32.mrf.mxu0
  %v7634 = vadd.f32 0.0, %v7633
  %7635 = vmatmul.bf16.gmra.mxu0 %v7507
  %v7636 = vpop.f32.mrf.mxu0
  %v7637 = vadd.f32 0.0, %v7636
  %v7638 = vpop.f32.mrf.mxu0
  %v7639 = vadd.f32 0.0, %v7638
  %7640 = vmatmul.bf16.gmra.mxu0 %v7510
  %v7641 = vpop.f32.mrf.mxu0
  %v7642 = vadd.f32 0.0, %v7641
  %v7643 = vpop.f32.mrf.mxu0
  %v7644 = vadd.f32 0.0, %v7643
  %7645 = vmatmul.bf16.gmra.mxu0 %v7513
  %v7646 = vpop.f32.mrf.mxu0
  %v7647 = vadd.f32 0.0, %v7646
  %v7648 = vpop.f32.mrf.mxu0
  %v7649 = vadd.f32 0.0, %v7648
  %7650 = vmatmul.bf16.gmra.mxu0 %v7516
  %v7651 = vpop.f32.mrf.mxu0
  %v7652 = vadd.f32 0.0, %v7651
  %v7653 = vpop.f32.mrf.mxu0
  %v7654 = vadd.f32 0.0, %v7653
  %7655 = vmatmul.bf16.gmra.mxu0 %v7519
  %v7656 = vpop.f32.mrf.mxu0
  %v7657 = vadd.f32 0.0, %v7656
  %v7658 = vpop.f32.mrf.mxu0
  %v7659 = vadd.f32 0.0, %v7658
  %7660 = vmatmul.bf16.gmra.mxu0 %v7522
  %v7661 = vpop.f32.mrf.mxu0
  %v7662 = vadd.f32 0.0, %v7661
  %v7663 = vpop.f32.mrf.mxu0
  %v7664 = vadd.f32 0.0, %v7663
  %7665 = vmatmul.bf16.gmra.mxu0 %v7525
  %v7666 = vpop.f32.mrf.mxu0
  %v7667 = vadd.f32 0.0, %v7666
  %v7668 = vpop.f32.mrf.mxu0
  %v7669 = vadd.f32 0.0, %v7668
  %7670 = vmatmul.bf16.gmra.mxu0 %v7528
  %v7671 = vpop.f32.mrf.mxu0
  %v7672 = vadd.f32 0.0, %v7671
  %v7673 = vpop.f32.mrf.mxu0
  %v7674 = vadd.f32 0.0, %v7673
  %7675 = vmatmul.bf16.gmra.mxu0 %v7531
  %v7676 = vpop.f32.mrf.mxu0
  %v7677 = vadd.f32 0.0, %v7676
  %v7678 = vpop.f32.mrf.mxu0
  %v7679 = vadd.f32 0.0, %v7678
  %7680 = vmatmul.bf16.gmra.mxu0 %v7534
  %v7681 = vpop.f32.mrf.mxu0
  %v7682 = vadd.f32 0.0, %v7681
  %v7683 = vpop.f32.mrf.mxu0
  %v7684 = vadd.f32 0.0, %v7683
  %7685 = vmatmul.bf16.gmra.mxu0 %v7537
  %v7686 = vpop.f32.mrf.mxu0
  %v7687 = vadd.f32 0.0, %v7686
  %v7688 = vpop.f32.mrf.mxu0
  %v7689 = vadd.f32 0.0, %v7688
  %7690 = vmatmul.bf16.gmra.mxu0 %v7540
  %v7691 = vpop.f32.mrf.mxu0
  %v7692 = vadd.f32 0.0, %v7691
  %v7693 = vpop.f32.mrf.mxu0
  %v7694 = vadd.f32 0.0, %v7693
  %7695 = vmatmul.bf16.gmra.mxu0 %v7543
  %v7696 = vpop.f32.mrf.mxu0
  %v7697 = vadd.f32 0.0, %v7696
  %v7698 = vpop.f32.mrf.mxu0
  %v7699 = vadd.f32 0.0, %v7698
  %7700 = vmatmul.bf16.gmra.mxu0 %v7546
  %v7701 = vpop.f32.mrf.mxu0
  %v7702 = vadd.f32 0.0, %v7701
  %v7703 = vpop.f32.mrf.mxu0
  %v7704 = vadd.f32 0.0, %v7703
  %7705 = vmatmul.bf16.gmra.mxu0 %v7549
  %v7706 = vpop.f32.mrf.mxu0
  %v7707 = vadd.f32 0.0, %v7706
  %v7708 = vpop.f32.mrf.mxu0
  %v7709 = vadd.f32 0.0, %v7708
  %7710 = vmatmul.bf16.gmra.mxu0 %v7552
  %v7711 = vpop.f32.mrf.mxu0
  %v7712 = vadd.f32 0.0, %v7711
  %v7713 = vpop.f32.mrf.mxu0
  %v7714 = vadd.f32 0.0, %v7713
  %7715 = vmatmul.bf16.gmra.mxu0 %v7555
  %v7716 = vpop.f32.mrf.mxu0
  %v7717 = vadd.f32 0.0, %v7716
  %v7718 = vpop.f32.mrf.mxu0
  %v7719 = vadd.f32 0.0, %v7718
  %7720 = vmatmul.bf16.gmra.mxu0 %v7558
  %v7721 = vpop.f32.mrf.mxu0
  %v7722 = vadd.f32 0.0, %v7721
  %v7723 = vpop.f32.mrf.mxu0
  %v7724 = vadd.f32 0.0, %v7723
  %7725 = vmatmul.bf16.gmra.mxu0 %v7561
  %v7726 = vpop.f32.mrf.mxu0
  %v7727 = vadd.f32 0.0, %v7726
  %v7728 = vpop.f32.mrf.mxu0
  %v7729 = vadd.f32 0.0, %v7728
  %7730 = vmatmul.bf16.gmra.mxu0 %v7564
  %v7731 = vpop.f32.mrf.mxu0
  %v7732 = vadd.f32 0.0, %v7731
  %v7733 = vpop.f32.mrf.mxu0
  %v7734 = vadd.f32 0.0, %v7733
  %7735 = vmatmul.bf16.gmra.mxu0 %v7567
  %v7736 = vpop.f32.mrf.mxu0
  %v7737 = vadd.f32 0.0, %v7736
  %v7738 = vpop.f32.mrf.mxu0
  %7739 = vdwg.mxu0
  %v7740 = vadd.f32 %v7342, %v7582
  %v7741 = vadd.f32 %v7343, %v7584
  %v7742 = vadd.f32 %v7344, %v7587
  %v7743 = vadd.f32 %v7345, %v7589
  %v7744 = vadd.f32 %v7346, %v7592
  %v7745 = vadd.f32 %v7347, %v7594
  %v7746 = vadd.f32 %v7348, %v7597
  %v7747 = vadd.f32 %v7349, %v7599
  %v7748 = vadd.f32 %v7350, %v7602
  %v7749 = vadd.f32 %v7351, %v7604
  %v7750 = vadd.f32 %v7352, %v7607
  %v7751 = vadd.f32 %v7353, %v7609
  %v7752 = vadd.f32 %v7354, %v7612
  %v7753 = vadd.f32 %v7355, %v7614
  %v7754 = vadd.f32 %v7356, %v7617
  %v7755 = vadd.f32 %v7357, %v7619
  %v7756 = vadd.f32 %v7358, %v7622
  %v7757 = vadd.f32 %v7359, %v7624
  %v7758 = vadd.f32 %v7360, %v7627
  %v7759 = vadd.f32 %v7361, %v7629
  %v7760 = vadd.f32 %v7362, %v7632
  %v7761 = vadd.f32 %v7363, %v7634
  %v7762 = vadd.f32 %v7364, %v7637
  %v7763 = vadd.f32 %v7365, %v7639
  %v7764 = vadd.f32 %v7366, %v7642
  %v7765 = vadd.f32 %v7367, %v7644
  %v7766 = vadd.f32 %v7368, %v7647
  %v7767 = vadd.f32 %v7369, %v7649
  %v7768 = vadd.f32 %v7370, %v7652
  %v7769 = vadd.f32 %v7371, %v7654
  %v7770 = vadd.f32 %v7372, %v7657
  %v7771 = vadd.f32 %v7373, %v7659
  %v7772 = vadd.f32 %v7374, %v7662
  %v7773 = vadd.f32 %v7375, %v7664
  %v7774 = vadd.f32 %v7376, %v7667
  %v7775 = vadd.f32 %v7377, %v7669
  %v7776 = vadd.f32 %v7378, %v7672
  %v7777 = vadd.f32 %v7379, %v7674
  %v7778 = vadd.f32 %v7380, %v7677
  %v7779 = vadd.f32 %v7381, %v7679
  %v7780 = vadd.f32 %v7382, %v7682
  %v7781 = vadd.f32 %v7383, %v7684
  %v7782 = vadd.f32 %v7384, %v7687
  %v7783 = vadd.f32 %v7385, %v7689
  %v7784 = vadd.f32 %v7386, %v7692
  %v7785 = vadd.f32 %v7387, %v7694
  %v7786 = vadd.f32 %v7388, %v7697
  %v7787 = vadd.f32 %v7389, %v7699
  %v7788 = vadd.f32 %v7390, %v7702
  %v7789 = vadd.f32 %v7391, %v7704
  %v7790 = vadd.f32 %v7392, %v7707
  %v7791 = vadd.f32 %v7393, %v7709
  %v7792 = vadd.f32 %v7394, %v7712
  %v7793 = vadd.f32 %v7395, %v7714
  %v7794 = vadd.f32 %v7396, %v7717
  %v7795 = vadd.f32 %v7397, %v7719
  %v7796 = vadd.f32 %v7398, %v7722
  %v7797 = vadd.f32 %v7399, %v7724
  %v7798 = vadd.f32 %v7400, %v7727
  %v7799 = vadd.f32 %v7401, %v7729
  %v7800 = vadd.f32 %v7402, %v7732
  %v7801 = vadd.f32 %v7403, %v7734
  %v7802 = vadd.f32 %v7404, %v7737
  %v7803 = vld [vmem:[#allocation2 + $0x124] sm:$0x3]
  %v7804 = vld [vmem:[%s1 + $0x38] sm:$0xf]
  %v7806 = vunpack.c.l.b16 %v7803
  %v7807 = vpack.c.b16 %v7806, %v6786
  %v7809 = vshrl.u32 %v7409, 16
  %v7811 = vrot.slane %v7809, 1
  %v7812 = vshll.u32 %v7409, 16
  %v7814 = vrot.slane %v7812, 2
  %v7815 = vor.u32 %v7811, %v7814
  %v7816 = vrot.slane %v6832, 1
  %v7817 = vrot.slane %v6828, 2
  %v7818 = vor.u32 %v7816, %v7817
  %v7819 = vsel %vm2728, %v7815, %v7818
  %v7820 = vrot.slane %v6840, 1
  %v7821 = vrot.slane %v6836, 2
  %v7822 = vor.u32 %v7820, %v7821
  %v7823 = vsel %vm2728, %v7818, %v7822
  %v7824 = vrot.slane %v6848, 1
  %v7825 = vrot.slane %v6844, 2
  %v7826 = vor.u32 %v7824, %v7825
  %v7827 = vsel %vm2728, %v7822, %v7826
  %v7828 = vrot.slane %v6856, 1
  %v7829 = vrot.slane %v6852, 2
  %v7830 = vor.u32 %v7828, %v7829
  %v7831 = vsel %vm2728, %v7826, %v7830
  %v7832 = vrot.slane %v6864, 1
  %v7833 = vrot.slane %v6860, 2
  %v7834 = vor.u32 %v7832, %v7833
  %v7835 = vsel %vm2728, %v7830, %v7834
  %v7836 = vrot.slane %v6872, 1
  %v7837 = vrot.slane %v6868, 2
  %v7838 = vor.u32 %v7836, %v7837
  %v7839 = vsel %vm2728, %v7834, %v7838
  %v7840 = vrot.slane %v6880, 1
  %v7841 = vrot.slane %v6876, 2
  %v7842 = vor.u32 %v7840, %v7841
  %v7843 = vsel %vm2728, %v7838, %v7842
  %v7844 = vrot.slane %v6888, 1
  %v7845 = vrot.slane %v6884, 2
  %v7846 = vor.u32 %v7844, %v7845
  %v7847 = vsel %vm2728, %v7842, %v7846
  %v7848 = vrot.slane %v6896, 1
  %v7849 = vrot.slane %v6892, 2
  %v7850 = vor.u32 %v7848, %v7849
  %v7851 = vsel %vm2728, %v7846, %v7850
  %v7852 = vrot.slane %v6904, 1
  %v7853 = vrot.slane %v6900, 2
  %v7854 = vor.u32 %v7852, %v7853
  %v7855 = vsel %vm2728, %v7850, %v7854
  %v7856 = vrot.slane %v6912, 1
  %v7857 = vrot.slane %v6908, 2
  %v7858 = vor.u32 %v7856, %v7857
  %v7859 = vsel %vm2728, %v7854, %v7858
  %v7860 = vrot.slane %v6920, 1
  %v7861 = vrot.slane %v6916, 2
  %v7862 = vor.u32 %v7860, %v7861
  %v7863 = vsel %vm2728, %v7858, %v7862
  %v7864 = vrot.slane %v6928, 1
  %v7865 = vrot.slane %v6924, 2
  %v7866 = vor.u32 %v7864, %v7865
  %v7867 = vsel %vm2728, %v7862, %v7866
  %v7868 = vrot.slane %v6936, 1
  %v7869 = vrot.slane %v6932, 2
  %v7870 = vor.u32 %v7868, %v7869
  %v7871 = vsel %vm2728, %v7866, %v7870
  %v7872 = vrot.slane %v6944, 1
  %v7873 = vrot.slane %v6940, 2
  %v7874 = vor.u32 %v7872, %v7873
  %v7875 = vsel %vm2728, %v7870, %v7874
  %v7876 = vrot.slane %v6952, 1
  %v7877 = vrot.slane %v6948, 2
  %v7878 = vor.u32 %v7876, %v7877
  %v7879 = vsel %vm2728, %v7874, %v7878
  %v7880 = vrot.slane %v6960, 1
  %v7881 = vrot.slane %v6956, 2
  %v7882 = vor.u32 %v7880, %v7881
  %v7883 = vsel %vm2728, %v7878, %v7882
  %v7884 = vrot.slane %v6968, 1
  %v7885 = vrot.slane %v6964, 2
  %v7886 = vor.u32 %v7884, %v7885
  %v7887 = vsel %vm2728, %v7882, %v7886
  %v7888 = vrot.slane %v6976, 1
  %v7889 = vrot.slane %v6972, 2
  %v7890 = vor.u32 %v7888, %v7889
  %v7891 = vsel %vm2728, %v7886, %v7890
  %v7892 = vrot.slane %v6984, 1
  %v7893 = vrot.slane %v6980, 2
  %v7894 = vor.u32 %v7892, %v7893
  %v7895 = vsel %vm2728, %v7890, %v7894
  %v7896 = vrot.slane %v6992, 1
  %v7897 = vrot.slane %v6988, 2
  %v7898 = vor.u32 %v7896, %v7897
  %v7899 = vsel %vm2728, %v7894, %v7898
  %v7900 = vrot.slane %v7000, 1
  %v7901 = vrot.slane %v6996, 2
  %v7902 = vor.u32 %v7900, %v7901
  %v7903 = vsel %vm2728, %v7898, %v7902
  %v7904 = vrot.slane %v7008, 1
  %v7905 = vrot.slane %v7004, 2
  %v7906 = vor.u32 %v7904, %v7905
  %v7907 = vsel %vm2728, %v7902, %v7906
  %v7908 = vrot.slane %v7016, 1
  %v7909 = vrot.slane %v7012, 2
  %v7910 = vor.u32 %v7908, %v7909
  %v7911 = vsel %vm2728, %v7906, %v7910
  %v7912 = vrot.slane %v7024, 1
  %v7913 = vrot.slane %v7020, 2
  %v7914 = vor.u32 %v7912, %v7913
  %v7915 = vsel %vm2728, %v7910, %v7914
  %v7916 = vrot.slane %v7032, 1
  %v7917 = vrot.slane %v7028, 2
  %v7918 = vor.u32 %v7916, %v7917
  %v7919 = vsel %vm2728, %v7914, %v7918
  %v7920 = vrot.slane %v7040, 1
  %v7921 = vrot.slane %v7036, 2
  %v7922 = vor.u32 %v7920, %v7921
  %v7923 = vsel %vm2728, %v7918, %v7922
  %v7924 = vrot.slane %v7048, 1
  %v7925 = vrot.slane %v7044, 2
  %v7926 = vor.u32 %v7924, %v7925
  %v7927 = vsel %vm2728, %v7922, %v7926
  %v7928 = vrot.slane %v7056, 1
  %v7929 = vrot.slane %v7052, 2
  %v7930 = vor.u32 %v7928, %v7929
  %v7931 = vsel %vm2728, %v7926, %v7930
  %v7932 = vrot.slane %v7064, 1
  %v7933 = vrot.slane %v7060, 2
  %v7934 = vor.u32 %v7932, %v7933
  %v7935 = vsel %vm2728, %v7930, %v7934
  %v7937 = vshrl.u32 %v7807, 16
  %v7939 = vrot.slane %v7937, 1
  %v7940 = vshll.u32 %v7807, 16
  %v7942 = vrot.slane %v7940, 2
  %v7943 = vor.u32 %v7939, %v7942
  %v7944 = vsel %vm2728, %v7934, %v7943
  %v7946 = vsel %vm610, %v7819, 0
  %v7949 = vsel %vm610, %v7823, 0
  %v7952 = vsel %vm610, %v7827, 0
  %v7955 = vsel %vm610, %v7831, 0
  %v7958 = vsel %vm610, %v7835, 0
  %v7961 = vsel %vm610, %v7839, 0
  %v7964 = vsel %vm610, %v7843, 0
  %v7967 = vsel %vm610, %v7847, 0
  %v7970 = vsel %vm610, %v7851, 0
  %v7973 = vsel %vm610, %v7855, 0
  %v7976 = vsel %vm610, %v7859, 0
  %v7979 = vsel %vm610, %v7863, 0
  %v7982 = vsel %vm610, %v7867, 0
  %v7985 = vsel %vm610, %v7871, 0
  %v7988 = vsel %vm610, %v7875, 0
  %v7991 = vsel %vm610, %v7879, 0
  %v7994 = vsel %vm610, %v7883, 0
  %v7997 = vsel %vm610, %v7887, 0
  %v8000 = vsel %vm610, %v7891, 0
  %v8003 = vsel %vm610, %v7895, 0
  %v8006 = vsel %vm610, %v7899, 0
  %v8009 = vsel %vm610, %v7903, 0
  %v8012 = vsel %vm610, %v7907, 0
  %v8015 = vsel %vm610, %v7911, 0
  %v8018 = vsel %vm610, %v7915, 0
  %v8021 = vsel %vm610, %v7919, 0
  %v8024 = vsel %vm610, %v7923, 0
  %v8027 = vsel %vm610, %v7927, 0
  %v8030 = vsel %vm610, %v7931, 0
  %v8033 = vsel %vm610, %v7935, 0
  %v8036 = vsel %vm610, %v7944, 0
  %v8039 = vsel %vm610, %v7943, 0
  %v8042 = vsel %vm707, %v7804, 0
  %8044 = vmatpush.bf16.msra.mxu0 0
  %8045 = vmatpush.bf16.msra.mxu0 0
  %8046 = vmatpush.bf16.msra.mxu0 0
  %8047 = vmatpush.bf16.msra.mxu0 0
  %8048 = vmatpush.bf16.msra.mxu0 0
  %8049 = vmatpush.bf16.msra.mxu0 0
  %8050 = vmatpush.bf16.msra.mxu0 0
  %8051 = vmatpush.bf16.msra.mxu0 %v8042
  %8052 = vmatmul.bf16.gmra.mxu0 %v7946
  %v8053 = vpop.f32.mrf.mxu0
  %v8054 = vadd.f32 0.0, %v8053
  %v8055 = vpop.f32.mrf.mxu0
  %v8056 = vadd.f32 0.0, %v8055
  %8057 = vmatmul.bf16.gmra.mxu0 %v7949
  %v8058 = vpop.f32.mrf.mxu0
  %v8059 = vadd.f32 0.0, %v8058
  %v8060 = vpop.f32.mrf.mxu0
  %v8061 = vadd.f32 0.0, %v8060
  %8062 = vmatmul.bf16.gmra.mxu0 %v7952
  %v8063 = vpop.f32.mrf.mxu0
  %v8064 = vadd.f32 0.0, %v8063
  %v8065 = vpop.f32.mrf.mxu0
  %v8066 = vadd.f32 0.0, %v8065
  %8067 = vmatmul.bf16.gmra.mxu0 %v7955
  %v8068 = vpop.f32.mrf.mxu0
  %v8069 = vadd.f32 0.0, %v8068
  %v8070 = vpop.f32.mrf.mxu0
  %v8071 = vadd.f32 0.0, %v8070
  %8072 = vmatmul.bf16.gmra.mxu0 %v7958
  %v8073 = vpop.f32.mrf.mxu0
  %v8074 = vadd.f32 0.0, %v8073
  %v8075 = vpop.f32.mrf.mxu0
  %v8076 = vadd.f32 0.0, %v8075
  %8077 = vmatmul.bf16.gmra.mxu0 %v7961
  %v8078 = vpop.f32.mrf.mxu0
  %v8079 = vadd.f32 0.0, %v8078
  %v8080 = vpop.f32.mrf.mxu0
  %v8081 = vadd.f32 0.0, %v8080
  %8082 = vmatmul.bf16.gmra.mxu0 %v7964
  %v8083 = vpop.f32.mrf.mxu0
  %v8084 = vadd.f32 0.0, %v8083
  %v8085 = vpop.f32.mrf.mxu0
  %v8086 = vadd.f32 0.0, %v8085
  %8087 = vmatmul.bf16.gmra.mxu0 %v7967
  %v8088 = vpop.f32.mrf.mxu0
  %v8089 = vadd.f32 0.0, %v8088
  %v8090 = vpop.f32.mrf.mxu0
  %v8091 = vadd.f32 0.0, %v8090
  %8092 = vmatmul.bf16.gmra.mxu0 %v7970
  %v8093 = vpop.f32.mrf.mxu0
  %v8094 = vadd.f32 0.0, %v8093
  %v8095 = vpop.f32.mrf.mxu0
  %v8096 = vadd.f32 0.0, %v8095
  %8097 = vmatmul.bf16.gmra.mxu0 %v7973
  %v8098 = vpop.f32.mrf.mxu0
  %v8099 = vadd.f32 0.0, %v8098
  %v8100 = vpop.f32.mrf.mxu0
  %v8101 = vadd.f32 0.0, %v8100
  %8102 = vmatmul.bf16.gmra.mxu0 %v7976
  %v8103 = vpop.f32.mrf.mxu0
  %v8104 = vadd.f32 0.0, %v8103
  %v8105 = vpop.f32.mrf.mxu0
  %v8106 = vadd.f32 0.0, %v8105
  %8107 = vmatmul.bf16.gmra.mxu0 %v7979
  %v8108 = vpop.f32.mrf.mxu0
  %v8109 = vadd.f32 0.0, %v8108
  %v8110 = vpop.f32.mrf.mxu0
  %v8111 = vadd.f32 0.0, %v8110
  %8112 = vmatmul.bf16.gmra.mxu0 %v7982
  %v8113 = vpop.f32.mrf.mxu0
  %v8114 = vadd.f32 0.0, %v8113
  %v8115 = vpop.f32.mrf.mxu0
  %v8116 = vadd.f32 0.0, %v8115
  %8117 = vmatmul.bf16.gmra.mxu0 %v7985
  %v8118 = vpop.f32.mrf.mxu0
  %v8119 = vadd.f32 0.0, %v8118
  %v8120 = vpop.f32.mrf.mxu0
  %v8121 = vadd.f32 0.0, %v8120
  %8122 = vmatmul.bf16.gmra.mxu0 %v7988
  %v8123 = vpop.f32.mrf.mxu0
  %v8124 = vadd.f32 0.0, %v8123
  %v8125 = vpop.f32.mrf.mxu0
  %v8126 = vadd.f32 0.0, %v8125
  %8127 = vmatmul.bf16.gmra.mxu0 %v7991
  %v8128 = vpop.f32.mrf.mxu0
  %v8129 = vadd.f32 0.0, %v8128
  %v8130 = vpop.f32.mrf.mxu0
  %v8131 = vadd.f32 0.0, %v8130
  %8132 = vmatmul.bf16.gmra.mxu0 %v7994
  %v8133 = vpop.f32.mrf.mxu0
  %v8134 = vadd.f32 0.0, %v8133
  %v8135 = vpop.f32.mrf.mxu0
  %v8136 = vadd.f32 0.0, %v8135
  %8137 = vmatmul.bf16.gmra.mxu0 %v7997
  %v8138 = vpop.f32.mrf.mxu0
  %v8139 = vadd.f32 0.0, %v8138
  %v8140 = vpop.f32.mrf.mxu0
  %v8141 = vadd.f32 0.0, %v8140
  %8142 = vmatmul.bf16.gmra.mxu0 %v8000
  %v8143 = vpop.f32.mrf.mxu0
  %v8144 = vadd.f32 0.0, %v8143
  %v8145 = vpop.f32.mrf.mxu0
  %v8146 = vadd.f32 0.0, %v8145
  %8147 = vmatmul.bf16.gmra.mxu0 %v8003
  %v8148 = vpop.f32.mrf.mxu0
  %v8149 = vadd.f32 0.0, %v8148
  %v8150 = vpop.f32.mrf.mxu0
  %v8151 = vadd.f32 0.0, %v8150
  %8152 = vmatmul.bf16.gmra.mxu0 %v8006
  %v8153 = vpop.f32.mrf.mxu0
  %v8154 = vadd.f32 0.0, %v8153
  %v8155 = vpop.f32.mrf.mxu0
  %v8156 = vadd.f32 0.0, %v8155
  %8157 = vmatmul.bf16.gmra.mxu0 %v8009
  %v8158 = vpop.f32.mrf.mxu0
  %v8159 = vadd.f32 0.0, %v8158
  %v8160 = vpop.f32.mrf.mxu0
  %v8161 = vadd.f32 0.0, %v8160
  %8162 = vmatmul.bf16.gmra.mxu0 %v8012
  %v8163 = vpop.f32.mrf.mxu0
  %v8164 = vadd.f32 0.0, %v8163
  %v8165 = vpop.f32.mrf.mxu0
  %v8166 = vadd.f32 0.0, %v8165
  %8167 = vmatmul.bf16.gmra.mxu0 %v8015
  %v8168 = vpop.f32.mrf.mxu0
  %v8169 = vadd.f32 0.0, %v8168
  %v8170 = vpop.f32.mrf.mxu0
  %v8171 = vadd.f32 0.0, %v8170
  %8172 = vmatmul.bf16.gmra.mxu0 %v8018
  %v8173 = vpop.f32.mrf.mxu0
  %v8174 = vadd.f32 0.0, %v8173
  %v8175 = vpop.f32.mrf.mxu0
  %v8176 = vadd.f32 0.0, %v8175
  %8177 = vmatmul.bf16.gmra.mxu0 %v8021
  %v8178 = vpop.f32.mrf.mxu0
  %v8179 = vadd.f32 0.0, %v8178
  %v8180 = vpop.f32.mrf.mxu0
  %v8181 = vadd.f32 0.0, %v8180
  %8182 = vmatmul.bf16.gmra.mxu0 %v8024
  %v8183 = vpop.f32.mrf.mxu0
  %v8184 = vadd.f32 0.0, %v8183
  %v8185 = vpop.f32.mrf.mxu0
  %v8186 = vadd.f32 0.0, %v8185
  %8187 = vmatmul.bf16.gmra.mxu0 %v8027
  %v8188 = vpop.f32.mrf.mxu0
  %v8189 = vadd.f32 0.0, %v8188
  %v8190 = vpop.f32.mrf.mxu0
  %v8191 = vadd.f32 0.0, %v8190
  %8192 = vmatmul.bf16.gmra.mxu0 %v8030
  %v8193 = vpop.f32.mrf.mxu0
  %v8194 = vadd.f32 0.0, %v8193
  %v8195 = vpop.f32.mrf.mxu0
  %v8196 = vadd.f32 0.0, %v8195
  %8197 = vmatmul.bf16.gmra.mxu0 %v8033
  %v8198 = vpop.f32.mrf.mxu0
  %v8199 = vadd.f32 0.0, %v8198
  %v8200 = vpop.f32.mrf.mxu0
  %v8201 = vadd.f32 0.0, %v8200
  %8202 = vmatmul.bf16.gmra.mxu0 %v8036
  %v8203 = vpop.f32.mrf.mxu0
  %v8204 = vadd.f32 0.0, %v8203
  %v8205 = vpop.f32.mrf.mxu0
  %v8206 = vadd.f32 0.0, %v8205
  %8207 = vmatmul.bf16.gmra.mxu0 %v8039
  %v8208 = vpop.f32.mrf.mxu0
  %v8209 = vadd.f32 0.0, %v8208
  %v8210 = vpop.f32.mrf.mxu0
  %8211 = vdwg.mxu0
  %v8212 = vadd.f32 %v7740, %v8054
  %v8213 = vadd.f32 %v7741, %v8056
  %v8214 = vadd.f32 %v7742, %v8059
  %v8215 = vadd.f32 %v7743, %v8061
  %v8216 = vadd.f32 %v7744, %v8064
  %v8217 = vadd.f32 %v7745, %v8066
  %v8218 = vadd.f32 %v7746, %v8069
  %v8219 = vadd.f32 %v7747, %v8071
  %v8220 = vadd.f32 %v7748, %v8074
  %v8221 = vadd.f32 %v7749, %v8076
  %v8222 = vadd.f32 %v7750, %v8079
  %v8223 = vadd.f32 %v7751, %v8081
  %v8224 = vadd.f32 %v7752, %v8084
  %v8225 = vadd.f32 %v7753, %v8086
  %v8226 = vadd.f32 %v7754, %v8089
  %v8227 = vadd.f32 %v7755, %v8091
  %v8228 = vadd.f32 %v7756, %v8094
  %v8229 = vadd.f32 %v7757, %v8096
  %v8230 = vadd.f32 %v7758, %v8099
  %v8231 = vadd.f32 %v7759, %v8101
  %v8232 = vadd.f32 %v7760, %v8104
  %v8233 = vadd.f32 %v7761, %v8106
  %v8234 = vadd.f32 %v7762, %v8109
  %v8235 = vadd.f32 %v7763, %v8111
  %v8236 = vadd.f32 %v7764, %v8114
  %v8237 = vadd.f32 %v7765, %v8116
  %v8238 = vadd.f32 %v7766, %v8119
  %v8239 = vadd.f32 %v7767, %v8121
  %v8240 = vadd.f32 %v7768, %v8124
  %v8241 = vadd.f32 %v7769, %v8126
  %v8242 = vadd.f32 %v7770, %v8129
  %v8243 = vadd.f32 %v7771, %v8131
  %v8244 = vadd.f32 %v7772, %v8134
  %v8245 = vadd.f32 %v7773, %v8136
  %v8246 = vadd.f32 %v7774, %v8139
  %v8247 = vadd.f32 %v7775, %v8141
  %v8248 = vadd.f32 %v7776, %v8144
  %v8249 = vadd.f32 %v7777, %v8146
  %v8250 = vadd.f32 %v7778, %v8149
  %v8251 = vadd.f32 %v7779, %v8151
  %v8252 = vadd.f32 %v7780, %v8154
  %v8253 = vadd.f32 %v7781, %v8156
  %v8254 = vadd.f32 %v7782, %v8159
  %v8255 = vadd.f32 %v7783, %v8161
  %v8256 = vadd.f32 %v7784, %v8164
  %v8257 = vadd.f32 %v7785, %v8166
  %v8258 = vadd.f32 %v7786, %v8169
  %v8259 = vadd.f32 %v7787, %v8171
  %v8260 = vadd.f32 %v7788, %v8174
  %v8261 = vadd.f32 %v7789, %v8176
  %v8262 = vadd.f32 %v7790, %v8179
  %v8263 = vadd.f32 %v7791, %v8181
  %v8264 = vadd.f32 %v7792, %v8184
  %v8265 = vadd.f32 %v7793, %v8186
  %v8266 = vadd.f32 %v7794, %v8189
  %v8267 = vadd.f32 %v7795, %v8191
  %v8268 = vadd.f32 %v7796, %v8194
  %v8269 = vadd.f32 %v7797, %v8196
  %v8270 = vadd.f32 %v7798, %v8199
  %v8271 = vadd.f32 %v7799, %v8201
  %v8272 = vadd.f32 %v7800, %v8204
  %v8273 = vadd.f32 %v7801, %v8206
  %v8274 = vadd.f32 %v7802, %v8209
  %v8275 = vld [vmem:[#allocation2 + $0x2c] sm:$0xe]
  %v8276 = vld [vmem:[#allocation2 + $0x30] sm:$0xf]
  %v8277 = vld [vmem:[#allocation2 + $0x34] sm:$0xf]
  %v8278 = vld [vmem:[#allocation2 + $0x38] sm:$0xf]
  %v8279 = vld [vmem:[#allocation2 + $0x3c] sm:$0xf]
  %v8280 = vld [vmem:[#allocation2 + $0x40] sm:$0xf]
  %v8281 = vld [vmem:[#allocation2 + $0x44] sm:$0xf]
  %v8282 = vld [vmem:[#allocation2 + $0x48] sm:$0xf]
  %v8283 = vld [vmem:[#allocation2 + $0x4c] sm:$0xf]
  %v8284 = vld [vmem:[#allocation2 + $0x50] sm:$0xf]
  %v8285 = vld [vmem:[#allocation2 + $0x54] sm:$0xf]
  %v8286 = vld [vmem:[#allocation2 + $0x58] sm:$0xf]
  %v8287 = vld [vmem:[#allocation2 + $0x5c] sm:$0xf]
  %v8288 = vld [vmem:[#allocation2 + $0x60] sm:$0xf]
  %v8289 = vld [vmem:[#allocation2 + $0x64] sm:$0xf]
  %v8290 = vld [vmem:[#allocation2 + $0x68] sm:$0xf]
  %v8291 = vld [vmem:[#allocation2 + $0x6c] sm:$0xf]
  %v8292 = vld [vmem:[#allocation2 + $0x70] sm:$0xf]
  %v8293 = vld [vmem:[#allocation2 + $0x74] sm:$0xf]
  %v8294 = vld [vmem:[#allocation2 + $0x78] sm:$0xf]
  %v8295 = vld [vmem:[#allocation2 + $0x7c] sm:$0xf]
  %v8296 = vld [vmem:[#allocation2 + $0x80] sm:$0xf]
  %v8297 = vld [vmem:[#allocation2 + $0x84] sm:$0xf]
  %v8298 = vld [vmem:[#allocation2 + $0x88] sm:$0xf]
  %v8299 = vld [vmem:[#allocation2 + $0x8c] sm:$0xf]
  %v8300 = vld [vmem:[#allocation2 + $0x90] sm:$0xf]
  %v8301 = vld [vmem:[#allocation2 + $0x94] sm:$0xf]
  %v8302 = vld [vmem:[#allocation2 + $0x98] sm:$0xf]
  %v8303 = vld [vmem:[#allocation2 + $0x9c] sm:$0xf]
  %v8304 = vld [vmem:[#allocation2 + $0xa0] sm:$0xf]
  %v8305 = vld [vmem:[#allocation2 + $0xa4] sm:$0xf]
  %v8306 = vld [vmem:[#allocation2 + $0xa8] sm:$0xf]
  %v8307 = vld [vmem:[#allocation2 + $0xac] sm:$0xf]
  %v8308 = vld [vmem:[#allocation2 + $0xb0] sm:$0xf]
  %v8309 = vld [vmem:[#allocation2 + $0xb4] sm:$0xf]
  %v8310 = vld [vmem:[#allocation2 + $0xb8] sm:$0xf]
  %v8311 = vld [vmem:[#allocation2 + $0xbc] sm:$0xf]
  %v8312 = vld [vmem:[#allocation2 + $0xc0] sm:$0xf]
  %v8313 = vld [vmem:[#allocation2 + $0xc4] sm:$0xf]
  %v8314 = vld [vmem:[#allocation2 + $0xc8] sm:$0xf]
  %v8315 = vld [vmem:[#allocation2 + $0xcc] sm:$0xf]
  %v8316 = vld [vmem:[#allocation2 + $0xd0] sm:$0xf]
  %v8317 = vld [vmem:[#allocation2 + $0xd4] sm:$0xf]
  %v8318 = vld [vmem:[#allocation2 + $0xd8] sm:$0xf]
  %v8319 = vld [vmem:[#allocation2 + $0xdc] sm:$0xf]
  %v8320 = vld [vmem:[#allocation2 + $0xe0] sm:$0xf]
  %v8321 = vld [vmem:[#allocation2 + $0xe4] sm:$0xf]
  %v8322 = vld [vmem:[#allocation2 + $0xe8] sm:$0xf]
  %v8323 = vld [vmem:[#allocation2 + $0xec] sm:$0xf]
  %v8324 = vld [vmem:[#allocation2 + $0xf0] sm:$0xf]
  %v8325 = vld [vmem:[#allocation2 + $0xf4] sm:$0xf]
  %v8326 = vld [vmem:[#allocation2 + $0xf8] sm:$0xf]
  %v8327 = vld [vmem:[#allocation2 + $0xfc] sm:$0xf]
  %v8328 = vld [vmem:[#allocation2 + $0x100] sm:$0xf]
  %v8329 = vld [vmem:[#allocation2 + $0x104] sm:$0xf]
  %v8330 = vld [vmem:[#allocation2 + $0x108] sm:$0xf]
  %v8331 = vld [vmem:[#allocation2 + $0x10c] sm:$0xf]
  %v8332 = vld [vmem:[#allocation2 + $0x110] sm:$0xf]
  %v8333 = vld [vmem:[#allocation2 + $0x114] sm:$0xf]
  %v8334 = vld [vmem:[#allocation2 + $0x118] sm:$0xf]
  %v8335 = vld [vmem:[#allocation2 + $0x11c] sm:$0xf]
  %v8336 = vld [vmem:[#allocation2 + $0x120] sm:$0xf]
  %v8337 = vld [vmem:[#allocation2 + $0x124] sm:$0xf]
  %v8338 = vld [vmem:[#allocation2 + $0x128] sm:$0x1]
  %v8339 = vld [vmem:[%s1 + $0x3c] sm:$0xf]
  %v8404 = vunpack.c.l.b16 %v8275
  %v8405 = vunpack.c.l.b16 %v8276
  %v8406 = vunpack.c.l.b16 %v8277
  %v8407 = vunpack.c.l.b16 %v8278
  %v8408 = vunpack.c.l.b16 %v8279
  %v8409 = vunpack.c.l.b16 %v8280
  %v8410 = vunpack.c.l.b16 %v8281
  %v8411 = vunpack.c.l.b16 %v8282
  %v8412 = vunpack.c.l.b16 %v8283
  %v8413 = vunpack.c.l.b16 %v8284
  %v8414 = vunpack.c.l.b16 %v8285
  %v8415 = vunpack.c.l.b16 %v8286
  %v8416 = vunpack.c.l.b16 %v8287
  %v8417 = vunpack.c.l.b16 %v8288
  %v8418 = vunpack.c.l.b16 %v8289
  %v8419 = vunpack.c.l.b16 %v8290
  %v8420 = vunpack.c.l.b16 %v8291
  %v8421 = vunpack.c.l.b16 %v8292
  %v8422 = vunpack.c.l.b16 %v8293
  %v8423 = vunpack.c.l.b16 %v8294
  %v8424 = vunpack.c.l.b16 %v8295
  %v8425 = vunpack.c.l.b16 %v8296
  %v8426 = vunpack.c.l.b16 %v8297
  %v8427 = vunpack.c.l.b16 %v8298
  %v8428 = vunpack.c.l.b16 %v8299
  %v8429 = vunpack.c.l.b16 %v8300
  %v8430 = vunpack.c.l.b16 %v8301
  %v8431 = vunpack.c.l.b16 %v8302
  %v8432 = vunpack.c.l.b16 %v8303
  %v8433 = vunpack.c.l.b16 %v8304
  %v8434 = vunpack.c.l.b16 %v8305
  %v8435 = vunpack.c.l.b16 %v8306
  %v8436 = vunpack.c.l.b16 %v8307
  %v8437 = vunpack.c.l.b16 %v8308
  %v8438 = vunpack.c.l.b16 %v8309
  %v8439 = vunpack.c.l.b16 %v8310
  %v8440 = vunpack.c.l.b16 %v8311
  %v8441 = vunpack.c.l.b16 %v8312
  %v8442 = vunpack.c.l.b16 %v8313
  %v8443 = vunpack.c.l.b16 %v8314
  %v8444 = vunpack.c.l.b16 %v8315
  %v8445 = vunpack.c.l.b16 %v8316
  %v8446 = vunpack.c.l.b16 %v8317
  %v8447 = vunpack.c.l.b16 %v8318
  %v8448 = vunpack.c.l.b16 %v8319
  %v8449 = vunpack.c.l.b16 %v8320
  %v8450 = vunpack.c.l.b16 %v8321
  %v8451 = vunpack.c.l.b16 %v8322
  %v8452 = vunpack.c.l.b16 %v8323
  %v8453 = vunpack.c.l.b16 %v8324
  %v8454 = vunpack.c.l.b16 %v8325
  %v8455 = vunpack.c.l.b16 %v8326
  %v8456 = vunpack.c.l.b16 %v8327
  %v8457 = vunpack.c.l.b16 %v8328
  %v8458 = vunpack.c.l.b16 %v8329
  %v8459 = vunpack.c.l.b16 %v8330
  %v8460 = vunpack.c.l.b16 %v8331
  %v8461 = vunpack.c.l.b16 %v8332
  %v8462 = vunpack.c.l.b16 %v8333
  %v8463 = vunpack.c.l.b16 %v8334
  %v8464 = vunpack.c.l.b16 %v8335
  %v8465 = vunpack.c.l.b16 %v8336
  %v8466 = vunpack.c.l.b16 %v8337
  %v8467 = vunpack.c.l.b16 %v8338
  %v8468 = vpack.c.b16 %v8405, %v8404
  %v8469 = vpack.c.b16 %v8407, %v8406
  %v8470 = vpack.c.b16 %v8409, %v8408
  %v8471 = vpack.c.b16 %v8411, %v8410
  %v8472 = vpack.c.b16 %v8413, %v8412
  %v8473 = vpack.c.b16 %v8415, %v8414
  %v8474 = vpack.c.b16 %v8417, %v8416
  %v8475 = vpack.c.b16 %v8419, %v8418
  %v8476 = vpack.c.b16 %v8421, %v8420
  %v8477 = vpack.c.b16 %v8423, %v8422
  %v8478 = vpack.c.b16 %v8425, %v8424
  %v8479 = vpack.c.b16 %v8427, %v8426
  %v8480 = vpack.c.b16 %v8429, %v8428
  %v8481 = vpack.c.b16 %v8431, %v8430
  %v8482 = vpack.c.b16 %v8433, %v8432
  %v8483 = vpack.c.b16 %v8435, %v8434
  %v8484 = vpack.c.b16 %v8437, %v8436
  %v8485 = vpack.c.b16 %v8439, %v8438
  %v8486 = vpack.c.b16 %v8441, %v8440
  %v8487 = vpack.c.b16 %v8443, %v8442
  %v8488 = vpack.c.b16 %v8445, %v8444
  %v8489 = vpack.c.b16 %v8447, %v8446
  %v8490 = vpack.c.b16 %v8449, %v8448
  %v8491 = vpack.c.b16 %v8451, %v8450
  %v8492 = vpack.c.b16 %v8453, %v8452
  %v8493 = vpack.c.b16 %v8455, %v8454
  %v8494 = vpack.c.b16 %v8457, %v8456
  %v8495 = vpack.c.b16 %v8459, %v8458
  %v8496 = vpack.c.b16 %v8461, %v8460
  %v8497 = vpack.c.b16 %v8463, %v8462
  %v8498 = vpack.c.b16 %v8465, %v8464
  %v8499 = vpack.c.b16 %v8467, %v8466
  %v8500 = vrot.slane %v8468, 1
  %v8501 = vrot.slane %v8469, 1
  %v8502 = vsel %vm1121, %v8500, %v8501
  %v8503 = vrot.slane %v8470, 1
  %v8504 = vsel %vm1121, %v8501, %v8503
  %v8505 = vrot.slane %v8471, 1
  %v8506 = vsel %vm1121, %v8503, %v8505
  %v8507 = vrot.slane %v8472, 1
  %v8508 = vsel %vm1121, %v8505, %v8507
  %v8509 = vrot.slane %v8473, 1
  %v8510 = vsel %vm1121, %v8507, %v8509
  %v8511 = vrot.slane %v8474, 1
  %v8512 = vsel %vm1121, %v8509, %v8511
  %v8513 = vrot.slane %v8475, 1
  %v8514 = vsel %vm1121, %v8511, %v8513
  %v8515 = vrot.slane %v8476, 1
  %v8516 = vsel %vm1121, %v8513, %v8515
  %v8517 = vrot.slane %v8477, 1
  %v8518 = vsel %vm1121, %v8515, %v8517
  %v8519 = vrot.slane %v8478, 1
  %v8520 = vsel %vm1121, %v8517, %v8519
  %v8521 = vrot.slane %v8479, 1
  %v8522 = vsel %vm1121, %v8519, %v8521
  %v8523 = vrot.slane %v8480, 1
  %v8524 = vsel %vm1121, %v8521, %v8523
  %v8525 = vrot.slane %v8481, 1
  %v8526 = vsel %vm1121, %v8523, %v8525
  %v8527 = vrot.slane %v8482, 1
  %v8528 = vsel %vm1121, %v8525, %v8527
  %v8529 = vrot.slane %v8483, 1
  %v8530 = vsel %vm1121, %v8527, %v8529
  %v8531 = vrot.slane %v8484, 1
  %v8532 = vsel %vm1121, %v8529, %v8531
  %v8533 = vrot.slane %v8485, 1
  %v8534 = vsel %vm1121, %v8531, %v8533
  %v8535 = vrot.slane %v8486, 1
  %v8536 = vsel %vm1121, %v8533, %v8535
  %v8537 = vrot.slane %v8487, 1
  %v8538 = vsel %vm1121, %v8535, %v8537
  %v8539 = vrot.slane %v8488, 1
  %v8540 = vsel %vm1121, %v8537, %v8539
  %v8541 = vrot.slane %v8489, 1
  %v8542 = vsel %vm1121, %v8539, %v8541
  %v8543 = vrot.slane %v8490, 1
  %v8544 = vsel %vm1121, %v8541, %v8543
  %v8545 = vrot.slane %v8491, 1
  %v8546 = vsel %vm1121, %v8543, %v8545
  %v8547 = vrot.slane %v8492, 1
  %v8548 = vsel %vm1121, %v8545, %v8547
  %v8549 = vrot.slane %v8493, 1
  %v8550 = vsel %vm1121, %v8547, %v8549
  %v8551 = vrot.slane %v8494, 1
  %v8552 = vsel %vm1121, %v8549, %v8551
  %v8553 = vrot.slane %v8495, 1
  %v8554 = vsel %vm1121, %v8551, %v8553
  %v8555 = vrot.slane %v8496, 1
  %v8556 = vsel %vm1121, %v8553, %v8555
  %v8557 = vrot.slane %v8497, 1
  %v8558 = vsel %vm1121, %v8555, %v8557
  %v8559 = vrot.slane %v8498, 1
  %v8560 = vsel %vm1121, %v8557, %v8559
  %v8561 = vrot.slane %v8499, 1
  %v8562 = vsel %vm1121, %v8559, %v8561
  %v8564 = vsel %vm610, %v8502, 0
  %v8567 = vsel %vm610, %v8504, 0
  %v8570 = vsel %vm610, %v8506, 0
  %v8573 = vsel %vm610, %v8508, 0
  %v8576 = vsel %vm610, %v8510, 0
  %v8579 = vsel %vm610, %v8512, 0
  %v8582 = vsel %vm610, %v8514, 0
  %v8585 = vsel %vm610, %v8516, 0
  %v8588 = vsel %vm610, %v8518, 0
  %v8591 = vsel %vm610, %v8520, 0
  %v8594 = vsel %vm610, %v8522, 0
  %v8597 = vsel %vm610, %v8524, 0
  %v8600 = vsel %vm610, %v8526, 0
  %v8603 = vsel %vm610, %v8528, 0
  %v8606 = vsel %vm610, %v8530, 0
  %v8609 = vsel %vm610, %v8532, 0
  %v8612 = vsel %vm610, %v8534, 0
  %v8615 = vsel %vm610, %v8536, 0
  %v8618 = vsel %vm610, %v8538, 0
  %v8621 = vsel %vm610, %v8540, 0
  %v8624 = vsel %vm610, %v8542, 0
  %v8627 = vsel %vm610, %v8544, 0
  %v8630 = vsel %vm610, %v8546, 0
  %v8633 = vsel %vm610, %v8548, 0
  %v8636 = vsel %vm610, %v8550, 0
  %v8639 = vsel %vm610, %v8552, 0
  %v8642 = vsel %vm610, %v8554, 0
  %v8645 = vsel %vm610, %v8556, 0
  %v8648 = vsel %vm610, %v8558, 0
  %v8651 = vsel %vm610, %v8560, 0
  %v8654 = vsel %vm610, %v8562, 0
  %v8657 = vsel %vm610, %v8561, 0
  %v8660 = vsel %vm707, %v8339, 0
  %8662 = vmatpush.bf16.msra.mxu0 0
  %8663 = vmatpush.bf16.msra.mxu0 0
  %8664 = vmatpush.bf16.msra.mxu0 0
  %8665 = vmatpush.bf16.msra.mxu0 0
  %8666 = vmatpush.bf16.msra.mxu0 0
  %8667 = vmatpush.bf16.msra.mxu0 0
  %8668 = vmatpush.bf16.msra.mxu0 0
  %8669 = vmatpush.bf16.msra.mxu0 %v8660
  %8670 = vmatmul.bf16.gmra.mxu0 %v8564
  %v8671 = vpop.f32.mrf.mxu0
  %v8672 = vadd.f32 0.0, %v8671
  %v8673 = vpop.f32.mrf.mxu0
  %v8674 = vadd.f32 0.0, %v8673
  %8675 = vmatmul.bf16.gmra.mxu0 %v8567
  %v8676 = vpop.f32.mrf.mxu0
  %v8677 = vadd.f32 0.0, %v8676
  %v8678 = vpop.f32.mrf.mxu0
  %v8679 = vadd.f32 0.0, %v8678
  %8680 = vmatmul.bf16.gmra.mxu0 %v8570
  %v8681 = vpop.f32.mrf.mxu0
  %v8682 = vadd.f32 0.0, %v8681
  %v8683 = vpop.f32.mrf.mxu0
  %v8684 = vadd.f32 0.0, %v8683
  %8685 = vmatmul.bf16.gmra.mxu0 %v8573
  %v8686 = vpop.f32.mrf.mxu0
  %v8687 = vadd.f32 0.0, %v8686
  %v8688 = vpop.f32.mrf.mxu0
  %v8689 = vadd.f32 0.0, %v8688
  %8690 = vmatmul.bf16.gmra.mxu0 %v8576
  %v8691 = vpop.f32.mrf.mxu0
  %v8692 = vadd.f32 0.0, %v8691
  %v8693 = vpop.f32.mrf.mxu0
  %v8694 = vadd.f32 0.0, %v8693
  %8695 = vmatmul.bf16.gmra.mxu0 %v8579
  %v8696 = vpop.f32.mrf.mxu0
  %v8697 = vadd.f32 0.0, %v8696
  %v8698 = vpop.f32.mrf.mxu0
  %v8699 = vadd.f32 0.0, %v8698
  %8700 = vmatmul.bf16.gmra.mxu0 %v8582
  %v8701 = vpop.f32.mrf.mxu0
  %v8702 = vadd.f32 0.0, %v8701
  %v8703 = vpop.f32.mrf.mxu0
  %v8704 = vadd.f32 0.0, %v8703
  %8705 = vmatmul.bf16.gmra.mxu0 %v8585
  %v8706 = vpop.f32.mrf.mxu0
  %v8707 = vadd.f32 0.0, %v8706
  %v8708 = vpop.f32.mrf.mxu0
  %v8709 = vadd.f32 0.0, %v8708
  %8710 = vmatmul.bf16.gmra.mxu0 %v8588
  %v8711 = vpop.f32.mrf.mxu0
  %v8712 = vadd.f32 0.0, %v8711
  %v8713 = vpop.f32.mrf.mxu0
  %v8714 = vadd.f32 0.0, %v8713
  %8715 = vmatmul.bf16.gmra.mxu0 %v8591
  %v8716 = vpop.f32.mrf.mxu0
  %v8717 = vadd.f32 0.0, %v8716
  %v8718 = vpop.f32.mrf.mxu0
  %v8719 = vadd.f32 0.0, %v8718
  %8720 = vmatmul.bf16.gmra.mxu0 %v8594
  %v8721 = vpop.f32.mrf.mxu0
  %v8722 = vadd.f32 0.0, %v8721
  %v8723 = vpop.f32.mrf.mxu0
  %v8724 = vadd.f32 0.0, %v8723
  %8725 = vmatmul.bf16.gmra.mxu0 %v8597
  %v8726 = vpop.f32.mrf.mxu0
  %v8727 = vadd.f32 0.0, %v8726
  %v8728 = vpop.f32.mrf.mxu0
  %v8729 = vadd.f32 0.0, %v8728
  %8730 = vmatmul.bf16.gmra.mxu0 %v8600
  %v8731 = vpop.f32.mrf.mxu0
  %v8732 = vadd.f32 0.0, %v8731
  %v8733 = vpop.f32.mrf.mxu0
  %v8734 = vadd.f32 0.0, %v8733
  %8735 = vmatmul.bf16.gmra.mxu0 %v8603
  %v8736 = vpop.f32.mrf.mxu0
  %v8737 = vadd.f32 0.0, %v8736
  %v8738 = vpop.f32.mrf.mxu0
  %v8739 = vadd.f32 0.0, %v8738
  %8740 = vmatmul.bf16.gmra.mxu0 %v8606
  %v8741 = vpop.f32.mrf.mxu0
  %v8742 = vadd.f32 0.0, %v8741
  %v8743 = vpop.f32.mrf.mxu0
  %v8744 = vadd.f32 0.0, %v8743
  %8745 = vmatmul.bf16.gmra.mxu0 %v8609
  %v8746 = vpop.f32.mrf.mxu0
  %v8747 = vadd.f32 0.0, %v8746
  %v8748 = vpop.f32.mrf.mxu0
  %v8749 = vadd.f32 0.0, %v8748
  %8750 = vmatmul.bf16.gmra.mxu0 %v8612
  %v8751 = vpop.f32.mrf.mxu0
  %v8752 = vadd.f32 0.0, %v8751
  %v8753 = vpop.f32.mrf.mxu0
  %v8754 = vadd.f32 0.0, %v8753
  %8755 = vmatmul.bf16.gmra.mxu0 %v8615
  %v8756 = vpop.f32.mrf.mxu0
  %v8757 = vadd.f32 0.0, %v8756
  %v8758 = vpop.f32.mrf.mxu0
  %v8759 = vadd.f32 0.0, %v8758
  %8760 = vmatmul.bf16.gmra.mxu0 %v8618
  %v8761 = vpop.f32.mrf.mxu0
  %v8762 = vadd.f32 0.0, %v8761
  %v8763 = vpop.f32.mrf.mxu0
  %v8764 = vadd.f32 0.0, %v8763
  %8765 = vmatmul.bf16.gmra.mxu0 %v8621
  %v8766 = vpop.f32.mrf.mxu0
  %v8767 = vadd.f32 0.0, %v8766
  %v8768 = vpop.f32.mrf.mxu0
  %v8769 = vadd.f32 0.0, %v8768
  %8770 = vmatmul.bf16.gmra.mxu0 %v8624
  %v8771 = vpop.f32.mrf.mxu0
  %v8772 = vadd.f32 0.0, %v8771
  %v8773 = vpop.f32.mrf.mxu0
  %v8774 = vadd.f32 0.0, %v8773
  %8775 = vmatmul.bf16.gmra.mxu0 %v8627
  %v8776 = vpop.f32.mrf.mxu0
  %v8777 = vadd.f32 0.0, %v8776
  %v8778 = vpop.f32.mrf.mxu0
  %v8779 = vadd.f32 0.0, %v8778
  %8780 = vmatmul.bf16.gmra.mxu0 %v8630
  %v8781 = vpop.f32.mrf.mxu0
  %v8782 = vadd.f32 0.0, %v8781
  %v8783 = vpop.f32.mrf.mxu0
  %v8784 = vadd.f32 0.0, %v8783
  %8785 = vmatmul.bf16.gmra.mxu0 %v8633
  %v8786 = vpop.f32.mrf.mxu0
  %v8787 = vadd.f32 0.0, %v8786
  %v8788 = vpop.f32.mrf.mxu0
  %v8789 = vadd.f32 0.0, %v8788
  %8790 = vmatmul.bf16.gmra.mxu0 %v8636
  %v8791 = vpop.f32.mrf.mxu0
  %v8792 = vadd.f32 0.0, %v8791
  %v8793 = vpop.f32.mrf.mxu0
  %v8794 = vadd.f32 0.0, %v8793
  %8795 = vmatmul.bf16.gmra.mxu0 %v8639
  %v8796 = vpop.f32.mrf.mxu0
  %v8797 = vadd.f32 0.0, %v8796
  %v8798 = vpop.f32.mrf.mxu0
  %v8799 = vadd.f32 0.0, %v8798
  %8800 = vmatmul.bf16.gmra.mxu0 %v8642
  %v8801 = vpop.f32.mrf.mxu0
  %v8802 = vadd.f32 0.0, %v8801
  %v8803 = vpop.f32.mrf.mxu0
  %v8804 = vadd.f32 0.0, %v8803
  %8805 = vmatmul.bf16.gmra.mxu0 %v8645
  %v8806 = vpop.f32.mrf.mxu0
  %v8807 = vadd.f32 0.0, %v8806
  %v8808 = vpop.f32.mrf.mxu0
  %v8809 = vadd.f32 0.0, %v8808
  %8810 = vmatmul.bf16.gmra.mxu0 %v8648
  %v8811 = vpop.f32.mrf.mxu0
  %v8812 = vadd.f32 0.0, %v8811
  %v8813 = vpop.f32.mrf.mxu0
  %v8814 = vadd.f32 0.0, %v8813
  %8815 = vmatmul.bf16.gmra.mxu0 %v8651
  %v8816 = vpop.f32.mrf.mxu0
  %v8817 = vadd.f32 0.0, %v8816
  %v8818 = vpop.f32.mrf.mxu0
  %v8819 = vadd.f32 0.0, %v8818
  %8820 = vmatmul.bf16.gmra.mxu0 %v8654
  %v8821 = vpop.f32.mrf.mxu0
  %v8822 = vadd.f32 0.0, %v8821
  %v8823 = vpop.f32.mrf.mxu0
  %v8824 = vadd.f32 0.0, %v8823
  %8825 = vmatmul.bf16.gmra.mxu0 %v8657
  %v8826 = vpop.f32.mrf.mxu0
  %v8827 = vadd.f32 0.0, %v8826
  %v8828 = vpop.f32.mrf.mxu0
  %8829 = vdwg.mxu0
  %v8830 = vadd.f32 %v8212, %v8672
  %v8831 = vadd.f32 %v8213, %v8674
  %v8832 = vadd.f32 %v8214, %v8677
  %v8833 = vadd.f32 %v8215, %v8679
  %v8834 = vadd.f32 %v8216, %v8682
  %v8835 = vadd.f32 %v8217, %v8684
  %v8836 = vadd.f32 %v8218, %v8687
  %v8837 = vadd.f32 %v8219, %v8689
  %v8838 = vadd.f32 %v8220, %v8692
  %v8839 = vadd.f32 %v8221, %v8694
  %v8840 = vadd.f32 %v8222, %v8697
  %v8841 = vadd.f32 %v8223, %v8699
  %v8842 = vadd.f32 %v8224, %v8702
  %v8843 = vadd.f32 %v8225, %v8704
  %v8844 = vadd.f32 %v8226, %v8707
  %v8845 = vadd.f32 %v8227, %v8709
  %v8846 = vadd.f32 %v8228, %v8712
  %v8847 = vadd.f32 %v8229, %v8714
  %v8848 = vadd.f32 %v8230, %v8717
  %v8849 = vadd.f32 %v8231, %v8719
  %v8850 = vadd.f32 %v8232, %v8722
  %v8851 = vadd.f32 %v8233, %v8724
  %v8852 = vadd.f32 %v8234, %v8727
  %v8853 = vadd.f32 %v8235, %v8729
  %v8854 = vadd.f32 %v8236, %v8732
  %v8855 = vadd.f32 %v8237, %v8734
  %v8856 = vadd.f32 %v8238, %v8737
  %v8857 = vadd.f32 %v8239, %v8739
  %v8858 = vadd.f32 %v8240, %v8742
  %v8859 = vadd.f32 %v8241, %v8744
  %v8860 = vadd.f32 %v8242, %v8747
  %v8861 = vadd.f32 %v8243, %v8749
  %v8862 = vadd.f32 %v8244, %v8752
  %v8863 = vadd.f32 %v8245, %v8754
  %v8864 = vadd.f32 %v8246, %v8757
  %v8865 = vadd.f32 %v8247, %v8759
  %v8866 = vadd.f32 %v8248, %v8762
  %v8867 = vadd.f32 %v8249, %v8764
  %v8868 = vadd.f32 %v8250, %v8767
  %v8869 = vadd.f32 %v8251, %v8769
  %v8870 = vadd.f32 %v8252, %v8772
  %v8871 = vadd.f32 %v8253, %v8774
  %v8872 = vadd.f32 %v8254, %v8777
  %v8873 = vadd.f32 %v8255, %v8779
  %v8874 = vadd.f32 %v8256, %v8782
  %v8875 = vadd.f32 %v8257, %v8784
  %v8876 = vadd.f32 %v8258, %v8787
  %v8877 = vadd.f32 %v8259, %v8789
  %v8878 = vadd.f32 %v8260, %v8792
  %v8879 = vadd.f32 %v8261, %v8794
  %v8880 = vadd.f32 %v8262, %v8797
  %v8881 = vadd.f32 %v8263, %v8799
  %v8882 = vadd.f32 %v8264, %v8802
  %v8883 = vadd.f32 %v8265, %v8804
  %v8884 = vadd.f32 %v8266, %v8807
  %v8885 = vadd.f32 %v8267, %v8809
  %v8886 = vadd.f32 %v8268, %v8812
  %v8887 = vadd.f32 %v8269, %v8814
  %v8888 = vadd.f32 %v8270, %v8817
  %v8889 = vadd.f32 %v8271, %v8819
  %v8890 = vadd.f32 %v8272, %v8822
  %v8891 = vadd.f32 %v8273, %v8824
  %v8892 = vadd.f32 %v8274, %v8827
  %v8893 = vld [vmem:[#allocation2 + $0x128] sm:$0x3]
  %v8894 = vld [vmem:[%s1 + $0x40] sm:$0xf]
  %v8896 = vunpack.c.l.b16 %v8893
  %v8897 = vpack.c.b16 %v8896, %v8466
  %v8899 = vshrl.u32 %v8468, 16
  %v8901 = vrot.slane %v8899, 1
  %v8902 = vshll.u32 %v8468, 16
  %v8904 = vrot.slane %v8902, 2
  %v8905 = vor.u32 %v8901, %v8904
  %v8907 = vshrl.u32 %v8469, 16
  %v8909 = vrot.slane %v8907, 1
  %v8910 = vshll.u32 %v8469, 16
  %v8912 = vrot.slane %v8910, 2
  %v8913 = vor.u32 %v8909, %v8912
  %v8914 = vsel %vm2728, %v8905, %v8913
  %v8916 = vshrl.u32 %v8470, 16
  %v8918 = vrot.slane %v8916, 1
  %v8919 = vshll.u32 %v8470, 16
  %v8921 = vrot.slane %v8919, 2
  %v8922 = vor.u32 %v8918, %v8921
  %v8923 = vsel %vm2728, %v8913, %v8922
  %v8925 = vshrl.u32 %v8471, 16
  %v8927 = vrot.slane %v8925, 1
  %v8928 = vshll.u32 %v8471, 16
  %v8930 = vrot.slane %v8928, 2
  %v8931 = vor.u32 %v8927, %v8930
  %v8932 = vsel %vm2728, %v8922, %v8931
  %v8934 = vshrl.u32 %v8472, 16
  %v8936 = vrot.slane %v8934, 1
  %v8937 = vshll.u32 %v8472, 16
  %v8939 = vrot.slane %v8937, 2
  %v8940 = vor.u32 %v8936, %v8939
  %v8941 = vsel %vm2728, %v8931, %v8940
  %v8943 = vshrl.u32 %v8473, 16
  %v8945 = vrot.slane %v8943, 1
  %v8946 = vshll.u32 %v8473, 16
  %v8948 = vrot.slane %v8946, 2
  %v8949 = vor.u32 %v8945, %v8948
  %v8950 = vsel %vm2728, %v8940, %v8949
  %v8952 = vshrl.u32 %v8474, 16
  %v8954 = vrot.slane %v8952, 1
  %v8955 = vshll.u32 %v8474, 16
  %v8957 = vrot.slane %v8955, 2
  %v8958 = vor.u32 %v8954, %v8957
  %v8959 = vsel %vm2728, %v8949, %v8958
  %v8961 = vshrl.u32 %v8475, 16
  %v8963 = vrot.slane %v8961, 1
  %v8964 = vshll.u32 %v8475, 16
  %v8966 = vrot.slane %v8964, 2
  %v8967 = vor.u32 %v8963, %v8966
  %v8968 = vsel %vm2728, %v8958, %v8967
  %v8970 = vshrl.u32 %v8476, 16
  %v8972 = vrot.slane %v8970, 1
  %v8973 = vshll.u32 %v8476, 16
  %v8975 = vrot.slane %v8973, 2
  %v8976 = vor.u32 %v8972, %v8975
  %v8977 = vsel %vm2728, %v8967, %v8976
  %v8979 = vshrl.u32 %v8477, 16
  %v8981 = vrot.slane %v8979, 1
  %v8982 = vshll.u32 %v8477, 16
  %v8984 = vrot.slane %v8982, 2
  %v8985 = vor.u32 %v8981, %v8984
  %v8986 = vsel %vm2728, %v8976, %v8985
  %v8988 = vshrl.u32 %v8478, 16
  %v8990 = vrot.slane %v8988, 1
  %v8991 = vshll.u32 %v8478, 16
  %v8993 = vrot.slane %v8991, 2
  %v8994 = vor.u32 %v8990, %v8993
  %v8995 = vsel %vm2728, %v8985, %v8994
  %v8997 = vshrl.u32 %v8479, 16
  %v8999 = vrot.slane %v8997, 1
  %v9000 = vshll.u32 %v8479, 16
  %v9002 = vrot.slane %v9000, 2
  %v9003 = vor.u32 %v8999, %v9002
  %v9004 = vsel %vm2728, %v8994, %v9003
  %v9006 = vshrl.u32 %v8480, 16
  %v9008 = vrot.slane %v9006, 1
  %v9009 = vshll.u32 %v8480, 16
  %v9011 = vrot.slane %v9009, 2
  %v9012 = vor.u32 %v9008, %v9011
  %v9013 = vsel %vm2728, %v9003, %v9012
  %v9015 = vshrl.u32 %v8481, 16
  %v9017 = vrot.slane %v9015, 1
  %v9018 = vshll.u32 %v8481, 16
  %v9020 = vrot.slane %v9018, 2
  %v9021 = vor.u32 %v9017, %v9020
  %v9022 = vsel %vm2728, %v9012, %v9021
  %v9024 = vshrl.u32 %v8482, 16
  %v9026 = vrot.slane %v9024, 1
  %v9027 = vshll.u32 %v8482, 16
  %v9029 = vrot.slane %v9027, 2
  %v9030 = vor.u32 %v9026, %v9029
  %v9031 = vsel %vm2728, %v9021, %v9030
  %v9033 = vshrl.u32 %v8483, 16
  %v9035 = vrot.slane %v9033, 1
  %v9036 = vshll.u32 %v8483, 16
  %v9038 = vrot.slane %v9036, 2
  %v9039 = vor.u32 %v9035, %v9038
  %v9040 = vsel %vm2728, %v9030, %v9039
  %v9042 = vshrl.u32 %v8484, 16
  %v9044 = vrot.slane %v9042, 1
  %v9045 = vshll.u32 %v8484, 16
  %v9047 = vrot.slane %v9045, 2
  %v9048 = vor.u32 %v9044, %v9047
  %v9049 = vsel %vm2728, %v9039, %v9048
  %v9051 = vshrl.u32 %v8485, 16
  %v9053 = vrot.slane %v9051, 1
  %v9054 = vshll.u32 %v8485, 16
  %v9056 = vrot.slane %v9054, 2
  %v9057 = vor.u32 %v9053, %v9056
  %v9058 = vsel %vm2728, %v9048, %v9057
  %v9060 = vshrl.u32 %v8486, 16
  %v9062 = vrot.slane %v9060, 1
  %v9063 = vshll.u32 %v8486, 16
  %v9065 = vrot.slane %v9063, 2
  %v9066 = vor.u32 %v9062, %v9065
  %v9067 = vsel %vm2728, %v9057, %v9066
  %v9069 = vshrl.u32 %v8487, 16
  %v9071 = vrot.slane %v9069, 1
  %v9072 = vshll.u32 %v8487, 16
  %v9074 = vrot.slane %v9072, 2
  %v9075 = vor.u32 %v9071, %v9074
  %v9076 = vsel %vm2728, %v9066, %v9075
  %v9078 = vshrl.u32 %v8488, 16
  %v9080 = vrot.slane %v9078, 1
  %v9081 = vshll.u32 %v8488, 16
  %v9083 = vrot.slane %v9081, 2
  %v9084 = vor.u32 %v9080, %v9083
  %v9085 = vsel %vm2728, %v9075, %v9084
  %v9087 = vshrl.u32 %v8489, 16
  %v9089 = vrot.slane %v9087, 1
  %v9090 = vshll.u32 %v8489, 16
  %v9092 = vrot.slane %v9090, 2
  %v9093 = vor.u32 %v9089, %v9092
  %v9094 = vsel %vm2728, %v9084, %v9093
  %v9096 = vshrl.u32 %v8490, 16
  %v9098 = vrot.slane %v9096, 1
  %v9099 = vshll.u32 %v8490, 16
  %v9101 = vrot.slane %v9099, 2
  %v9102 = vor.u32 %v9098, %v9101
  %v9103 = vsel %vm2728, %v9093, %v9102
  %v9105 = vshrl.u32 %v8491, 16
  %v9107 = vrot.slane %v9105, 1
  %v9108 = vshll.u32 %v8491, 16
  %v9110 = vrot.slane %v9108, 2
  %v9111 = vor.u32 %v9107, %v9110
  %v9112 = vsel %vm2728, %v9102, %v9111
  %v9114 = vshrl.u32 %v8492, 16
  %v9116 = vrot.slane %v9114, 1
  %v9117 = vshll.u32 %v8492, 16
  %v9119 = vrot.slane %v9117, 2
  %v9120 = vor.u32 %v9116, %v9119
  %v9121 = vsel %vm2728, %v9111, %v9120
  %v9123 = vshrl.u32 %v8493, 16
  %v9125 = vrot.slane %v9123, 1
  %v9126 = vshll.u32 %v8493, 16
  %v9128 = vrot.slane %v9126, 2
  %v9129 = vor.u32 %v9125, %v9128
  %v9130 = vsel %vm2728, %v9120, %v9129
  %v9132 = vshrl.u32 %v8494, 16
  %v9134 = vrot.slane %v9132, 1
  %v9135 = vshll.u32 %v8494, 16
  %v9137 = vrot.slane %v9135, 2
  %v9138 = vor.u32 %v9134, %v9137
  %v9139 = vsel %vm2728, %v9129, %v9138
  %v9141 = vshrl.u32 %v8495, 16
  %v9143 = vrot.slane %v9141, 1
  %v9144 = vshll.u32 %v8495, 16
  %v9146 = vrot.slane %v9144, 2
  %v9147 = vor.u32 %v9143, %v9146
  %v9148 = vsel %vm2728, %v9138, %v9147
  %v9150 = vshrl.u32 %v8496, 16
  %v9152 = vrot.slane %v9150, 1
  %v9153 = vshll.u32 %v8496, 16
  %v9155 = vrot.slane %v9153, 2
  %v9156 = vor.u32 %v9152, %v9155
  %v9157 = vsel %vm2728, %v9147, %v9156
  %v9159 = vshrl.u32 %v8497, 16
  %v9161 = vrot.slane %v9159, 1
  %v9162 = vshll.u32 %v8497, 16
  %v9164 = vrot.slane %v9162, 2
  %v9165 = vor.u32 %v9161, %v9164
  %v9166 = vsel %vm2728, %v9156, %v9165
  %v9168 = vshrl.u32 %v8498, 16
  %v9170 = vrot.slane %v9168, 1
  %v9171 = vshll.u32 %v8498, 16
  %v9173 = vrot.slane %v9171, 2
  %v9174 = vor.u32 %v9170, %v9173
  %v9175 = vsel %vm2728, %v9165, %v9174
  %v9177 = vshrl.u32 %v8897, 16
  %v9179 = vrot.slane %v9177, 1
  %v9180 = vshll.u32 %v8897, 16
  %v9182 = vrot.slane %v9180, 2
  %v9183 = vor.u32 %v9179, %v9182
  %v9184 = vsel %vm2728, %v9174, %v9183
  %v9186 = vsel %vm610, %v8914, 0
  %v9189 = vsel %vm610, %v8923, 0
  %v9192 = vsel %vm610, %v8932, 0
  %v9195 = vsel %vm610, %v8941, 0
  %v9198 = vsel %vm610, %v8950, 0
  %v9201 = vsel %vm610, %v8959, 0
  %v9204 = vsel %vm610, %v8968, 0
  %v9207 = vsel %vm610, %v8977, 0
  %v9210 = vsel %vm610, %v8986, 0
  %v9213 = vsel %vm610, %v8995, 0
  %v9216 = vsel %vm610, %v9004, 0
  %v9219 = vsel %vm610, %v9013, 0
  %v9222 = vsel %vm610, %v9022, 0
  %v9225 = vsel %vm610, %v9031, 0
  %v9228 = vsel %vm610, %v9040, 0
  %v9231 = vsel %vm610, %v9049, 0
  %v9234 = vsel %vm610, %v9058, 0
  %v9237 = vsel %vm610, %v9067, 0
  %v9240 = vsel %vm610, %v9076, 0
  %v9243 = vsel %vm610, %v9085, 0
  %v9246 = vsel %vm610, %v9094, 0
  %v9249 = vsel %vm610, %v9103, 0
  %v9252 = vsel %vm610, %v9112, 0
  %v9255 = vsel %vm610, %v9121, 0
  %v9258 = vsel %vm610, %v9130, 0
  %v9261 = vsel %vm610, %v9139, 0
  %v9264 = vsel %vm610, %v9148, 0
  %v9267 = vsel %vm610, %v9157, 0
  %v9270 = vsel %vm610, %v9166, 0
  %v9273 = vsel %vm610, %v9175, 0
  %v9276 = vsel %vm610, %v9184, 0
  %v9279 = vsel %vm610, %v9183, 0
  %v9282 = vsel %vm707, %v8894, 0
  %9284 = vmatpush.bf16.msra.mxu0 0
  %9285 = vmatpush.bf16.msra.mxu0 0
  %9286 = vmatpush.bf16.msra.mxu0 0
  %9287 = vmatpush.bf16.msra.mxu0 0
  %9288 = vmatpush.bf16.msra.mxu0 0
  %9289 = vmatpush.bf16.msra.mxu0 0
  %9290 = vmatpush.bf16.msra.mxu0 0
  %9291 = vmatpush.bf16.msra.mxu0 %v9282
  %9292 = vmatmul.bf16.gmra.mxu0 %v9186
  %v9293 = vpop.f32.mrf.mxu0
  %v9294 = vadd.f32 0.0, %v9293
  %v9295 = vpop.f32.mrf.mxu0
  %v9296 = vadd.f32 0.0, %v9295
  %9297 = vmatmul.bf16.gmra.mxu0 %v9189
  %v9298 = vpop.f32.mrf.mxu0
  %v9299 = vadd.f32 0.0, %v9298
  %v9300 = vpop.f32.mrf.mxu0
  %v9301 = vadd.f32 0.0, %v9300
  %9302 = vmatmul.bf16.gmra.mxu0 %v9192
  %v9303 = vpop.f32.mrf.mxu0
  %v9304 = vadd.f32 0.0, %v9303
  %v9305 = vpop.f32.mrf.mxu0
  %v9306 = vadd.f32 0.0, %v9305
  %9307 = vmatmul.bf16.gmra.mxu0 %v9195
  %v9308 = vpop.f32.mrf.mxu0
  %v9309 = vadd.f32 0.0, %v9308
  %v9310 = vpop.f32.mrf.mxu0
  %v9311 = vadd.f32 0.0, %v9310
  %9312 = vmatmul.bf16.gmra.mxu0 %v9198
  %v9313 = vpop.f32.mrf.mxu0
  %v9314 = vadd.f32 0.0, %v9313
  %v9315 = vpop.f32.mrf.mxu0
  %v9316 = vadd.f32 0.0, %v9315
  %9317 = vmatmul.bf16.gmra.mxu0 %v9201
  %v9318 = vpop.f32.mrf.mxu0
  %v9319 = vadd.f32 0.0, %v9318
  %v9320 = vpop.f32.mrf.mxu0
  %v9321 = vadd.f32 0.0, %v9320
  %9322 = vmatmul.bf16.gmra.mxu0 %v9204
  %v9323 = vpop.f32.mrf.mxu0
  %v9324 = vadd.f32 0.0, %v9323
  %v9325 = vpop.f32.mrf.mxu0
  %v9326 = vadd.f32 0.0, %v9325
  %9327 = vmatmul.bf16.gmra.mxu0 %v9207
  %v9328 = vpop.f32.mrf.mxu0
  %v9329 = vadd.f32 0.0, %v9328
  %v9330 = vpop.f32.mrf.mxu0
  %v9331 = vadd.f32 0.0, %v9330
  %9332 = vmatmul.bf16.gmra.mxu0 %v9210
  %v9333 = vpop.f32.mrf.mxu0
  %v9334 = vadd.f32 0.0, %v9333
  %v9335 = vpop.f32.mrf.mxu0
  %v9336 = vadd.f32 0.0, %v9335
  %9337 = vmatmul.bf16.gmra.mxu0 %v9213
  %v9338 = vpop.f32.mrf.mxu0
  %v9339 = vadd.f32 0.0, %v9338
  %v9340 = vpop.f32.mrf.mxu0
  %v9341 = vadd.f32 0.0, %v9340
  %9342 = vmatmul.bf16.gmra.mxu0 %v9216
  %v9343 = vpop.f32.mrf.mxu0
  %v9344 = vadd.f32 0.0, %v9343
  %v9345 = vpop.f32.mrf.mxu0
  %v9346 = vadd.f32 0.0, %v9345
  %9347 = vmatmul.bf16.gmra.mxu0 %v9219
  %v9348 = vpop.f32.mrf.mxu0
  %v9349 = vadd.f32 0.0, %v9348
  %v9350 = vpop.f32.mrf.mxu0
  %v9351 = vadd.f32 0.0, %v9350
  %9352 = vmatmul.bf16.gmra.mxu0 %v9222
  %v9353 = vpop.f32.mrf.mxu0
  %v9354 = vadd.f32 0.0, %v9353
  %v9355 = vpop.f32.mrf.mxu0
  %v9356 = vadd.f32 0.0, %v9355
  %9357 = vmatmul.bf16.gmra.mxu0 %v9225
  %v9358 = vpop.f32.mrf.mxu0
  %v9359 = vadd.f32 0.0, %v9358
  %v9360 = vpop.f32.mrf.mxu0
  %v9361 = vadd.f32 0.0, %v9360
  %9362 = vmatmul.bf16.gmra.mxu0 %v9228
  %v9363 = vpop.f32.mrf.mxu0
  %v9364 = vadd.f32 0.0, %v9363
  %v9365 = vpop.f32.mrf.mxu0
  %v9366 = vadd.f32 0.0, %v9365
  %9367 = vmatmul.bf16.gmra.mxu0 %v9231
  %v9368 = vpop.f32.mrf.mxu0
  %v9369 = vadd.f32 0.0, %v9368
  %v9370 = vpop.f32.mrf.mxu0
  %v9371 = vadd.f32 0.0, %v9370
  %9372 = vmatmul.bf16.gmra.mxu0 %v9234
  %v9373 = vpop.f32.mrf.mxu0
  %v9374 = vadd.f32 0.0, %v9373
  %v9375 = vpop.f32.mrf.mxu0
  %v9376 = vadd.f32 0.0, %v9375
  %9377 = vmatmul.bf16.gmra.mxu0 %v9237
  %v9378 = vpop.f32.mrf.mxu0
  %v9379 = vadd.f32 0.0, %v9378
  %v9380 = vpop.f32.mrf.mxu0
  %v9381 = vadd.f32 0.0, %v9380
  %9382 = vmatmul.bf16.gmra.mxu0 %v9240
  %v9383 = vpop.f32.mrf.mxu0
  %v9384 = vadd.f32 0.0, %v9383
  %v9385 = vpop.f32.mrf.mxu0
  %v9386 = vadd.f32 0.0, %v9385
  %9387 = vmatmul.bf16.gmra.mxu0 %v9243
  %v9388 = vpop.f32.mrf.mxu0
  %v9389 = vadd.f32 0.0, %v9388
  %v9390 = vpop.f32.mrf.mxu0
  %v9391 = vadd.f32 0.0, %v9390
  %9392 = vmatmul.bf16.gmra.mxu0 %v9246
  %v9393 = vpop.f32.mrf.mxu0
  %v9394 = vadd.f32 0.0, %v9393
  %v9395 = vpop.f32.mrf.mxu0
  %v9396 = vadd.f32 0.0, %v9395
  %9397 = vmatmul.bf16.gmra.mxu0 %v9249
  %v9398 = vpop.f32.mrf.mxu0
  %v9399 = vadd.f32 0.0, %v9398
  %v9400 = vpop.f32.mrf.mxu0
  %v9401 = vadd.f32 0.0, %v9400
  %9402 = vmatmul.bf16.gmra.mxu0 %v9252
  %v9403 = vpop.f32.mrf.mxu0
  %v9404 = vadd.f32 0.0, %v9403
  %v9405 = vpop.f32.mrf.mxu0
  %v9406 = vadd.f32 0.0, %v9405
  %9407 = vmatmul.bf16.gmra.mxu0 %v9255
  %v9408 = vpop.f32.mrf.mxu0
  %v9409 = vadd.f32 0.0, %v9408
  %v9410 = vpop.f32.mrf.mxu0
  %v9411 = vadd.f32 0.0, %v9410
  %9412 = vmatmul.bf16.gmra.mxu0 %v9258
  %v9413 = vpop.f32.mrf.mxu0
  %v9414 = vadd.f32 0.0, %v9413
  %v9415 = vpop.f32.mrf.mxu0
  %v9416 = vadd.f32 0.0, %v9415
  %9417 = vmatmul.bf16.gmra.mxu0 %v9261
  %v9418 = vpop.f32.mrf.mxu0
  %v9419 = vadd.f32 0.0, %v9418
  %v9420 = vpop.f32.mrf.mxu0
  %v9421 = vadd.f32 0.0, %v9420
  %9422 = vmatmul.bf16.gmra.mxu0 %v9264
  %v9423 = vpop.f32.mrf.mxu0
  %v9424 = vadd.f32 0.0, %v9423
  %v9425 = vpop.f32.mrf.mxu0
  %v9426 = vadd.f32 0.0, %v9425
  %9427 = vmatmul.bf16.gmra.mxu0 %v9267
  %v9428 = vpop.f32.mrf.mxu0
  %v9429 = vadd.f32 0.0, %v9428
  %v9430 = vpop.f32.mrf.mxu0
  %v9431 = vadd.f32 0.0, %v9430
  %9432 = vmatmul.bf16.gmra.mxu0 %v9270
  %v9433 = vpop.f32.mrf.mxu0
  %v9434 = vadd.f32 0.0, %v9433
  %v9435 = vpop.f32.mrf.mxu0
  %v9436 = vadd.f32 0.0, %v9435
  %9437 = vmatmul.bf16.gmra.mxu0 %v9273
  %v9438 = vpop.f32.mrf.mxu0
  %v9439 = vadd.f32 0.0, %v9438
  %v9440 = vpop.f32.mrf.mxu0
  %v9441 = vadd.f32 0.0, %v9440
  %9442 = vmatmul.bf16.gmra.mxu0 %v9276
  %v9443 = vpop.f32.mrf.mxu0
  %v9444 = vadd.f32 0.0, %v9443
  %v9445 = vpop.f32.mrf.mxu0
  %v9446 = vadd.f32 0.0, %v9445
  %9447 = vmatmul.bf16.gmra.mxu0 %v9279
  %v9448 = vpop.f32.mrf.mxu0
  %v9449 = vadd.f32 0.0, %v9448
  %v9450 = vpop.f32.mrf.mxu0
  %9451 = vdwg.mxu0
  %v9452 = vadd.f32 %v8830, %v9294
  %v9453 = vadd.f32 %v8831, %v9296
  %v9454 = vadd.f32 %v8832, %v9299
  %v9455 = vadd.f32 %v8833, %v9301
  %v9456 = vadd.f32 %v8834, %v9304
  %v9457 = vadd.f32 %v8835, %v9306
  %v9458 = vadd.f32 %v8836, %v9309
  %v9459 = vadd.f32 %v8837, %v9311
  %v9460 = vadd.f32 %v8838, %v9314
  %v9461 = vadd.f32 %v8839, %v9316
  %v9462 = vadd.f32 %v8840, %v9319
  %v9463 = vadd.f32 %v8841, %v9321
  %v9464 = vadd.f32 %v8842, %v9324
  %v9465 = vadd.f32 %v8843, %v9326
  %v9466 = vadd.f32 %v8844, %v9329
  %v9467 = vadd.f32 %v8845, %v9331
  %v9468 = vadd.f32 %v8846, %v9334
  %v9469 = vadd.f32 %v8847, %v9336
  %v9470 = vadd.f32 %v8848, %v9339
  %v9471 = vadd.f32 %v8849, %v9341
  %v9472 = vadd.f32 %v8850, %v9344
  %v9473 = vadd.f32 %v8851, %v9346
  %v9474 = vadd.f32 %v8852, %v9349
  %v9475 = vadd.f32 %v8853, %v9351
  %v9476 = vadd.f32 %v8854, %v9354
  %v9477 = vadd.f32 %v8855, %v9356
  %v9478 = vadd.f32 %v8856, %v9359
  %v9479 = vadd.f32 %v8857, %v9361
  %v9480 = vadd.f32 %v8858, %v9364
  %v9481 = vadd.f32 %v8859, %v9366
  %v9482 = vadd.f32 %v8860, %v9369
  %v9483 = vadd.f32 %v8861, %v9371
  %v9484 = vadd.f32 %v8862, %v9374
  %v9485 = vadd.f32 %v8863, %v9376
  %v9486 = vadd.f32 %v8864, %v9379
  %v9487 = vadd.f32 %v8865, %v9381
  %v9488 = vadd.f32 %v8866, %v9384
  %v9489 = vadd.f32 %v8867, %v9386
  %v9490 = vadd.f32 %v8868, %v9389
  %v9491 = vadd.f32 %v8869, %v9391
  %v9492 = vadd.f32 %v8870, %v9394
  %v9493 = vadd.f32 %v8871, %v9396
  %v9494 = vadd.f32 %v8872, %v9399
  %v9495 = vadd.f32 %v8873, %v9401
  %v9496 = vadd.f32 %v8874, %v9404
  %v9497 = vadd.f32 %v8875, %v9406
  %v9498 = vadd.f32 %v8876, %v9409
  %v9499 = vadd.f32 %v8877, %v9411
  %v9500 = vadd.f32 %v8878, %v9414
  %v9501 = vadd.f32 %v8879, %v9416
  %v9502 = vadd.f32 %v8880, %v9419
  %v9503 = vadd.f32 %v8881, %v9421
  %v9504 = vadd.f32 %v8882, %v9424
  %v9505 = vadd.f32 %v8883, %v9426
  %v9506 = vadd.f32 %v8884, %v9429
  %v9507 = vadd.f32 %v8885, %v9431
  %v9508 = vadd.f32 %v8886, %v9434
  %v9509 = vadd.f32 %v8887, %v9436
  %v9510 = vadd.f32 %v8888, %v9439
  %v9511 = vadd.f32 %v8889, %v9441
  %v9512 = vadd.f32 %v8890, %v9444
  %v9513 = vadd.f32 %v8891, %v9446
  %v9514 = vadd.f32 %v8892, %v9449
  %v9515 = vld [vmem:[#allocation2 + $0x2c] sm:$0xc]
  %v9516 = vld [vmem:[%s1 + $0x44] sm:$0xf]
  %v9518 = vunpack.c.l.b16 %v9515
  %v9519 = vpack.c.b16 %v8405, %v9518
  %v9520 = vrot.slane %v9519, 2
  %v9521 = vrot.slane %v8469, 2
  %v9522 = vsel %vm4441, %v9520, %v9521
  %v9523 = vrot.slane %v8470, 2
  %v9524 = vsel %vm4441, %v9521, %v9523
  %v9525 = vrot.slane %v8471, 2
  %v9526 = vsel %vm4441, %v9523, %v9525
  %v9527 = vrot.slane %v8472, 2
  %v9528 = vsel %vm4441, %v9525, %v9527
  %v9529 = vrot.slane %v8473, 2
  %v9530 = vsel %vm4441, %v9527, %v9529
  %v9531 = vrot.slane %v8474, 2
  %v9532 = vsel %vm4441, %v9529, %v9531
  %v9533 = vrot.slane %v8475, 2
  %v9534 = vsel %vm4441, %v9531, %v9533
  %v9535 = vrot.slane %v8476, 2
  %v9536 = vsel %vm4441, %v9533, %v9535
  %v9537 = vrot.slane %v8477, 2
  %v9538 = vsel %vm4441, %v9535, %v9537
  %v9539 = vrot.slane %v8478, 2
  %v9540 = vsel %vm4441, %v9537, %v9539
  %v9541 = vrot.slane %v8479, 2
  %v9542 = vsel %vm4441, %v9539, %v9541
  %v9543 = vrot.slane %v8480, 2
  %v9544 = vsel %vm4441, %v9541, %v9543
  %v9545 = vrot.slane %v8481, 2
  %v9546 = vsel %vm4441, %v9543, %v9545
  %v9547 = vrot.slane %v8482, 2
  %v9548 = vsel %vm4441, %v9545, %v9547
  %v9549 = vrot.slane %v8483, 2
  %v9550 = vsel %vm4441, %v9547, %v9549
  %v9551 = vrot.slane %v8484, 2
  %v9552 = vsel %vm4441, %v9549, %v9551
  %v9553 = vrot.slane %v8485, 2
  %v9554 = vsel %vm4441, %v9551, %v9553
  %v9555 = vrot.slane %v8486, 2
  %v9556 = vsel %vm4441, %v9553, %v9555
  %v9557 = vrot.slane %v8487, 2
  %v9558 = vsel %vm4441, %v9555, %v9557
  %v9559 = vrot.slane %v8488, 2
  %v9560 = vsel %vm4441, %v9557, %v9559
  %v9561 = vrot.slane %v8489, 2
  %v9562 = vsel %vm4441, %v9559, %v9561
  %v9563 = vrot.slane %v8490, 2
  %v9564 = vsel %vm4441, %v9561, %v9563
  %v9565 = vrot.slane %v8491, 2
  %v9566 = vsel %vm4441, %v9563, %v9565
  %v9567 = vrot.slane %v8492, 2
  %v9568 = vsel %vm4441, %v9565, %v9567
  %v9569 = vrot.slane %v8493, 2
  %v9570 = vsel %vm4441, %v9567, %v9569
  %v9571 = vrot.slane %v8494, 2
  %v9572 = vsel %vm4441, %v9569, %v9571
  %v9573 = vrot.slane %v8495, 2
  %v9574 = vsel %vm4441, %v9571, %v9573
  %v9575 = vrot.slane %v8496, 2
  %v9576 = vsel %vm4441, %v9573, %v9575
  %v9577 = vrot.slane %v8497, 2
  %v9578 = vsel %vm4441, %v9575, %v9577
  %v9579 = vrot.slane %v8498, 2
  %v9580 = vsel %vm4441, %v9577, %v9579
  %v9581 = vrot.slane %v8897, 2
  %v9582 = vsel %vm4441, %v9579, %v9581
  %v9584 = vsel %vm610, %v9522, 0
  %v9587 = vsel %vm610, %v9524, 0
  %v9590 = vsel %vm610, %v9526, 0
  %v9593 = vsel %vm610, %v9528, 0
  %v9596 = vsel %vm610, %v9530, 0
  %v9599 = vsel %vm610, %v9532, 0
  %v9602 = vsel %vm610, %v9534, 0
  %v9605 = vsel %vm610, %v9536, 0
  %v9608 = vsel %vm610, %v9538, 0
  %v9611 = vsel %vm610, %v9540, 0
  %v9614 = vsel %vm610, %v9542, 0
  %v9617 = vsel %vm610, %v9544, 0
  %v9620 = vsel %vm610, %v9546, 0
  %v9623 = vsel %vm610, %v9548, 0
  %v9626 = vsel %vm610, %v9550, 0
  %v9629 = vsel %vm610, %v9552, 0
  %v9632 = vsel %vm610, %v9554, 0
  %v9635 = vsel %vm610, %v9556, 0
  %v9638 = vsel %vm610, %v9558, 0
  %v9641 = vsel %vm610, %v9560, 0
  %v9644 = vsel %vm610, %v9562, 0
  %v9647 = vsel %vm610, %v9564, 0
  %v9650 = vsel %vm610, %v9566, 0
  %v9653 = vsel %vm610, %v9568, 0
  %v9656 = vsel %vm610, %v9570, 0
  %v9659 = vsel %vm610, %v9572, 0
  %v9662 = vsel %vm610, %v9574, 0
  %v9665 = vsel %vm610, %v9576, 0
  %v9668 = vsel %vm610, %v9578, 0
  %v9671 = vsel %vm610, %v9580, 0
  %v9674 = vsel %vm610, %v9582, 0
  %v9677 = vsel %vm610, %v9581, 0
  %v9680 = vsel %vm707, %v9516, 0
  %9682 = vmatpush.bf16.msra.mxu0 0
  %9683 = vmatpush.bf16.msra.mxu0 0
  %9684 = vmatpush.bf16.msra.mxu0 0
  %9685 = vmatpush.bf16.msra.mxu0 0
  %9686 = vmatpush.bf16.msra.mxu0 0
  %9687 = vmatpush.bf16.msra.mxu0 0
  %9688 = vmatpush.bf16.msra.mxu0 0
  %9689 = vmatpush.bf16.msra.mxu0 %v9680
  %9690 = vmatmul.bf16.gmra.mxu0 %v9584
  %v9691 = vpop.f32.mrf.mxu0
  %v9692 = vadd.f32 0.0, %v9691
  %v9693 = vpop.f32.mrf.mxu0
  %v9694 = vadd.f32 0.0, %v9693
  %9695 = vmatmul.bf16.gmra.mxu0 %v9587
  %v9696 = vpop.f32.mrf.mxu0
  %v9697 = vadd.f32 0.0, %v9696
  %v9698 = vpop.f32.mrf.mxu0
  %v9699 = vadd.f32 0.0, %v9698
  %9700 = vmatmul.bf16.gmra.mxu0 %v9590
  %v9701 = vpop.f32.mrf.mxu0
  %v9702 = vadd.f32 0.0, %v9701
  %v9703 = vpop.f32.mrf.mxu0
  %v9704 = vadd.f32 0.0, %v9703
  %9705 = vmatmul.bf16.gmra.mxu0 %v9593
  %v9706 = vpop.f32.mrf.mxu0
  %v9707 = vadd.f32 0.0, %v9706
  %v9708 = vpop.f32.mrf.mxu0
  %v9709 = vadd.f32 0.0, %v9708
  %9710 = vmatmul.bf16.gmra.mxu0 %v9596
  %v9711 = vpop.f32.mrf.mxu0
  %v9712 = vadd.f32 0.0, %v9711
  %v9713 = vpop.f32.mrf.mxu0
  %v9714 = vadd.f32 0.0, %v9713
  %9715 = vmatmul.bf16.gmra.mxu0 %v9599
  %v9716 = vpop.f32.mrf.mxu0
  %v9717 = vadd.f32 0.0, %v9716
  %v9718 = vpop.f32.mrf.mxu0
  %v9719 = vadd.f32 0.0, %v9718
  %9720 = vmatmul.bf16.gmra.mxu0 %v9602
  %v9721 = vpop.f32.mrf.mxu0
  %v9722 = vadd.f32 0.0, %v9721
  %v9723 = vpop.f32.mrf.mxu0
  %v9724 = vadd.f32 0.0, %v9723
  %9725 = vmatmul.bf16.gmra.mxu0 %v9605
  %v9726 = vpop.f32.mrf.mxu0
  %v9727 = vadd.f32 0.0, %v9726
  %v9728 = vpop.f32.mrf.mxu0
  %v9729 = vadd.f32 0.0, %v9728
  %9730 = vmatmul.bf16.gmra.mxu0 %v9608
  %v9731 = vpop.f32.mrf.mxu0
  %v9732 = vadd.f32 0.0, %v9731
  %v9733 = vpop.f32.mrf.mxu0
  %v9734 = vadd.f32 0.0, %v9733
  %9735 = vmatmul.bf16.gmra.mxu0 %v9611
  %v9736 = vpop.f32.mrf.mxu0
  %v9737 = vadd.f32 0.0, %v9736
  %v9738 = vpop.f32.mrf.mxu0
  %v9739 = vadd.f32 0.0, %v9738
  %9740 = vmatmul.bf16.gmra.mxu0 %v9614
  %v9741 = vpop.f32.mrf.mxu0
  %v9742 = vadd.f32 0.0, %v9741
  %v9743 = vpop.f32.mrf.mxu0
  %v9744 = vadd.f32 0.0, %v9743
  %9745 = vmatmul.bf16.gmra.mxu0 %v9617
  %v9746 = vpop.f32.mrf.mxu0
  %v9747 = vadd.f32 0.0, %v9746
  %v9748 = vpop.f32.mrf.mxu0
  %v9749 = vadd.f32 0.0, %v9748
  %9750 = vmatmul.bf16.gmra.mxu0 %v9620
  %v9751 = vpop.f32.mrf.mxu0
  %v9752 = vadd.f32 0.0, %v9751
  %v9753 = vpop.f32.mrf.mxu0
  %v9754 = vadd.f32 0.0, %v9753
  %9755 = vmatmul.bf16.gmra.mxu0 %v9623
  %v9756 = vpop.f32.mrf.mxu0
  %v9757 = vadd.f32 0.0, %v9756
  %v9758 = vpop.f32.mrf.mxu0
  %v9759 = vadd.f32 0.0, %v9758
  %9760 = vmatmul.bf16.gmra.mxu0 %v9626
  %v9761 = vpop.f32.mrf.mxu0
  %v9762 = vadd.f32 0.0, %v9761
  %v9763 = vpop.f32.mrf.mxu0
  %v9764 = vadd.f32 0.0, %v9763
  %9765 = vmatmul.bf16.gmra.mxu0 %v9629
  %v9766 = vpop.f32.mrf.mxu0
  %v9767 = vadd.f32 0.0, %v9766
  %v9768 = vpop.f32.mrf.mxu0
  %v9769 = vadd.f32 0.0, %v9768
  %9770 = vmatmul.bf16.gmra.mxu0 %v9632
  %v9771 = vpop.f32.mrf.mxu0
  %v9772 = vadd.f32 0.0, %v9771
  %v9773 = vpop.f32.mrf.mxu0
  %v9774 = vadd.f32 0.0, %v9773
  %9775 = vmatmul.bf16.gmra.mxu0 %v9635
  %v9776 = vpop.f32.mrf.mxu0
  %v9777 = vadd.f32 0.0, %v9776
  %v9778 = vpop.f32.mrf.mxu0
  %v9779 = vadd.f32 0.0, %v9778
  %9780 = vmatmul.bf16.gmra.mxu0 %v9638
  %v9781 = vpop.f32.mrf.mxu0
  %v9782 = vadd.f32 0.0, %v9781
  %v9783 = vpop.f32.mrf.mxu0
  %v9784 = vadd.f32 0.0, %v9783
  %9785 = vmatmul.bf16.gmra.mxu0 %v9641
  %v9786 = vpop.f32.mrf.mxu0
  %v9787 = vadd.f32 0.0, %v9786
  %v9788 = vpop.f32.mrf.mxu0
  %v9789 = vadd.f32 0.0, %v9788
  %9790 = vmatmul.bf16.gmra.mxu0 %v9644
  %v9791 = vpop.f32.mrf.mxu0
  %v9792 = vadd.f32 0.0, %v9791
  %v9793 = vpop.f32.mrf.mxu0
  %v9794 = vadd.f32 0.0, %v9793
  %9795 = vmatmul.bf16.gmra.mxu0 %v9647
  %v9796 = vpop.f32.mrf.mxu0
  %v9797 = vadd.f32 0.0, %v9796
  %v9798 = vpop.f32.mrf.mxu0
  %v9799 = vadd.f32 0.0, %v9798
  %9800 = vmatmul.bf16.gmra.mxu0 %v9650
  %v9801 = vpop.f32.mrf.mxu0
  %v9802 = vadd.f32 0.0, %v9801
  %v9803 = vpop.f32.mrf.mxu0
  %v9804 = vadd.f32 0.0, %v9803
  %9805 = vmatmul.bf16.gmra.mxu0 %v9653
  %v9806 = vpop.f32.mrf.mxu0
  %v9807 = vadd.f32 0.0, %v9806
  %v9808 = vpop.f32.mrf.mxu0
  %v9809 = vadd.f32 0.0, %v9808
  %9810 = vmatmul.bf16.gmra.mxu0 %v9656
  %v9811 = vpop.f32.mrf.mxu0
  %v9812 = vadd.f32 0.0, %v9811
  %v9813 = vpop.f32.mrf.mxu0
  %v9814 = vadd.f32 0.0, %v9813
  %9815 = vmatmul.bf16.gmra.mxu0 %v9659
  %v9816 = vpop.f32.mrf.mxu0
  %v9817 = vadd.f32 0.0, %v9816
  %v9818 = vpop.f32.mrf.mxu0
  %v9819 = vadd.f32 0.0, %v9818
  %9820 = vmatmul.bf16.gmra.mxu0 %v9662
  %v9821 = vpop.f32.mrf.mxu0
  %v9822 = vadd.f32 0.0, %v9821
  %v9823 = vpop.f32.mrf.mxu0
  %v9824 = vadd.f32 0.0, %v9823
  %9825 = vmatmul.bf16.gmra.mxu0 %v9665
  %v9826 = vpop.f32.mrf.mxu0
  %v9827 = vadd.f32 0.0, %v9826
  %v9828 = vpop.f32.mrf.mxu0
  %v9829 = vadd.f32 0.0, %v9828
  %9830 = vmatmul.bf16.gmra.mxu0 %v9668
  %v9831 = vpop.f32.mrf.mxu0
  %v9832 = vadd.f32 0.0, %v9831
  %v9833 = vpop.f32.mrf.mxu0
  %v9834 = vadd.f32 0.0, %v9833
  %9835 = vmatmul.bf16.gmra.mxu0 %v9671
  %v9836 = vpop.f32.mrf.mxu0
  %v9837 = vadd.f32 0.0, %v9836
  %v9838 = vpop.f32.mrf.mxu0
  %v9839 = vadd.f32 0.0, %v9838
  %9840 = vmatmul.bf16.gmra.mxu0 %v9674
  %v9841 = vpop.f32.mrf.mxu0
  %v9842 = vadd.f32 0.0, %v9841
  %v9843 = vpop.f32.mrf.mxu0
  %v9844 = vadd.f32 0.0, %v9843
  %9845 = vmatmul.bf16.gmra.mxu0 %v9677
  %v9846 = vpop.f32.mrf.mxu0
  %v9847 = vadd.f32 0.0, %v9846
  %v9848 = vpop.f32.mrf.mxu0
  %9849 = vdwg.mxu0
  %v9850 = vadd.f32 %v9452, %v9692
  %v9851 = vadd.f32 %v9453, %v9694
  %v9852 = vadd.f32 %v9454, %v9697
  %v9853 = vadd.f32 %v9455, %v9699
  %v9854 = vadd.f32 %v9456, %v9702
  %v9855 = vadd.f32 %v9457, %v9704
  %v9856 = vadd.f32 %v9458, %v9707
  %v9857 = vadd.f32 %v9459, %v9709
  %v9858 = vadd.f32 %v9460, %v9712
  %v9859 = vadd.f32 %v9461, %v9714
  %v9860 = vadd.f32 %v9462, %v9717
  %v9861 = vadd.f32 %v9463, %v9719
  %v9862 = vadd.f32 %v9464, %v9722
  %v9863 = vadd.f32 %v9465, %v9724
  %v9864 = vadd.f32 %v9466, %v9727
  %v9865 = vadd.f32 %v9467, %v9729
  %v9866 = vadd.f32 %v9468, %v9732
  %v9867 = vadd.f32 %v9469, %v9734
  %v9868 = vadd.f32 %v9470, %v9737
  %v9869 = vadd.f32 %v9471, %v9739
  %v9870 = vadd.f32 %v9472, %v9742
  %v9871 = vadd.f32 %v9473, %v9744
  %v9872 = vadd.f32 %v9474, %v9747
  %v9873 = vadd.f32 %v9475, %v9749
  %v9874 = vadd.f32 %v9476, %v9752
  %v9875 = vadd.f32 %v9477, %v9754
  %v9876 = vadd.f32 %v9478, %v9757
  %v9877 = vadd.f32 %v9479, %v9759
  %v9878 = vadd.f32 %v9480, %v9762
  %v9879 = vadd.f32 %v9481, %v9764
  %v9880 = vadd.f32 %v9482, %v9767
  %v9881 = vadd.f32 %v9483, %v9769
  %v9882 = vadd.f32 %v9484, %v9772
  %v9883 = vadd.f32 %v9485, %v9774
  %v9884 = vadd.f32 %v9486, %v9777
  %v9885 = vadd.f32 %v9487, %v9779
  %v9886 = vadd.f32 %v9488, %v9782
  %v9887 = vadd.f32 %v9489, %v9784
  %v9888 = vadd.f32 %v9490, %v9787
  %v9889 = vadd.f32 %v9491, %v9789
  %v9890 = vadd.f32 %v9492, %v9792
  %v9891 = vadd.f32 %v9493, %v9794
  %v9892 = vadd.f32 %v9494, %v9797
  %v9893 = vadd.f32 %v9495, %v9799
  %v9894 = vadd.f32 %v9496, %v9802
  %v9895 = vadd.f32 %v9497, %v9804
  %v9896 = vadd.f32 %v9498, %v9807
  %v9897 = vadd.f32 %v9499, %v9809
  %v9898 = vadd.f32 %v9500, %v9812
  %v9899 = vadd.f32 %v9501, %v9814
  %v9900 = vadd.f32 %v9502, %v9817
  %v9901 = vadd.f32 %v9503, %v9819
  %v9902 = vadd.f32 %v9504, %v9822
  %v9903 = vadd.f32 %v9505, %v9824
  %v9904 = vadd.f32 %v9506, %v9827
  %v9905 = vadd.f32 %v9507, %v9829
  %v9906 = vadd.f32 %v9508, %v9832
  %v9907 = vadd.f32 %v9509, %v9834
  %v9908 = vadd.f32 %v9510, %v9837
  %v9909 = vadd.f32 %v9511, %v9839
  %v9910 = vadd.f32 %v9512, %v9842
  %v9911 = vadd.f32 %v9513, %v9844
  %v9912 = vadd.f32 %v9514, %v9847
  %v9913 = vld [vmem:[#allocation2 + $0x48] sm:$0xf]
  %v9914 = vld [vmem:[#allocation2 + $0x4c] sm:$0xf]
  %v9915 = vld [vmem:[#allocation2 + $0x50] sm:$0xf]
  %v9916 = vld [vmem:[#allocation2 + $0x54] sm:$0xf]
  %v9917 = vld [vmem:[#allocation2 + $0x58] sm:$0xf]
  %v9918 = vld [vmem:[#allocation2 + $0x5c] sm:$0xf]
  %v9919 = vld [vmem:[#allocation2 + $0x60] sm:$0xf]
  %v9920 = vld [vmem:[#allocation2 + $0x64] sm:$0xf]
  %v9921 = vld [vmem:[#allocation2 + $0x68] sm:$0xf]
  %v9922 = vld [vmem:[#allocation2 + $0x6c] sm:$0xf]
  %v9923 = vld [vmem:[#allocation2 + $0x70] sm:$0xf]
  %v9924 = vld [vmem:[#allocation2 + $0x74] sm:$0xf]
  %v9925 = vld [vmem:[#allocation2 + $0x78] sm:$0xf]
  %v9926 = vld [vmem:[#allocation2 + $0x7c] sm:$0xf]
  %v9927 = vld [vmem:[#allocation2 + $0x80] sm:$0xf]
  %v9928 = vld [vmem:[#allocation2 + $0x84] sm:$0xf]
  %v9929 = vld [vmem:[#allocation2 + $0x88] sm:$0xf]
  %v9930 = vld [vmem:[#allocation2 + $0x8c] sm:$0xf]
  %v9931 = vld [vmem:[#allocation2 + $0x90] sm:$0xf]
  %v9932 = vld [vmem:[#allocation2 + $0x94] sm:$0xf]
  %v9933 = vld [vmem:[#allocation2 + $0x98] sm:$0xf]
  %v9934 = vld [vmem:[#allocation2 + $0x9c] sm:$0xf]
  %v9935 = vld [vmem:[#allocation2 + $0xa0] sm:$0xf]
  %v9936 = vld [vmem:[#allocation2 + $0xa4] sm:$0xf]
  %v9937 = vld [vmem:[#allocation2 + $0xa8] sm:$0xf]
  %v9938 = vld [vmem:[#allocation2 + $0xac] sm:$0xf]
  %v9939 = vld [vmem:[#allocation2 + $0xb0] sm:$0xf]
  %v9940 = vld [vmem:[#allocation2 + $0xb4] sm:$0xf]
  %v9941 = vld [vmem:[#allocation2 + $0xb8] sm:$0xf]
  %v9942 = vld [vmem:[#allocation2 + $0xbc] sm:$0xf]
  %v9943 = vld [vmem:[#allocation2 + $0xc0] sm:$0xf]
  %v9944 = vld [vmem:[#allocation2 + $0xc4] sm:$0xf]
  %v9945 = vld [vmem:[#allocation2 + $0xc8] sm:$0xf]
  %v9946 = vld [vmem:[#allocation2 + $0xcc] sm:$0xf]
  %v9947 = vld [vmem:[#allocation2 + $0xd0] sm:$0xf]
  %v9948 = vld [vmem:[#allocation2 + $0xd4] sm:$0xf]
  %v9949 = vld [vmem:[#allocation2 + $0xd8] sm:$0xf]
  %v9950 = vld [vmem:[#allocation2 + $0xdc] sm:$0xf]
  %v9951 = vld [vmem:[#allocation2 + $0xe0] sm:$0xf]
  %v9952 = vld [vmem:[#allocation2 + $0xe4] sm:$0xf]
  %v9953 = vld [vmem:[#allocation2 + $0xe8] sm:$0xf]
  %v9954 = vld [vmem:[#allocation2 + $0xec] sm:$0xf]
  %v9955 = vld [vmem:[#allocation2 + $0xf0] sm:$0xf]
  %v9956 = vld [vmem:[#allocation2 + $0xf4] sm:$0xf]
  %v9957 = vld [vmem:[#allocation2 + $0xf8] sm:$0xf]
  %v9958 = vld [vmem:[#allocation2 + $0xfc] sm:$0xf]
  %v9959 = vld [vmem:[#allocation2 + $0x100] sm:$0xf]
  %v9960 = vld [vmem:[#allocation2 + $0x104] sm:$0xf]
  %v9961 = vld [vmem:[#allocation2 + $0x108] sm:$0xf]
  %v9962 = vld [vmem:[#allocation2 + $0x10c] sm:$0xf]
  %v9963 = vld [vmem:[#allocation2 + $0x110] sm:$0xf]
  %v9964 = vld [vmem:[#allocation2 + $0x114] sm:$0xf]
  %v9965 = vld [vmem:[#allocation2 + $0x118] sm:$0xf]
  %v9966 = vld [vmem:[#allocation2 + $0x11c] sm:$0xf]
  %v9967 = vld [vmem:[#allocation2 + $0x120] sm:$0xf]
  %v9968 = vld [vmem:[#allocation2 + $0x124] sm:$0xf]
  %v9969 = vld [vmem:[#allocation2 + $0x128] sm:$0xf]
  %v9970 = vld [vmem:[#allocation2 + $0x12c] sm:$0xf]
  %v9971 = vld [vmem:[#allocation2 + $0x130] sm:$0xf]
  %v9972 = vld [vmem:[#allocation2 + $0x134] sm:$0xf]
  %v9973 = vld [vmem:[#allocation2 + $0x138] sm:$0xf]
  %v9974 = vld [vmem:[#allocation2 + $0x13c] sm:$0xf]
  %v9975 = vld [vmem:[#allocation2 + $0x140] sm:$0xf]
  %v9976 = vld [vmem:[%s1 + $0x48] sm:$0xf]
  %v10040 = vunpack.c.l.b16 %v9913
  %v10041 = vunpack.c.l.b16 %v9914
  %v10042 = vunpack.c.l.b16 %v9915
  %v10043 = vunpack.c.l.b16 %v9916
  %v10044 = vunpack.c.l.b16 %v9917
  %v10045 = vunpack.c.l.b16 %v9918
  %v10046 = vunpack.c.l.b16 %v9919
  %v10047 = vunpack.c.l.b16 %v9920
  %v10048 = vunpack.c.l.b16 %v9921
  %v10049 = vunpack.c.l.b16 %v9922
  %v10050 = vunpack.c.l.b16 %v9923
  %v10051 = vunpack.c.l.b16 %v9924
  %v10052 = vunpack.c.l.b16 %v9925
  %v10053 = vunpack.c.l.b16 %v9926
  %v10054 = vunpack.c.l.b16 %v9927
  %v10055 = vunpack.c.l.b16 %v9928
  %v10056 = vunpack.c.l.b16 %v9929
  %v10057 = vunpack.c.l.b16 %v9930
  %v10058 = vunpack.c.l.b16 %v9931
  %v10059 = vunpack.c.l.b16 %v9932
  %v10060 = vunpack.c.l.b16 %v9933
  %v10061 = vunpack.c.l.b16 %v9934
  %v10062 = vunpack.c.l.b16 %v9935
  %v10063 = vunpack.c.l.b16 %v9936
  %v10064 = vunpack.c.l.b16 %v9937
  %v10065 = vunpack.c.l.b16 %v9938
  %v10066 = vunpack.c.l.b16 %v9939
  %v10067 = vunpack.c.l.b16 %v9940
  %v10068 = vunpack.c.l.b16 %v9941
  %v10069 = vunpack.c.l.b16 %v9942
  %v10070 = vunpack.c.l.b16 %v9943
  %v10071 = vunpack.c.l.b16 %v9944
  %v10072 = vunpack.c.l.b16 %v9945
  %v10073 = vunpack.c.l.b16 %v9946
  %v10074 = vunpack.c.l.b16 %v9947
  %v10075 = vunpack.c.l.b16 %v9948
  %v10076 = vunpack.c.l.b16 %v9949
  %v10077 = vunpack.c.l.b16 %v9950
  %v10078 = vunpack.c.l.b16 %v9951
  %v10079 = vunpack.c.l.b16 %v9952
  %v10080 = vunpack.c.l.b16 %v9953
  %v10081 = vunpack.c.l.b16 %v9954
  %v10082 = vunpack.c.l.b16 %v9955
  %v10083 = vunpack.c.l.b16 %v9956
  %v10084 = vunpack.c.l.b16 %v9957
  %v10085 = vunpack.c.l.b16 %v9958
  %v10086 = vunpack.c.l.b16 %v9959
  %v10087 = vunpack.c.l.b16 %v9960
  %v10088 = vunpack.c.l.b16 %v9961
  %v10089 = vunpack.c.l.b16 %v9962
  %v10090 = vunpack.c.l.b16 %v9963
  %v10091 = vunpack.c.l.b16 %v9964
  %v10092 = vunpack.c.l.b16 %v9965
  %v10093 = vunpack.c.l.b16 %v9966
  %v10094 = vunpack.c.l.b16 %v9967
  %v10095 = vunpack.c.l.b16 %v9968
  %v10096 = vunpack.c.l.b16 %v9969
  %v10097 = vunpack.c.l.b16 %v9970
  %v10098 = vunpack.c.l.b16 %v9971
  %v10099 = vunpack.c.l.b16 %v9972
  %v10100 = vunpack.c.l.b16 %v9973
  %v10101 = vunpack.c.l.b16 %v9974
  %v10102 = vunpack.c.l.b16 %v9975
  %v10103 = vpack.c.b16 %v10041, %v10040
  %v10104 = vpack.c.b16 %v10043, %v10042
  %v10105 = vpack.c.b16 %v10045, %v10044
  %v10106 = vpack.c.b16 %v10047, %v10046
  %v10107 = vpack.c.b16 %v10049, %v10048
  %v10108 = vpack.c.b16 %v10051, %v10050
  %v10109 = vpack.c.b16 %v10053, %v10052
  %v10110 = vpack.c.b16 %v10055, %v10054
  %v10111 = vpack.c.b16 %v10057, %v10056
  %v10112 = vpack.c.b16 %v10059, %v10058
  %v10113 = vpack.c.b16 %v10061, %v10060
  %v10114 = vpack.c.b16 %v10063, %v10062
  %v10115 = vpack.c.b16 %v10065, %v10064
  %v10116 = vpack.c.b16 %v10067, %v10066
  %v10117 = vpack.c.b16 %v10069, %v10068
  %v10118 = vpack.c.b16 %v10071, %v10070
  %v10119 = vpack.c.b16 %v10073, %v10072
  %v10120 = vpack.c.b16 %v10075, %v10074
  %v10121 = vpack.c.b16 %v10077, %v10076
  %v10122 = vpack.c.b16 %v10079, %v10078
  %v10123 = vpack.c.b16 %v10081, %v10080
  %v10124 = vpack.c.b16 %v10083, %v10082
  %v10125 = vpack.c.b16 %v10085, %v10084
  %v10126 = vpack.c.b16 %v10087, %v10086
  %v10127 = vpack.c.b16 %v10089, %v10088
  %v10128 = vpack.c.b16 %v10091, %v10090
  %v10129 = vpack.c.b16 %v10093, %v10092
  %v10130 = vpack.c.b16 %v10095, %v10094
  %v10131 = vpack.c.b16 %v10097, %v10096
  %v10132 = vpack.c.b16 %v10099, %v10098
  %v10133 = vpack.c.b16 %v10101, %v10100
  %v10134 = vpack.c.b16 %v10102, %v10102
  %v10136 = vsel %vm610, %v10103, 0
  %v10139 = vsel %vm610, %v10104, 0
  %v10142 = vsel %vm610, %v10105, 0
  %v10145 = vsel %vm610, %v10106, 0
  %v10148 = vsel %vm610, %v10107, 0
  %v10151 = vsel %vm610, %v10108, 0
  %v10154 = vsel %vm610, %v10109, 0
  %v10157 = vsel %vm610, %v10110, 0
  %v10160 = vsel %vm610, %v10111, 0
  %v10163 = vsel %vm610, %v10112, 0
  %v10166 = vsel %vm610, %v10113, 0
  %v10169 = vsel %vm610, %v10114, 0
  %v10172 = vsel %vm610, %v10115, 0
  %v10175 = vsel %vm610, %v10116, 0
  %v10178 = vsel %vm610, %v10117, 0
  %v10181 = vsel %vm610, %v10118, 0
  %v10184 = vsel %vm610, %v10119, 0
  %v10187 = vsel %vm610, %v10120, 0
  %v10190 = vsel %vm610, %v10121, 0
  %v10193 = vsel %vm610, %v10122, 0
  %v10196 = vsel %vm610, %v10123, 0
  %v10199 = vsel %vm610, %v10124, 0
  %v10202 = vsel %vm610, %v10125, 0
  %v10205 = vsel %vm610, %v10126, 0
  %v10208 = vsel %vm610, %v10127, 0
  %v10211 = vsel %vm610, %v10128, 0
  %v10214 = vsel %vm610, %v10129, 0
  %v10217 = vsel %vm610, %v10130, 0
  %v10220 = vsel %vm610, %v10131, 0
  %v10223 = vsel %vm610, %v10132, 0
  %v10226 = vsel %vm610, %v10133, 0
  %v10229 = vsel %vm610, %v10134, 0
  %v10232 = vsel %vm707, %v9976, 0
  %10234 = vmatpush.bf16.msra.mxu0 0
  %10235 = vmatpush.bf16.msra.mxu0 0
  %10236 = vmatpush.bf16.msra.mxu0 0
  %10237 = vmatpush.bf16.msra.mxu0 0
  %10238 = vmatpush.bf16.msra.mxu0 0
  %10239 = vmatpush.bf16.msra.mxu0 0
  %10240 = vmatpush.bf16.msra.mxu0 0
  %10241 = vmatpush.bf16.msra.mxu0 %v10232
  %10242 = vmatmul.bf16.gmra.mxu0 %v10136
  %v10243 = vpop.f32.mrf.mxu0
  %v10244 = vadd.f32 0.0, %v10243
  %v10245 = vpop.f32.mrf.mxu0
  %v10246 = vadd.f32 0.0, %v10245
  %10247 = vmatmul.bf16.gmra.mxu0 %v10139
  %v10248 = vpop.f32.mrf.mxu0
  %v10249 = vadd.f32 0.0, %v10248
  %v10250 = vpop.f32.mrf.mxu0
  %v10251 = vadd.f32 0.0, %v10250
  %10252 = vmatmul.bf16.gmra.mxu0 %v10142
  %v10253 = vpop.f32.mrf.mxu0
  %v10254 = vadd.f32 0.0, %v10253
  %v10255 = vpop.f32.mrf.mxu0
  %v10256 = vadd.f32 0.0, %v10255
  %10257 = vmatmul.bf16.gmra.mxu0 %v10145
  %v10258 = vpop.f32.mrf.mxu0
  %v10259 = vadd.f32 0.0, %v10258
  %v10260 = vpop.f32.mrf.mxu0
  %v10261 = vadd.f32 0.0, %v10260
  %10262 = vmatmul.bf16.gmra.mxu0 %v10148
  %v10263 = vpop.f32.mrf.mxu0
  %v10264 = vadd.f32 0.0, %v10263
  %v10265 = vpop.f32.mrf.mxu0
  %v10266 = vadd.f32 0.0, %v10265
  %10267 = vmatmul.bf16.gmra.mxu0 %v10151
  %v10268 = vpop.f32.mrf.mxu0
  %v10269 = vadd.f32 0.0, %v10268
  %v10270 = vpop.f32.mrf.mxu0
  %v10271 = vadd.f32 0.0, %v10270
  %10272 = vmatmul.bf16.gmra.mxu0 %v10154
  %v10273 = vpop.f32.mrf.mxu0
  %v10274 = vadd.f32 0.0, %v10273
  %v10275 = vpop.f32.mrf.mxu0
  %v10276 = vadd.f32 0.0, %v10275
  %10277 = vmatmul.bf16.gmra.mxu0 %v10157
  %v10278 = vpop.f32.mrf.mxu0
  %v10279 = vadd.f32 0.0, %v10278
  %v10280 = vpop.f32.mrf.mxu0
  %v10281 = vadd.f32 0.0, %v10280
  %10282 = vmatmul.bf16.gmra.mxu0 %v10160
  %v10283 = vpop.f32.mrf.mxu0
  %v10284 = vadd.f32 0.0, %v10283
  %v10285 = vpop.f32.mrf.mxu0
  %v10286 = vadd.f32 0.0, %v10285
  %10287 = vmatmul.bf16.gmra.mxu0 %v10163
  %v10288 = vpop.f32.mrf.mxu0
  %v10289 = vadd.f32 0.0, %v10288
  %v10290 = vpop.f32.mrf.mxu0
  %v10291 = vadd.f32 0.0, %v10290
  %10292 = vmatmul.bf16.gmra.mxu0 %v10166
  %v10293 = vpop.f32.mrf.mxu0
  %v10294 = vadd.f32 0.0, %v10293
  %v10295 = vpop.f32.mrf.mxu0
  %v10296 = vadd.f32 0.0, %v10295
  %10297 = vmatmul.bf16.gmra.mxu0 %v10169
  %v10298 = vpop.f32.mrf.mxu0
  %v10299 = vadd.f32 0.0, %v10298
  %v10300 = vpop.f32.mrf.mxu0
  %v10301 = vadd.f32 0.0, %v10300
  %10302 = vmatmul.bf16.gmra.mxu0 %v10172
  %v10303 = vpop.f32.mrf.mxu0
  %v10304 = vadd.f32 0.0, %v10303
  %v10305 = vpop.f32.mrf.mxu0
  %v10306 = vadd.f32 0.0, %v10305
  %10307 = vmatmul.bf16.gmra.mxu0 %v10175
  %v10308 = vpop.f32.mrf.mxu0
  %v10309 = vadd.f32 0.0, %v10308
  %v10310 = vpop.f32.mrf.mxu0
  %v10311 = vadd.f32 0.0, %v10310
  %10312 = vmatmul.bf16.gmra.mxu0 %v10178
  %v10313 = vpop.f32.mrf.mxu0
  %v10314 = vadd.f32 0.0, %v10313
  %v10315 = vpop.f32.mrf.mxu0
  %v10316 = vadd.f32 0.0, %v10315
  %10317 = vmatmul.bf16.gmra.mxu0 %v10181
  %v10318 = vpop.f32.mrf.mxu0
  %v10319 = vadd.f32 0.0, %v10318
  %v10320 = vpop.f32.mrf.mxu0
  %v10321 = vadd.f32 0.0, %v10320
  %10322 = vmatmul.bf16.gmra.mxu0 %v10184
  %v10323 = vpop.f32.mrf.mxu0
  %v10324 = vadd.f32 0.0, %v10323
  %v10325 = vpop.f32.mrf.mxu0
  %v10326 = vadd.f32 0.0, %v10325
  %10327 = vmatmul.bf16.gmra.mxu0 %v10187
  %v10328 = vpop.f32.mrf.mxu0
  %v10329 = vadd.f32 0.0, %v10328
  %v10330 = vpop.f32.mrf.mxu0
  %v10331 = vadd.f32 0.0, %v10330
  %10332 = vmatmul.bf16.gmra.mxu0 %v10190
  %v10333 = vpop.f32.mrf.mxu0
  %v10334 = vadd.f32 0.0, %v10333
  %v10335 = vpop.f32.mrf.mxu0
  %v10336 = vadd.f32 0.0, %v10335
  %10337 = vmatmul.bf16.gmra.mxu0 %v10193
  %v10338 = vpop.f32.mrf.mxu0
  %v10339 = vadd.f32 0.0, %v10338
  %v10340 = vpop.f32.mrf.mxu0
  %v10341 = vadd.f32 0.0, %v10340
  %10342 = vmatmul.bf16.gmra.mxu0 %v10196
  %v10343 = vpop.f32.mrf.mxu0
  %v10344 = vadd.f32 0.0, %v10343
  %v10345 = vpop.f32.mrf.mxu0
  %v10346 = vadd.f32 0.0, %v10345
  %10347 = vmatmul.bf16.gmra.mxu0 %v10199
  %v10348 = vpop.f32.mrf.mxu0
  %v10349 = vadd.f32 0.0, %v10348
  %v10350 = vpop.f32.mrf.mxu0
  %v10351 = vadd.f32 0.0, %v10350
  %10352 = vmatmul.bf16.gmra.mxu0 %v10202
  %v10353 = vpop.f32.mrf.mxu0
  %v10354 = vadd.f32 0.0, %v10353
  %v10355 = vpop.f32.mrf.mxu0
  %v10356 = vadd.f32 0.0, %v10355
  %10357 = vmatmul.bf16.gmra.mxu0 %v10205
  %v10358 = vpop.f32.mrf.mxu0
  %v10359 = vadd.f32 0.0, %v10358
  %v10360 = vpop.f32.mrf.mxu0
  %v10361 = vadd.f32 0.0, %v10360
  %10362 = vmatmul.bf16.gmra.mxu0 %v10208
  %v10363 = vpop.f32.mrf.mxu0
  %v10364 = vadd.f32 0.0, %v10363
  %v10365 = vpop.f32.mrf.mxu0
  %v10366 = vadd.f32 0.0, %v10365
  %10367 = vmatmul.bf16.gmra.mxu0 %v10211
  %v10368 = vpop.f32.mrf.mxu0
  %v10369 = vadd.f32 0.0, %v10368
  %v10370 = vpop.f32.mrf.mxu0
  %v10371 = vadd.f32 0.0, %v10370
  %10372 = vmatmul.bf16.gmra.mxu0 %v10214
  %v10373 = vpop.f32.mrf.mxu0
  %v10374 = vadd.f32 0.0, %v10373
  %v10375 = vpop.f32.mrf.mxu0
  %v10376 = vadd.f32 0.0, %v10375
  %10377 = vmatmul.bf16.gmra.mxu0 %v10217
  %v10378 = vpop.f32.mrf.mxu0
  %v10379 = vadd.f32 0.0, %v10378
  %v10380 = vpop.f32.mrf.mxu0
  %v10381 = vadd.f32 0.0, %v10380
  %10382 = vmatmul.bf16.gmra.mxu0 %v10220
  %v10383 = vpop.f32.mrf.mxu0
  %v10384 = vadd.f32 0.0, %v10383
  %v10385 = vpop.f32.mrf.mxu0
  %v10386 = vadd.f32 0.0, %v10385
  %10387 = vmatmul.bf16.gmra.mxu0 %v10223
  %v10388 = vpop.f32.mrf.mxu0
  %v10389 = vadd.f32 0.0, %v10388
  %v10390 = vpop.f32.mrf.mxu0
  %v10391 = vadd.f32 0.0, %v10390
  %10392 = vmatmul.bf16.gmra.mxu0 %v10226
  %v10393 = vpop.f32.mrf.mxu0
  %v10394 = vadd.f32 0.0, %v10393
  %v10395 = vpop.f32.mrf.mxu0
  %v10396 = vadd.f32 0.0, %v10395
  %10397 = vmatmul.bf16.gmra.mxu0 %v10229
  %v10398 = vpop.f32.mrf.mxu0
  %v10399 = vadd.f32 0.0, %v10398
  %v10400 = vpop.f32.mrf.mxu0
  %10401 = vdwg.mxu0
  %v10402 = vadd.f32 %v9850, %v10244
  %v10403 = vadd.f32 %v9851, %v10246
  %v10404 = vadd.f32 %v9852, %v10249
  %v10405 = vadd.f32 %v9853, %v10251
  %v10406 = vadd.f32 %v9854, %v10254
  %v10407 = vadd.f32 %v9855, %v10256
  %v10408 = vadd.f32 %v9856, %v10259
  %v10409 = vadd.f32 %v9857, %v10261
  %v10410 = vadd.f32 %v9858, %v10264
  %v10411 = vadd.f32 %v9859, %v10266
  %v10412 = vadd.f32 %v9860, %v10269
  %v10413 = vadd.f32 %v9861, %v10271
  %v10414 = vadd.f32 %v9862, %v10274
  %v10415 = vadd.f32 %v9863, %v10276
  %v10416 = vadd.f32 %v9864, %v10279
  %v10417 = vadd.f32 %v9865, %v10281
  %v10418 = vadd.f32 %v9866, %v10284
  %v10419 = vadd.f32 %v9867, %v10286
  %v10420 = vadd.f32 %v9868, %v10289
  %v10421 = vadd.f32 %v9869, %v10291
  %v10422 = vadd.f32 %v9870, %v10294
  %v10423 = vadd.f32 %v9871, %v10296
  %v10424 = vadd.f32 %v9872, %v10299
  %v10425 = vadd.f32 %v9873, %v10301
  %v10426 = vadd.f32 %v9874, %v10304
  %v10427 = vadd.f32 %v9875, %v10306
  %v10428 = vadd.f32 %v9876, %v10309
  %v10429 = vadd.f32 %v9877, %v10311
  %v10430 = vadd.f32 %v9878, %v10314
  %v10431 = vadd.f32 %v9879, %v10316
  %v10432 = vadd.f32 %v9880, %v10319
  %v10433 = vadd.f32 %v9881, %v10321
  %v10434 = vadd.f32 %v9882, %v10324
  %v10435 = vadd.f32 %v9883, %v10326
  %v10436 = vadd.f32 %v9884, %v10329
  %v10437 = vadd.f32 %v9885, %v10331
  %v10438 = vadd.f32 %v9886, %v10334
  %v10439 = vadd.f32 %v9887, %v10336
  %v10440 = vadd.f32 %v9888, %v10339
  %v10441 = vadd.f32 %v9889, %v10341
  %v10442 = vadd.f32 %v9890, %v10344
  %v10443 = vadd.f32 %v9891, %v10346
  %v10444 = vadd.f32 %v9892, %v10349
  %v10445 = vadd.f32 %v9893, %v10351
  %v10446 = vadd.f32 %v9894, %v10354
  %v10447 = vadd.f32 %v9895, %v10356
  %v10448 = vadd.f32 %v9896, %v10359
  %v10449 = vadd.f32 %v9897, %v10361
  %v10450 = vadd.f32 %v9898, %v10364
  %v10451 = vadd.f32 %v9899, %v10366
  %v10452 = vadd.f32 %v9900, %v10369
  %v10453 = vadd.f32 %v9901, %v10371
  %v10454 = vadd.f32 %v9902, %v10374
  %v10455 = vadd.f32 %v9903, %v10376
  %v10456 = vadd.f32 %v9904, %v10379
  %v10457 = vadd.f32 %v9905, %v10381
  %v10458 = vadd.f32 %v9906, %v10384
  %v10459 = vadd.f32 %v9907, %v10386
  %v10460 = vadd.f32 %v9908, %v10389
  %v10461 = vadd.f32 %v9909, %v10391
  %v10462 = vadd.f32 %v9910, %v10394
  %v10463 = vadd.f32 %v9911, %v10396
  %v10464 = vadd.f32 %v9912, %v10399
  %v10465 = vld [vmem:[#allocation2 + $0x48] sm:$0xf]
  %v10466 = vld [vmem:[#allocation2 + $0x4c] sm:$0xf]
  %v10467 = vld [vmem:[#allocation2 + $0x50] sm:$0xf]
  %v10468 = vld [vmem:[#allocation2 + $0x54] sm:$0xf]
  %v10469 = vld [vmem:[#allocation2 + $0x58] sm:$0xf]
  %v10470 = vld [vmem:[#allocation2 + $0x5c] sm:$0xf]
  %v10471 = vld [vmem:[#allocation2 + $0x60] sm:$0xf]
  %v10472 = vld [vmem:[#allocation2 + $0x64] sm:$0xf]
  %v10473 = vld [vmem:[#allocation2 + $0x68] sm:$0xf]
  %v10474 = vld [vmem:[#allocation2 + $0x6c] sm:$0xf]
  %v10475 = vld [vmem:[#allocation2 + $0x70] sm:$0xf]
  %v10476 = vld [vmem:[#allocation2 + $0x74] sm:$0xf]
  %v10477 = vld [vmem:[#allocation2 + $0x78] sm:$0xf]
  %v10478 = vld [vmem:[#allocation2 + $0x7c] sm:$0xf]
  %v10479 = vld [vmem:[#allocation2 + $0x80] sm:$0xf]
  %v10480 = vld [vmem:[#allocation2 + $0x84] sm:$0xf]
  %v10481 = vld [vmem:[#allocation2 + $0x88] sm:$0xf]
  %v10482 = vld [vmem:[#allocation2 + $0x8c] sm:$0xf]
  %v10483 = vld [vmem:[#allocation2 + $0x90] sm:$0xf]
  %v10484 = vld [vmem:[#allocation2 + $0x94] sm:$0xf]
  %v10485 = vld [vmem:[#allocation2 + $0x98] sm:$0xf]
  %v10486 = vld [vmem:[#allocation2 + $0x9c] sm:$0xf]
  %v10487 = vld [vmem:[#allocation2 + $0xa0] sm:$0xf]
  %v10488 = vld [vmem:[#allocation2 + $0xa4] sm:$0xf]
  %v10489 = vld [vmem:[#allocation2 + $0xa8] sm:$0xf]
  %v10490 = vld [vmem:[#allocation2 + $0xac] sm:$0xf]
  %v10491 = vld [vmem:[#allocation2 + $0xb0] sm:$0xf]
  %v10492 = vld [vmem:[#allocation2 + $0xb4] sm:$0xf]
  %v10493 = vld [vmem:[#allocation2 + $0xb8] sm:$0xf]
  %v10494 = vld [vmem:[#allocation2 + $0xbc] sm:$0xf]
  %v10495 = vld [vmem:[#allocation2 + $0xc0] sm:$0xf]
  %v10496 = vld [vmem:[#allocation2 + $0xc4] sm:$0xf]
  %v10497 = vld [vmem:[#allocation2 + $0xc8] sm:$0xf]
  %v10498 = vld [vmem:[#allocation2 + $0xcc] sm:$0xf]
  %v10499 = vld [vmem:[#allocation2 + $0xd0] sm:$0xf]
  %v10500 = vld [vmem:[#allocation2 + $0xd4] sm:$0xf]
  %v10501 = vld [vmem:[#allocation2 + $0xd8] sm:$0xf]
  %v10502 = vld [vmem:[#allocation2 + $0xdc] sm:$0xf]
  %v10503 = vld [vmem:[#allocation2 + $0xe0] sm:$0xf]
  %v10504 = vld [vmem:[#allocation2 + $0xe4] sm:$0xf]
  %v10505 = vld [vmem:[#allocation2 + $0xe8] sm:$0xf]
  %v10506 = vld [vmem:[#allocation2 + $0xec] sm:$0xf]
  %v10507 = vld [vmem:[#allocation2 + $0xf0] sm:$0xf]
  %v10508 = vld [vmem:[#allocation2 + $0xf4] sm:$0xf]
  %v10509 = vld [vmem:[#allocation2 + $0xf8] sm:$0xf]
  %v10510 = vld [vmem:[#allocation2 + $0xfc] sm:$0xf]
  %v10511 = vld [vmem:[#allocation2 + $0x100] sm:$0xf]
  %v10512 = vld [vmem:[#allocation2 + $0x104] sm:$0xf]
  %v10513 = vld [vmem:[#allocation2 + $0x108] sm:$0xf]
  %v10514 = vld [vmem:[#allocation2 + $0x10c] sm:$0xf]
  %v10515 = vld [vmem:[#allocation2 + $0x110] sm:$0xf]
  %v10516 = vld [vmem:[#allocation2 + $0x114] sm:$0xf]
  %v10517 = vld [vmem:[#allocation2 + $0x118] sm:$0xf]
  %v10518 = vld [vmem:[#allocation2 + $0x11c] sm:$0xf]
  %v10519 = vld [vmem:[#allocation2 + $0x120] sm:$0xf]
  %v10520 = vld [vmem:[#allocation2 + $0x124] sm:$0xf]
  %v10521 = vld [vmem:[#allocation2 + $0x128] sm:$0xf]
  %v10522 = vld [vmem:[#allocation2 + $0x12c] sm:$0xf]
  %v10523 = vld [vmem:[#allocation2 + $0x130] sm:$0xf]
  %v10524 = vld [vmem:[#allocation2 + $0x134] sm:$0xf]
  %v10525 = vld [vmem:[#allocation2 + $0x138] sm:$0xf]
  %v10526 = vld [vmem:[#allocation2 + $0x13c] sm:$0xf]
  %v10527 = vld [vmem:[#allocation2 + $0x140] sm:$0xf]
  %v10528 = vld [vmem:[#allocation2 + $0x144] sm:$0x1]
  %v10529 = vld [vmem:[%s1 + $0x4c] sm:$0xf]
  %v10594 = vunpack.c.l.b16 %v10465
  %v10595 = vunpack.c.l.b16 %v10466
  %v10596 = vunpack.c.l.b16 %v10467
  %v10597 = vunpack.c.l.b16 %v10468
  %v10598 = vunpack.c.l.b16 %v10469
  %v10599 = vunpack.c.l.b16 %v10470
  %v10600 = vunpack.c.l.b16 %v10471
  %v10601 = vunpack.c.l.b16 %v10472
  %v10602 = vunpack.c.l.b16 %v10473
  %v10603 = vunpack.c.l.b16 %v10474
  %v10604 = vunpack.c.l.b16 %v10475
  %v10605 = vunpack.c.l.b16 %v10476
  %v10606 = vunpack.c.l.b16 %v10477
  %v10607 = vunpack.c.l.b16 %v10478
  %v10608 = vunpack.c.l.b16 %v10479
  %v10609 = vunpack.c.l.b16 %v10480
  %v10610 = vunpack.c.l.b16 %v10481
  %v10611 = vunpack.c.l.b16 %v10482
  %v10612 = vunpack.c.l.b16 %v10483
  %v10613 = vunpack.c.l.b16 %v10484
  %v10614 = vunpack.c.l.b16 %v10485
  %v10615 = vunpack.c.l.b16 %v10486
  %v10616 = vunpack.c.l.b16 %v10487
  %v10617 = vunpack.c.l.b16 %v10488
  %v10618 = vunpack.c.l.b16 %v10489
  %v10619 = vunpack.c.l.b16 %v10490
  %v10620 = vunpack.c.l.b16 %v10491
  %v10621 = vunpack.c.l.b16 %v10492
  %v10622 = vunpack.c.l.b16 %v10493
  %v10623 = vunpack.c.l.b16 %v10494
  %v10624 = vunpack.c.l.b16 %v10495
  %v10625 = vunpack.c.l.b16 %v10496
  %v10626 = vunpack.c.l.b16 %v10497
  %v10627 = vunpack.c.l.b16 %v10498
  %v10628 = vunpack.c.l.b16 %v10499
  %v10629 = vunpack.c.l.b16 %v10500
  %v10630 = vunpack.c.l.b16 %v10501
  %v10631 = vunpack.c.l.b16 %v10502
  %v10632 = vunpack.c.l.b16 %v10503
  %v10633 = vunpack.c.l.b16 %v10504
  %v10634 = vunpack.c.l.b16 %v10505
  %v10635 = vunpack.c.l.b16 %v10506
  %v10636 = vunpack.c.l.b16 %v10507
  %v10637 = vunpack.c.l.b16 %v10508
  %v10638 = vunpack.c.l.b16 %v10509
  %v10639 = vunpack.c.l.b16 %v10510
  %v10640 = vunpack.c.l.b16 %v10511
  %v10641 = vunpack.c.l.b16 %v10512
  %v10642 = vunpack.c.l.b16 %v10513
  %v10643 = vunpack.c.l.b16 %v10514
  %v10644 = vunpack.c.l.b16 %v10515
  %v10645 = vunpack.c.l.b16 %v10516
  %v10646 = vunpack.c.l.b16 %v10517
  %v10647 = vunpack.c.l.b16 %v10518
  %v10648 = vunpack.c.l.b16 %v10519
  %v10649 = vunpack.c.l.b16 %v10520
  %v10650 = vunpack.c.l.b16 %v10521
  %v10651 = vunpack.c.l.b16 %v10522
  %v10652 = vunpack.c.l.b16 %v10523
  %v10653 = vunpack.c.l.b16 %v10524
  %v10654 = vunpack.c.l.b16 %v10525
  %v10655 = vunpack.c.l.b16 %v10526
  %v10656 = vunpack.c.l.b16 %v10527
  %v10657 = vunpack.c.l.b16 %v10528
  %v10658 = vpack.c.b16 %v10595, %v10594
  %v10659 = vpack.c.b16 %v10597, %v10596
  %v10660 = vpack.c.b16 %v10599, %v10598
  %v10661 = vpack.c.b16 %v10601, %v10600
  %v10662 = vpack.c.b16 %v10603, %v10602
  %v10663 = vpack.c.b16 %v10605, %v10604
  %v10664 = vpack.c.b16 %v10607, %v10606
  %v10665 = vpack.c.b16 %v10609, %v10608
  %v10666 = vpack.c.b16 %v10611, %v10610
  %v10667 = vpack.c.b16 %v10613, %v10612
  %v10668 = vpack.c.b16 %v10615, %v10614
  %v10669 = vpack.c.b16 %v10617, %v10616
  %v10670 = vpack.c.b16 %v10619, %v10618
  %v10671 = vpack.c.b16 %v10621, %v10620
  %v10672 = vpack.c.b16 %v10623, %v10622
  %v10673 = vpack.c.b16 %v10625, %v10624
  %v10674 = vpack.c.b16 %v10627, %v10626
  %v10675 = vpack.c.b16 %v10629, %v10628
  %v10676 = vpack.c.b16 %v10631, %v10630
  %v10677 = vpack.c.b16 %v10633, %v10632
  %v10678 = vpack.c.b16 %v10635, %v10634
  %v10679 = vpack.c.b16 %v10637, %v10636
  %v10680 = vpack.c.b16 %v10639, %v10638
  %v10681 = vpack.c.b16 %v10641, %v10640
  %v10682 = vpack.c.b16 %v10643, %v10642
  %v10683 = vpack.c.b16 %v10645, %v10644
  %v10684 = vpack.c.b16 %v10647, %v10646
  %v10685 = vpack.c.b16 %v10649, %v10648
  %v10686 = vpack.c.b16 %v10651, %v10650
  %v10687 = vpack.c.b16 %v10653, %v10652
  %v10688 = vpack.c.b16 %v10655, %v10654
  %v10689 = vpack.c.b16 %v10657, %v10656
  %v10691 = vshrl.u32 %v10658, 16
  %v10693 = vshll.u32 %v10658, 16
  %v10695 = vrot.slane %v10693, 1
  %v10696 = vor.u32 %v10691, %v10695
  %v10698 = vshll.u32 %v10659, 16
  %v10700 = vrot.slane %v10698, 1
  %v10701 = vsel %vm354, %v10696, %v10700
  %v10702 = vshrl.u32 %v10659, 16
  %v10704 = vor.u32 %v10702, %v10700
  %v10706 = vshll.u32 %v10660, 16
  %v10708 = vrot.slane %v10706, 1
  %v10709 = vsel %vm354, %v10704, %v10708
  %v10710 = vshrl.u32 %v10660, 16
  %v10712 = vor.u32 %v10710, %v10708
  %v10714 = vshll.u32 %v10661, 16
  %v10716 = vrot.slane %v10714, 1
  %v10717 = vsel %vm354, %v10712, %v10716
  %v10718 = vshrl.u32 %v10661, 16
  %v10720 = vor.u32 %v10718, %v10716
  %v10722 = vshll.u32 %v10662, 16
  %v10724 = vrot.slane %v10722, 1
  %v10725 = vsel %vm354, %v10720, %v10724
  %v10726 = vshrl.u32 %v10662, 16
  %v10728 = vor.u32 %v10726, %v10724
  %v10730 = vshll.u32 %v10663, 16
  %v10732 = vrot.slane %v10730, 1
  %v10733 = vsel %vm354, %v10728, %v10732
  %v10734 = vshrl.u32 %v10663, 16
  %v10736 = vor.u32 %v10734, %v10732
  %v10738 = vshll.u32 %v10664, 16
  %v10740 = vrot.slane %v10738, 1
  %v10741 = vsel %vm354, %v10736, %v10740
  %v10742 = vshrl.u32 %v10664, 16
  %v10744 = vor.u32 %v10742, %v10740
  %v10746 = vshll.u32 %v10665, 16
  %v10748 = vrot.slane %v10746, 1
  %v10749 = vsel %vm354, %v10744, %v10748
  %v10750 = vshrl.u32 %v10665, 16
  %v10752 = vor.u32 %v10750, %v10748
  %v10754 = vshll.u32 %v10666, 16
  %v10756 = vrot.slane %v10754, 1
  %v10757 = vsel %vm354, %v10752, %v10756
  %v10758 = vshrl.u32 %v10666, 16
  %v10760 = vor.u32 %v10758, %v10756
  %v10762 = vshll.u32 %v10667, 16
  %v10764 = vrot.slane %v10762, 1
  %v10765 = vsel %vm354, %v10760, %v10764
  %v10766 = vshrl.u32 %v10667, 16
  %v10768 = vor.u32 %v10766, %v10764
  %v10770 = vshll.u32 %v10668, 16
  %v10772 = vrot.slane %v10770, 1
  %v10773 = vsel %vm354, %v10768, %v10772
  %v10774 = vshrl.u32 %v10668, 16
  %v10776 = vor.u32 %v10774, %v10772
  %v10778 = vshll.u32 %v10669, 16
  %v10780 = vrot.slane %v10778, 1
  %v10781 = vsel %vm354, %v10776, %v10780
  %v10782 = vshrl.u32 %v10669, 16
  %v10784 = vor.u32 %v10782, %v10780
  %v10786 = vshll.u32 %v10670, 16
  %v10788 = vrot.slane %v10786, 1
  %v10789 = vsel %vm354, %v10784, %v10788
  %v10790 = vshrl.u32 %v10670, 16
  %v10792 = vor.u32 %v10790, %v10788
  %v10794 = vshll.u32 %v10671, 16
  %v10796 = vrot.slane %v10794, 1
  %v10797 = vsel %vm354, %v10792, %v10796
  %v10798 = vshrl.u32 %v10671, 16
  %v10800 = vor.u32 %v10798, %v10796
  %v10802 = vshll.u32 %v10672, 16
  %v10804 = vrot.slane %v10802, 1
  %v10805 = vsel %vm354, %v10800, %v10804
  %v10806 = vshrl.u32 %v10672, 16
  %v10808 = vor.u32 %v10806, %v10804
  %v10810 = vshll.u32 %v10673, 16
  %v10812 = vrot.slane %v10810, 1
  %v10813 = vsel %vm354, %v10808, %v10812
  %v10814 = vshrl.u32 %v10673, 16
  %v10816 = vor.u32 %v10814, %v10812
  %v10818 = vshll.u32 %v10674, 16
  %v10820 = vrot.slane %v10818, 1
  %v10821 = vsel %vm354, %v10816, %v10820
  %v10822 = vshrl.u32 %v10674, 16
  %v10824 = vor.u32 %v10822, %v10820
  %v10826 = vshll.u32 %v10675, 16
  %v10828 = vrot.slane %v10826, 1
  %v10829 = vsel %vm354, %v10824, %v10828
  %v10830 = vshrl.u32 %v10675, 16
  %v10832 = vor.u32 %v10830, %v10828
  %v10834 = vshll.u32 %v10676, 16
  %v10836 = vrot.slane %v10834, 1
  %v10837 = vsel %vm354, %v10832, %v10836
  %v10838 = vshrl.u32 %v10676, 16
  %v10840 = vor.u32 %v10838, %v10836
  %v10842 = vshll.u32 %v10677, 16
  %v10844 = vrot.slane %v10842, 1
  %v10845 = vsel %vm354, %v10840, %v10844
  %v10846 = vshrl.u32 %v10677, 16
  %v10848 = vor.u32 %v10846, %v10844
  %v10850 = vshll.u32 %v10678, 16
  %v10852 = vrot.slane %v10850, 1
  %v10853 = vsel %vm354, %v10848, %v10852
  %v10854 = vshrl.u32 %v10678, 16
  %v10856 = vor.u32 %v10854, %v10852
  %v10858 = vshll.u32 %v10679, 16
  %v10860 = vrot.slane %v10858, 1
  %v10861 = vsel %vm354, %v10856, %v10860
  %v10862 = vshrl.u32 %v10679, 16
  %v10864 = vor.u32 %v10862, %v10860
  %v10866 = vshll.u32 %v10680, 16
  %v10868 = vrot.slane %v10866, 1
  %v10869 = vsel %vm354, %v10864, %v10868
  %v10870 = vshrl.u32 %v10680, 16
  %v10872 = vor.u32 %v10870, %v10868
  %v10874 = vshll.u32 %v10681, 16
  %v10876 = vrot.slane %v10874, 1
  %v10877 = vsel %vm354, %v10872, %v10876
  %v10878 = vshrl.u32 %v10681, 16
  %v10880 = vor.u32 %v10878, %v10876
  %v10882 = vshll.u32 %v10682, 16
  %v10884 = vrot.slane %v10882, 1
  %v10885 = vsel %vm354, %v10880, %v10884
  %v10886 = vshrl.u32 %v10682, 16
  %v10888 = vor.u32 %v10886, %v10884
  %v10890 = vshll.u32 %v10683, 16
  %v10892 = vrot.slane %v10890, 1
  %v10893 = vsel %vm354, %v10888, %v10892
  %v10894 = vshrl.u32 %v10683, 16
  %v10896 = vor.u32 %v10894, %v10892
  %v10898 = vshll.u32 %v10684, 16
  %v10900 = vrot.slane %v10898, 1
  %v10901 = vsel %vm354, %v10896, %v10900
  %v10902 = vshrl.u32 %v10684, 16
  %v10904 = vor.u32 %v10902, %v10900
  %v10906 = vshll.u32 %v10685, 16
  %v10908 = vrot.slane %v10906, 1
  %v10909 = vsel %vm354, %v10904, %v10908
  %v10910 = vshrl.u32 %v10685, 16
  %v10912 = vor.u32 %v10910, %v10908
  %v10914 = vshll.u32 %v10686, 16
  %v10916 = vrot.slane %v10914, 1
  %v10917 = vsel %vm354, %v10912, %v10916
  %v10918 = vshrl.u32 %v10686, 16
  %v10920 = vor.u32 %v10918, %v10916
  %v10922 = vshll.u32 %v10687, 16
  %v10924 = vrot.slane %v10922, 1
  %v10925 = vsel %vm354, %v10920, %v10924
  %v10926 = vshrl.u32 %v10687, 16
  %v10928 = vor.u32 %v10926, %v10924
  %v10930 = vshll.u32 %v10688, 16
  %v10932 = vrot.slane %v10930, 1
  %v10933 = vsel %vm354, %v10928, %v10932
  %v10934 = vshrl.u32 %v10688, 16
  %v10936 = vor.u32 %v10934, %v10932
  %v10938 = vshll.u32 %v10689, 16
  %v10940 = vrot.slane %v10938, 1
  %v10941 = vsel %vm354, %v10936, %v10940
  %v10942 = vshrl.u32 %v10689, 16
  %v10944 = vor.u32 %v10942, %v10940
  %v10946 = vsel %vm610, %v10701, 0
  %v10949 = vsel %vm610, %v10709, 0
  %v10952 = vsel %vm610, %v10717, 0
  %v10955 = vsel %vm610, %v10725, 0
  %v10958 = vsel %vm610, %v10733, 0
  %v10961 = vsel %vm610, %v10741, 0
  %v10964 = vsel %vm610, %v10749, 0
  %v10967 = vsel %vm610, %v10757, 0
  %v10970 = vsel %vm610, %v10765, 0
  %v10973 = vsel %vm610, %v10773, 0
  %v10976 = vsel %vm610, %v10781, 0
  %v10979 = vsel %vm610, %v10789, 0
  %v10982 = vsel %vm610, %v10797, 0
  %v10985 = vsel %vm610, %v10805, 0
  %v10988 = vsel %vm610, %v10813, 0
  %v10991 = vsel %vm610, %v10821, 0
  %v10994 = vsel %vm610, %v10829, 0
  %v10997 = vsel %vm610, %v10837, 0
  %v11000 = vsel %vm610, %v10845, 0
  %v11003 = vsel %vm610, %v10853, 0
  %v11006 = vsel %vm610, %v10861, 0
  %v11009 = vsel %vm610, %v10869, 0
  %v11012 = vsel %vm610, %v10877, 0
  %v11015 = vsel %vm610, %v10885, 0
  %v11018 = vsel %vm610, %v10893, 0
  %v11021 = vsel %vm610, %v10901, 0
  %v11024 = vsel %vm610, %v10909, 0
  %v11027 = vsel %vm610, %v10917, 0
  %v11030 = vsel %vm610, %v10925, 0
  %v11033 = vsel %vm610, %v10933, 0
  %v11036 = vsel %vm610, %v10941, 0
  %v11039 = vsel %vm610, %v10944, 0
  %v11042 = vsel %vm707, %v10529, 0
  %11044 = vmatpush.bf16.msra.mxu0 0
  %11045 = vmatpush.bf16.msra.mxu0 0
  %11046 = vmatpush.bf16.msra.mxu0 0
  %11047 = vmatpush.bf16.msra.mxu0 0
  %11048 = vmatpush.bf16.msra.mxu0 0
  %11049 = vmatpush.bf16.msra.mxu0 0
  %11050 = vmatpush.bf16.msra.mxu0 0
  %11051 = vmatpush.bf16.msra.mxu0 %v11042
  %11052 = vmatmul.bf16.gmra.mxu0 %v10946
  %v11053 = vpop.f32.mrf.mxu0
  %v11054 = vadd.f32 0.0, %v11053
  %v11055 = vpop.f32.mrf.mxu0
  %v11056 = vadd.f32 0.0, %v11055
  %11057 = vmatmul.bf16.gmra.mxu0 %v10949
  %v11058 = vpop.f32.mrf.mxu0
  %v11059 = vadd.f32 0.0, %v11058
  %v11060 = vpop.f32.mrf.mxu0
  %v11061 = vadd.f32 0.0, %v11060
  %11062 = vmatmul.bf16.gmra.mxu0 %v10952
  %v11063 = vpop.f32.mrf.mxu0
  %v11064 = vadd.f32 0.0, %v11063
  %v11065 = vpop.f32.mrf.mxu0
  %v11066 = vadd.f32 0.0, %v11065
  %11067 = vmatmul.bf16.gmra.mxu0 %v10955
  %v11068 = vpop.f32.mrf.mxu0
  %v11069 = vadd.f32 0.0, %v11068
  %v11070 = vpop.f32.mrf.mxu0
  %v11071 = vadd.f32 0.0, %v11070
  %11072 = vmatmul.bf16.gmra.mxu0 %v10958
  %v11073 = vpop.f32.mrf.mxu0
  %v11074 = vadd.f32 0.0, %v11073
  %v11075 = vpop.f32.mrf.mxu0
  %v11076 = vadd.f32 0.0, %v11075
  %11077 = vmatmul.bf16.gmra.mxu0 %v10961
  %v11078 = vpop.f32.mrf.mxu0
  %v11079 = vadd.f32 0.0, %v11078
  %v11080 = vpop.f32.mrf.mxu0
  %v11081 = vadd.f32 0.0, %v11080
  %11082 = vmatmul.bf16.gmra.mxu0 %v10964
  %v11083 = vpop.f32.mrf.mxu0
  %v11084 = vadd.f32 0.0, %v11083
  %v11085 = vpop.f32.mrf.mxu0
  %v11086 = vadd.f32 0.0, %v11085
  %11087 = vmatmul.bf16.gmra.mxu0 %v10967
  %v11088 = vpop.f32.mrf.mxu0
  %v11089 = vadd.f32 0.0, %v11088
  %v11090 = vpop.f32.mrf.mxu0
  %v11091 = vadd.f32 0.0, %v11090
  %11092 = vmatmul.bf16.gmra.mxu0 %v10970
  %v11093 = vpop.f32.mrf.mxu0
  %v11094 = vadd.f32 0.0, %v11093
  %v11095 = vpop.f32.mrf.mxu0
  %v11096 = vadd.f32 0.0, %v11095
  %11097 = vmatmul.bf16.gmra.mxu0 %v10973
  %v11098 = vpop.f32.mrf.mxu0
  %v11099 = vadd.f32 0.0, %v11098
  %v11100 = vpop.f32.mrf.mxu0
  %v11101 = vadd.f32 0.0, %v11100
  %11102 = vmatmul.bf16.gmra.mxu0 %v10976
  %v11103 = vpop.f32.mrf.mxu0
  %v11104 = vadd.f32 0.0, %v11103
  %v11105 = vpop.f32.mrf.mxu0
  %v11106 = vadd.f32 0.0, %v11105
  %11107 = vmatmul.bf16.gmra.mxu0 %v10979
  %v11108 = vpop.f32.mrf.mxu0
  %v11109 = vadd.f32 0.0, %v11108
  %v11110 = vpop.f32.mrf.mxu0
  %v11111 = vadd.f32 0.0, %v11110
  %11112 = vmatmul.bf16.gmra.mxu0 %v10982
  %v11113 = vpop.f32.mrf.mxu0
  %v11114 = vadd.f32 0.0, %v11113
  %v11115 = vpop.f32.mrf.mxu0
  %v11116 = vadd.f32 0.0, %v11115
  %11117 = vmatmul.bf16.gmra.mxu0 %v10985
  %v11118 = vpop.f32.mrf.mxu0
  %v11119 = vadd.f32 0.0, %v11118
  %v11120 = vpop.f32.mrf.mxu0
  %v11121 = vadd.f32 0.0, %v11120
  %11122 = vmatmul.bf16.gmra.mxu0 %v10988
  %v11123 = vpop.f32.mrf.mxu0
  %v11124 = vadd.f32 0.0, %v11123
  %v11125 = vpop.f32.mrf.mxu0
  %v11126 = vadd.f32 0.0, %v11125
  %11127 = vmatmul.bf16.gmra.mxu0 %v10991
  %v11128 = vpop.f32.mrf.mxu0
  %v11129 = vadd.f32 0.0, %v11128
  %v11130 = vpop.f32.mrf.mxu0
  %v11131 = vadd.f32 0.0, %v11130
  %11132 = vmatmul.bf16.gmra.mxu0 %v10994
  %v11133 = vpop.f32.mrf.mxu0
  %v11134 = vadd.f32 0.0, %v11133
  %v11135 = vpop.f32.mrf.mxu0
  %v11136 = vadd.f32 0.0, %v11135
  %11137 = vmatmul.bf16.gmra.mxu0 %v10997
  %v11138 = vpop.f32.mrf.mxu0
  %v11139 = vadd.f32 0.0, %v11138
  %v11140 = vpop.f32.mrf.mxu0
  %v11141 = vadd.f32 0.0, %v11140
  %11142 = vmatmul.bf16.gmra.mxu0 %v11000
  %v11143 = vpop.f32.mrf.mxu0
  %v11144 = vadd.f32 0.0, %v11143
  %v11145 = vpop.f32.mrf.mxu0
  %v11146 = vadd.f32 0.0, %v11145
  %11147 = vmatmul.bf16.gmra.mxu0 %v11003
  %v11148 = vpop.f32.mrf.mxu0
  %v11149 = vadd.f32 0.0, %v11148
  %v11150 = vpop.f32.mrf.mxu0
  %v11151 = vadd.f32 0.0, %v11150
  %11152 = vmatmul.bf16.gmra.mxu0 %v11006
  %v11153 = vpop.f32.mrf.mxu0
  %v11154 = vadd.f32 0.0, %v11153
  %v11155 = vpop.f32.mrf.mxu0
  %v11156 = vadd.f32 0.0, %v11155
  %11157 = vmatmul.bf16.gmra.mxu0 %v11009
  %v11158 = vpop.f32.mrf.mxu0
  %v11159 = vadd.f32 0.0, %v11158
  %v11160 = vpop.f32.mrf.mxu0
  %v11161 = vadd.f32 0.0, %v11160
  %11162 = vmatmul.bf16.gmra.mxu0 %v11012
  %v11163 = vpop.f32.mrf.mxu0
  %v11164 = vadd.f32 0.0, %v11163
  %v11165 = vpop.f32.mrf.mxu0
  %v11166 = vadd.f32 0.0, %v11165
  %11167 = vmatmul.bf16.gmra.mxu0 %v11015
  %v11168 = vpop.f32.mrf.mxu0
  %v11169 = vadd.f32 0.0, %v11168
  %v11170 = vpop.f32.mrf.mxu0
  %v11171 = vadd.f32 0.0, %v11170
  %11172 = vmatmul.bf16.gmra.mxu0 %v11018
  %v11173 = vpop.f32.mrf.mxu0
  %v11174 = vadd.f32 0.0, %v11173
  %v11175 = vpop.f32.mrf.mxu0
  %v11176 = vadd.f32 0.0, %v11175
  %11177 = vmatmul.bf16.gmra.mxu0 %v11021
  %v11178 = vpop.f32.mrf.mxu0
  %v11179 = vadd.f32 0.0, %v11178
  %v11180 = vpop.f32.mrf.mxu0
  %v11181 = vadd.f32 0.0, %v11180
  %11182 = vmatmul.bf16.gmra.mxu0 %v11024
  %v11183 = vpop.f32.mrf.mxu0
  %v11184 = vadd.f32 0.0, %v11183
  %v11185 = vpop.f32.mrf.mxu0
  %v11186 = vadd.f32 0.0, %v11185
  %11187 = vmatmul.bf16.gmra.mxu0 %v11027
  %v11188 = vpop.f32.mrf.mxu0
  %v11189 = vadd.f32 0.0, %v11188
  %v11190 = vpop.f32.mrf.mxu0
  %v11191 = vadd.f32 0.0, %v11190
  %11192 = vmatmul.bf16.gmra.mxu0 %v11030
  %v11193 = vpop.f32.mrf.mxu0
  %v11194 = vadd.f32 0.0, %v11193
  %v11195 = vpop.f32.mrf.mxu0
  %v11196 = vadd.f32 0.0, %v11195
  %11197 = vmatmul.bf16.gmra.mxu0 %v11033
  %v11198 = vpop.f32.mrf.mxu0
  %v11199 = vadd.f32 0.0, %v11198
  %v11200 = vpop.f32.mrf.mxu0
  %v11201 = vadd.f32 0.0, %v11200
  %11202 = vmatmul.bf16.gmra.mxu0 %v11036
  %v11203 = vpop.f32.mrf.mxu0
  %v11204 = vadd.f32 0.0, %v11203
  %v11205 = vpop.f32.mrf.mxu0
  %v11206 = vadd.f32 0.0, %v11205
  %11207 = vmatmul.bf16.gmra.mxu0 %v11039
  %v11208 = vpop.f32.mrf.mxu0
  %v11209 = vadd.f32 0.0, %v11208
  %v11210 = vpop.f32.mrf.mxu0
  %11211 = vdwg.mxu0
  %v11212 = vadd.f32 %v10402, %v11054
  %v11213 = vadd.f32 %v10403, %v11056
  %v11214 = vadd.f32 %v10404, %v11059
  %v11215 = vadd.f32 %v10405, %v11061
  %v11216 = vadd.f32 %v10406, %v11064
  %v11217 = vadd.f32 %v10407, %v11066
  %v11218 = vadd.f32 %v10408, %v11069
  %v11219 = vadd.f32 %v10409, %v11071
  %v11220 = vadd.f32 %v10410, %v11074
  %v11221 = vadd.f32 %v10411, %v11076
  %v11222 = vadd.f32 %v10412, %v11079
  %v11223 = vadd.f32 %v10413, %v11081
  %v11224 = vadd.f32 %v10414, %v11084
  %v11225 = vadd.f32 %v10415, %v11086
  %v11226 = vadd.f32 %v10416, %v11089
  %v11227 = vadd.f32 %v10417, %v11091
  %v11228 = vadd.f32 %v10418, %v11094
  %v11229 = vadd.f32 %v10419, %v11096
  %v11230 = vadd.f32 %v10420, %v11099
  %v11231 = vadd.f32 %v10421, %v11101
  %v11232 = vadd.f32 %v10422, %v11104
  %v11233 = vadd.f32 %v10423, %v11106
  %v11234 = vadd.f32 %v10424, %v11109
  %v11235 = vadd.f32 %v10425, %v11111
  %v11236 = vadd.f32 %v10426, %v11114
  %v11237 = vadd.f32 %v10427, %v11116
  %v11238 = vadd.f32 %v10428, %v11119
  %v11239 = vadd.f32 %v10429, %v11121
  %v11240 = vadd.f32 %v10430, %v11124
  %v11241 = vadd.f32 %v10431, %v11126
  %v11242 = vadd.f32 %v10432, %v11129
  %v11243 = vadd.f32 %v10433, %v11131
  %v11244 = vadd.f32 %v10434, %v11134
  %v11245 = vadd.f32 %v10435, %v11136
  %v11246 = vadd.f32 %v10436, %v11139
  %v11247 = vadd.f32 %v10437, %v11141
  %v11248 = vadd.f32 %v10438, %v11144
  %v11249 = vadd.f32 %v10439, %v11146
  %v11250 = vadd.f32 %v10440, %v11149
  %v11251 = vadd.f32 %v10441, %v11151
  %v11252 = vadd.f32 %v10442, %v11154
  %v11253 = vadd.f32 %v10443, %v11156
  %v11254 = vadd.f32 %v10444, %v11159
  %v11255 = vadd.f32 %v10445, %v11161
  %v11256 = vadd.f32 %v10446, %v11164
  %v11257 = vadd.f32 %v10447, %v11166
  %v11258 = vadd.f32 %v10448, %v11169
  %v11259 = vadd.f32 %v10449, %v11171
  %v11260 = vadd.f32 %v10450, %v11174
  %v11261 = vadd.f32 %v10451, %v11176
  %v11262 = vadd.f32 %v10452, %v11179
  %v11263 = vadd.f32 %v10453, %v11181
  %v11264 = vadd.f32 %v10454, %v11184
  %v11265 = vadd.f32 %v10455, %v11186
  %v11266 = vadd.f32 %v10456, %v11189
  %v11267 = vadd.f32 %v10457, %v11191
  %v11268 = vadd.f32 %v10458, %v11194
  %v11269 = vadd.f32 %v10459, %v11196
  %v11270 = vadd.f32 %v10460, %v11199
  %v11271 = vadd.f32 %v10461, %v11201
  %v11272 = vadd.f32 %v10462, %v11204
  %v11273 = vadd.f32 %v10463, %v11206
  %v11274 = vadd.f32 %v10464, %v11209
  %v11275 = vld [vmem:[#allocation2 + $0x48] sm:$0xe]
  %v11276 = vld [vmem:[%s1 + $0x50] sm:$0xf]
  %v11278 = vunpack.c.l.b16 %v11275
  %v11279 = vpack.c.b16 %v10595, %v11278
  %v11280 = vrot.slane %v11279, 1
  %v11281 = vrot.slane %v10659, 1
  %v11282 = vsel %vm1121, %v11280, %v11281
  %v11283 = vrot.slane %v10660, 1
  %v11284 = vsel %vm1121, %v11281, %v11283
  %v11285 = vrot.slane %v10661, 1
  %v11286 = vsel %vm1121, %v11283, %v11285
  %v11287 = vrot.slane %v10662, 1
  %v11288 = vsel %vm1121, %v11285, %v11287
  %v11289 = vrot.slane %v10663, 1
  %v11290 = vsel %vm1121, %v11287, %v11289
  %v11291 = vrot.slane %v10664, 1
  %v11292 = vsel %vm1121, %v11289, %v11291
  %v11293 = vrot.slane %v10665, 1
  %v11294 = vsel %vm1121, %v11291, %v11293
  %v11295 = vrot.slane %v10666, 1
  %v11296 = vsel %vm1121, %v11293, %v11295
  %v11297 = vrot.slane %v10667, 1
  %v11298 = vsel %vm1121, %v11295, %v11297
  %v11299 = vrot.slane %v10668, 1
  %v11300 = vsel %vm1121, %v11297, %v11299
  %v11301 = vrot.slane %v10669, 1
  %v11302 = vsel %vm1121, %v11299, %v11301
  %v11303 = vrot.slane %v10670, 1
  %v11304 = vsel %vm1121, %v11301, %v11303
  %v11305 = vrot.slane %v10671, 1
  %v11306 = vsel %vm1121, %v11303, %v11305
  %v11307 = vrot.slane %v10672, 1
  %v11308 = vsel %vm1121, %v11305, %v11307
  %v11309 = vrot.slane %v10673, 1
  %v11310 = vsel %vm1121, %v11307, %v11309
  %v11311 = vrot.slane %v10674, 1
  %v11312 = vsel %vm1121, %v11309, %v11311
  %v11313 = vrot.slane %v10675, 1
  %v11314 = vsel %vm1121, %v11311, %v11313
  %v11315 = vrot.slane %v10676, 1
  %v11316 = vsel %vm1121, %v11313, %v11315
  %v11317 = vrot.slane %v10677, 1
  %v11318 = vsel %vm1121, %v11315, %v11317
  %v11319 = vrot.slane %v10678, 1
  %v11320 = vsel %vm1121, %v11317, %v11319
  %v11321 = vrot.slane %v10679, 1
  %v11322 = vsel %vm1121, %v11319, %v11321
  %v11323 = vrot.slane %v10680, 1
  %v11324 = vsel %vm1121, %v11321, %v11323
  %v11325 = vrot.slane %v10681, 1
  %v11326 = vsel %vm1121, %v11323, %v11325
  %v11327 = vrot.slane %v10682, 1
  %v11328 = vsel %vm1121, %v11325, %v11327
  %v11329 = vrot.slane %v10683, 1
  %v11330 = vsel %vm1121, %v11327, %v11329
  %v11331 = vrot.slane %v10684, 1
  %v11332 = vsel %vm1121, %v11329, %v11331
  %v11333 = vrot.slane %v10685, 1
  %v11334 = vsel %vm1121, %v11331, %v11333
  %v11335 = vrot.slane %v10686, 1
  %v11336 = vsel %vm1121, %v11333, %v11335
  %v11337 = vrot.slane %v10687, 1
  %v11338 = vsel %vm1121, %v11335, %v11337
  %v11339 = vrot.slane %v10688, 1
  %v11340 = vsel %vm1121, %v11337, %v11339
  %v11341 = vrot.slane %v10689, 1
  %v11342 = vsel %vm1121, %v11339, %v11341
  %v11344 = vsel %vm610, %v11282, 0
  %v11347 = vsel %vm610, %v11284, 0
  %v11350 = vsel %vm610, %v11286, 0
  %v11353 = vsel %vm610, %v11288, 0
  %v11356 = vsel %vm610, %v11290, 0
  %v11359 = vsel %vm610, %v11292, 0
  %v11362 = vsel %vm610, %v11294, 0
  %v11365 = vsel %vm610, %v11296, 0
  %v11368 = vsel %vm610, %v11298, 0
  %v11371 = vsel %vm610, %v11300, 0
  %v11374 = vsel %vm610, %v11302, 0
  %v11377 = vsel %vm610, %v11304, 0
  %v11380 = vsel %vm610, %v11306, 0
  %v11383 = vsel %vm610, %v11308, 0
  %v11386 = vsel %vm610, %v11310, 0
  %v11389 = vsel %vm610, %v11312, 0
  %v11392 = vsel %vm610, %v11314, 0
  %v11395 = vsel %vm610, %v11316, 0
  %v11398 = vsel %vm610, %v11318, 0
  %v11401 = vsel %vm610, %v11320, 0
  %v11404 = vsel %vm610, %v11322, 0
  %v11407 = vsel %vm610, %v11324, 0
  %v11410 = vsel %vm610, %v11326, 0
  %v11413 = vsel %vm610, %v11328, 0
  %v11416 = vsel %vm610, %v11330, 0
  %v11419 = vsel %vm610, %v11332, 0
  %v11422 = vsel %vm610, %v11334, 0
  %v11425 = vsel %vm610, %v11336, 0
  %v11428 = vsel %vm610, %v11338, 0
  %v11431 = vsel %vm610, %v11340, 0
  %v11434 = vsel %vm610, %v11342, 0
  %v11437 = vsel %vm610, %v11341, 0
  %v11440 = vsel %vm707, %v11276, 0
  %11442 = vmatpush.bf16.msra.mxu0 0
  %11443 = vmatpush.bf16.msra.mxu0 0
  %11444 = vmatpush.bf16.msra.mxu0 0
  %11445 = vmatpush.bf16.msra.mxu0 0
  %11446 = vmatpush.bf16.msra.mxu0 0
  %11447 = vmatpush.bf16.msra.mxu0 0
  %11448 = vmatpush.bf16.msra.mxu0 0
  %11449 = vmatpush.bf16.msra.mxu0 %v11440
  %11450 = vmatmul.bf16.gmra.mxu0 %v11344
  %v11451 = vpop.f32.mrf.mxu0
  %v11452 = vadd.f32 0.0, %v11451
  %v11453 = vpop.f32.mrf.mxu0
  %v11454 = vadd.f32 0.0, %v11453
  %11455 = vmatmul.bf16.gmra.mxu0 %v11347
  %v11456 = vpop.f32.mrf.mxu0
  %v11457 = vadd.f32 0.0, %v11456
  %v11458 = vpop.f32.mrf.mxu0
  %v11459 = vadd.f32 0.0, %v11458
  %11460 = vmatmul.bf16.gmra.mxu0 %v11350
  %v11461 = vpop.f32.mrf.mxu0
  %v11462 = vadd.f32 0.0, %v11461
  %v11463 = vpop.f32.mrf.mxu0
  %v11464 = vadd.f32 0.0, %v11463
  %11465 = vmatmul.bf16.gmra.mxu0 %v11353
  %v11466 = vpop.f32.mrf.mxu0
  %v11467 = vadd.f32 0.0, %v11466
  %v11468 = vpop.f32.mrf.mxu0
  %v11469 = vadd.f32 0.0, %v11468
  %11470 = vmatmul.bf16.gmra.mxu0 %v11356
  %v11471 = vpop.f32.mrf.mxu0
  %v11472 = vadd.f32 0.0, %v11471
  %v11473 = vpop.f32.mrf.mxu0
  %v11474 = vadd.f32 0.0, %v11473
  %11475 = vmatmul.bf16.gmra.mxu0 %v11359
  %v11476 = vpop.f32.mrf.mxu0
  %v11477 = vadd.f32 0.0, %v11476
  %v11478 = vpop.f32.mrf.mxu0
  %v11479 = vadd.f32 0.0, %v11478
  %11480 = vmatmul.bf16.gmra.mxu0 %v11362
  %v11481 = vpop.f32.mrf.mxu0
  %v11482 = vadd.f32 0.0, %v11481
  %v11483 = vpop.f32.mrf.mxu0
  %v11484 = vadd.f32 0.0, %v11483
  %11485 = vmatmul.bf16.gmra.mxu0 %v11365
  %v11486 = vpop.f32.mrf.mxu0
  %v11487 = vadd.f32 0.0, %v11486
  %v11488 = vpop.f32.mrf.mxu0
  %v11489 = vadd.f32 0.0, %v11488
  %11490 = vmatmul.bf16.gmra.mxu0 %v11368
  %v11491 = vpop.f32.mrf.mxu0
  %v11492 = vadd.f32 0.0, %v11491
  %v11493 = vpop.f32.mrf.mxu0
  %v11494 = vadd.f32 0.0, %v11493
  %11495 = vmatmul.bf16.gmra.mxu0 %v11371
  %v11496 = vpop.f32.mrf.mxu0
  %v11497 = vadd.f32 0.0, %v11496
  %v11498 = vpop.f32.mrf.mxu0
  %v11499 = vadd.f32 0.0, %v11498
  %11500 = vmatmul.bf16.gmra.mxu0 %v11374
  %v11501 = vpop.f32.mrf.mxu0
  %v11502 = vadd.f32 0.0, %v11501
  %v11503 = vpop.f32.mrf.mxu0
  %v11504 = vadd.f32 0.0, %v11503
  %11505 = vmatmul.bf16.gmra.mxu0 %v11377
  %v11506 = vpop.f32.mrf.mxu0
  %v11507 = vadd.f32 0.0, %v11506
  %v11508 = vpop.f32.mrf.mxu0
  %v11509 = vadd.f32 0.0, %v11508
  %11510 = vmatmul.bf16.gmra.mxu0 %v11380
  %v11511 = vpop.f32.mrf.mxu0
  %v11512 = vadd.f32 0.0, %v11511
  %v11513 = vpop.f32.mrf.mxu0
  %v11514 = vadd.f32 0.0, %v11513
  %11515 = vmatmul.bf16.gmra.mxu0 %v11383
  %v11516 = vpop.f32.mrf.mxu0
  %v11517 = vadd.f32 0.0, %v11516
  %v11518 = vpop.f32.mrf.mxu0
  %v11519 = vadd.f32 0.0, %v11518
  %11520 = vmatmul.bf16.gmra.mxu0 %v11386
  %v11521 = vpop.f32.mrf.mxu0
  %v11522 = vadd.f32 0.0, %v11521
  %v11523 = vpop.f32.mrf.mxu0
  %v11524 = vadd.f32 0.0, %v11523
  %11525 = vmatmul.bf16.gmra.mxu0 %v11389
  %v11526 = vpop.f32.mrf.mxu0
  %v11527 = vadd.f32 0.0, %v11526
  %v11528 = vpop.f32.mrf.mxu0
  %v11529 = vadd.f32 0.0, %v11528
  %11530 = vmatmul.bf16.gmra.mxu0 %v11392
  %v11531 = vpop.f32.mrf.mxu0
  %v11532 = vadd.f32 0.0, %v11531
  %v11533 = vpop.f32.mrf.mxu0
  %v11534 = vadd.f32 0.0, %v11533
  %11535 = vmatmul.bf16.gmra.mxu0 %v11395
  %v11536 = vpop.f32.mrf.mxu0
  %v11537 = vadd.f32 0.0, %v11536
  %v11538 = vpop.f32.mrf.mxu0
  %v11539 = vadd.f32 0.0, %v11538
  %11540 = vmatmul.bf16.gmra.mxu0 %v11398
  %v11541 = vpop.f32.mrf.mxu0
  %v11542 = vadd.f32 0.0, %v11541
  %v11543 = vpop.f32.mrf.mxu0
  %v11544 = vadd.f32 0.0, %v11543
  %11545 = vmatmul.bf16.gmra.mxu0 %v11401
  %v11546 = vpop.f32.mrf.mxu0
  %v11547 = vadd.f32 0.0, %v11546
  %v11548 = vpop.f32.mrf.mxu0
  %v11549 = vadd.f32 0.0, %v11548
  %11550 = vmatmul.bf16.gmra.mxu0 %v11404
  %v11551 = vpop.f32.mrf.mxu0
  %v11552 = vadd.f32 0.0, %v11551
  %v11553 = vpop.f32.mrf.mxu0
  %v11554 = vadd.f32 0.0, %v11553
  %11555 = vmatmul.bf16.gmra.mxu0 %v11407
  %v11556 = vpop.f32.mrf.mxu0
  %v11557 = vadd.f32 0.0, %v11556
  %v11558 = vpop.f32.mrf.mxu0
  %v11559 = vadd.f32 0.0, %v11558
  %11560 = vmatmul.bf16.gmra.mxu0 %v11410
  %v11561 = vpop.f32.mrf.mxu0
  %v11562 = vadd.f32 0.0, %v11561
  %v11563 = vpop.f32.mrf.mxu0
  %v11564 = vadd.f32 0.0, %v11563
  %11565 = vmatmul.bf16.gmra.mxu0 %v11413
  %v11566 = vpop.f32.mrf.mxu0
  %v11567 = vadd.f32 0.0, %v11566
  %v11568 = vpop.f32.mrf.mxu0
  %v11569 = vadd.f32 0.0, %v11568
  %11570 = vmatmul.bf16.gmra.mxu0 %v11416
  %v11571 = vpop.f32.mrf.mxu0
  %v11572 = vadd.f32 0.0, %v11571
  %v11573 = vpop.f32.mrf.mxu0
  %v11574 = vadd.f32 0.0, %v11573
  %11575 = vmatmul.bf16.gmra.mxu0 %v11419
  %v11576 = vpop.f32.mrf.mxu0
  %v11577 = vadd.f32 0.0, %v11576
  %v11578 = vpop.f32.mrf.mxu0
  %v11579 = vadd.f32 0.0, %v11578
  %11580 = vmatmul.bf16.gmra.mxu0 %v11422
  %v11581 = vpop.f32.mrf.mxu0
  %v11582 = vadd.f32 0.0, %v11581
  %v11583 = vpop.f32.mrf.mxu0
  %v11584 = vadd.f32 0.0, %v11583
  %11585 = vmatmul.bf16.gmra.mxu0 %v11425
  %v11586 = vpop.f32.mrf.mxu0
  %v11587 = vadd.f32 0.0, %v11586
  %v11588 = vpop.f32.mrf.mxu0
  %v11589 = vadd.f32 0.0, %v11588
  %11590 = vmatmul.bf16.gmra.mxu0 %v11428
  %v11591 = vpop.f32.mrf.mxu0
  %v11592 = vadd.f32 0.0, %v11591
  %v11593 = vpop.f32.mrf.mxu0
  %v11594 = vadd.f32 0.0, %v11593
  %11595 = vmatmul.bf16.gmra.mxu0 %v11431
  %v11596 = vpop.f32.mrf.mxu0
  %v11597 = vadd.f32 0.0, %v11596
  %v11598 = vpop.f32.mrf.mxu0
  %v11599 = vadd.f32 0.0, %v11598
  %11600 = vmatmul.bf16.gmra.mxu0 %v11434
  %v11601 = vpop.f32.mrf.mxu0
  %v11602 = vadd.f32 0.0, %v11601
  %v11603 = vpop.f32.mrf.mxu0
  %v11604 = vadd.f32 0.0, %v11603
  %11605 = vmatmul.bf16.gmra.mxu0 %v11437
  %v11606 = vpop.f32.mrf.mxu0
  %v11607 = vadd.f32 0.0, %v11606
  %v11608 = vpop.f32.mrf.mxu0
  %11609 = vdwg.mxu0
  %v11610 = vadd.f32 %v11212, %v11452
  %v11611 = vadd.f32 %v11213, %v11454
  %v11612 = vadd.f32 %v11214, %v11457
  %v11613 = vadd.f32 %v11215, %v11459
  %v11614 = vadd.f32 %v11216, %v11462
  %v11615 = vadd.f32 %v11217, %v11464
  %v11616 = vadd.f32 %v11218, %v11467
  %v11617 = vadd.f32 %v11219, %v11469
  %v11618 = vadd.f32 %v11220, %v11472
  %v11619 = vadd.f32 %v11221, %v11474
  %v11620 = vadd.f32 %v11222, %v11477
  %v11621 = vadd.f32 %v11223, %v11479
  %v11622 = vadd.f32 %v11224, %v11482
  %v11623 = vadd.f32 %v11225, %v11484
  %v11624 = vadd.f32 %v11226, %v11487
  %v11625 = vadd.f32 %v11227, %v11489
  %v11626 = vadd.f32 %v11228, %v11492
  %v11627 = vadd.f32 %v11229, %v11494
  %v11628 = vadd.f32 %v11230, %v11497
  %v11629 = vadd.f32 %v11231, %v11499
  %v11630 = vadd.f32 %v11232, %v11502
  %v11631 = vadd.f32 %v11233, %v11504
  %v11632 = vadd.f32 %v11234, %v11507
  %v11633 = vadd.f32 %v11235, %v11509
  %v11634 = vadd.f32 %v11236, %v11512
  %v11635 = vadd.f32 %v11237, %v11514
  %v11636 = vadd.f32 %v11238, %v11517
  %v11637 = vadd.f32 %v11239, %v11519
  %v11638 = vadd.f32 %v11240, %v11522
  %v11639 = vadd.f32 %v11241, %v11524
  %v11640 = vadd.f32 %v11242, %v11527
  %v11641 = vadd.f32 %v11243, %v11529
  %v11642 = vadd.f32 %v11244, %v11532
  %v11643 = vadd.f32 %v11245, %v11534
  %v11644 = vadd.f32 %v11246, %v11537
  %v11645 = vadd.f32 %v11247, %v11539
  %v11646 = vadd.f32 %v11248, %v11542
  %v11647 = vadd.f32 %v11249, %v11544
  %v11648 = vadd.f32 %v11250, %v11547
  %v11649 = vadd.f32 %v11251, %v11549
  %v11650 = vadd.f32 %v11252, %v11552
  %v11651 = vadd.f32 %v11253, %v11554
  %v11652 = vadd.f32 %v11254, %v11557
  %v11653 = vadd.f32 %v11255, %v11559
  %v11654 = vadd.f32 %v11256, %v11562
  %v11655 = vadd.f32 %v11257, %v11564
  %v11656 = vadd.f32 %v11258, %v11567
  %v11657 = vadd.f32 %v11259, %v11569
  %v11658 = vadd.f32 %v11260, %v11572
  %v11659 = vadd.f32 %v11261, %v11574
  %v11660 = vadd.f32 %v11262, %v11577
  %v11661 = vadd.f32 %v11263, %v11579
  %v11662 = vadd.f32 %v11264, %v11582
  %v11663 = vadd.f32 %v11265, %v11584
  %v11664 = vadd.f32 %v11266, %v11587
  %v11665 = vadd.f32 %v11267, %v11589
  %v11666 = vadd.f32 %v11268, %v11592
  %v11667 = vadd.f32 %v11269, %v11594
  %v11668 = vadd.f32 %v11270, %v11597
  %v11669 = vadd.f32 %v11271, %v11599
  %v11670 = vadd.f32 %v11272, %v11602
  %v11671 = vadd.f32 %v11273, %v11604
  %v11672 = vadd.f32 %v11274, %v11607
  %v11673 = vld [vmem:[#allocation2 + $0x4c] sm:$0xf]
  %v11674 = vld [vmem:[#allocation2 + $0x50] sm:$0xf]
  %v11675 = vld [vmem:[#allocation2 + $0x54] sm:$0xf]
  %v11676 = vld [vmem:[#allocation2 + $0x58] sm:$0xf]
  %v11677 = vld [vmem:[#allocation2 + $0x5c] sm:$0xf]
  %v11678 = vld [vmem:[#allocation2 + $0x60] sm:$0xf]
  %v11679 = vld [vmem:[#allocation2 + $0x64] sm:$0xf]
  %v11680 = vld [vmem:[#allocation2 + $0x68] sm:$0xf]
  %v11681 = vld [vmem:[#allocation2 + $0x6c] sm:$0xf]
  %v11682 = vld [vmem:[#allocation2 + $0x70] sm:$0xf]
  %v11683 = vld [vmem:[#allocation2 + $0x74] sm:$0xf]
  %v11684 = vld [vmem:[#allocation2 + $0x78] sm:$0xf]
  %v11685 = vld [vmem:[#allocation2 + $0x7c] sm:$0xf]
  %v11686 = vld [vmem:[#allocation2 + $0x80] sm:$0xf]
  %v11687 = vld [vmem:[#allocation2 + $0x84] sm:$0xf]
  %v11688 = vld [vmem:[#allocation2 + $0x88] sm:$0xf]
  %v11689 = vld [vmem:[#allocation2 + $0x8c] sm:$0xf]
  %v11690 = vld [vmem:[#allocation2 + $0x90] sm:$0xf]
  %v11691 = vld [vmem:[#allocation2 + $0x94] sm:$0xf]
  %v11692 = vld [vmem:[#allocation2 + $0x98] sm:$0xf]
  %v11693 = vld [vmem:[#allocation2 + $0x9c] sm:$0xf]
  %v11694 = vld [vmem:[#allocation2 + $0xa0] sm:$0xf]
  %v11695 = vld [vmem:[#allocation2 + $0xa4] sm:$0xf]
  %v11696 = vld [vmem:[#allocation2 + $0xa8] sm:$0xf]
  %v11697 = vld [vmem:[#allocation2 + $0xac] sm:$0xf]
  %v11698 = vld [vmem:[#allocation2 + $0xb0] sm:$0xf]
  %v11699 = vld [vmem:[#allocation2 + $0xb4] sm:$0xf]
  %v11700 = vld [vmem:[#allocation2 + $0xb8] sm:$0xf]
  %v11701 = vld [vmem:[#allocation2 + $0xbc] sm:$0xf]
  %v11702 = vld [vmem:[#allocation2 + $0xc0] sm:$0xf]
  %v11703 = vld [vmem:[#allocation2 + $0xc4] sm:$0xf]
  %v11704 = vld [vmem:[#allocation2 + $0xc8] sm:$0xf]
  %v11705 = vld [vmem:[#allocation2 + $0xcc] sm:$0xf]
  %v11706 = vld [vmem:[#allocation2 + $0xd0] sm:$0xf]
  %v11707 = vld [vmem:[#allocation2 + $0xd4] sm:$0xf]
  %v11708 = vld [vmem:[#allocation2 + $0xd8] sm:$0xf]
  %v11709 = vld [vmem:[#allocation2 + $0xdc] sm:$0xf]
  %v11710 = vld [vmem:[#allocation2 + $0xe0] sm:$0xf]
  %v11711 = vld [vmem:[#allocation2 + $0xe4] sm:$0xf]
  %v11712 = vld [vmem:[#allocation2 + $0xe8] sm:$0xf]
  %v11713 = vld [vmem:[#allocation2 + $0xec] sm:$0xf]
  %v11714 = vld [vmem:[#allocation2 + $0xf0] sm:$0xf]
  %v11715 = vld [vmem:[#allocation2 + $0xf4] sm:$0xf]
  %v11716 = vld [vmem:[#allocation2 + $0xf8] sm:$0xf]
  %v11717 = vld [vmem:[#allocation2 + $0xfc] sm:$0xf]
  %v11718 = vld [vmem:[#allocation2 + $0x100] sm:$0xf]
  %v11719 = vld [vmem:[#allocation2 + $0x104] sm:$0xf]
  %v11720 = vld [vmem:[#allocation2 + $0x108] sm:$0xf]
  %v11721 = vld [vmem:[#allocation2 + $0x10c] sm:$0xf]
  %v11722 = vld [vmem:[#allocation2 + $0x110] sm:$0xf]
  %v11723 = vld [vmem:[#allocation2 + $0x114] sm:$0xf]
  %v11724 = vld [vmem:[#allocation2 + $0x118] sm:$0xf]
  %v11725 = vld [vmem:[#allocation2 + $0x11c] sm:$0xf]
  %v11726 = vld [vmem:[#allocation2 + $0x120] sm:$0xf]
  %v11727 = vld [vmem:[#allocation2 + $0x124] sm:$0xf]
  %v11728 = vld [vmem:[#allocation2 + $0x128] sm:$0xf]
  %v11729 = vld [vmem:[#allocation2 + $0x12c] sm:$0xf]
  %v11730 = vld [vmem:[#allocation2 + $0x130] sm:$0xf]
  %v11731 = vld [vmem:[#allocation2 + $0x134] sm:$0xf]
  %v11732 = vld [vmem:[#allocation2 + $0x138] sm:$0xf]
  %v11733 = vld [vmem:[#allocation2 + $0x13c] sm:$0xf]
  %v11734 = vld [vmem:[#allocation2 + $0x140] sm:$0xf]
  %v11735 = vld [vmem:[#allocation2 + $0x144] sm:$0xf]
  %v11736 = vld [vmem:[#allocation2 + $0x148] sm:$0x1]
  %v11737 = vld [vmem:[%s1 + $0x54] sm:$0xf]
  %v11802 = vunpack.c.l.b16 %v11673
  %v11803 = vunpack.c.l.b16 %v11674
  %v11804 = vunpack.c.l.b16 %v11675
  %v11805 = vunpack.c.l.b16 %v11676
  %v11806 = vunpack.c.l.b16 %v11677
  %v11807 = vunpack.c.l.b16 %v11678
  %v11808 = vunpack.c.l.b16 %v11679
  %v11809 = vunpack.c.l.b16 %v11680
  %v11810 = vunpack.c.l.b16 %v11681
  %v11811 = vunpack.c.l.b16 %v11682
  %v11812 = vunpack.c.l.b16 %v11683
  %v11813 = vunpack.c.l.b16 %v11684
  %v11814 = vunpack.c.l.b16 %v11685
  %v11815 = vunpack.c.l.b16 %v11686
  %v11816 = vunpack.c.l.b16 %v11687
  %v11817 = vunpack.c.l.b16 %v11688
  %v11818 = vunpack.c.l.b16 %v11689
  %v11819 = vunpack.c.l.b16 %v11690
  %v11820 = vunpack.c.l.b16 %v11691
  %v11821 = vunpack.c.l.b16 %v11692
  %v11822 = vunpack.c.l.b16 %v11693
  %v11823 = vunpack.c.l.b16 %v11694
  %v11824 = vunpack.c.l.b16 %v11695
  %v11825 = vunpack.c.l.b16 %v11696
  %v11826 = vunpack.c.l.b16 %v11697
  %v11827 = vunpack.c.l.b16 %v11698
  %v11828 = vunpack.c.l.b16 %v11699
  %v11829 = vunpack.c.l.b16 %v11700
  %v11830 = vunpack.c.l.b16 %v11701
  %v11831 = vunpack.c.l.b16 %v11702
  %v11832 = vunpack.c.l.b16 %v11703
  %v11833 = vunpack.c.l.b16 %v11704
  %v11834 = vunpack.c.l.b16 %v11705
  %v11835 = vunpack.c.l.b16 %v11706
  %v11836 = vunpack.c.l.b16 %v11707
  %v11837 = vunpack.c.l.b16 %v11708
  %v11838 = vunpack.c.l.b16 %v11709
  %v11839 = vunpack.c.l.b16 %v11710
  %v11840 = vunpack.c.l.b16 %v11711
  %v11841 = vunpack.c.l.b16 %v11712
  %v11842 = vunpack.c.l.b16 %v11713
  %v11843 = vunpack.c.l.b16 %v11714
  %v11844 = vunpack.c.l.b16 %v11715
  %v11845 = vunpack.c.l.b16 %v11716
  %v11846 = vunpack.c.l.b16 %v11717
  %v11847 = vunpack.c.l.b16 %v11718
  %v11848 = vunpack.c.l.b16 %v11719
  %v11849 = vunpack.c.l.b16 %v11720
  %v11850 = vunpack.c.l.b16 %v11721
  %v11851 = vunpack.c.l.b16 %v11722
  %v11852 = vunpack.c.l.b16 %v11723
  %v11853 = vunpack.c.l.b16 %v11724
  %v11854 = vunpack.c.l.b16 %v11725
  %v11855 = vunpack.c.l.b16 %v11726
  %v11856 = vunpack.c.l.b16 %v11727
  %v11857 = vunpack.c.l.b16 %v11728
  %v11858 = vunpack.c.l.b16 %v11729
  %v11859 = vunpack.c.l.b16 %v11730
  %v11860 = vunpack.c.l.b16 %v11731
  %v11861 = vunpack.c.l.b16 %v11732
  %v11862 = vunpack.c.l.b16 %v11733
  %v11863 = vunpack.c.l.b16 %v11734
  %v11864 = vunpack.c.l.b16 %v11735
  %v11865 = vunpack.c.l.b16 %v11736
  %v11866 = vpack.c.b16 %v11803, %v11802
  %v11867 = vpack.c.b16 %v11805, %v11804
  %v11868 = vpack.c.b16 %v11807, %v11806
  %v11869 = vpack.c.b16 %v11809, %v11808
  %v11870 = vpack.c.b16 %v11811, %v11810
  %v11871 = vpack.c.b16 %v11813, %v11812
  %v11872 = vpack.c.b16 %v11815, %v11814
  %v11873 = vpack.c.b16 %v11817, %v11816
  %v11874 = vpack.c.b16 %v11819, %v11818
  %v11875 = vpack.c.b16 %v11821, %v11820
  %v11876 = vpack.c.b16 %v11823, %v11822
  %v11877 = vpack.c.b16 %v11825, %v11824
  %v11878 = vpack.c.b16 %v11827, %v11826
  %v11879 = vpack.c.b16 %v11829, %v11828
  %v11880 = vpack.c.b16 %v11831, %v11830
  %v11881 = vpack.c.b16 %v11833, %v11832
  %v11882 = vpack.c.b16 %v11835, %v11834
  %v11883 = vpack.c.b16 %v11837, %v11836
  %v11884 = vpack.c.b16 %v11839, %v11838
  %v11885 = vpack.c.b16 %v11841, %v11840
  %v11886 = vpack.c.b16 %v11843, %v11842
  %v11887 = vpack.c.b16 %v11845, %v11844
  %v11888 = vpack.c.b16 %v11847, %v11846
  %v11889 = vpack.c.b16 %v11849, %v11848
  %v11890 = vpack.c.b16 %v11851, %v11850
  %v11891 = vpack.c.b16 %v11853, %v11852
  %v11892 = vpack.c.b16 %v11855, %v11854
  %v11893 = vpack.c.b16 %v11857, %v11856
  %v11894 = vpack.c.b16 %v11859, %v11858
  %v11895 = vpack.c.b16 %v11861, %v11860
  %v11896 = vpack.c.b16 %v11863, %v11862
  %v11897 = vpack.c.b16 %v11865, %v11864
  %v11899 = vshrl.u32 %v11866, 16
  %v11901 = vshll.u32 %v11866, 16
  %v11903 = vrot.slane %v11901, 1
  %v11904 = vor.u32 %v11899, %v11903
  %v11906 = vshll.u32 %v11867, 16
  %v11908 = vrot.slane %v11906, 1
  %v11909 = vsel %vm354, %v11904, %v11908
  %v11910 = vshrl.u32 %v11867, 16
  %v11912 = vor.u32 %v11910, %v11908
  %v11914 = vshll.u32 %v11868, 16
  %v11916 = vrot.slane %v11914, 1
  %v11917 = vsel %vm354, %v11912, %v11916
  %v11918 = vshrl.u32 %v11868, 16
  %v11920 = vor.u32 %v11918, %v11916
  %v11922 = vshll.u32 %v11869, 16
  %v11924 = vrot.slane %v11922, 1
  %v11925 = vsel %vm354, %v11920, %v11924
  %v11926 = vshrl.u32 %v11869, 16
  %v11928 = vor.u32 %v11926, %v11924
  %v11930 = vshll.u32 %v11870, 16
  %v11932 = vrot.slane %v11930, 1
  %v11933 = vsel %vm354, %v11928, %v11932
  %v11934 = vshrl.u32 %v11870, 16
  %v11936 = vor.u32 %v11934, %v11932
  %v11938 = vshll.u32 %v11871, 16
  %v11940 = vrot.slane %v11938, 1
  %v11941 = vsel %vm354, %v11936, %v11940
  %v11942 = vshrl.u32 %v11871, 16
  %v11944 = vor.u32 %v11942, %v11940
  %v11946 = vshll.u32 %v11872, 16
  %v11948 = vrot.slane %v11946, 1
  %v11949 = vsel %vm354, %v11944, %v11948
  %v11950 = vshrl.u32 %v11872, 16
  %v11952 = vor.u32 %v11950, %v11948
  %v11954 = vshll.u32 %v11873, 16
  %v11956 = vrot.slane %v11954, 1
  %v11957 = vsel %vm354, %v11952, %v11956
  %v11958 = vshrl.u32 %v11873, 16
  %v11960 = vor.u32 %v11958, %v11956
  %v11962 = vshll.u32 %v11874, 16
  %v11964 = vrot.slane %v11962, 1
  %v11965 = vsel %vm354, %v11960, %v11964
  %v11966 = vshrl.u32 %v11874, 16
  %v11968 = vor.u32 %v11966, %v11964
  %v11970 = vshll.u32 %v11875, 16
  %v11972 = vrot.slane %v11970, 1
  %v11973 = vsel %vm354, %v11968, %v11972
  %v11974 = vshrl.u32 %v11875, 16
  %v11976 = vor.u32 %v11974, %v11972
  %v11978 = vshll.u32 %v11876, 16
  %v11980 = vrot.slane %v11978, 1
  %v11981 = vsel %vm354, %v11976, %v11980
  %v11982 = vshrl.u32 %v11876, 16
  %v11984 = vor.u32 %v11982, %v11980
  %v11986 = vshll.u32 %v11877, 16
  %v11988 = vrot.slane %v11986, 1
  %v11989 = vsel %vm354, %v11984, %v11988
  %v11990 = vshrl.u32 %v11877, 16
  %v11992 = vor.u32 %v11990, %v11988
  %v11994 = vshll.u32 %v11878, 16
  %v11996 = vrot.slane %v11994, 1
  %v11997 = vsel %vm354, %v11992, %v11996
  %v11998 = vshrl.u32 %v11878, 16
  %v12000 = vor.u32 %v11998, %v11996
  %v12002 = vshll.u32 %v11879, 16
  %v12004 = vrot.slane %v12002, 1
  %v12005 = vsel %vm354, %v12000, %v12004
  %v12006 = vshrl.u32 %v11879, 16
  %v12008 = vor.u32 %v12006, %v12004
  %v12010 = vshll.u32 %v11880, 16
  %v12012 = vrot.slane %v12010, 1
  %v12013 = vsel %vm354, %v12008, %v12012
  %v12014 = vshrl.u32 %v11880, 16
  %v12016 = vor.u32 %v12014, %v12012
  %v12018 = vshll.u32 %v11881, 16
  %v12020 = vrot.slane %v12018, 1
  %v12021 = vsel %vm354, %v12016, %v12020
  %v12022 = vshrl.u32 %v11881, 16
  %v12024 = vor.u32 %v12022, %v12020
  %v12026 = vshll.u32 %v11882, 16
  %v12028 = vrot.slane %v12026, 1
  %v12029 = vsel %vm354, %v12024, %v12028
  %v12030 = vshrl.u32 %v11882, 16
  %v12032 = vor.u32 %v12030, %v12028
  %v12034 = vshll.u32 %v11883, 16
  %v12036 = vrot.slane %v12034, 1
  %v12037 = vsel %vm354, %v12032, %v12036
  %v12038 = vshrl.u32 %v11883, 16
  %v12040 = vor.u32 %v12038, %v12036
  %v12042 = vshll.u32 %v11884, 16
  %v12044 = vrot.slane %v12042, 1
  %v12045 = vsel %vm354, %v12040, %v12044
  %v12046 = vshrl.u32 %v11884, 16
  %v12048 = vor.u32 %v12046, %v12044
  %v12050 = vshll.u32 %v11885, 16
  %v12052 = vrot.slane %v12050, 1
  %v12053 = vsel %vm354, %v12048, %v12052
  %v12054 = vshrl.u32 %v11885, 16
  %v12056 = vor.u32 %v12054, %v12052
  %v12058 = vshll.u32 %v11886, 16
  %v12060 = vrot.slane %v12058, 1
  %v12061 = vsel %vm354, %v12056, %v12060
  %v12062 = vshrl.u32 %v11886, 16
  %v12064 = vor.u32 %v12062, %v12060
  %v12066 = vshll.u32 %v11887, 16
  %v12068 = vrot.slane %v12066, 1
  %v12069 = vsel %vm354, %v12064, %v12068
  %v12070 = vshrl.u32 %v11887, 16
  %v12072 = vor.u32 %v12070, %v12068
  %v12074 = vshll.u32 %v11888, 16
  %v12076 = vrot.slane %v12074, 1
  %v12077 = vsel %vm354, %v12072, %v12076
  %v12078 = vshrl.u32 %v11888, 16
  %v12080 = vor.u32 %v12078, %v12076
  %v12082 = vshll.u32 %v11889, 16
  %v12084 = vrot.slane %v12082, 1
  %v12085 = vsel %vm354, %v12080, %v12084
  %v12086 = vshrl.u32 %v11889, 16
  %v12088 = vor.u32 %v12086, %v12084
  %v12090 = vshll.u32 %v11890, 16
  %v12092 = vrot.slane %v12090, 1
  %v12093 = vsel %vm354, %v12088, %v12092
  %v12094 = vshrl.u32 %v11890, 16
  %v12096 = vor.u32 %v12094, %v12092
  %v12098 = vshll.u32 %v11891, 16
  %v12100 = vrot.slane %v12098, 1
  %v12101 = vsel %vm354, %v12096, %v12100
  %v12102 = vshrl.u32 %v11891, 16
  %v12104 = vor.u32 %v12102, %v12100
  %v12106 = vshll.u32 %v11892, 16
  %v12108 = vrot.slane %v12106, 1
  %v12109 = vsel %vm354, %v12104, %v12108
  %v12110 = vshrl.u32 %v11892, 16
  %v12112 = vor.u32 %v12110, %v12108
  %v12114 = vshll.u32 %v11893, 16
  %v12116 = vrot.slane %v12114, 1
  %v12117 = vsel %vm354, %v12112, %v12116
  %v12118 = vshrl.u32 %v11893, 16
  %v12120 = vor.u32 %v12118, %v12116
  %v12122 = vshll.u32 %v11894, 16
  %v12124 = vrot.slane %v12122, 1
  %v12125 = vsel %vm354, %v12120, %v12124
  %v12126 = vshrl.u32 %v11894, 16
  %v12128 = vor.u32 %v12126, %v12124
  %v12130 = vshll.u32 %v11895, 16
  %v12132 = vrot.slane %v12130, 1
  %v12133 = vsel %vm354, %v12128, %v12132
  %v12134 = vshrl.u32 %v11895, 16
  %v12136 = vor.u32 %v12134, %v12132
  %v12138 = vshll.u32 %v11896, 16
  %v12140 = vrot.slane %v12138, 1
  %v12141 = vsel %vm354, %v12136, %v12140
  %v12142 = vshrl.u32 %v11896, 16
  %v12144 = vor.u32 %v12142, %v12140
  %v12146 = vshll.u32 %v11897, 16
  %v12148 = vrot.slane %v12146, 1
  %v12149 = vsel %vm354, %v12144, %v12148
  %v12150 = vshrl.u32 %v11897, 16
  %v12152 = vor.u32 %v12150, %v12148
  %v12154 = vsel %vm610, %v11909, 0
  %v12157 = vsel %vm610, %v11917, 0
  %v12160 = vsel %vm610, %v11925, 0
  %v12163 = vsel %vm610, %v11933, 0
  %v12166 = vsel %vm610, %v11941, 0
  %v12169 = vsel %vm610, %v11949, 0
  %v12172 = vsel %vm610, %v11957, 0
  %v12175 = vsel %vm610, %v11965, 0
  %v12178 = vsel %vm610, %v11973, 0
  %v12181 = vsel %vm610, %v11981, 0
  %v12184 = vsel %vm610, %v11989, 0
  %v12187 = vsel %vm610, %v11997, 0
  %v12190 = vsel %vm610, %v12005, 0
  %v12193 = vsel %vm610, %v12013, 0
  %v12196 = vsel %vm610, %v12021, 0
  %v12199 = vsel %vm610, %v12029, 0
  %v12202 = vsel %vm610, %v12037, 0
  %v12205 = vsel %vm610, %v12045, 0
  %v12208 = vsel %vm610, %v12053, 0
  %v12211 = vsel %vm610, %v12061, 0
  %v12214 = vsel %vm610, %v12069, 0
  %v12217 = vsel %vm610, %v12077, 0
  %v12220 = vsel %vm610, %v12085, 0
  %v12223 = vsel %vm610, %v12093, 0
  %v12226 = vsel %vm610, %v12101, 0
  %v12229 = vsel %vm610, %v12109, 0
  %v12232 = vsel %vm610, %v12117, 0
  %v12235 = vsel %vm610, %v12125, 0
  %v12238 = vsel %vm610, %v12133, 0
  %v12241 = vsel %vm610, %v12141, 0
  %v12244 = vsel %vm610, %v12149, 0
  %v12247 = vsel %vm610, %v12152, 0
  %v12250 = vsel %vm707, %v11737, 0
  %12252 = vmatpush.bf16.msra.mxu0 0
  %12253 = vmatpush.bf16.msra.mxu0 0
  %12254 = vmatpush.bf16.msra.mxu0 0
  %12255 = vmatpush.bf16.msra.mxu0 0
  %12256 = vmatpush.bf16.msra.mxu0 0
  %12257 = vmatpush.bf16.msra.mxu0 0
  %12258 = vmatpush.bf16.msra.mxu0 0
  %12259 = vmatpush.bf16.msra.mxu0 %v12250
  %12260 = vmatmul.bf16.gmra.mxu0 %v12154
  %v12261 = vpop.f32.mrf.mxu0
  %v12262 = vadd.f32 0.0, %v12261
  %v12263 = vpop.f32.mrf.mxu0
  %v12264 = vadd.f32 0.0, %v12263
  %12265 = vmatmul.bf16.gmra.mxu0 %v12157
  %v12266 = vpop.f32.mrf.mxu0
  %v12267 = vadd.f32 0.0, %v12266
  %v12268 = vpop.f32.mrf.mxu0
  %v12269 = vadd.f32 0.0, %v12268
  %12270 = vmatmul.bf16.gmra.mxu0 %v12160
  %v12271 = vpop.f32.mrf.mxu0
  %v12272 = vadd.f32 0.0, %v12271
  %v12273 = vpop.f32.mrf.mxu0
  %v12274 = vadd.f32 0.0, %v12273
  %12275 = vmatmul.bf16.gmra.mxu0 %v12163
  %v12276 = vpop.f32.mrf.mxu0
  %v12277 = vadd.f32 0.0, %v12276
  %v12278 = vpop.f32.mrf.mxu0
  %v12279 = vadd.f32 0.0, %v12278
  %12280 = vmatmul.bf16.gmra.mxu0 %v12166
  %v12281 = vpop.f32.mrf.mxu0
  %v12282 = vadd.f32 0.0, %v12281
  %v12283 = vpop.f32.mrf.mxu0
  %v12284 = vadd.f32 0.0, %v12283
  %12285 = vmatmul.bf16.gmra.mxu0 %v12169
  %v12286 = vpop.f32.mrf.mxu0
  %v12287 = vadd.f32 0.0, %v12286
  %v12288 = vpop.f32.mrf.mxu0
  %v12289 = vadd.f32 0.0, %v12288
  %12290 = vmatmul.bf16.gmra.mxu0 %v12172
  %v12291 = vpop.f32.mrf.mxu0
  %v12292 = vadd.f32 0.0, %v12291
  %v12293 = vpop.f32.mrf.mxu0
  %v12294 = vadd.f32 0.0, %v12293
  %12295 = vmatmul.bf16.gmra.mxu0 %v12175
  %v12296 = vpop.f32.mrf.mxu0
  %v12297 = vadd.f32 0.0, %v12296
  %v12298 = vpop.f32.mrf.mxu0
  %v12299 = vadd.f32 0.0, %v12298
  %12300 = vmatmul.bf16.gmra.mxu0 %v12178
  %v12301 = vpop.f32.mrf.mxu0
  %v12302 = vadd.f32 0.0, %v12301
  %v12303 = vpop.f32.mrf.mxu0
  %v12304 = vadd.f32 0.0, %v12303
  %12305 = vmatmul.bf16.gmra.mxu0 %v12181
  %v12306 = vpop.f32.mrf.mxu0
  %v12307 = vadd.f32 0.0, %v12306
  %v12308 = vpop.f32.mrf.mxu0
  %v12309 = vadd.f32 0.0, %v12308
  %12310 = vmatmul.bf16.gmra.mxu0 %v12184
  %v12311 = vpop.f32.mrf.mxu0
  %v12312 = vadd.f32 0.0, %v12311
  %v12313 = vpop.f32.mrf.mxu0
  %v12314 = vadd.f32 0.0, %v12313
  %12315 = vmatmul.bf16.gmra.mxu0 %v12187
  %v12316 = vpop.f32.mrf.mxu0
  %v12317 = vadd.f32 0.0, %v12316
  %v12318 = vpop.f32.mrf.mxu0
  %v12319 = vadd.f32 0.0, %v12318
  %12320 = vmatmul.bf16.gmra.mxu0 %v12190
  %v12321 = vpop.f32.mrf.mxu0
  %v12322 = vadd.f32 0.0, %v12321
  %v12323 = vpop.f32.mrf.mxu0
  %v12324 = vadd.f32 0.0, %v12323
  %12325 = vmatmul.bf16.gmra.mxu0 %v12193
  %v12326 = vpop.f32.mrf.mxu0
  %v12327 = vadd.f32 0.0, %v12326
  %v12328 = vpop.f32.mrf.mxu0
  %v12329 = vadd.f32 0.0, %v12328
  %12330 = vmatmul.bf16.gmra.mxu0 %v12196
  %v12331 = vpop.f32.mrf.mxu0
  %v12332 = vadd.f32 0.0, %v12331
  %v12333 = vpop.f32.mrf.mxu0
  %v12334 = vadd.f32 0.0, %v12333
  %12335 = vmatmul.bf16.gmra.mxu0 %v12199
  %v12336 = vpop.f32.mrf.mxu0
  %v12337 = vadd.f32 0.0, %v12336
  %v12338 = vpop.f32.mrf.mxu0
  %v12339 = vadd.f32 0.0, %v12338
  %12340 = vmatmul.bf16.gmra.mxu0 %v12202
  %v12341 = vpop.f32.mrf.mxu0
  %v12342 = vadd.f32 0.0, %v12341
  %v12343 = vpop.f32.mrf.mxu0
  %v12344 = vadd.f32 0.0, %v12343
  %12345 = vmatmul.bf16.gmra.mxu0 %v12205
  %v12346 = vpop.f32.mrf.mxu0
  %v12347 = vadd.f32 0.0, %v12346
  %v12348 = vpop.f32.mrf.mxu0
  %v12349 = vadd.f32 0.0, %v12348
  %12350 = vmatmul.bf16.gmra.mxu0 %v12208
  %v12351 = vpop.f32.mrf.mxu0
  %v12352 = vadd.f32 0.0, %v12351
  %v12353 = vpop.f32.mrf.mxu0
  %v12354 = vadd.f32 0.0, %v12353
  %12355 = vmatmul.bf16.gmra.mxu0 %v12211
  %v12356 = vpop.f32.mrf.mxu0
  %v12357 = vadd.f32 0.0, %v12356
  %v12358 = vpop.f32.mrf.mxu0
  %v12359 = vadd.f32 0.0, %v12358
  %12360 = vmatmul.bf16.gmra.mxu0 %v12214
  %v12361 = vpop.f32.mrf.mxu0
  %v12362 = vadd.f32 0.0, %v12361
  %v12363 = vpop.f32.mrf.mxu0
  %v12364 = vadd.f32 0.0, %v12363
  %12365 = vmatmul.bf16.gmra.mxu0 %v12217
  %v12366 = vpop.f32.mrf.mxu0
  %v12367 = vadd.f32 0.0, %v12366
  %v12368 = vpop.f32.mrf.mxu0
  %v12369 = vadd.f32 0.0, %v12368
  %12370 = vmatmul.bf16.gmra.mxu0 %v12220
  %v12371 = vpop.f32.mrf.mxu0
  %v12372 = vadd.f32 0.0, %v12371
  %v12373 = vpop.f32.mrf.mxu0
  %v12374 = vadd.f32 0.0, %v12373
  %12375 = vmatmul.bf16.gmra.mxu0 %v12223
  %v12376 = vpop.f32.mrf.mxu0
  %v12377 = vadd.f32 0.0, %v12376
  %v12378 = vpop.f32.mrf.mxu0
  %v12379 = vadd.f32 0.0, %v12378
  %12380 = vmatmul.bf16.gmra.mxu0 %v12226
  %v12381 = vpop.f32.mrf.mxu0
  %v12382 = vadd.f32 0.0, %v12381
  %v12383 = vpop.f32.mrf.mxu0
  %v12384 = vadd.f32 0.0, %v12383
  %12385 = vmatmul.bf16.gmra.mxu0 %v12229
  %v12386 = vpop.f32.mrf.mxu0
  %v12387 = vadd.f32 0.0, %v12386
  %v12388 = vpop.f32.mrf.mxu0
  %v12389 = vadd.f32 0.0, %v12388
  %12390 = vmatmul.bf16.gmra.mxu0 %v12232
  %v12391 = vpop.f32.mrf.mxu0
  %v12392 = vadd.f32 0.0, %v12391
  %v12393 = vpop.f32.mrf.mxu0
  %v12394 = vadd.f32 0.0, %v12393
  %12395 = vmatmul.bf16.gmra.mxu0 %v12235
  %v12396 = vpop.f32.mrf.mxu0
  %v12397 = vadd.f32 0.0, %v12396
  %v12398 = vpop.f32.mrf.mxu0
  %v12399 = vadd.f32 0.0, %v12398
  %12400 = vmatmul.bf16.gmra.mxu0 %v12238
  %v12401 = vpop.f32.mrf.mxu0
  %v12402 = vadd.f32 0.0, %v12401
  %v12403 = vpop.f32.mrf.mxu0
  %v12404 = vadd.f32 0.0, %v12403
  %12405 = vmatmul.bf16.gmra.mxu0 %v12241
  %v12406 = vpop.f32.mrf.mxu0
  %v12407 = vadd.f32 0.0, %v12406
  %v12408 = vpop.f32.mrf.mxu0
  %v12409 = vadd.f32 0.0, %v12408
  %12410 = vmatmul.bf16.gmra.mxu0 %v12244
  %v12411 = vpop.f32.mrf.mxu0
  %v12412 = vadd.f32 0.0, %v12411
  %v12413 = vpop.f32.mrf.mxu0
  %v12414 = vadd.f32 0.0, %v12413
  %12415 = vmatmul.bf16.gmra.mxu0 %v12247
  %v12416 = vpop.f32.mrf.mxu0
  %v12417 = vadd.f32 0.0, %v12416
  %v12418 = vpop.f32.mrf.mxu0
  %12419 = vdwg.mxu0
  %v12420 = vadd.f32 %v11610, %v12262
  %v12421 = vadd.f32 %v11611, %v12264
  %v12422 = vadd.f32 %v11612, %v12267
  %v12423 = vadd.f32 %v11613, %v12269
  %v12424 = vadd.f32 %v11614, %v12272
  %v12425 = vadd.f32 %v11615, %v12274
  %v12426 = vadd.f32 %v11616, %v12277
  %v12427 = vadd.f32 %v11617, %v12279
  %v12428 = vadd.f32 %v11618, %v12282
  %v12429 = vadd.f32 %v11619, %v12284
  %v12430 = vadd.f32 %v11620, %v12287
  %v12431 = vadd.f32 %v11621, %v12289
  %v12432 = vadd.f32 %v11622, %v12292
  %v12433 = vadd.f32 %v11623, %v12294
  %v12434 = vadd.f32 %v11624, %v12297
  %v12435 = vadd.f32 %v11625, %v12299
  %v12436 = vadd.f32 %v11626, %v12302
  %v12437 = vadd.f32 %v11627, %v12304
  %v12438 = vadd.f32 %v11628, %v12307
  %v12439 = vadd.f32 %v11629, %v12309
  %v12440 = vadd.f32 %v11630, %v12312
  %v12441 = vadd.f32 %v11631, %v12314
  %v12442 = vadd.f32 %v11632, %v12317
  %v12443 = vadd.f32 %v11633, %v12319
  %v12444 = vadd.f32 %v11634, %v12322
  %v12445 = vadd.f32 %v11635, %v12324
  %v12446 = vadd.f32 %v11636, %v12327
  %v12447 = vadd.f32 %v11637, %v12329
  %v12448 = vadd.f32 %v11638, %v12332
  %v12449 = vadd.f32 %v11639, %v12334
  %v12450 = vadd.f32 %v11640, %v12337
  %v12451 = vadd.f32 %v11641, %v12339
  %v12452 = vadd.f32 %v11642, %v12342
  %v12453 = vadd.f32 %v11643, %v12344
  %v12454 = vadd.f32 %v11644, %v12347
  %v12455 = vadd.f32 %v11645, %v12349
  %v12456 = vadd.f32 %v11646, %v12352
  %v12457 = vadd.f32 %v11647, %v12354
  %v12458 = vadd.f32 %v11648, %v12357
  %v12459 = vadd.f32 %v11649, %v12359
  %v12460 = vadd.f32 %v11650, %v12362
  %v12461 = vadd.f32 %v11651, %v12364
  %v12462 = vadd.f32 %v11652, %v12367
  %v12463 = vadd.f32 %v11653, %v12369
  %v12464 = vadd.f32 %v11654, %v12372
  %v12465 = vadd.f32 %v11655, %v12374
  %v12466 = vadd.f32 %v11656, %v12377
  %v12467 = vadd.f32 %v11657, %v12379
  %v12468 = vadd.f32 %v11658, %v12382
  %v12469 = vadd.f32 %v11659, %v12384
  %v12470 = vadd.f32 %v11660, %v12387
  %v12471 = vadd.f32 %v11661, %v12389
  %v12472 = vadd.f32 %v11662, %v12392
  %v12473 = vadd.f32 %v11663, %v12394
  %v12474 = vadd.f32 %v11664, %v12397
  %v12475 = vadd.f32 %v11665, %v12399
  %v12476 = vadd.f32 %v11666, %v12402
  %v12477 = vadd.f32 %v11667, %v12404
  %v12478 = vadd.f32 %v11668, %v12407
  %v12479 = vadd.f32 %v11669, %v12409
  %v12480 = vadd.f32 %v11670, %v12412
  %v12481 = vadd.f32 %v11671, %v12414
  %v12482 = vadd.f32 %v11672, %v12417
  %v12483 = vld [vmem:[#allocation2 + $0x4c] sm:$0xe]
  %v12484 = vld [vmem:[%s1 + $0x58] sm:$0xf]
  %v12486 = vunpack.c.l.b16 %v12483
  %v12487 = vpack.c.b16 %v11803, %v12486
  %v12488 = vrot.slane %v12487, 1
  %v12489 = vrot.slane %v11867, 1
  %v12490 = vsel %vm1121, %v12488, %v12489
  %v12491 = vrot.slane %v11868, 1
  %v12492 = vsel %vm1121, %v12489, %v12491
  %v12493 = vrot.slane %v11869, 1
  %v12494 = vsel %vm1121, %v12491, %v12493
  %v12495 = vrot.slane %v11870, 1
  %v12496 = vsel %vm1121, %v12493, %v12495
  %v12497 = vrot.slane %v11871, 1
  %v12498 = vsel %vm1121, %v12495, %v12497
  %v12499 = vrot.slane %v11872, 1
  %v12500 = vsel %vm1121, %v12497, %v12499
  %v12501 = vrot.slane %v11873, 1
  %v12502 = vsel %vm1121, %v12499, %v12501
  %v12503 = vrot.slane %v11874, 1
  %v12504 = vsel %vm1121, %v12501, %v12503
  %v12505 = vrot.slane %v11875, 1
  %v12506 = vsel %vm1121, %v12503, %v12505
  %v12507 = vrot.slane %v11876, 1
  %v12508 = vsel %vm1121, %v12505, %v12507
  %v12509 = vrot.slane %v11877, 1
  %v12510 = vsel %vm1121, %v12507, %v12509
  %v12511 = vrot.slane %v11878, 1
  %v12512 = vsel %vm1121, %v12509, %v12511
  %v12513 = vrot.slane %v11879, 1
  %v12514 = vsel %vm1121, %v12511, %v12513
  %v12515 = vrot.slane %v11880, 1
  %v12516 = vsel %vm1121, %v12513, %v12515
  %v12517 = vrot.slane %v11881, 1
  %v12518 = vsel %vm1121, %v12515, %v12517
  %v12519 = vrot.slane %v11882, 1
  %v12520 = vsel %vm1121, %v12517, %v12519
  %v12521 = vrot.slane %v11883, 1
  %v12522 = vsel %vm1121, %v12519, %v12521
  %v12523 = vrot.slane %v11884, 1
  %v12524 = vsel %vm1121, %v12521, %v12523
  %v12525 = vrot.slane %v11885, 1
  %v12526 = vsel %vm1121, %v12523, %v12525
  %v12527 = vrot.slane %v11886, 1
  %v12528 = vsel %vm1121, %v12525, %v12527
  %v12529 = vrot.slane %v11887, 1
  %v12530 = vsel %vm1121, %v12527, %v12529
  %v12531 = vrot.slane %v11888, 1
  %v12532 = vsel %vm1121, %v12529, %v12531
  %v12533 = vrot.slane %v11889, 1
  %v12534 = vsel %vm1121, %v12531, %v12533
  %v12535 = vrot.slane %v11890, 1
  %v12536 = vsel %vm1121, %v12533, %v12535
  %v12537 = vrot.slane %v11891, 1
  %v12538 = vsel %vm1121, %v12535, %v12537
  %v12539 = vrot.slane %v11892, 1
  %v12540 = vsel %vm1121, %v12537, %v12539
  %v12541 = vrot.slane %v11893, 1
  %v12542 = vsel %vm1121, %v12539, %v12541
  %v12543 = vrot.slane %v11894, 1
  %v12544 = vsel %vm1121, %v12541, %v12543
  %v12545 = vrot.slane %v11895, 1
  %v12546 = vsel %vm1121, %v12543, %v12545
  %v12547 = vrot.slane %v11896, 1
  %v12548 = vsel %vm1121, %v12545, %v12547
  %v12549 = vrot.slane %v11897, 1
  %v12550 = vsel %vm1121, %v12547, %v12549
  %v12552 = vsel %vm610, %v12490, 0
  %v12555 = vsel %vm610, %v12492, 0
  %v12558 = vsel %vm610, %v12494, 0
  %v12561 = vsel %vm610, %v12496, 0
  %v12564 = vsel %vm610, %v12498, 0
  %v12567 = vsel %vm610, %v12500, 0
  %v12570 = vsel %vm610, %v12502, 0
  %v12573 = vsel %vm610, %v12504, 0
  %v12576 = vsel %vm610, %v12506, 0
  %v12579 = vsel %vm610, %v12508, 0
  %v12582 = vsel %vm610, %v12510, 0
  %v12585 = vsel %vm610, %v12512, 0
  %v12588 = vsel %vm610, %v12514, 0
  %v12591 = vsel %vm610, %v12516, 0
  %v12594 = vsel %vm610, %v12518, 0
  %v12597 = vsel %vm610, %v12520, 0
  %v12600 = vsel %vm610, %v12522, 0
  %v12603 = vsel %vm610, %v12524, 0
  %v12606 = vsel %vm610, %v12526, 0
  %v12609 = vsel %vm610, %v12528, 0
  %v12612 = vsel %vm610, %v12530, 0
  %v12615 = vsel %vm610, %v12532, 0
  %v12618 = vsel %vm610, %v12534, 0
  %v12621 = vsel %vm610, %v12536, 0
  %v12624 = vsel %vm610, %v12538, 0
  %v12627 = vsel %vm610, %v12540, 0
  %v12630 = vsel %vm610, %v12542, 0
  %v12633 = vsel %vm610, %v12544, 0
  %v12636 = vsel %vm610, %v12546, 0
  %v12639 = vsel %vm610, %v12548, 0
  %v12642 = vsel %vm610, %v12550, 0
  %v12645 = vsel %vm610, %v12549, 0
  %v12648 = vsel %vm707, %v12484, 0
  %12650 = vmatpush.bf16.msra.mxu0 0
  %12651 = vmatpush.bf16.msra.mxu0 0
  %12652 = vmatpush.bf16.msra.mxu0 0
  %12653 = vmatpush.bf16.msra.mxu0 0
  %12654 = vmatpush.bf16.msra.mxu0 0
  %12655 = vmatpush.bf16.msra.mxu0 0
  %12656 = vmatpush.bf16.msra.mxu0 0
  %12657 = vmatpush.bf16.msra.mxu0 %v12648
  %12658 = vmatmul.bf16.gmra.mxu0 %v12552
  %v12659 = vpop.f32.mrf.mxu0
  %v12660 = vadd.f32 0.0, %v12659
  %v12661 = vpop.f32.mrf.mxu0
  %v12662 = vadd.f32 0.0, %v12661
  %12663 = vmatmul.bf16.gmra.mxu0 %v12555
  %v12664 = vpop.f32.mrf.mxu0
  %v12665 = vadd.f32 0.0, %v12664
  %v12666 = vpop.f32.mrf.mxu0
  %v12667 = vadd.f32 0.0, %v12666
  %12668 = vmatmul.bf16.gmra.mxu0 %v12558
  %v12669 = vpop.f32.mrf.mxu0
  %v12670 = vadd.f32 0.0, %v12669
  %v12671 = vpop.f32.mrf.mxu0
  %v12672 = vadd.f32 0.0, %v12671
  %12673 = vmatmul.bf16.gmra.mxu0 %v12561
  %v12674 = vpop.f32.mrf.mxu0
  %v12675 = vadd.f32 0.0, %v12674
  %v12676 = vpop.f32.mrf.mxu0
  %v12677 = vadd.f32 0.0, %v12676
  %12678 = vmatmul.bf16.gmra.mxu0 %v12564
  %v12679 = vpop.f32.mrf.mxu0
  %v12680 = vadd.f32 0.0, %v12679
  %v12681 = vpop.f32.mrf.mxu0
  %v12682 = vadd.f32 0.0, %v12681
  %12683 = vmatmul.bf16.gmra.mxu0 %v12567
  %v12684 = vpop.f32.mrf.mxu0
  %v12685 = vadd.f32 0.0, %v12684
  %v12686 = vpop.f32.mrf.mxu0
  %v12687 = vadd.f32 0.0, %v12686
  %12688 = vmatmul.bf16.gmra.mxu0 %v12570
  %v12689 = vpop.f32.mrf.mxu0
  %v12690 = vadd.f32 0.0, %v12689
  %v12691 = vpop.f32.mrf.mxu0
  %v12692 = vadd.f32 0.0, %v12691
  %12693 = vmatmul.bf16.gmra.mxu0 %v12573
  %v12694 = vpop.f32.mrf.mxu0
  %v12695 = vadd.f32 0.0, %v12694
  %v12696 = vpop.f32.mrf.mxu0
  %v12697 = vadd.f32 0.0, %v12696
  %12698 = vmatmul.bf16.gmra.mxu0 %v12576
  %v12699 = vpop.f32.mrf.mxu0
  %v12700 = vadd.f32 0.0, %v12699
  %v12701 = vpop.f32.mrf.mxu0
  %v12702 = vadd.f32 0.0, %v12701
  %12703 = vmatmul.bf16.gmra.mxu0 %v12579
  %v12704 = vpop.f32.mrf.mxu0
  %v12705 = vadd.f32 0.0, %v12704
  %v12706 = vpop.f32.mrf.mxu0
  %v12707 = vadd.f32 0.0, %v12706
  %12708 = vmatmul.bf16.gmra.mxu0 %v12582
  %v12709 = vpop.f32.mrf.mxu0
  %v12710 = vadd.f32 0.0, %v12709
  %v12711 = vpop.f32.mrf.mxu0
  %v12712 = vadd.f32 0.0, %v12711
  %12713 = vmatmul.bf16.gmra.mxu0 %v12585
  %v12714 = vpop.f32.mrf.mxu0
  %v12715 = vadd.f32 0.0, %v12714
  %v12716 = vpop.f32.mrf.mxu0
  %v12717 = vadd.f32 0.0, %v12716
  %12718 = vmatmul.bf16.gmra.mxu0 %v12588
  %v12719 = vpop.f32.mrf.mxu0
  %v12720 = vadd.f32 0.0, %v12719
  %v12721 = vpop.f32.mrf.mxu0
  %v12722 = vadd.f32 0.0, %v12721
  %12723 = vmatmul.bf16.gmra.mxu0 %v12591
  %v12724 = vpop.f32.mrf.mxu0
  %v12725 = vadd.f32 0.0, %v12724
  %v12726 = vpop.f32.mrf.mxu0
  %v12727 = vadd.f32 0.0, %v12726
  %12728 = vmatmul.bf16.gmra.mxu0 %v12594
  %v12729 = vpop.f32.mrf.mxu0
  %v12730 = vadd.f32 0.0, %v12729
  %v12731 = vpop.f32.mrf.mxu0
  %v12732 = vadd.f32 0.0, %v12731
  %12733 = vmatmul.bf16.gmra.mxu0 %v12597
  %v12734 = vpop.f32.mrf.mxu0
  %v12735 = vadd.f32 0.0, %v12734
  %v12736 = vpop.f32.mrf.mxu0
  %v12737 = vadd.f32 0.0, %v12736
  %12738 = vmatmul.bf16.gmra.mxu0 %v12600
  %v12739 = vpop.f32.mrf.mxu0
  %v12740 = vadd.f32 0.0, %v12739
  %v12741 = vpop.f32.mrf.mxu0
  %v12742 = vadd.f32 0.0, %v12741
  %12743 = vmatmul.bf16.gmra.mxu0 %v12603
  %v12744 = vpop.f32.mrf.mxu0
  %v12745 = vadd.f32 0.0, %v12744
  %v12746 = vpop.f32.mrf.mxu0
  %v12747 = vadd.f32 0.0, %v12746
  %12748 = vmatmul.bf16.gmra.mxu0 %v12606
  %v12749 = vpop.f32.mrf.mxu0
  %v12750 = vadd.f32 0.0, %v12749
  %v12751 = vpop.f32.mrf.mxu0
  %v12752 = vadd.f32 0.0, %v12751
  %12753 = vmatmul.bf16.gmra.mxu0 %v12609
  %v12754 = vpop.f32.mrf.mxu0
  %v12755 = vadd.f32 0.0, %v12754
  %v12756 = vpop.f32.mrf.mxu0
  %v12757 = vadd.f32 0.0, %v12756
  %12758 = vmatmul.bf16.gmra.mxu0 %v12612
  %v12759 = vpop.f32.mrf.mxu0
  %v12760 = vadd.f32 0.0, %v12759
  %v12761 = vpop.f32.mrf.mxu0
  %v12762 = vadd.f32 0.0, %v12761
  %12763 = vmatmul.bf16.gmra.mxu0 %v12615
  %v12764 = vpop.f32.mrf.mxu0
  %v12765 = vadd.f32 0.0, %v12764
  %v12766 = vpop.f32.mrf.mxu0
  %v12767 = vadd.f32 0.0, %v12766
  %12768 = vmatmul.bf16.gmra.mxu0 %v12618
  %v12769 = vpop.f32.mrf.mxu0
  %v12770 = vadd.f32 0.0, %v12769
  %v12771 = vpop.f32.mrf.mxu0
  %v12772 = vadd.f32 0.0, %v12771
  %12773 = vmatmul.bf16.gmra.mxu0 %v12621
  %v12774 = vpop.f32.mrf.mxu0
  %v12775 = vadd.f32 0.0, %v12774
  %v12776 = vpop.f32.mrf.mxu0
  %v12777 = vadd.f32 0.0, %v12776
  %12778 = vmatmul.bf16.gmra.mxu0 %v12624
  %v12779 = vpop.f32.mrf.mxu0
  %v12780 = vadd.f32 0.0, %v12779
  %v12781 = vpop.f32.mrf.mxu0
  %v12782 = vadd.f32 0.0, %v12781
  %12783 = vmatmul.bf16.gmra.mxu0 %v12627
  %v12784 = vpop.f32.mrf.mxu0
  %v12785 = vadd.f32 0.0, %v12784
  %v12786 = vpop.f32.mrf.mxu0
  %v12787 = vadd.f32 0.0, %v12786
  %12788 = vmatmul.bf16.gmra.mxu0 %v12630
  %v12789 = vpop.f32.mrf.mxu0
  %v12790 = vadd.f32 0.0, %v12789
  %v12791 = vpop.f32.mrf.mxu0
  %v12792 = vadd.f32 0.0, %v12791
  %12793 = vmatmul.bf16.gmra.mxu0 %v12633
  %v12794 = vpop.f32.mrf.mxu0
  %v12795 = vadd.f32 0.0, %v12794
  %v12796 = vpop.f32.mrf.mxu0
  %v12797 = vadd.f32 0.0, %v12796
  %12798 = vmatmul.bf16.gmra.mxu0 %v12636
  %v12799 = vpop.f32.mrf.mxu0
  %v12800 = vadd.f32 0.0, %v12799
  %v12801 = vpop.f32.mrf.mxu0
  %v12802 = vadd.f32 0.0, %v12801
  %12803 = vmatmul.bf16.gmra.mxu0 %v12639
  %v12804 = vpop.f32.mrf.mxu0
  %v12805 = vadd.f32 0.0, %v12804
  %v12806 = vpop.f32.mrf.mxu0
  %v12807 = vadd.f32 0.0, %v12806
  %12808 = vmatmul.bf16.gmra.mxu0 %v12642
  %v12809 = vpop.f32.mrf.mxu0
  %v12810 = vadd.f32 0.0, %v12809
  %v12811 = vpop.f32.mrf.mxu0
  %v12812 = vadd.f32 0.0, %v12811
  %12813 = vmatmul.bf16.gmra.mxu0 %v12645
  %v12814 = vpop.f32.mrf.mxu0
  %v12815 = vadd.f32 0.0, %v12814
  %v12816 = vpop.f32.mrf.mxu0
  %12817 = vdwg.mxu0
  %v12818 = vadd.f32 %v12420, %v12660
  %v12819 = vadd.f32 %v12421, %v12662
  %v12820 = vadd.f32 %v12422, %v12665
  %v12821 = vadd.f32 %v12423, %v12667
  %v12822 = vadd.f32 %v12424, %v12670
  %v12823 = vadd.f32 %v12425, %v12672
  %v12824 = vadd.f32 %v12426, %v12675
  %v12825 = vadd.f32 %v12427, %v12677
  %v12826 = vadd.f32 %v12428, %v12680
  %v12827 = vadd.f32 %v12429, %v12682
  %v12828 = vadd.f32 %v12430, %v12685
  %v12829 = vadd.f32 %v12431, %v12687
  %v12830 = vadd.f32 %v12432, %v12690
  %v12831 = vadd.f32 %v12433, %v12692
  %v12832 = vadd.f32 %v12434, %v12695
  %v12833 = vadd.f32 %v12435, %v12697
  %v12834 = vadd.f32 %v12436, %v12700
  %v12835 = vadd.f32 %v12437, %v12702
  %v12836 = vadd.f32 %v12438, %v12705
  %v12837 = vadd.f32 %v12439, %v12707
  %v12838 = vadd.f32 %v12440, %v12710
  %v12839 = vadd.f32 %v12441, %v12712
  %v12840 = vadd.f32 %v12442, %v12715
  %v12841 = vadd.f32 %v12443, %v12717
  %v12842 = vadd.f32 %v12444, %v12720
  %v12843 = vadd.f32 %v12445, %v12722
  %v12844 = vadd.f32 %v12446, %v12725
  %v12845 = vadd.f32 %v12447, %v12727
  %v12846 = vadd.f32 %v12448, %v12730
  %v12847 = vadd.f32 %v12449, %v12732
  %v12848 = vadd.f32 %v12450, %v12735
  %v12849 = vadd.f32 %v12451, %v12737
  %v12850 = vadd.f32 %v12452, %v12740
  %v12851 = vadd.f32 %v12453, %v12742
  %v12852 = vadd.f32 %v12454, %v12745
  %v12853 = vadd.f32 %v12455, %v12747
  %v12854 = vadd.f32 %v12456, %v12750
  %v12855 = vadd.f32 %v12457, %v12752
  %v12856 = vadd.f32 %v12458, %v12755
  %v12857 = vadd.f32 %v12459, %v12757
  %v12858 = vadd.f32 %v12460, %v12760
  %v12859 = vadd.f32 %v12461, %v12762
  %v12860 = vadd.f32 %v12462, %v12765
  %v12861 = vadd.f32 %v12463, %v12767
  %v12862 = vadd.f32 %v12464, %v12770
  %v12863 = vadd.f32 %v12465, %v12772
  %v12864 = vadd.f32 %v12466, %v12775
  %v12865 = vadd.f32 %v12467, %v12777
  %v12866 = vadd.f32 %v12468, %v12780
  %v12867 = vadd.f32 %v12469, %v12782
  %v12868 = vadd.f32 %v12470, %v12785
  %v12869 = vadd.f32 %v12471, %v12787
  %v12870 = vadd.f32 %v12472, %v12790
  %v12871 = vadd.f32 %v12473, %v12792
  %v12872 = vadd.f32 %v12474, %v12795
  %v12873 = vadd.f32 %v12475, %v12797
  %v12874 = vadd.f32 %v12476, %v12800
  %v12875 = vadd.f32 %v12477, %v12802
  %v12876 = vadd.f32 %v12478, %v12805
  %v12877 = vadd.f32 %v12479, %v12807
  %v12878 = vadd.f32 %v12480, %v12810
  %v12879 = vadd.f32 %v12481, %v12812
  %v12880 = vadd.f32 %v12482, %v12815
  %v12881 = vld [vmem:[#allocation2 + $0x148] sm:$0x3]
  %v12882 = vld [vmem:[%s1 + $0x5c] sm:$0xf]
  %v12884 = vunpack.c.l.b16 %v12881
  %v12885 = vpack.c.b16 %v12884, %v11864
  %v12887 = vshrl.u32 %v12487, 16
  %v12889 = vrot.slane %v12887, 1
  %v12890 = vshll.u32 %v12487, 16
  %v12892 = vrot.slane %v12890, 2
  %v12893 = vor.u32 %v12889, %v12892
  %v12894 = vrot.slane %v11910, 1
  %v12895 = vrot.slane %v11906, 2
  %v12896 = vor.u32 %v12894, %v12895
  %v12897 = vsel %vm2728, %v12893, %v12896
  %v12898 = vrot.slane %v11918, 1
  %v12899 = vrot.slane %v11914, 2
  %v12900 = vor.u32 %v12898, %v12899
  %v12901 = vsel %vm2728, %v12896, %v12900
  %v12902 = vrot.slane %v11926, 1
  %v12903 = vrot.slane %v11922, 2
  %v12904 = vor.u32 %v12902, %v12903
  %v12905 = vsel %vm2728, %v12900, %v12904
  %v12906 = vrot.slane %v11934, 1
  %v12907 = vrot.slane %v11930, 2
  %v12908 = vor.u32 %v12906, %v12907
  %v12909 = vsel %vm2728, %v12904, %v12908
  %v12910 = vrot.slane %v11942, 1
  %v12911 = vrot.slane %v11938, 2
  %v12912 = vor.u32 %v12910, %v12911
  %v12913 = vsel %vm2728, %v12908, %v12912
  %v12914 = vrot.slane %v11950, 1
  %v12915 = vrot.slane %v11946, 2
  %v12916 = vor.u32 %v12914, %v12915
  %v12917 = vsel %vm2728, %v12912, %v12916
  %v12918 = vrot.slane %v11958, 1
  %v12919 = vrot.slane %v11954, 2
  %v12920 = vor.u32 %v12918, %v12919
  %v12921 = vsel %vm2728, %v12916, %v12920
  %v12922 = vrot.slane %v11966, 1
  %v12923 = vrot.slane %v11962, 2
  %v12924 = vor.u32 %v12922, %v12923
  %v12925 = vsel %vm2728, %v12920, %v12924
  %v12926 = vrot.slane %v11974, 1
  %v12927 = vrot.slane %v11970, 2
  %v12928 = vor.u32 %v12926, %v12927
  %v12929 = vsel %vm2728, %v12924, %v12928
  %v12930 = vrot.slane %v11982, 1
  %v12931 = vrot.slane %v11978, 2
  %v12932 = vor.u32 %v12930, %v12931
  %v12933 = vsel %vm2728, %v12928, %v12932
  %v12934 = vrot.slane %v11990, 1
  %v12935 = vrot.slane %v11986, 2
  %v12936 = vor.u32 %v12934, %v12935
  %v12937 = vsel %vm2728, %v12932, %v12936
  %v12938 = vrot.slane %v11998, 1
  %v12939 = vrot.slane %v11994, 2
  %v12940 = vor.u32 %v12938, %v12939
  %v12941 = vsel %vm2728, %v12936, %v12940
  %v12942 = vrot.slane %v12006, 1
  %v12943 = vrot.slane %v12002, 2
  %v12944 = vor.u32 %v12942, %v12943
  %v12945 = vsel %vm2728, %v12940, %v12944
  %v12946 = vrot.slane %v12014, 1
  %v12947 = vrot.slane %v12010, 2
  %v12948 = vor.u32 %v12946, %v12947
  %v12949 = vsel %vm2728, %v12944, %v12948
  %v12950 = vrot.slane %v12022, 1
  %v12951 = vrot.slane %v12018, 2
  %v12952 = vor.u32 %v12950, %v12951
  %v12953 = vsel %vm2728, %v12948, %v12952
  %v12954 = vrot.slane %v12030, 1
  %v12955 = vrot.slane %v12026, 2
  %v12956 = vor.u32 %v12954, %v12955
  %v12957 = vsel %vm2728, %v12952, %v12956
  %v12958 = vrot.slane %v12038, 1
  %v12959 = vrot.slane %v12034, 2
  %v12960 = vor.u32 %v12958, %v12959
  %v12961 = vsel %vm2728, %v12956, %v12960
  %v12962 = vrot.slane %v12046, 1
  %v12963 = vrot.slane %v12042, 2
  %v12964 = vor.u32 %v12962, %v12963
  %v12965 = vsel %vm2728, %v12960, %v12964
  %v12966 = vrot.slane %v12054, 1
  %v12967 = vrot.slane %v12050, 2
  %v12968 = vor.u32 %v12966, %v12967
  %v12969 = vsel %vm2728, %v12964, %v12968
  %v12970 = vrot.slane %v12062, 1
  %v12971 = vrot.slane %v12058, 2
  %v12972 = vor.u32 %v12970, %v12971
  %v12973 = vsel %vm2728, %v12968, %v12972
  %v12974 = vrot.slane %v12070, 1
  %v12975 = vrot.slane %v12066, 2
  %v12976 = vor.u32 %v12974, %v12975
  %v12977 = vsel %vm2728, %v12972, %v12976
  %v12978 = vrot.slane %v12078, 1
  %v12979 = vrot.slane %v12074, 2
  %v12980 = vor.u32 %v12978, %v12979
  %v12981 = vsel %vm2728, %v12976, %v12980
  %v12982 = vrot.slane %v12086, 1
  %v12983 = vrot.slane %v12082, 2
  %v12984 = vor.u32 %v12982, %v12983
  %v12985 = vsel %vm2728, %v12980, %v12984
  %v12986 = vrot.slane %v12094, 1
  %v12987 = vrot.slane %v12090, 2
  %v12988 = vor.u32 %v12986, %v12987
  %v12989 = vsel %vm2728, %v12984, %v12988
  %v12990 = vrot.slane %v12102, 1
  %v12991 = vrot.slane %v12098, 2
  %v12992 = vor.u32 %v12990, %v12991
  %v12993 = vsel %vm2728, %v12988, %v12992
  %v12994 = vrot.slane %v12110, 1
  %v12995 = vrot.slane %v12106, 2
  %v12996 = vor.u32 %v12994, %v12995
  %v12997 = vsel %vm2728, %v12992, %v12996
  %v12998 = vrot.slane %v12118, 1
  %v12999 = vrot.slane %v12114, 2
  %v13000 = vor.u32 %v12998, %v12999
  %v13001 = vsel %vm2728, %v12996, %v13000
  %v13002 = vrot.slane %v12126, 1
  %v13003 = vrot.slane %v12122, 2
  %v13004 = vor.u32 %v13002, %v13003
  %v13005 = vsel %vm2728, %v13000, %v13004
  %v13006 = vrot.slane %v12134, 1
  %v13007 = vrot.slane %v12130, 2
  %v13008 = vor.u32 %v13006, %v13007
  %v13009 = vsel %vm2728, %v13004, %v13008
  %v13010 = vrot.slane %v12142, 1
  %v13011 = vrot.slane %v12138, 2
  %v13012 = vor.u32 %v13010, %v13011
  %v13013 = vsel %vm2728, %v13008, %v13012
  %v13015 = vshrl.u32 %v12885, 16
  %v13017 = vrot.slane %v13015, 1
  %v13018 = vshll.u32 %v12885, 16
  %v13020 = vrot.slane %v13018, 2
  %v13021 = vor.u32 %v13017, %v13020
  %v13022 = vsel %vm2728, %v13012, %v13021
  %v13024 = vsel %vm610, %v12897, 0
  %v13027 = vsel %vm610, %v12901, 0
  %v13030 = vsel %vm610, %v12905, 0
  %v13033 = vsel %vm610, %v12909, 0
  %v13036 = vsel %vm610, %v12913, 0
  %v13039 = vsel %vm610, %v12917, 0
  %v13042 = vsel %vm610, %v12921, 0
  %v13045 = vsel %vm610, %v12925, 0
  %v13048 = vsel %vm610, %v12929, 0
  %v13051 = vsel %vm610, %v12933, 0
  %v13054 = vsel %vm610, %v12937, 0
  %v13057 = vsel %vm610, %v12941, 0
  %v13060 = vsel %vm610, %v12945, 0
  %v13063 = vsel %vm610, %v12949, 0
  %v13066 = vsel %vm610, %v12953, 0
  %v13069 = vsel %vm610, %v12957, 0
  %v13072 = vsel %vm610, %v12961, 0
  %v13075 = vsel %vm610, %v12965, 0
  %v13078 = vsel %vm610, %v12969, 0
  %v13081 = vsel %vm610, %v12973, 0
  %v13084 = vsel %vm610, %v12977, 0
  %v13087 = vsel %vm610, %v12981, 0
  %v13090 = vsel %vm610, %v12985, 0
  %v13093 = vsel %vm610, %v12989, 0
  %v13096 = vsel %vm610, %v12993, 0
  %v13099 = vsel %vm610, %v12997, 0
  %v13102 = vsel %vm610, %v13001, 0
  %v13105 = vsel %vm610, %v13005, 0
  %v13108 = vsel %vm610, %v13009, 0
  %v13111 = vsel %vm610, %v13013, 0
  %v13114 = vsel %vm610, %v13022, 0
  %v13117 = vsel %vm610, %v13021, 0
  %v13120 = vsel %vm707, %v12882, 0
  %13122 = vmatpush.bf16.msra.mxu0 0
  %13123 = vmatpush.bf16.msra.mxu0 0
  %13124 = vmatpush.bf16.msra.mxu0 0
  %13125 = vmatpush.bf16.msra.mxu0 0
  %13126 = vmatpush.bf16.msra.mxu0 0
  %13127 = vmatpush.bf16.msra.mxu0 0
  %13128 = vmatpush.bf16.msra.mxu0 0
  %13129 = vmatpush.bf16.msra.mxu0 %v13120
  %13130 = vmatmul.bf16.gmra.mxu0 %v13024
  %v13131 = vpop.f32.mrf.mxu0
  %v13132 = vadd.f32 0.0, %v13131
  %v13133 = vpop.f32.mrf.mxu0
  %v13134 = vadd.f32 0.0, %v13133
  %13135 = vmatmul.bf16.gmra.mxu0 %v13027
  %v13136 = vpop.f32.mrf.mxu0
  %v13137 = vadd.f32 0.0, %v13136
  %v13138 = vpop.f32.mrf.mxu0
  %v13139 = vadd.f32 0.0, %v13138
  %13140 = vmatmul.bf16.gmra.mxu0 %v13030
  %v13141 = vpop.f32.mrf.mxu0
  %v13142 = vadd.f32 0.0, %v13141
  %v13143 = vpop.f32.mrf.mxu0
  %v13144 = vadd.f32 0.0, %v13143
  %13145 = vmatmul.bf16.gmra.mxu0 %v13033
  %v13146 = vpop.f32.mrf.mxu0
  %v13147 = vadd.f32 0.0, %v13146
  %v13148 = vpop.f32.mrf.mxu0
  %v13149 = vadd.f32 0.0, %v13148
  %13150 = vmatmul.bf16.gmra.mxu0 %v13036
  %v13151 = vpop.f32.mrf.mxu0
  %v13152 = vadd.f32 0.0, %v13151
  %v13153 = vpop.f32.mrf.mxu0
  %v13154 = vadd.f32 0.0, %v13153
  %13155 = vmatmul.bf16.gmra.mxu0 %v13039
  %v13156 = vpop.f32.mrf.mxu0
  %v13157 = vadd.f32 0.0, %v13156
  %v13158 = vpop.f32.mrf.mxu0
  %v13159 = vadd.f32 0.0, %v13158
  %13160 = vmatmul.bf16.gmra.mxu0 %v13042
  %v13161 = vpop.f32.mrf.mxu0
  %v13162 = vadd.f32 0.0, %v13161
  %v13163 = vpop.f32.mrf.mxu0
  %v13164 = vadd.f32 0.0, %v13163
  %13165 = vmatmul.bf16.gmra.mxu0 %v13045
  %v13166 = vpop.f32.mrf.mxu0
  %v13167 = vadd.f32 0.0, %v13166
  %v13168 = vpop.f32.mrf.mxu0
  %v13169 = vadd.f32 0.0, %v13168
  %13170 = vmatmul.bf16.gmra.mxu0 %v13048
  %v13171 = vpop.f32.mrf.mxu0
  %v13172 = vadd.f32 0.0, %v13171
  %v13173 = vpop.f32.mrf.mxu0
  %v13174 = vadd.f32 0.0, %v13173
  %13175 = vmatmul.bf16.gmra.mxu0 %v13051
  %v13176 = vpop.f32.mrf.mxu0
  %v13177 = vadd.f32 0.0, %v13176
  %v13178 = vpop.f32.mrf.mxu0
  %v13179 = vadd.f32 0.0, %v13178
  %13180 = vmatmul.bf16.gmra.mxu0 %v13054
  %v13181 = vpop.f32.mrf.mxu0
  %v13182 = vadd.f32 0.0, %v13181
  %v13183 = vpop.f32.mrf.mxu0
  %v13184 = vadd.f32 0.0, %v13183
  %13185 = vmatmul.bf16.gmra.mxu0 %v13057
  %v13186 = vpop.f32.mrf.mxu0
  %v13187 = vadd.f32 0.0, %v13186
  %v13188 = vpop.f32.mrf.mxu0
  %v13189 = vadd.f32 0.0, %v13188
  %13190 = vmatmul.bf16.gmra.mxu0 %v13060
  %v13191 = vpop.f32.mrf.mxu0
  %v13192 = vadd.f32 0.0, %v13191
  %v13193 = vpop.f32.mrf.mxu0
  %v13194 = vadd.f32 0.0, %v13193
  %13195 = vmatmul.bf16.gmra.mxu0 %v13063
  %v13196 = vpop.f32.mrf.mxu0
  %v13197 = vadd.f32 0.0, %v13196
  %v13198 = vpop.f32.mrf.mxu0
  %v13199 = vadd.f32 0.0, %v13198
  %13200 = vmatmul.bf16.gmra.mxu0 %v13066
  %v13201 = vpop.f32.mrf.mxu0
  %v13202 = vadd.f32 0.0, %v13201
  %v13203 = vpop.f32.mrf.mxu0
  %v13204 = vadd.f32 0.0, %v13203
  %13205 = vmatmul.bf16.gmra.mxu0 %v13069
  %v13206 = vpop.f32.mrf.mxu0
  %v13207 = vadd.f32 0.0, %v13206
  %v13208 = vpop.f32.mrf.mxu0
  %v13209 = vadd.f32 0.0, %v13208
  %13210 = vmatmul.bf16.gmra.mxu0 %v13072
  %v13211 = vpop.f32.mrf.mxu0
  %v13212 = vadd.f32 0.0, %v13211
  %v13213 = vpop.f32.mrf.mxu0
  %v13214 = vadd.f32 0.0, %v13213
  %13215 = vmatmul.bf16.gmra.mxu0 %v13075
  %v13216 = vpop.f32.mrf.mxu0
  %v13217 = vadd.f32 0.0, %v13216
  %v13218 = vpop.f32.mrf.mxu0
  %v13219 = vadd.f32 0.0, %v13218
  %13220 = vmatmul.bf16.gmra.mxu0 %v13078
  %v13221 = vpop.f32.mrf.mxu0
  %v13222 = vadd.f32 0.0, %v13221
  %v13223 = vpop.f32.mrf.mxu0
  %v13224 = vadd.f32 0.0, %v13223
  %13225 = vmatmul.bf16.gmra.mxu0 %v13081
  %v13226 = vpop.f32.mrf.mxu0
  %v13227 = vadd.f32 0.0, %v13226
  %v13228 = vpop.f32.mrf.mxu0
  %v13229 = vadd.f32 0.0, %v13228
  %13230 = vmatmul.bf16.gmra.mxu0 %v13084
  %v13231 = vpop.f32.mrf.mxu0
  %v13232 = vadd.f32 0.0, %v13231
  %v13233 = vpop.f32.mrf.mxu0
  %v13234 = vadd.f32 0.0, %v13233
  %13235 = vmatmul.bf16.gmra.mxu0 %v13087
  %v13236 = vpop.f32.mrf.mxu0
  %v13237 = vadd.f32 0.0, %v13236
  %v13238 = vpop.f32.mrf.mxu0
  %v13239 = vadd.f32 0.0, %v13238
  %13240 = vmatmul.bf16.gmra.mxu0 %v13090
  %v13241 = vpop.f32.mrf.mxu0
  %v13242 = vadd.f32 0.0, %v13241
  %v13243 = vpop.f32.mrf.mxu0
  %v13244 = vadd.f32 0.0, %v13243
  %13245 = vmatmul.bf16.gmra.mxu0 %v13093
  %v13246 = vpop.f32.mrf.mxu0
  %v13247 = vadd.f32 0.0, %v13246
  %v13248 = vpop.f32.mrf.mxu0
  %v13249 = vadd.f32 0.0, %v13248
  %13250 = vmatmul.bf16.gmra.mxu0 %v13096
  %v13251 = vpop.f32.mrf.mxu0
  %v13252 = vadd.f32 0.0, %v13251
  %v13253 = vpop.f32.mrf.mxu0
  %v13254 = vadd.f32 0.0, %v13253
  %13255 = vmatmul.bf16.gmra.mxu0 %v13099
  %v13256 = vpop.f32.mrf.mxu0
  %v13257 = vadd.f32 0.0, %v13256
  %v13258 = vpop.f32.mrf.mxu0
  %v13259 = vadd.f32 0.0, %v13258
  %13260 = vmatmul.bf16.gmra.mxu0 %v13102
  %v13261 = vpop.f32.mrf.mxu0
  %v13262 = vadd.f32 0.0, %v13261
  %v13263 = vpop.f32.mrf.mxu0
  %v13264 = vadd.f32 0.0, %v13263
  %13265 = vmatmul.bf16.gmra.mxu0 %v13105
  %v13266 = vpop.f32.mrf.mxu0
  %v13267 = vadd.f32 0.0, %v13266
  %v13268 = vpop.f32.mrf.mxu0
  %v13269 = vadd.f32 0.0, %v13268
  %13270 = vmatmul.bf16.gmra.mxu0 %v13108
  %v13271 = vpop.f32.mrf.mxu0
  %v13272 = vadd.f32 0.0, %v13271
  %v13273 = vpop.f32.mrf.mxu0
  %v13274 = vadd.f32 0.0, %v13273
  %13275 = vmatmul.bf16.gmra.mxu0 %v13111
  %v13276 = vpop.f32.mrf.mxu0
  %v13277 = vadd.f32 0.0, %v13276
  %v13278 = vpop.f32.mrf.mxu0
  %v13279 = vadd.f32 0.0, %v13278
  %13280 = vmatmul.bf16.gmra.mxu0 %v13114
  %v13281 = vpop.f32.mrf.mxu0
  %v13282 = vadd.f32 0.0, %v13281
  %v13283 = vpop.f32.mrf.mxu0
  %v13284 = vadd.f32 0.0, %v13283
  %13285 = vmatmul.bf16.gmra.mxu0 %v13117
  %v13286 = vpop.f32.mrf.mxu0
  %v13287 = vadd.f32 0.0, %v13286
  %v13288 = vpop.f32.mrf.mxu0
  %13289 = vdwg.mxu0
  %v13290 = vadd.f32 %v12818, %v13132
  %v13291 = vadd.f32 %v12819, %v13134
  %v13292 = vadd.f32 %v12820, %v13137
  %v13293 = vadd.f32 %v12821, %v13139
  %v13294 = vadd.f32 %v12822, %v13142
  %v13295 = vadd.f32 %v12823, %v13144
  %v13296 = vadd.f32 %v12824, %v13147
  %v13297 = vadd.f32 %v12825, %v13149
  %v13298 = vadd.f32 %v12826, %v13152
  %v13299 = vadd.f32 %v12827, %v13154
  %v13300 = vadd.f32 %v12828, %v13157
  %v13301 = vadd.f32 %v12829, %v13159
  %v13302 = vadd.f32 %v12830, %v13162
  %v13303 = vadd.f32 %v12831, %v13164
  %v13304 = vadd.f32 %v12832, %v13167
  %v13305 = vadd.f32 %v12833, %v13169
  %v13306 = vadd.f32 %v12834, %v13172
  %v13307 = vadd.f32 %v12835, %v13174
  %v13308 = vadd.f32 %v12836, %v13177
  %v13309 = vadd.f32 %v12837, %v13179
  %v13310 = vadd.f32 %v12838, %v13182
  %v13311 = vadd.f32 %v12839, %v13184
  %v13312 = vadd.f32 %v12840, %v13187
  %v13313 = vadd.f32 %v12841, %v13189
  %v13314 = vadd.f32 %v12842, %v13192
  %v13315 = vadd.f32 %v12843, %v13194
  %v13316 = vadd.f32 %v12844, %v13197
  %v13317 = vadd.f32 %v12845, %v13199
  %v13318 = vadd.f32 %v12846, %v13202
  %v13319 = vadd.f32 %v12847, %v13204
  %v13320 = vadd.f32 %v12848, %v13207
  %v13321 = vadd.f32 %v12849, %v13209
  %v13322 = vadd.f32 %v12850, %v13212
  %v13323 = vadd.f32 %v12851, %v13214
  %v13324 = vadd.f32 %v12852, %v13217
  %v13325 = vadd.f32 %v12853, %v13219
  %v13326 = vadd.f32 %v12854, %v13222
  %v13327 = vadd.f32 %v12855, %v13224
  %v13328 = vadd.f32 %v12856, %v13227
  %v13329 = vadd.f32 %v12857, %v13229
  %v13330 = vadd.f32 %v12858, %v13232
  %v13331 = vadd.f32 %v12859, %v13234
  %v13332 = vadd.f32 %v12860, %v13237
  %v13333 = vadd.f32 %v12861, %v13239
  %v13334 = vadd.f32 %v12862, %v13242
  %v13335 = vadd.f32 %v12863, %v13244
  %v13336 = vadd.f32 %v12864, %v13247
  %v13337 = vadd.f32 %v12865, %v13249
  %v13338 = vadd.f32 %v12866, %v13252
  %v13339 = vadd.f32 %v12867, %v13254
  %v13340 = vadd.f32 %v12868, %v13257
  %v13341 = vadd.f32 %v12869, %v13259
  %v13342 = vadd.f32 %v12870, %v13262
  %v13343 = vadd.f32 %v12871, %v13264
  %v13344 = vadd.f32 %v12872, %v13267
  %v13345 = vadd.f32 %v12873, %v13269
  %v13346 = vadd.f32 %v12874, %v13272
  %v13347 = vadd.f32 %v12875, %v13274
  %v13348 = vadd.f32 %v12876, %v13277
  %v13349 = vadd.f32 %v12877, %v13279
  %v13350 = vadd.f32 %v12878, %v13282
  %v13351 = vadd.f32 %v12879, %v13284
  %v13352 = vadd.f32 %v12880, %v13287
  %v13353 = vld [vmem:[#allocation2 + $0x50] sm:$0xe]
  %v13354 = vld [vmem:[#allocation2 + $0x54] sm:$0xf]
  %v13355 = vld [vmem:[#allocation2 + $0x58] sm:$0xf]
  %v13356 = vld [vmem:[#allocation2 + $0x5c] sm:$0xf]
  %v13357 = vld [vmem:[#allocation2 + $0x60] sm:$0xf]
  %v13358 = vld [vmem:[#allocation2 + $0x64] sm:$0xf]
  %v13359 = vld [vmem:[#allocation2 + $0x68] sm:$0xf]
  %v13360 = vld [vmem:[#allocation2 + $0x6c] sm:$0xf]
  %v13361 = vld [vmem:[#allocation2 + $0x70] sm:$0xf]
  %v13362 = vld [vmem:[#allocation2 + $0x74] sm:$0xf]
  %v13363 = vld [vmem:[#allocation2 + $0x78] sm:$0xf]
  %v13364 = vld [vmem:[#allocation2 + $0x7c] sm:$0xf]
  %v13365 = vld [vmem:[#allocation2 + $0x80] sm:$0xf]
  %v13366 = vld [vmem:[#allocation2 + $0x84] sm:$0xf]
  %v13367 = vld [vmem:[#allocation2 + $0x88] sm:$0xf]
  %v13368 = vld [vmem:[#allocation2 + $0x8c] sm:$0xf]
  %v13369 = vld [vmem:[#allocation2 + $0x90] sm:$0xf]
  %v13370 = vld [vmem:[#allocation2 + $0x94] sm:$0xf]
  %v13371 = vld [vmem:[#allocation2 + $0x98] sm:$0xf]
  %v13372 = vld [vmem:[#allocation2 + $0x9c] sm:$0xf]
  %v13373 = vld [vmem:[#allocation2 + $0xa0] sm:$0xf]
  %v13374 = vld [vmem:[#allocation2 + $0xa4] sm:$0xf]
  %v13375 = vld [vmem:[#allocation2 + $0xa8] sm:$0xf]
  %v13376 = vld [vmem:[#allocation2 + $0xac] sm:$0xf]
  %v13377 = vld [vmem:[#allocation2 + $0xb0] sm:$0xf]
  %v13378 = vld [vmem:[#allocation2 + $0xb4] sm:$0xf]
  %v13379 = vld [vmem:[#allocation2 + $0xb8] sm:$0xf]
  %v13380 = vld [vmem:[#allocation2 + $0xbc] sm:$0xf]
  %v13381 = vld [vmem:[#allocation2 + $0xc0] sm:$0xf]
  %v13382 = vld [vmem:[#allocation2 + $0xc4] sm:$0xf]
  %v13383 = vld [vmem:[#allocation2 + $0xc8] sm:$0xf]
  %v13384 = vld [vmem:[#allocation2 + $0xcc] sm:$0xf]
  %v13385 = vld [vmem:[#allocation2 + $0xd0] sm:$0xf]
  %v13386 = vld [vmem:[#allocation2 + $0xd4] sm:$0xf]
  %v13387 = vld [vmem:[#allocation2 + $0xd8] sm:$0xf]
  %v13388 = vld [vmem:[#allocation2 + $0xdc] sm:$0xf]
  %v13389 = vld [vmem:[#allocation2 + $0xe0] sm:$0xf]
  %v13390 = vld [vmem:[#allocation2 + $0xe4] sm:$0xf]
  %v13391 = vld [vmem:[#allocation2 + $0xe8] sm:$0xf]
  %v13392 = vld [vmem:[#allocation2 + $0xec] sm:$0xf]
  %v13393 = vld [vmem:[#allocation2 + $0xf0] sm:$0xf]
  %v13394 = vld [vmem:[#allocation2 + $0xf4] sm:$0xf]
  %v13395 = vld [vmem:[#allocation2 + $0xf8] sm:$0xf]
  %v13396 = vld [vmem:[#allocation2 + $0xfc] sm:$0xf]
  %v13397 = vld [vmem:[#allocation2 + $0x100] sm:$0xf]
  %v13398 = vld [vmem:[#allocation2 + $0x104] sm:$0xf]
  %v13399 = vld [vmem:[#allocation2 + $0x108] sm:$0xf]
  %v13400 = vld [vmem:[#allocation2 + $0x10c] sm:$0xf]
  %v13401 = vld [vmem:[#allocation2 + $0x110] sm:$0xf]
  %v13402 = vld [vmem:[#allocation2 + $0x114] sm:$0xf]
  %v13403 = vld [vmem:[#allocation2 + $0x118] sm:$0xf]
  %v13404 = vld [vmem:[#allocation2 + $0x11c] sm:$0xf]
  %v13405 = vld [vmem:[#allocation2 + $0x120] sm:$0xf]
  %v13406 = vld [vmem:[#allocation2 + $0x124] sm:$0xf]
  %v13407 = vld [vmem:[#allocation2 + $0x128] sm:$0xf]
  %v13408 = vld [vmem:[#allocation2 + $0x12c] sm:$0xf]
  %v13409 = vld [vmem:[#allocation2 + $0x130] sm:$0xf]
  %v13410 = vld [vmem:[#allocation2 + $0x134] sm:$0xf]
  %v13411 = vld [vmem:[#allocation2 + $0x138] sm:$0xf]
  %v13412 = vld [vmem:[#allocation2 + $0x13c] sm:$0xf]
  %v13413 = vld [vmem:[#allocation2 + $0x140] sm:$0xf]
  %v13414 = vld [vmem:[#allocation2 + $0x144] sm:$0xf]
  %v13415 = vld [vmem:[#allocation2 + $0x148] sm:$0xf]
  %v13416 = vld [vmem:[#allocation2 + $0x14c] sm:$0x1]
  %v13417 = vld [vmem:[%s1 + $0x60] sm:$0xf]
  %v13482 = vunpack.c.l.b16 %v13353
  %v13483 = vunpack.c.l.b16 %v13354
  %v13484 = vunpack.c.l.b16 %v13355
  %v13485 = vunpack.c.l.b16 %v13356
  %v13486 = vunpack.c.l.b16 %v13357
  %v13487 = vunpack.c.l.b16 %v13358
  %v13488 = vunpack.c.l.b16 %v13359
  %v13489 = vunpack.c.l.b16 %v13360
  %v13490 = vunpack.c.l.b16 %v13361
  %v13491 = vunpack.c.l.b16 %v13362
  %v13492 = vunpack.c.l.b16 %v13363
  %v13493 = vunpack.c.l.b16 %v13364
  %v13494 = vunpack.c.l.b16 %v13365
  %v13495 = vunpack.c.l.b16 %v13366
  %v13496 = vunpack.c.l.b16 %v13367
  %v13497 = vunpack.c.l.b16 %v13368
  %v13498 = vunpack.c.l.b16 %v13369
  %v13499 = vunpack.c.l.b16 %v13370
  %v13500 = vunpack.c.l.b16 %v13371
  %v13501 = vunpack.c.l.b16 %v13372
  %v13502 = vunpack.c.l.b16 %v13373
  %v13503 = vunpack.c.l.b16 %v13374
  %v13504 = vunpack.c.l.b16 %v13375
  %v13505 = vunpack.c.l.b16 %v13376
  %v13506 = vunpack.c.l.b16 %v13377
  %v13507 = vunpack.c.l.b16 %v13378
  %v13508 = vunpack.c.l.b16 %v13379
  %v13509 = vunpack.c.l.b16 %v13380
  %v13510 = vunpack.c.l.b16 %v13381
  %v13511 = vunpack.c.l.b16 %v13382
  %v13512 = vunpack.c.l.b16 %v13383
  %v13513 = vunpack.c.l.b16 %v13384
  %v13514 = vunpack.c.l.b16 %v13385
  %v13515 = vunpack.c.l.b16 %v13386
  %v13516 = vunpack.c.l.b16 %v13387
  %v13517 = vunpack.c.l.b16 %v13388
  %v13518 = vunpack.c.l.b16 %v13389
  %v13519 = vunpack.c.l.b16 %v13390
  %v13520 = vunpack.c.l.b16 %v13391
  %v13521 = vunpack.c.l.b16 %v13392
  %v13522 = vunpack.c.l.b16 %v13393
  %v13523 = vunpack.c.l.b16 %v13394
  %v13524 = vunpack.c.l.b16 %v13395
  %v13525 = vunpack.c.l.b16 %v13396
  %v13526 = vunpack.c.l.b16 %v13397
  %v13527 = vunpack.c.l.b16 %v13398
  %v13528 = vunpack.c.l.b16 %v13399
  %v13529 = vunpack.c.l.b16 %v13400
  %v13530 = vunpack.c.l.b16 %v13401
  %v13531 = vunpack.c.l.b16 %v13402
  %v13532 = vunpack.c.l.b16 %v13403
  %v13533 = vunpack.c.l.b16 %v13404
  %v13534 = vunpack.c.l.b16 %v13405
  %v13535 = vunpack.c.l.b16 %v13406
  %v13536 = vunpack.c.l.b16 %v13407
  %v13537 = vunpack.c.l.b16 %v13408
  %v13538 = vunpack.c.l.b16 %v13409
  %v13539 = vunpack.c.l.b16 %v13410
  %v13540 = vunpack.c.l.b16 %v13411
  %v13541 = vunpack.c.l.b16 %v13412
  %v13542 = vunpack.c.l.b16 %v13413
  %v13543 = vunpack.c.l.b16 %v13414
  %v13544 = vunpack.c.l.b16 %v13415
  %v13545 = vunpack.c.l.b16 %v13416
  %v13546 = vpack.c.b16 %v13483, %v13482
  %v13547 = vpack.c.b16 %v13485, %v13484
  %v13548 = vpack.c.b16 %v13487, %v13486
  %v13549 = vpack.c.b16 %v13489, %v13488
  %v13550 = vpack.c.b16 %v13491, %v13490
  %v13551 = vpack.c.b16 %v13493, %v13492
  %v13552 = vpack.c.b16 %v13495, %v13494
  %v13553 = vpack.c.b16 %v13497, %v13496
  %v13554 = vpack.c.b16 %v13499, %v13498
  %v13555 = vpack.c.b16 %v13501, %v13500
  %v13556 = vpack.c.b16 %v13503, %v13502
  %v13557 = vpack.c.b16 %v13505, %v13504
  %v13558 = vpack.c.b16 %v13507, %v13506
  %v13559 = vpack.c.b16 %v13509, %v13508
  %v13560 = vpack.c.b16 %v13511, %v13510
  %v13561 = vpack.c.b16 %v13513, %v13512
  %v13562 = vpack.c.b16 %v13515, %v13514
  %v13563 = vpack.c.b16 %v13517, %v13516
  %v13564 = vpack.c.b16 %v13519, %v13518
  %v13565 = vpack.c.b16 %v13521, %v13520
  %v13566 = vpack.c.b16 %v13523, %v13522
  %v13567 = vpack.c.b16 %v13525, %v13524
  %v13568 = vpack.c.b16 %v13527, %v13526
  %v13569 = vpack.c.b16 %v13529, %v13528
  %v13570 = vpack.c.b16 %v13531, %v13530
  %v13571 = vpack.c.b16 %v13533, %v13532
  %v13572 = vpack.c.b16 %v13535, %v13534
  %v13573 = vpack.c.b16 %v13537, %v13536
  %v13574 = vpack.c.b16 %v13539, %v13538
  %v13575 = vpack.c.b16 %v13541, %v13540
  %v13576 = vpack.c.b16 %v13543, %v13542
  %v13577 = vpack.c.b16 %v13545, %v13544
  %v13578 = vrot.slane %v13546, 1
  %v13579 = vrot.slane %v13547, 1
  %v13580 = vsel %vm1121, %v13578, %v13579
  %v13581 = vrot.slane %v13548, 1
  %v13582 = vsel %vm1121, %v13579, %v13581
  %v13583 = vrot.slane %v13549, 1
  %v13584 = vsel %vm1121, %v13581, %v13583
  %v13585 = vrot.slane %v13550, 1
  %v13586 = vsel %vm1121, %v13583, %v13585
  %v13587 = vrot.slane %v13551, 1
  %v13588 = vsel %vm1121, %v13585, %v13587
  %v13589 = vrot.slane %v13552, 1
  %v13590 = vsel %vm1121, %v13587, %v13589
  %v13591 = vrot.slane %v13553, 1
  %v13592 = vsel %vm1121, %v13589, %v13591
  %v13593 = vrot.slane %v13554, 1
  %v13594 = vsel %vm1121, %v13591, %v13593
  %v13595 = vrot.slane %v13555, 1
  %v13596 = vsel %vm1121, %v13593, %v13595
  %v13597 = vrot.slane %v13556, 1
  %v13598 = vsel %vm1121, %v13595, %v13597
  %v13599 = vrot.slane %v13557, 1
  %v13600 = vsel %vm1121, %v13597, %v13599
  %v13601 = vrot.slane %v13558, 1
  %v13602 = vsel %vm1121, %v13599, %v13601
  %v13603 = vrot.slane %v13559, 1
  %v13604 = vsel %vm1121, %v13601, %v13603
  %v13605 = vrot.slane %v13560, 1
  %v13606 = vsel %vm1121, %v13603, %v13605
  %v13607 = vrot.slane %v13561, 1
  %v13608 = vsel %vm1121, %v13605, %v13607
  %v13609 = vrot.slane %v13562, 1
  %v13610 = vsel %vm1121, %v13607, %v13609
  %v13611 = vrot.slane %v13563, 1
  %v13612 = vsel %vm1121, %v13609, %v13611
  %v13613 = vrot.slane %v13564, 1
  %v13614 = vsel %vm1121, %v13611, %v13613
  %v13615 = vrot.slane %v13565, 1
  %v13616 = vsel %vm1121, %v13613, %v13615
  %v13617 = vrot.slane %v13566, 1
  %v13618 = vsel %vm1121, %v13615, %v13617
  %v13619 = vrot.slane %v13567, 1
  %v13620 = vsel %vm1121, %v13617, %v13619
  %v13621 = vrot.slane %v13568, 1
  %v13622 = vsel %vm1121, %v13619, %v13621
  %v13623 = vrot.slane %v13569, 1
  %v13624 = vsel %vm1121, %v13621, %v13623
  %v13625 = vrot.slane %v13570, 1
  %v13626 = vsel %vm1121, %v13623, %v13625
  %v13627 = vrot.slane %v13571, 1
  %v13628 = vsel %vm1121, %v13625, %v13627
  %v13629 = vrot.slane %v13572, 1
  %v13630 = vsel %vm1121, %v13627, %v13629
  %v13631 = vrot.slane %v13573, 1
  %v13632 = vsel %vm1121, %v13629, %v13631
  %v13633 = vrot.slane %v13574, 1
  %v13634 = vsel %vm1121, %v13631, %v13633
  %v13635 = vrot.slane %v13575, 1
  %v13636 = vsel %vm1121, %v13633, %v13635
  %v13637 = vrot.slane %v13576, 1
  %v13638 = vsel %vm1121, %v13635, %v13637
  %v13639 = vrot.slane %v13577, 1
  %v13640 = vsel %vm1121, %v13637, %v13639
  %v13642 = vsel %vm610, %v13580, 0
  %v13645 = vsel %vm610, %v13582, 0
  %v13648 = vsel %vm610, %v13584, 0
  %v13651 = vsel %vm610, %v13586, 0
  %v13654 = vsel %vm610, %v13588, 0
  %v13657 = vsel %vm610, %v13590, 0
  %v13660 = vsel %vm610, %v13592, 0
  %v13663 = vsel %vm610, %v13594, 0
  %v13666 = vsel %vm610, %v13596, 0
  %v13669 = vsel %vm610, %v13598, 0
  %v13672 = vsel %vm610, %v13600, 0
  %v13675 = vsel %vm610, %v13602, 0
  %v13678 = vsel %vm610, %v13604, 0
  %v13681 = vsel %vm610, %v13606, 0
  %v13684 = vsel %vm610, %v13608, 0
  %v13687 = vsel %vm610, %v13610, 0
  %v13690 = vsel %vm610, %v13612, 0
  %v13693 = vsel %vm610, %v13614, 0
  %v13696 = vsel %vm610, %v13616, 0
  %v13699 = vsel %vm610, %v13618, 0
  %v13702 = vsel %vm610, %v13620, 0
  %v13705 = vsel %vm610, %v13622, 0
  %v13708 = vsel %vm610, %v13624, 0
  %v13711 = vsel %vm610, %v13626, 0
  %v13714 = vsel %vm610, %v13628, 0
  %v13717 = vsel %vm610, %v13630, 0
  %v13720 = vsel %vm610, %v13632, 0
  %v13723 = vsel %vm610, %v13634, 0
  %v13726 = vsel %vm610, %v13636, 0
  %v13729 = vsel %vm610, %v13638, 0
  %v13732 = vsel %vm610, %v13640, 0
  %v13735 = vsel %vm610, %v13639, 0
  %v13738 = vsel %vm707, %v13417, 0
  %13740 = vmatpush.bf16.msra.mxu0 0
  %13741 = vmatpush.bf16.msra.mxu0 0
  %13742 = vmatpush.bf16.msra.mxu0 0
  %13743 = vmatpush.bf16.msra.mxu0 0
  %13744 = vmatpush.bf16.msra.mxu0 0
  %13745 = vmatpush.bf16.msra.mxu0 0
  %13746 = vmatpush.bf16.msra.mxu0 0
  %13747 = vmatpush.bf16.msra.mxu0 %v13738
  %13748 = vmatmul.bf16.gmra.mxu0 %v13642
  %v13749 = vpop.f32.mrf.mxu0
  %v13750 = vadd.f32 0.0, %v13749
  %v13751 = vpop.f32.mrf.mxu0
  %v13752 = vadd.f32 0.0, %v13751
  %13753 = vmatmul.bf16.gmra.mxu0 %v13645
  %v13754 = vpop.f32.mrf.mxu0
  %v13755 = vadd.f32 0.0, %v13754
  %v13756 = vpop.f32.mrf.mxu0
  %v13757 = vadd.f32 0.0, %v13756
  %13758 = vmatmul.bf16.gmra.mxu0 %v13648
  %v13759 = vpop.f32.mrf.mxu0
  %v13760 = vadd.f32 0.0, %v13759
  %v13761 = vpop.f32.mrf.mxu0
  %v13762 = vadd.f32 0.0, %v13761
  %13763 = vmatmul.bf16.gmra.mxu0 %v13651
  %v13764 = vpop.f32.mrf.mxu0
  %v13765 = vadd.f32 0.0, %v13764
  %v13766 = vpop.f32.mrf.mxu0
  %v13767 = vadd.f32 0.0, %v13766
  %13768 = vmatmul.bf16.gmra.mxu0 %v13654
  %v13769 = vpop.f32.mrf.mxu0
  %v13770 = vadd.f32 0.0, %v13769
  %v13771 = vpop.f32.mrf.mxu0
  %v13772 = vadd.f32 0.0, %v13771
  %13773 = vmatmul.bf16.gmra.mxu0 %v13657
  %v13774 = vpop.f32.mrf.mxu0
  %v13775 = vadd.f32 0.0, %v13774
  %v13776 = vpop.f32.mrf.mxu0
  %v13777 = vadd.f32 0.0, %v13776
  %13778 = vmatmul.bf16.gmra.mxu0 %v13660
  %v13779 = vpop.f32.mrf.mxu0
  %v13780 = vadd.f32 0.0, %v13779
  %v13781 = vpop.f32.mrf.mxu0
  %v13782 = vadd.f32 0.0, %v13781
  %13783 = vmatmul.bf16.gmra.mxu0 %v13663
  %v13784 = vpop.f32.mrf.mxu0
  %v13785 = vadd.f32 0.0, %v13784
  %v13786 = vpop.f32.mrf.mxu0
  %v13787 = vadd.f32 0.0, %v13786
  %13788 = vmatmul.bf16.gmra.mxu0 %v13666
  %v13789 = vpop.f32.mrf.mxu0
  %v13790 = vadd.f32 0.0, %v13789
  %v13791 = vpop.f32.mrf.mxu0
  %v13792 = vadd.f32 0.0, %v13791
  %13793 = vmatmul.bf16.gmra.mxu0 %v13669
  %v13794 = vpop.f32.mrf.mxu0
  %v13795 = vadd.f32 0.0, %v13794
  %v13796 = vpop.f32.mrf.mxu0
  %v13797 = vadd.f32 0.0, %v13796
  %13798 = vmatmul.bf16.gmra.mxu0 %v13672
  %v13799 = vpop.f32.mrf.mxu0
  %v13800 = vadd.f32 0.0, %v13799
  %v13801 = vpop.f32.mrf.mxu0
  %v13802 = vadd.f32 0.0, %v13801
  %13803 = vmatmul.bf16.gmra.mxu0 %v13675
  %v13804 = vpop.f32.mrf.mxu0
  %v13805 = vadd.f32 0.0, %v13804
  %v13806 = vpop.f32.mrf.mxu0
  %v13807 = vadd.f32 0.0, %v13806
  %13808 = vmatmul.bf16.gmra.mxu0 %v13678
  %v13809 = vpop.f32.mrf.mxu0
  %v13810 = vadd.f32 0.0, %v13809
  %v13811 = vpop.f32.mrf.mxu0
  %v13812 = vadd.f32 0.0, %v13811
  %13813 = vmatmul.bf16.gmra.mxu0 %v13681
  %v13814 = vpop.f32.mrf.mxu0
  %v13815 = vadd.f32 0.0, %v13814
  %v13816 = vpop.f32.mrf.mxu0
  %v13817 = vadd.f32 0.0, %v13816
  %13818 = vmatmul.bf16.gmra.mxu0 %v13684
  %v13819 = vpop.f32.mrf.mxu0
  %v13820 = vadd.f32 0.0, %v13819
  %v13821 = vpop.f32.mrf.mxu0
  %v13822 = vadd.f32 0.0, %v13821
  %13823 = vmatmul.bf16.gmra.mxu0 %v13687
  %v13824 = vpop.f32.mrf.mxu0
  %v13825 = vadd.f32 0.0, %v13824
  %v13826 = vpop.f32.mrf.mxu0
  %v13827 = vadd.f32 0.0, %v13826
  %13828 = vmatmul.bf16.gmra.mxu0 %v13690
  %v13829 = vpop.f32.mrf.mxu0
  %v13830 = vadd.f32 0.0, %v13829
  %v13831 = vpop.f32.mrf.mxu0
  %v13832 = vadd.f32 0.0, %v13831
  %13833 = vmatmul.bf16.gmra.mxu0 %v13693
  %v13834 = vpop.f32.mrf.mxu0
  %v13835 = vadd.f32 0.0, %v13834
  %v13836 = vpop.f32.mrf.mxu0
  %v13837 = vadd.f32 0.0, %v13836
  %13838 = vmatmul.bf16.gmra.mxu0 %v13696
  %v13839 = vpop.f32.mrf.mxu0
  %v13840 = vadd.f32 0.0, %v13839
  %v13841 = vpop.f32.mrf.mxu0
  %v13842 = vadd.f32 0.0, %v13841
  %13843 = vmatmul.bf16.gmra.mxu0 %v13699
  %v13844 = vpop.f32.mrf.mxu0
  %v13845 = vadd.f32 0.0, %v13844
  %v13846 = vpop.f32.mrf.mxu0
  %v13847 = vadd.f32 0.0, %v13846
  %13848 = vmatmul.bf16.gmra.mxu0 %v13702
  %v13849 = vpop.f32.mrf.mxu0
  %v13850 = vadd.f32 0.0, %v13849
  %v13851 = vpop.f32.mrf.mxu0
  %v13852 = vadd.f32 0.0, %v13851
  %13853 = vmatmul.bf16.gmra.mxu0 %v13705
  %v13854 = vpop.f32.mrf.mxu0
  %v13855 = vadd.f32 0.0, %v13854
  %v13856 = vpop.f32.mrf.mxu0
  %v13857 = vadd.f32 0.0, %v13856
  %13858 = vmatmul.bf16.gmra.mxu0 %v13708
  %v13859 = vpop.f32.mrf.mxu0
  %v13860 = vadd.f32 0.0, %v13859
  %v13861 = vpop.f32.mrf.mxu0
  %v13862 = vadd.f32 0.0, %v13861
  %13863 = vmatmul.bf16.gmra.mxu0 %v13711
  %v13864 = vpop.f32.mrf.mxu0
  %v13865 = vadd.f32 0.0, %v13864
  %v13866 = vpop.f32.mrf.mxu0
  %v13867 = vadd.f32 0.0, %v13866
  %13868 = vmatmul.bf16.gmra.mxu0 %v13714
  %v13869 = vpop.f32.mrf.mxu0
  %v13870 = vadd.f32 0.0, %v13869
  %v13871 = vpop.f32.mrf.mxu0
  %v13872 = vadd.f32 0.0, %v13871
  %13873 = vmatmul.bf16.gmra.mxu0 %v13717
  %v13874 = vpop.f32.mrf.mxu0
  %v13875 = vadd.f32 0.0, %v13874
  %v13876 = vpop.f32.mrf.mxu0
  %v13877 = vadd.f32 0.0, %v13876
  %13878 = vmatmul.bf16.gmra.mxu0 %v13720
  %v13879 = vpop.f32.mrf.mxu0
  %v13880 = vadd.f32 0.0, %v13879
  %v13881 = vpop.f32.mrf.mxu0
  %v13882 = vadd.f32 0.0, %v13881
  %13883 = vmatmul.bf16.gmra.mxu0 %v13723
  %v13884 = vpop.f32.mrf.mxu0
  %v13885 = vadd.f32 0.0, %v13884
  %v13886 = vpop.f32.mrf.mxu0
  %v13887 = vadd.f32 0.0, %v13886
  %13888 = vmatmul.bf16.gmra.mxu0 %v13726
  %v13889 = vpop.f32.mrf.mxu0
  %v13890 = vadd.f32 0.0, %v13889
  %v13891 = vpop.f32.mrf.mxu0
  %v13892 = vadd.f32 0.0, %v13891
  %13893 = vmatmul.bf16.gmra.mxu0 %v13729
  %v13894 = vpop.f32.mrf.mxu0
  %v13895 = vadd.f32 0.0, %v13894
  %v13896 = vpop.f32.mrf.mxu0
  %v13897 = vadd.f32 0.0, %v13896
  %13898 = vmatmul.bf16.gmra.mxu0 %v13732
  %v13899 = vpop.f32.mrf.mxu0
  %v13900 = vadd.f32 0.0, %v13899
  %v13901 = vpop.f32.mrf.mxu0
  %v13902 = vadd.f32 0.0, %v13901
  %13903 = vmatmul.bf16.gmra.mxu0 %v13735
  %v13904 = vpop.f32.mrf.mxu0
  %v13905 = vadd.f32 0.0, %v13904
  %v13906 = vpop.f32.mrf.mxu0
  %13907 = vdwg.mxu0
  %v13908 = vadd.f32 %v13290, %v13750
  %v13909 = vadd.f32 %v13291, %v13752
  %v13910 = vadd.f32 %v13292, %v13755
  %v13911 = vadd.f32 %v13293, %v13757
  %v13912 = vadd.f32 %v13294, %v13760
  %v13913 = vadd.f32 %v13295, %v13762
  %v13914 = vadd.f32 %v13296, %v13765
  %v13915 = vadd.f32 %v13297, %v13767
  %v13916 = vadd.f32 %v13298, %v13770
  %v13917 = vadd.f32 %v13299, %v13772
  %v13918 = vadd.f32 %v13300, %v13775
  %v13919 = vadd.f32 %v13301, %v13777
  %v13920 = vadd.f32 %v13302, %v13780
  %v13921 = vadd.f32 %v13303, %v13782
  %v13922 = vadd.f32 %v13304, %v13785
  %v13923 = vadd.f32 %v13305, %v13787
  %v13924 = vadd.f32 %v13306, %v13790
  %v13925 = vadd.f32 %v13307, %v13792
  %v13926 = vadd.f32 %v13308, %v13795
  %v13927 = vadd.f32 %v13309, %v13797
  %v13928 = vadd.f32 %v13310, %v13800
  %v13929 = vadd.f32 %v13311, %v13802
  %v13930 = vadd.f32 %v13312, %v13805
  %v13931 = vadd.f32 %v13313, %v13807
  %v13932 = vadd.f32 %v13314, %v13810
  %v13933 = vadd.f32 %v13315, %v13812
  %v13934 = vadd.f32 %v13316, %v13815
  %v13935 = vadd.f32 %v13317, %v13817
  %v13936 = vadd.f32 %v13318, %v13820
  %v13937 = vadd.f32 %v13319, %v13822
  %v13938 = vadd.f32 %v13320, %v13825
  %v13939 = vadd.f32 %v13321, %v13827
  %v13940 = vadd.f32 %v13322, %v13830
  %v13941 = vadd.f32 %v13323, %v13832
  %v13942 = vadd.f32 %v13324, %v13835
  %v13943 = vadd.f32 %v13325, %v13837
  %v13944 = vadd.f32 %v13326, %v13840
  %v13945 = vadd.f32 %v13327, %v13842
  %v13946 = vadd.f32 %v13328, %v13845
  %v13947 = vadd.f32 %v13329, %v13847
  %v13948 = vadd.f32 %v13330, %v13850
  %v13949 = vadd.f32 %v13331, %v13852
  %v13950 = vadd.f32 %v13332, %v13855
  %v13951 = vadd.f32 %v13333, %v13857
  %v13952 = vadd.f32 %v13334, %v13860
  %v13953 = vadd.f32 %v13335, %v13862
  %v13954 = vadd.f32 %v13336, %v13865
  %v13955 = vadd.f32 %v13337, %v13867
  %v13956 = vadd.f32 %v13338, %v13870
  %v13957 = vadd.f32 %v13339, %v13872
  %v13958 = vadd.f32 %v13340, %v13875
  %v13959 = vadd.f32 %v13341, %v13877
  %v13960 = vadd.f32 %v13342, %v13880
  %v13961 = vadd.f32 %v13343, %v13882
  %v13962 = vadd.f32 %v13344, %v13885
  %v13963 = vadd.f32 %v13345, %v13887
  %v13964 = vadd.f32 %v13346, %v13890
  %v13965 = vadd.f32 %v13347, %v13892
  %v13966 = vadd.f32 %v13348, %v13895
  %v13967 = vadd.f32 %v13349, %v13897
  %v13968 = vadd.f32 %v13350, %v13900
  %v13969 = vadd.f32 %v13351, %v13902
  %v13970 = vadd.f32 %v13352, %v13905
  %v13971 = vld [vmem:[#allocation2 + $0x14c] sm:$0x3]
  %v13972 = vld [vmem:[%s1 + $0x64] sm:$0xf]
  %v13974 = vunpack.c.l.b16 %v13971
  %v13975 = vpack.c.b16 %v13974, %v13544
  %v13977 = vshrl.u32 %v13546, 16
  %v13979 = vrot.slane %v13977, 1
  %v13980 = vshll.u32 %v13546, 16
  %v13982 = vrot.slane %v13980, 2
  %v13983 = vor.u32 %v13979, %v13982
  %v13985 = vshrl.u32 %v13547, 16
  %v13987 = vrot.slane %v13985, 1
  %v13988 = vshll.u32 %v13547, 16
  %v13990 = vrot.slane %v13988, 2
  %v13991 = vor.u32 %v13987, %v13990
  %v13992 = vsel %vm2728, %v13983, %v13991
  %v13994 = vshrl.u32 %v13548, 16
  %v13996 = vrot.slane %v13994, 1
  %v13997 = vshll.u32 %v13548, 16
  %v13999 = vrot.slane %v13997, 2
  %v14000 = vor.u32 %v13996, %v13999
  %v14001 = vsel %vm2728, %v13991, %v14000
  %v14003 = vshrl.u32 %v13549, 16
  %v14005 = vrot.slane %v14003, 1
  %v14006 = vshll.u32 %v13549, 16
  %v14008 = vrot.slane %v14006, 2
  %v14009 = vor.u32 %v14005, %v14008
  %v14010 = vsel %vm2728, %v14000, %v14009
  %v14012 = vshrl.u32 %v13550, 16
  %v14014 = vrot.slane %v14012, 1
  %v14015 = vshll.u32 %v13550, 16
  %v14017 = vrot.slane %v14015, 2
  %v14018 = vor.u32 %v14014, %v14017
  %v14019 = vsel %vm2728, %v14009, %v14018
  %v14021 = vshrl.u32 %v13551, 16
  %v14023 = vrot.slane %v14021, 1
  %v14024 = vshll.u32 %v13551, 16
  %v14026 = vrot.slane %v14024, 2
  %v14027 = vor.u32 %v14023, %v14026
  %v14028 = vsel %vm2728, %v14018, %v14027
  %v14030 = vshrl.u32 %v13552, 16
  %v14032 = vrot.slane %v14030, 1
  %v14033 = vshll.u32 %v13552, 16
  %v14035 = vrot.slane %v14033, 2
  %v14036 = vor.u32 %v14032, %v14035
  %v14037 = vsel %vm2728, %v14027, %v14036
  %v14039 = vshrl.u32 %v13553, 16
  %v14041 = vrot.slane %v14039, 1
  %v14042 = vshll.u32 %v13553, 16
  %v14044 = vrot.slane %v14042, 2
  %v14045 = vor.u32 %v14041, %v14044
  %v14046 = vsel %vm2728, %v14036, %v14045
  %v14048 = vshrl.u32 %v13554, 16
  %v14050 = vrot.slane %v14048, 1
  %v14051 = vshll.u32 %v13554, 16
  %v14053 = vrot.slane %v14051, 2
  %v14054 = vor.u32 %v14050, %v14053
  %v14055 = vsel %vm2728, %v14045, %v14054
  %v14057 = vshrl.u32 %v13555, 16
  %v14059 = vrot.slane %v14057, 1
  %v14060 = vshll.u32 %v13555, 16
  %v14062 = vrot.slane %v14060, 2
  %v14063 = vor.u32 %v14059, %v14062
  %v14064 = vsel %vm2728, %v14054, %v14063
  %v14066 = vshrl.u32 %v13556, 16
  %v14068 = vrot.slane %v14066, 1
  %v14069 = vshll.u32 %v13556, 16
  %v14071 = vrot.slane %v14069, 2
  %v14072 = vor.u32 %v14068, %v14071
  %v14073 = vsel %vm2728, %v14063, %v14072
  %v14075 = vshrl.u32 %v13557, 16
  %v14077 = vrot.slane %v14075, 1
  %v14078 = vshll.u32 %v13557, 16
  %v14080 = vrot.slane %v14078, 2
  %v14081 = vor.u32 %v14077, %v14080
  %v14082 = vsel %vm2728, %v14072, %v14081
  %v14084 = vshrl.u32 %v13558, 16
  %v14086 = vrot.slane %v14084, 1
  %v14087 = vshll.u32 %v13558, 16
  %v14089 = vrot.slane %v14087, 2
  %v14090 = vor.u32 %v14086, %v14089
  %v14091 = vsel %vm2728, %v14081, %v14090
  %v14093 = vshrl.u32 %v13559, 16
  %v14095 = vrot.slane %v14093, 1
  %v14096 = vshll.u32 %v13559, 16
  %v14098 = vrot.slane %v14096, 2
  %v14099 = vor.u32 %v14095, %v14098
  %v14100 = vsel %vm2728, %v14090, %v14099
  %v14102 = vshrl.u32 %v13560, 16
  %v14104 = vrot.slane %v14102, 1
  %v14105 = vshll.u32 %v13560, 16
  %v14107 = vrot.slane %v14105, 2
  %v14108 = vor.u32 %v14104, %v14107
  %v14109 = vsel %vm2728, %v14099, %v14108
  %v14111 = vshrl.u32 %v13561, 16
  %v14113 = vrot.slane %v14111, 1
  %v14114 = vshll.u32 %v13561, 16
  %v14116 = vrot.slane %v14114, 2
  %v14117 = vor.u32 %v14113, %v14116
  %v14118 = vsel %vm2728, %v14108, %v14117
  %v14120 = vshrl.u32 %v13562, 16
  %v14122 = vrot.slane %v14120, 1
  %v14123 = vshll.u32 %v13562, 16
  %v14125 = vrot.slane %v14123, 2
  %v14126 = vor.u32 %v14122, %v14125
  %v14127 = vsel %vm2728, %v14117, %v14126
  %v14129 = vshrl.u32 %v13563, 16
  %v14131 = vrot.slane %v14129, 1
  %v14132 = vshll.u32 %v13563, 16
  %v14134 = vrot.slane %v14132, 2
  %v14135 = vor.u32 %v14131, %v14134
  %v14136 = vsel %vm2728, %v14126, %v14135
  %v14138 = vshrl.u32 %v13564, 16
  %v14140 = vrot.slane %v14138, 1
  %v14141 = vshll.u32 %v13564, 16
  %v14143 = vrot.slane %v14141, 2
  %v14144 = vor.u32 %v14140, %v14143
  %v14145 = vsel %vm2728, %v14135, %v14144
  %v14147 = vshrl.u32 %v13565, 16
  %v14149 = vrot.slane %v14147, 1
  %v14150 = vshll.u32 %v13565, 16
  %v14152 = vrot.slane %v14150, 2
  %v14153 = vor.u32 %v14149, %v14152
  %v14154 = vsel %vm2728, %v14144, %v14153
  %v14156 = vshrl.u32 %v13566, 16
  %v14158 = vrot.slane %v14156, 1
  %v14159 = vshll.u32 %v13566, 16
  %v14161 = vrot.slane %v14159, 2
  %v14162 = vor.u32 %v14158, %v14161
  %v14163 = vsel %vm2728, %v14153, %v14162
  %v14165 = vshrl.u32 %v13567, 16
  %v14167 = vrot.slane %v14165, 1
  %v14168 = vshll.u32 %v13567, 16
  %v14170 = vrot.slane %v14168, 2
  %v14171 = vor.u32 %v14167, %v14170
  %v14172 = vsel %vm2728, %v14162, %v14171
  %v14174 = vshrl.u32 %v13568, 16
  %v14176 = vrot.slane %v14174, 1
  %v14177 = vshll.u32 %v13568, 16
  %v14179 = vrot.slane %v14177, 2
  %v14180 = vor.u32 %v14176, %v14179
  %v14181 = vsel %vm2728, %v14171, %v14180
  %v14183 = vshrl.u32 %v13569, 16
  %v14185 = vrot.slane %v14183, 1
  %v14186 = vshll.u32 %v13569, 16
  %v14188 = vrot.slane %v14186, 2
  %v14189 = vor.u32 %v14185, %v14188
  %v14190 = vsel %vm2728, %v14180, %v14189
  %v14192 = vshrl.u32 %v13570, 16
  %v14194 = vrot.slane %v14192, 1
  %v14195 = vshll.u32 %v13570, 16
  %v14197 = vrot.slane %v14195, 2
  %v14198 = vor.u32 %v14194, %v14197
  %v14199 = vsel %vm2728, %v14189, %v14198
  %v14201 = vshrl.u32 %v13571, 16
  %v14203 = vrot.slane %v14201, 1
  %v14204 = vshll.u32 %v13571, 16
  %v14206 = vrot.slane %v14204, 2
  %v14207 = vor.u32 %v14203, %v14206
  %v14208 = vsel %vm2728, %v14198, %v14207
  %v14210 = vshrl.u32 %v13572, 16
  %v14212 = vrot.slane %v14210, 1
  %v14213 = vshll.u32 %v13572, 16
  %v14215 = vrot.slane %v14213, 2
  %v14216 = vor.u32 %v14212, %v14215
  %v14217 = vsel %vm2728, %v14207, %v14216
  %v14219 = vshrl.u32 %v13573, 16
  %v14221 = vrot.slane %v14219, 1
  %v14222 = vshll.u32 %v13573, 16
  %v14224 = vrot.slane %v14222, 2
  %v14225 = vor.u32 %v14221, %v14224
  %v14226 = vsel %vm2728, %v14216, %v14225
  %v14228 = vshrl.u32 %v13574, 16
  %v14230 = vrot.slane %v14228, 1
  %v14231 = vshll.u32 %v13574, 16
  %v14233 = vrot.slane %v14231, 2
  %v14234 = vor.u32 %v14230, %v14233
  %v14235 = vsel %vm2728, %v14225, %v14234
  %v14237 = vshrl.u32 %v13575, 16
  %v14239 = vrot.slane %v14237, 1
  %v14240 = vshll.u32 %v13575, 16
  %v14242 = vrot.slane %v14240, 2
  %v14243 = vor.u32 %v14239, %v14242
  %v14244 = vsel %vm2728, %v14234, %v14243
  %v14246 = vshrl.u32 %v13576, 16
  %v14248 = vrot.slane %v14246, 1
  %v14249 = vshll.u32 %v13576, 16
  %v14251 = vrot.slane %v14249, 2
  %v14252 = vor.u32 %v14248, %v14251
  %v14253 = vsel %vm2728, %v14243, %v14252
  %v14255 = vshrl.u32 %v13975, 16
  %v14257 = vrot.slane %v14255, 1
  %v14258 = vshll.u32 %v13975, 16
  %v14260 = vrot.slane %v14258, 2
  %v14261 = vor.u32 %v14257, %v14260
  %v14262 = vsel %vm2728, %v14252, %v14261
  %v14264 = vsel %vm610, %v13992, 0
  %v14267 = vsel %vm610, %v14001, 0
  %v14270 = vsel %vm610, %v14010, 0
  %v14273 = vsel %vm610, %v14019, 0
  %v14276 = vsel %vm610, %v14028, 0
  %v14279 = vsel %vm610, %v14037, 0
  %v14282 = vsel %vm610, %v14046, 0
  %v14285 = vsel %vm610, %v14055, 0
  %v14288 = vsel %vm610, %v14064, 0
  %v14291 = vsel %vm610, %v14073, 0
  %v14294 = vsel %vm610, %v14082, 0
  %v14297 = vsel %vm610, %v14091, 0
  %v14300 = vsel %vm610, %v14100, 0
  %v14303 = vsel %vm610, %v14109, 0
  %v14306 = vsel %vm610, %v14118, 0
  %v14309 = vsel %vm610, %v14127, 0
  %v14312 = vsel %vm610, %v14136, 0
  %v14315 = vsel %vm610, %v14145, 0
  %v14318 = vsel %vm610, %v14154, 0
  %v14321 = vsel %vm610, %v14163, 0
  %v14324 = vsel %vm610, %v14172, 0
  %v14327 = vsel %vm610, %v14181, 0
  %v14330 = vsel %vm610, %v14190, 0
  %v14333 = vsel %vm610, %v14199, 0
  %v14336 = vsel %vm610, %v14208, 0
  %v14339 = vsel %vm610, %v14217, 0
  %v14342 = vsel %vm610, %v14226, 0
  %v14345 = vsel %vm610, %v14235, 0
  %v14348 = vsel %vm610, %v14244, 0
  %v14351 = vsel %vm610, %v14253, 0
  %v14354 = vsel %vm610, %v14262, 0
  %v14357 = vsel %vm610, %v14261, 0
  %v14360 = vsel %vm707, %v13972, 0
  %14362 = vmatpush.bf16.msra.mxu0 0
  %14363 = vmatpush.bf16.msra.mxu0 0
  %14364 = vmatpush.bf16.msra.mxu0 0
  %14365 = vmatpush.bf16.msra.mxu0 0
  %14366 = vmatpush.bf16.msra.mxu0 0
  %14367 = vmatpush.bf16.msra.mxu0 0
  %14368 = vmatpush.bf16.msra.mxu0 0
  %14369 = vmatpush.bf16.msra.mxu0 %v14360
  %14370 = vmatmul.bf16.gmra.mxu0 %v14264
  %v14371 = vpop.f32.mrf.mxu0
  %v14372 = vadd.f32 0.0, %v14371
  %v14373 = vpop.f32.mrf.mxu0
  %v14374 = vadd.f32 0.0, %v14373
  %14375 = vmatmul.bf16.gmra.mxu0 %v14267
  %v14376 = vpop.f32.mrf.mxu0
  %v14377 = vadd.f32 0.0, %v14376
  %v14378 = vpop.f32.mrf.mxu0
  %v14379 = vadd.f32 0.0, %v14378
  %14380 = vmatmul.bf16.gmra.mxu0 %v14270
  %v14381 = vpop.f32.mrf.mxu0
  %v14382 = vadd.f32 0.0, %v14381
  %v14383 = vpop.f32.mrf.mxu0
  %v14384 = vadd.f32 0.0, %v14383
  %14385 = vmatmul.bf16.gmra.mxu0 %v14273
  %v14386 = vpop.f32.mrf.mxu0
  %v14387 = vadd.f32 0.0, %v14386
  %v14388 = vpop.f32.mrf.mxu0
  %v14389 = vadd.f32 0.0, %v14388
  %14390 = vmatmul.bf16.gmra.mxu0 %v14276
  %v14391 = vpop.f32.mrf.mxu0
  %v14392 = vadd.f32 0.0, %v14391
  %v14393 = vpop.f32.mrf.mxu0
  %v14394 = vadd.f32 0.0, %v14393
  %14395 = vmatmul.bf16.gmra.mxu0 %v14279
  %v14396 = vpop.f32.mrf.mxu0
  %v14397 = vadd.f32 0.0, %v14396
  %v14398 = vpop.f32.mrf.mxu0
  %v14399 = vadd.f32 0.0, %v14398
  %14400 = vmatmul.bf16.gmra.mxu0 %v14282
  %v14401 = vpop.f32.mrf.mxu0
  %v14402 = vadd.f32 0.0, %v14401
  %v14403 = vpop.f32.mrf.mxu0
  %v14404 = vadd.f32 0.0, %v14403
  %14405 = vmatmul.bf16.gmra.mxu0 %v14285
  %v14406 = vpop.f32.mrf.mxu0
  %v14407 = vadd.f32 0.0, %v14406
  %v14408 = vpop.f32.mrf.mxu0
  %v14409 = vadd.f32 0.0, %v14408
  %14410 = vmatmul.bf16.gmra.mxu0 %v14288
  %v14411 = vpop.f32.mrf.mxu0
  %v14412 = vadd.f32 0.0, %v14411
  %v14413 = vpop.f32.mrf.mxu0
  %v14414 = vadd.f32 0.0, %v14413
  %14415 = vmatmul.bf16.gmra.mxu0 %v14291
  %v14416 = vpop.f32.mrf.mxu0
  %v14417 = vadd.f32 0.0, %v14416
  %v14418 = vpop.f32.mrf.mxu0
  %v14419 = vadd.f32 0.0, %v14418
  %14420 = vmatmul.bf16.gmra.mxu0 %v14294
  %v14421 = vpop.f32.mrf.mxu0
  %v14422 = vadd.f32 0.0, %v14421
  %v14423 = vpop.f32.mrf.mxu0
  %v14424 = vadd.f32 0.0, %v14423
  %14425 = vmatmul.bf16.gmra.mxu0 %v14297
  %v14426 = vpop.f32.mrf.mxu0
  %v14427 = vadd.f32 0.0, %v14426
  %v14428 = vpop.f32.mrf.mxu0
  %v14429 = vadd.f32 0.0, %v14428
  %14430 = vmatmul.bf16.gmra.mxu0 %v14300
  %v14431 = vpop.f32.mrf.mxu0
  %v14432 = vadd.f32 0.0, %v14431
  %v14433 = vpop.f32.mrf.mxu0
  %v14434 = vadd.f32 0.0, %v14433
  %14435 = vmatmul.bf16.gmra.mxu0 %v14303
  %v14436 = vpop.f32.mrf.mxu0
  %v14437 = vadd.f32 0.0, %v14436
  %v14438 = vpop.f32.mrf.mxu0
  %v14439 = vadd.f32 0.0, %v14438
  %14440 = vmatmul.bf16.gmra.mxu0 %v14306
  %v14441 = vpop.f32.mrf.mxu0
  %v14442 = vadd.f32 0.0, %v14441
  %v14443 = vpop.f32.mrf.mxu0
  %v14444 = vadd.f32 0.0, %v14443
  %14445 = vmatmul.bf16.gmra.mxu0 %v14309
  %v14446 = vpop.f32.mrf.mxu0
  %v14447 = vadd.f32 0.0, %v14446
  %v14448 = vpop.f32.mrf.mxu0
  %v14449 = vadd.f32 0.0, %v14448
  %14450 = vmatmul.bf16.gmra.mxu0 %v14312
  %v14451 = vpop.f32.mrf.mxu0
  %v14452 = vadd.f32 0.0, %v14451
  %v14453 = vpop.f32.mrf.mxu0
  %v14454 = vadd.f32 0.0, %v14453
  %14455 = vmatmul.bf16.gmra.mxu0 %v14315
  %v14456 = vpop.f32.mrf.mxu0
  %v14457 = vadd.f32 0.0, %v14456
  %v14458 = vpop.f32.mrf.mxu0
  %v14459 = vadd.f32 0.0, %v14458
  %14460 = vmatmul.bf16.gmra.mxu0 %v14318
  %v14461 = vpop.f32.mrf.mxu0
  %v14462 = vadd.f32 0.0, %v14461
  %v14463 = vpop.f32.mrf.mxu0
  %v14464 = vadd.f32 0.0, %v14463
  %14465 = vmatmul.bf16.gmra.mxu0 %v14321
  %v14466 = vpop.f32.mrf.mxu0
  %v14467 = vadd.f32 0.0, %v14466
  %v14468 = vpop.f32.mrf.mxu0
  %v14469 = vadd.f32 0.0, %v14468
  %14470 = vmatmul.bf16.gmra.mxu0 %v14324
  %v14471 = vpop.f32.mrf.mxu0
  %v14472 = vadd.f32 0.0, %v14471
  %v14473 = vpop.f32.mrf.mxu0
  %v14474 = vadd.f32 0.0, %v14473
  %14475 = vmatmul.bf16.gmra.mxu0 %v14327
  %v14476 = vpop.f32.mrf.mxu0
  %v14477 = vadd.f32 0.0, %v14476
  %v14478 = vpop.f32.mrf.mxu0
  %v14479 = vadd.f32 0.0, %v14478
  %14480 = vmatmul.bf16.gmra.mxu0 %v14330
  %v14481 = vpop.f32.mrf.mxu0
  %v14482 = vadd.f32 0.0, %v14481
  %v14483 = vpop.f32.mrf.mxu0
  %v14484 = vadd.f32 0.0, %v14483
  %14485 = vmatmul.bf16.gmra.mxu0 %v14333
  %v14486 = vpop.f32.mrf.mxu0
  %v14487 = vadd.f32 0.0, %v14486
  %v14488 = vpop.f32.mrf.mxu0
  %v14489 = vadd.f32 0.0, %v14488
  %14490 = vmatmul.bf16.gmra.mxu0 %v14336
  %v14491 = vpop.f32.mrf.mxu0
  %v14492 = vadd.f32 0.0, %v14491
  %v14493 = vpop.f32.mrf.mxu0
  %v14494 = vadd.f32 0.0, %v14493
  %14495 = vmatmul.bf16.gmra.mxu0 %v14339
  %v14496 = vpop.f32.mrf.mxu0
  %v14497 = vadd.f32 0.0, %v14496
  %v14498 = vpop.f32.mrf.mxu0
  %v14499 = vadd.f32 0.0, %v14498
  %14500 = vmatmul.bf16.gmra.mxu0 %v14342
  %v14501 = vpop.f32.mrf.mxu0
  %v14502 = vadd.f32 0.0, %v14501
  %v14503 = vpop.f32.mrf.mxu0
  %v14504 = vadd.f32 0.0, %v14503
  %14505 = vmatmul.bf16.gmra.mxu0 %v14345
  %v14506 = vpop.f32.mrf.mxu0
  %v14507 = vadd.f32 0.0, %v14506
  %v14508 = vpop.f32.mrf.mxu0
  %v14509 = vadd.f32 0.0, %v14508
  %14510 = vmatmul.bf16.gmra.mxu0 %v14348
  %v14511 = vpop.f32.mrf.mxu0
  %v14512 = vadd.f32 0.0, %v14511
  %v14513 = vpop.f32.mrf.mxu0
  %v14514 = vadd.f32 0.0, %v14513
  %14515 = vmatmul.bf16.gmra.mxu0 %v14351
  %v14516 = vpop.f32.mrf.mxu0
  %v14517 = vadd.f32 0.0, %v14516
  %v14518 = vpop.f32.mrf.mxu0
  %v14519 = vadd.f32 0.0, %v14518
  %14520 = vmatmul.bf16.gmra.mxu0 %v14354
  %v14521 = vpop.f32.mrf.mxu0
  %v14522 = vadd.f32 0.0, %v14521
  %v14523 = vpop.f32.mrf.mxu0
  %v14524 = vadd.f32 0.0, %v14523
  %14525 = vmatmul.bf16.gmra.mxu0 %v14357
  %v14526 = vpop.f32.mrf.mxu0
  %v14527 = vadd.f32 0.0, %v14526
  %v14528 = vpop.f32.mrf.mxu0
  %14529 = vdwg.mxu0
  %v14530 = vadd.f32 %v13908, %v14372
  %v14531 = vadd.f32 %v13909, %v14374
  %v14532 = vadd.f32 %v13910, %v14377
  %v14533 = vadd.f32 %v13911, %v14379
  %v14534 = vadd.f32 %v13912, %v14382
  %v14535 = vadd.f32 %v13913, %v14384
  %v14536 = vadd.f32 %v13914, %v14387
  %v14537 = vadd.f32 %v13915, %v14389
  %v14538 = vadd.f32 %v13916, %v14392
  %v14539 = vadd.f32 %v13917, %v14394
  %v14540 = vadd.f32 %v13918, %v14397
  %v14541 = vadd.f32 %v13919, %v14399
  %v14542 = vadd.f32 %v13920, %v14402
  %v14543 = vadd.f32 %v13921, %v14404
  %v14544 = vadd.f32 %v13922, %v14407
  %v14545 = vadd.f32 %v13923, %v14409
  %v14546 = vadd.f32 %v13924, %v14412
  %v14547 = vadd.f32 %v13925, %v14414
  %v14548 = vadd.f32 %v13926, %v14417
  %v14549 = vadd.f32 %v13927, %v14419
  %v14550 = vadd.f32 %v13928, %v14422
  %v14551 = vadd.f32 %v13929, %v14424
  %v14552 = vadd.f32 %v13930, %v14427
  %v14553 = vadd.f32 %v13931, %v14429
  %v14554 = vadd.f32 %v13932, %v14432
  %v14555 = vadd.f32 %v13933, %v14434
  %v14556 = vadd.f32 %v13934, %v14437
  %v14557 = vadd.f32 %v13935, %v14439
  %v14558 = vadd.f32 %v13936, %v14442
  %v14559 = vadd.f32 %v13937, %v14444
  %v14560 = vadd.f32 %v13938, %v14447
  %v14561 = vadd.f32 %v13939, %v14449
  %v14562 = vadd.f32 %v13940, %v14452
  %v14563 = vadd.f32 %v13941, %v14454
  %v14564 = vadd.f32 %v13942, %v14457
  %v14565 = vadd.f32 %v13943, %v14459
  %v14566 = vadd.f32 %v13944, %v14462
  %v14567 = vadd.f32 %v13945, %v14464
  %v14568 = vadd.f32 %v13946, %v14467
  %v14569 = vadd.f32 %v13947, %v14469
  %v14570 = vadd.f32 %v13948, %v14472
  %v14571 = vadd.f32 %v13949, %v14474
  %v14572 = vadd.f32 %v13950, %v14477
  %v14573 = vadd.f32 %v13951, %v14479
  %v14574 = vadd.f32 %v13952, %v14482
  %v14575 = vadd.f32 %v13953, %v14484
  %v14576 = vadd.f32 %v13954, %v14487
  %v14577 = vadd.f32 %v13955, %v14489
  %v14578 = vadd.f32 %v13956, %v14492
  %v14579 = vadd.f32 %v13957, %v14494
  %v14580 = vadd.f32 %v13958, %v14497
  %v14581 = vadd.f32 %v13959, %v14499
  %v14582 = vadd.f32 %v13960, %v14502
  %v14583 = vadd.f32 %v13961, %v14504
  %v14584 = vadd.f32 %v13962, %v14507
  %v14585 = vadd.f32 %v13963, %v14509
  %v14586 = vadd.f32 %v13964, %v14512
  %v14587 = vadd.f32 %v13965, %v14514
  %v14588 = vadd.f32 %v13966, %v14517
  %v14589 = vadd.f32 %v13967, %v14519
  %v14590 = vadd.f32 %v13968, %v14522
  %v14591 = vadd.f32 %v13969, %v14524
  %v14592 = vadd.f32 %v13970, %v14527
  %v14593 = vld [vmem:[#allocation2 + $0x50] sm:$0xc]
  %v14594 = vld [vmem:[%s1 + $0x68] sm:$0xf]
  %v14596 = vunpack.c.l.b16 %v14593
  %v14597 = vpack.c.b16 %v13483, %v14596
  %v14598 = vrot.slane %v14597, 2
  %v14599 = vrot.slane %v13547, 2
  %v14600 = vsel %vm4441, %v14598, %v14599
  %v14601 = vrot.slane %v13548, 2
  %v14602 = vsel %vm4441, %v14599, %v14601
  %v14603 = vrot.slane %v13549, 2
  %v14604 = vsel %vm4441, %v14601, %v14603
  %v14605 = vrot.slane %v13550, 2
  %v14606 = vsel %vm4441, %v14603, %v14605
  %v14607 = vrot.slane %v13551, 2
  %v14608 = vsel %vm4441, %v14605, %v14607
  %v14609 = vrot.slane %v13552, 2
  %v14610 = vsel %vm4441, %v14607, %v14609
  %v14611 = vrot.slane %v13553, 2
  %v14612 = vsel %vm4441, %v14609, %v14611
  %v14613 = vrot.slane %v13554, 2
  %v14614 = vsel %vm4441, %v14611, %v14613
  %v14615 = vrot.slane %v13555, 2
  %v14616 = vsel %vm4441, %v14613, %v14615
  %v14617 = vrot.slane %v13556, 2
  %v14618 = vsel %vm4441, %v14615, %v14617
  %v14619 = vrot.slane %v13557, 2
  %v14620 = vsel %vm4441, %v14617, %v14619
  %v14621 = vrot.slane %v13558, 2
  %v14622 = vsel %vm4441, %v14619, %v14621
  %v14623 = vrot.slane %v13559, 2
  %v14624 = vsel %vm4441, %v14621, %v14623
  %v14625 = vrot.slane %v13560, 2
  %v14626 = vsel %vm4441, %v14623, %v14625
  %v14627 = vrot.slane %v13561, 2
  %v14628 = vsel %vm4441, %v14625, %v14627
  %v14629 = vrot.slane %v13562, 2
  %v14630 = vsel %vm4441, %v14627, %v14629
  %v14631 = vrot.slane %v13563, 2
  %v14632 = vsel %vm4441, %v14629, %v14631
  %v14633 = vrot.slane %v13564, 2
  %v14634 = vsel %vm4441, %v14631, %v14633
  %v14635 = vrot.slane %v13565, 2
  %v14636 = vsel %vm4441, %v14633, %v14635
  %v14637 = vrot.slane %v13566, 2
  %v14638 = vsel %vm4441, %v14635, %v14637
  %v14639 = vrot.slane %v13567, 2
  %v14640 = vsel %vm4441, %v14637, %v14639
  %v14641 = vrot.slane %v13568, 2
  %v14642 = vsel %vm4441, %v14639, %v14641
  %v14643 = vrot.slane %v13569, 2
  %v14644 = vsel %vm4441, %v14641, %v14643
  %v14645 = vrot.slane %v13570, 2
  %v14646 = vsel %vm4441, %v14643, %v14645
  %v14647 = vrot.slane %v13571, 2
  %v14648 = vsel %vm4441, %v14645, %v14647
  %v14649 = vrot.slane %v13572, 2
  %v14650 = vsel %vm4441, %v14647, %v14649
  %v14651 = vrot.slane %v13573, 2
  %v14652 = vsel %vm4441, %v14649, %v14651
  %v14653 = vrot.slane %v13574, 2
  %v14654 = vsel %vm4441, %v14651, %v14653
  %v14655 = vrot.slane %v13575, 2
  %v14656 = vsel %vm4441, %v14653, %v14655
  %v14657 = vrot.slane %v13576, 2
  %v14658 = vsel %vm4441, %v14655, %v14657
  %v14659 = vrot.slane %v13975, 2
  %v14660 = vsel %vm4441, %v14657, %v14659
  %v14662 = vsel %vm610, %v14600, 0
  %v14665 = vsel %vm610, %v14602, 0
  %v14668 = vsel %vm610, %v14604, 0
  %v14671 = vsel %vm610, %v14606, 0
  %v14674 = vsel %vm610, %v14608, 0
  %v14677 = vsel %vm610, %v14610, 0
  %v14680 = vsel %vm610, %v14612, 0
  %v14683 = vsel %vm610, %v14614, 0
  %v14686 = vsel %vm610, %v14616, 0
  %v14689 = vsel %vm610, %v14618, 0
  %v14692 = vsel %vm610, %v14620, 0
  %v14695 = vsel %vm610, %v14622, 0
  %v14698 = vsel %vm610, %v14624, 0
  %v14701 = vsel %vm610, %v14626, 0
  %v14704 = vsel %vm610, %v14628, 0
  %v14707 = vsel %vm610, %v14630, 0
  %v14710 = vsel %vm610, %v14632, 0
  %v14713 = vsel %vm610, %v14634, 0
  %v14716 = vsel %vm610, %v14636, 0
  %v14719 = vsel %vm610, %v14638, 0
  %v14722 = vsel %vm610, %v14640, 0
  %v14725 = vsel %vm610, %v14642, 0
  %v14728 = vsel %vm610, %v14644, 0
  %v14731 = vsel %vm610, %v14646, 0
  %v14734 = vsel %vm610, %v14648, 0
  %v14737 = vsel %vm610, %v14650, 0
  %v14740 = vsel %vm610, %v14652, 0
  %v14743 = vsel %vm610, %v14654, 0
  %v14746 = vsel %vm610, %v14656, 0
  %v14749 = vsel %vm610, %v14658, 0
  %v14752 = vsel %vm610, %v14660, 0
  %v14755 = vsel %vm610, %v14659, 0
  %v14758 = vsel %vm707, %v14594, 0
  %14760 = vmatpush.bf16.msra.mxu0 0
  %14761 = vmatpush.bf16.msra.mxu0 0
  %14762 = vmatpush.bf16.msra.mxu0 0
  %14763 = vmatpush.bf16.msra.mxu0 0
  %14764 = vmatpush.bf16.msra.mxu0 0
  %14765 = vmatpush.bf16.msra.mxu0 0
  %14766 = vmatpush.bf16.msra.mxu0 0
  %14767 = vmatpush.bf16.msra.mxu0 %v14758
  %14768 = vmatmul.bf16.gmra.mxu0 %v14662
  %v14769 = vpop.f32.mrf.mxu0
  %v14770 = vadd.f32 0.0, %v14769
  %v14771 = vpop.f32.mrf.mxu0
  %v14772 = vadd.f32 0.0, %v14771
  %14773 = vmatmul.bf16.gmra.mxu0 %v14665
  %v14774 = vpop.f32.mrf.mxu0
  %v14775 = vadd.f32 0.0, %v14774
  %v14776 = vpop.f32.mrf.mxu0
  %v14777 = vadd.f32 0.0, %v14776
  %14778 = vmatmul.bf16.gmra.mxu0 %v14668
  %v14779 = vpop.f32.mrf.mxu0
  %v14780 = vadd.f32 0.0, %v14779
  %v14781 = vpop.f32.mrf.mxu0
  %v14782 = vadd.f32 0.0, %v14781
  %14783 = vmatmul.bf16.gmra.mxu0 %v14671
  %v14784 = vpop.f32.mrf.mxu0
  %v14785 = vadd.f32 0.0, %v14784
  %v14786 = vpop.f32.mrf.mxu0
  %v14787 = vadd.f32 0.0, %v14786
  %14788 = vmatmul.bf16.gmra.mxu0 %v14674
  %v14789 = vpop.f32.mrf.mxu0
  %v14790 = vadd.f32 0.0, %v14789
  %v14791 = vpop.f32.mrf.mxu0
  %v14792 = vadd.f32 0.0, %v14791
  %14793 = vmatmul.bf16.gmra.mxu0 %v14677
  %v14794 = vpop.f32.mrf.mxu0
  %v14795 = vadd.f32 0.0, %v14794
  %v14796 = vpop.f32.mrf.mxu0
  %v14797 = vadd.f32 0.0, %v14796
  %14798 = vmatmul.bf16.gmra.mxu0 %v14680
  %v14799 = vpop.f32.mrf.mxu0
  %v14800 = vadd.f32 0.0, %v14799
  %v14801 = vpop.f32.mrf.mxu0
  %v14802 = vadd.f32 0.0, %v14801
  %14803 = vmatmul.bf16.gmra.mxu0 %v14683
  %v14804 = vpop.f32.mrf.mxu0
  %v14805 = vadd.f32 0.0, %v14804
  %v14806 = vpop.f32.mrf.mxu0
  %v14807 = vadd.f32 0.0, %v14806
  %14808 = vmatmul.bf16.gmra.mxu0 %v14686
  %v14809 = vpop.f32.mrf.mxu0
  %v14810 = vadd.f32 0.0, %v14809
  %v14811 = vpop.f32.mrf.mxu0
  %v14812 = vadd.f32 0.0, %v14811
  %14813 = vmatmul.bf16.gmra.mxu0 %v14689
  %v14814 = vpop.f32.mrf.mxu0
  %v14815 = vadd.f32 0.0, %v14814
  %v14816 = vpop.f32.mrf.mxu0
  %v14817 = vadd.f32 0.0, %v14816
  %14818 = vmatmul.bf16.gmra.mxu0 %v14692
  %v14819 = vpop.f32.mrf.mxu0
  %v14820 = vadd.f32 0.0, %v14819
  %v14821 = vpop.f32.mrf.mxu0
  %v14822 = vadd.f32 0.0, %v14821
  %14823 = vmatmul.bf16.gmra.mxu0 %v14695
  %v14824 = vpop.f32.mrf.mxu0
  %v14825 = vadd.f32 0.0, %v14824
  %v14826 = vpop.f32.mrf.mxu0
  %v14827 = vadd.f32 0.0, %v14826
  %14828 = vmatmul.bf16.gmra.mxu0 %v14698
  %v14829 = vpop.f32.mrf.mxu0
  %v14830 = vadd.f32 0.0, %v14829
  %v14831 = vpop.f32.mrf.mxu0
  %v14832 = vadd.f32 0.0, %v14831
  %14833 = vmatmul.bf16.gmra.mxu0 %v14701
  %v14834 = vpop.f32.mrf.mxu0
  %v14835 = vadd.f32 0.0, %v14834
  %v14836 = vpop.f32.mrf.mxu0
  %v14837 = vadd.f32 0.0, %v14836
  %14838 = vmatmul.bf16.gmra.mxu0 %v14704
  %v14839 = vpop.f32.mrf.mxu0
  %v14840 = vadd.f32 0.0, %v14839
  %v14841 = vpop.f32.mrf.mxu0
  %v14842 = vadd.f32 0.0, %v14841
  %14843 = vmatmul.bf16.gmra.mxu0 %v14707
  %v14844 = vpop.f32.mrf.mxu0
  %v14845 = vadd.f32 0.0, %v14844
  %v14846 = vpop.f32.mrf.mxu0
  %v14847 = vadd.f32 0.0, %v14846
  %14848 = vmatmul.bf16.gmra.mxu0 %v14710
  %v14849 = vpop.f32.mrf.mxu0
  %v14850 = vadd.f32 0.0, %v14849
  %v14851 = vpop.f32.mrf.mxu0
  %v14852 = vadd.f32 0.0, %v14851
  %14853 = vmatmul.bf16.gmra.mxu0 %v14713
  %v14854 = vpop.f32.mrf.mxu0
  %v14855 = vadd.f32 0.0, %v14854
  %v14856 = vpop.f32.mrf.mxu0
  %v14857 = vadd.f32 0.0, %v14856
  %14858 = vmatmul.bf16.gmra.mxu0 %v14716
  %v14859 = vpop.f32.mrf.mxu0
  %v14860 = vadd.f32 0.0, %v14859
  %v14861 = vpop.f32.mrf.mxu0
  %v14862 = vadd.f32 0.0, %v14861
  %14863 = vmatmul.bf16.gmra.mxu0 %v14719
  %v14864 = vpop.f32.mrf.mxu0
  %v14865 = vadd.f32 0.0, %v14864
  %v14866 = vpop.f32.mrf.mxu0
  %v14867 = vadd.f32 0.0, %v14866
  %14868 = vmatmul.bf16.gmra.mxu0 %v14722
  %v14869 = vpop.f32.mrf.mxu0
  %v14870 = vadd.f32 0.0, %v14869
  %v14871 = vpop.f32.mrf.mxu0
  %v14872 = vadd.f32 0.0, %v14871
  %14873 = vmatmul.bf16.gmra.mxu0 %v14725
  %v14874 = vpop.f32.mrf.mxu0
  %v14875 = vadd.f32 0.0, %v14874
  %v14876 = vpop.f32.mrf.mxu0
  %v14877 = vadd.f32 0.0, %v14876
  %14878 = vmatmul.bf16.gmra.mxu0 %v14728
  %v14879 = vpop.f32.mrf.mxu0
  %v14880 = vadd.f32 0.0, %v14879
  %v14881 = vpop.f32.mrf.mxu0
  %v14882 = vadd.f32 0.0, %v14881
  %14883 = vmatmul.bf16.gmra.mxu0 %v14731
  %v14884 = vpop.f32.mrf.mxu0
  %v14885 = vadd.f32 0.0, %v14884
  %v14886 = vpop.f32.mrf.mxu0
  %v14887 = vadd.f32 0.0, %v14886
  %14888 = vmatmul.bf16.gmra.mxu0 %v14734
  %v14889 = vpop.f32.mrf.mxu0
  %v14890 = vadd.f32 0.0, %v14889
  %v14891 = vpop.f32.mrf.mxu0
  %v14892 = vadd.f32 0.0, %v14891
  %14893 = vmatmul.bf16.gmra.mxu0 %v14737
  %v14894 = vpop.f32.mrf.mxu0
  %v14895 = vadd.f32 0.0, %v14894
  %v14896 = vpop.f32.mrf.mxu0
  %v14897 = vadd.f32 0.0, %v14896
  %14898 = vmatmul.bf16.gmra.mxu0 %v14740
  %v14899 = vpop.f32.mrf.mxu0
  %v14900 = vadd.f32 0.0, %v14899
  %v14901 = vpop.f32.mrf.mxu0
  %v14902 = vadd.f32 0.0, %v14901
  %14903 = vmatmul.bf16.gmra.mxu0 %v14743
  %v14904 = vpop.f32.mrf.mxu0
  %v14905 = vadd.f32 0.0, %v14904
  %v14906 = vpop.f32.mrf.mxu0
  %v14907 = vadd.f32 0.0, %v14906
  %14908 = vmatmul.bf16.gmra.mxu0 %v14746
  %v14909 = vpop.f32.mrf.mxu0
  %v14910 = vadd.f32 0.0, %v14909
  %v14911 = vpop.f32.mrf.mxu0
  %v14912 = vadd.f32 0.0, %v14911
  %14913 = vmatmul.bf16.gmra.mxu0 %v14749
  %v14914 = vpop.f32.mrf.mxu0
  %v14915 = vadd.f32 0.0, %v14914
  %v14916 = vpop.f32.mrf.mxu0
  %v14917 = vadd.f32 0.0, %v14916
  %14918 = vmatmul.bf16.gmra.mxu0 %v14752
  %v14919 = vpop.f32.mrf.mxu0
  %v14920 = vadd.f32 0.0, %v14919
  %v14921 = vpop.f32.mrf.mxu0
  %v14922 = vadd.f32 0.0, %v14921
  %14923 = vmatmul.bf16.gmra.mxu0 %v14755
  %v14924 = vpop.f32.mrf.mxu0
  %v14925 = vadd.f32 0.0, %v14924
  %v14926 = vpop.f32.mrf.mxu0
  %14927 = vdwg.mxu0
  %v14928 = vadd.f32 %v14530, %v14770
  %v14929 = vadd.f32 %v14531, %v14772
  %v14930 = vadd.f32 %v14532, %v14775
  %v14931 = vadd.f32 %v14533, %v14777
  %v14932 = vadd.f32 %v14534, %v14780
  %v14933 = vadd.f32 %v14535, %v14782
  %v14934 = vadd.f32 %v14536, %v14785
  %v14935 = vadd.f32 %v14537, %v14787
  %v14936 = vadd.f32 %v14538, %v14790
  %v14937 = vadd.f32 %v14539, %v14792
  %v14938 = vadd.f32 %v14540, %v14795
  %v14939 = vadd.f32 %v14541, %v14797
  %v14940 = vadd.f32 %v14542, %v14800
  %v14941 = vadd.f32 %v14543, %v14802
  %v14942 = vadd.f32 %v14544, %v14805
  %v14943 = vadd.f32 %v14545, %v14807
  %v14944 = vadd.f32 %v14546, %v14810
  %v14945 = vadd.f32 %v14547, %v14812
  %v14946 = vadd.f32 %v14548, %v14815
  %v14947 = vadd.f32 %v14549, %v14817
  %v14948 = vadd.f32 %v14550, %v14820
  %v14949 = vadd.f32 %v14551, %v14822
  %v14950 = vadd.f32 %v14552, %v14825
  %v14951 = vadd.f32 %v14553, %v14827
  %v14952 = vadd.f32 %v14554, %v14830
  %v14953 = vadd.f32 %v14555, %v14832
  %v14954 = vadd.f32 %v14556, %v14835
  %v14955 = vadd.f32 %v14557, %v14837
  %v14956 = vadd.f32 %v14558, %v14840
  %v14957 = vadd.f32 %v14559, %v14842
  %v14958 = vadd.f32 %v14560, %v14845
  %v14959 = vadd.f32 %v14561, %v14847
  %v14960 = vadd.f32 %v14562, %v14850
  %v14961 = vadd.f32 %v14563, %v14852
  %v14962 = vadd.f32 %v14564, %v14855
  %v14963 = vadd.f32 %v14565, %v14857
  %v14964 = vadd.f32 %v14566, %v14860
  %v14965 = vadd.f32 %v14567, %v14862
  %v14966 = vadd.f32 %v14568, %v14865
  %v14967 = vadd.f32 %v14569, %v14867
  %v14968 = vadd.f32 %v14570, %v14870
  %v14969 = vadd.f32 %v14571, %v14872
  %v14970 = vadd.f32 %v14572, %v14875
  %v14971 = vadd.f32 %v14573, %v14877
  %v14972 = vadd.f32 %v14574, %v14880
  %v14973 = vadd.f32 %v14575, %v14882
  %v14974 = vadd.f32 %v14576, %v14885
  %v14975 = vadd.f32 %v14577, %v14887
  %v14976 = vadd.f32 %v14578, %v14890
  %v14977 = vadd.f32 %v14579, %v14892
  %v14978 = vadd.f32 %v14580, %v14895
  %v14979 = vadd.f32 %v14581, %v14897
  %v14980 = vadd.f32 %v14582, %v14900
  %v14981 = vadd.f32 %v14583, %v14902
  %v14982 = vadd.f32 %v14584, %v14905
  %v14983 = vadd.f32 %v14585, %v14907
  %v14984 = vadd.f32 %v14586, %v14910
  %v14985 = vadd.f32 %v14587, %v14912
  %v14986 = vadd.f32 %v14588, %v14915
  %v14987 = vadd.f32 %v14589, %v14917
  %v14988 = vadd.f32 %v14590, %v14920
  %v14989 = vadd.f32 %v14591, %v14922
  %v14990 = vadd.f32 %v14592, %v14925
  %v14991 = vld [vmem:[%s2] sm:$0x1]
  %v14993 = vperm.slane %v14991, 0
  %v14995 = vmul.f32 %v14928, %v14993
  %v14996 = vmul.f32 %v14929, %v14993
  %v14997 = vmul.f32 %v14930, %v14993
  %v14998 = vmul.f32 %v14931, %v14993
  %v14999 = vmul.f32 %v14932, %v14993
  %v15000 = vmul.f32 %v14933, %v14993
  %v15001 = vmul.f32 %v14934, %v14993
  %v15002 = vmul.f32 %v14935, %v14993
  %v15003 = vmul.f32 %v14936, %v14993
  %v15004 = vmul.f32 %v14937, %v14993
  %v15005 = vmul.f32 %v14938, %v14993
  %v15006 = vmul.f32 %v14939, %v14993
  %v15007 = vmul.f32 %v14940, %v14993
  %v15008 = vmul.f32 %v14941, %v14993
  %v15009 = vmul.f32 %v14942, %v14993
  %v15010 = vmul.f32 %v14943, %v14993
  %v15011 = vmul.f32 %v14944, %v14993
  %v15012 = vmul.f32 %v14945, %v14993
  %v15013 = vmul.f32 %v14946, %v14993
  %v15014 = vmul.f32 %v14947, %v14993
  %v15015 = vmul.f32 %v14948, %v14993
  %v15016 = vmul.f32 %v14949, %v14993
  %v15017 = vmul.f32 %v14950, %v14993
  %v15018 = vmul.f32 %v14951, %v14993
  %v15019 = vmul.f32 %v14952, %v14993
  %v15020 = vmul.f32 %v14953, %v14993
  %v15021 = vmul.f32 %v14954, %v14993
  %v15022 = vmul.f32 %v14955, %v14993
  %v15023 = vmul.f32 %v14956, %v14993
  %v15024 = vmul.f32 %v14957, %v14993
  %v15025 = vmul.f32 %v14958, %v14993
  %v15026 = vmul.f32 %v14959, %v14993
  %v15027 = vmul.f32 %v14960, %v14993
  %v15028 = vmul.f32 %v14961, %v14993
  %v15029 = vmul.f32 %v14962, %v14993
  %v15030 = vmul.f32 %v14963, %v14993
  %v15031 = vmul.f32 %v14964, %v14993
  %v15032 = vmul.f32 %v14965, %v14993
  %v15033 = vmul.f32 %v14966, %v14993
  %v15034 = vmul.f32 %v14967, %v14993
  %v15035 = vmul.f32 %v14968, %v14993
  %v15036 = vmul.f32 %v14969, %v14993
  %v15037 = vmul.f32 %v14970, %v14993
  %v15038 = vmul.f32 %v14971, %v14993
  %v15039 = vmul.f32 %v14972, %v14993
  %v15040 = vmul.f32 %v14973, %v14993
  %v15041 = vmul.f32 %v14974, %v14993
  %v15042 = vmul.f32 %v14975, %v14993
  %v15043 = vmul.f32 %v14976, %v14993
  %v15044 = vmul.f32 %v14977, %v14993
  %v15045 = vmul.f32 %v14978, %v14993
  %v15046 = vmul.f32 %v14979, %v14993
  %v15047 = vmul.f32 %v14980, %v14993
  %v15048 = vmul.f32 %v14981, %v14993
  %v15049 = vmul.f32 %v14982, %v14993
  %v15050 = vmul.f32 %v14983, %v14993
  %v15051 = vmul.f32 %v14984, %v14993
  %v15052 = vmul.f32 %v14985, %v14993
  %v15053 = vmul.f32 %v14986, %v14993
  %v15054 = vmul.f32 %v14987, %v14993
  %v15055 = vmul.f32 %v14988, %v14993
  %v15056 = vmul.f32 %v14989, %v14993
  %v15057 = vmul.f32 %v14990, %v14993
  %v15058 = vld [vmem:[%s3] sm:$0x1]
  %v15060 = vperm.slane %v15058, 0
  %v15062 = vadd.f32 %v14995, %v15060
  %v15063 = vadd.f32 %v14996, %v15060
  %v15064 = vadd.f32 %v14997, %v15060
  %v15065 = vadd.f32 %v14998, %v15060
  %v15066 = vadd.f32 %v14999, %v15060
  %v15067 = vadd.f32 %v15000, %v15060
  %v15068 = vadd.f32 %v15001, %v15060
  %v15069 = vadd.f32 %v15002, %v15060
  %v15070 = vadd.f32 %v15003, %v15060
  %v15071 = vadd.f32 %v15004, %v15060
  %v15072 = vadd.f32 %v15005, %v15060
  %v15073 = vadd.f32 %v15006, %v15060
  %v15074 = vadd.f32 %v15007, %v15060
  %v15075 = vadd.f32 %v15008, %v15060
  %v15076 = vadd.f32 %v15009, %v15060
  %v15077 = vadd.f32 %v15010, %v15060
  %v15078 = vadd.f32 %v15011, %v15060
  %v15079 = vadd.f32 %v15012, %v15060
  %v15080 = vadd.f32 %v15013, %v15060
  %v15081 = vadd.f32 %v15014, %v15060
  %v15082 = vadd.f32 %v15015, %v15060
  %v15083 = vadd.f32 %v15016, %v15060
  %v15084 = vadd.f32 %v15017, %v15060
  %v15085 = vadd.f32 %v15018, %v15060
  %v15086 = vadd.f32 %v15019, %v15060
  %v15087 = vadd.f32 %v15020, %v15060
  %v15088 = vadd.f32 %v15021, %v15060
  %v15089 = vadd.f32 %v15022, %v15060
  %v15090 = vadd.f32 %v15023, %v15060
  %v15091 = vadd.f32 %v15024, %v15060
  %v15092 = vadd.f32 %v15025, %v15060
  %v15093 = vadd.f32 %v15026, %v15060
  %v15094 = vadd.f32 %v15027, %v15060
  %v15095 = vadd.f32 %v15028, %v15060
  %v15096 = vadd.f32 %v15029, %v15060
  %v15097 = vadd.f32 %v15030, %v15060
  %v15098 = vadd.f32 %v15031, %v15060
  %v15099 = vadd.f32 %v15032, %v15060
  %v15100 = vadd.f32 %v15033, %v15060
  %v15101 = vadd.f32 %v15034, %v15060
  %v15102 = vadd.f32 %v15035, %v15060
  %v15103 = vadd.f32 %v15036, %v15060
  %v15104 = vadd.f32 %v15037, %v15060
  %v15105 = vadd.f32 %v15038, %v15060
  %v15106 = vadd.f32 %v15039, %v15060
  %v15107 = vadd.f32 %v15040, %v15060
  %v15108 = vadd.f32 %v15041, %v15060
  %v15109 = vadd.f32 %v15042, %v15060
  %v15110 = vadd.f32 %v15043, %v15060
  %v15111 = vadd.f32 %v15044, %v15060
  %v15112 = vadd.f32 %v15045, %v15060
  %v15113 = vadd.f32 %v15046, %v15060
  %v15114 = vadd.f32 %v15047, %v15060
  %v15115 = vadd.f32 %v15048, %v15060
  %v15116 = vadd.f32 %v15049, %v15060
  %v15117 = vadd.f32 %v15050, %v15060
  %v15118 = vadd.f32 %v15051, %v15060
  %v15119 = vadd.f32 %v15052, %v15060
  %v15120 = vadd.f32 %v15053, %v15060
  %v15121 = vadd.f32 %v15054, %v15060
  %v15122 = vadd.f32 %v15055, %v15060
  %v15123 = vadd.f32 %v15056, %v15060
  %v15124 = vadd.f32 %v15057, %v15060
  %v15125 = vld [vmem:[%s4] sm:$0xf]
  %v15126 = vld [vmem:[%s4 + $0x4] sm:$0xf]
  %v15127 = vld [vmem:[%s4 + $0x8] sm:$0xf]
  %v15128 = vld [vmem:[%s4 + $0xc] sm:$0xf]
  %v15129 = vld [vmem:[%s4 + $0x10] sm:$0xf]
  %v15130 = vld [vmem:[%s4 + $0x14] sm:$0xf]
  %v15131 = vld [vmem:[%s4 + $0x18] sm:$0xf]
  %v15132 = vld [vmem:[%s4 + $0x1c] sm:$0xf]
  %v15133 = vld [vmem:[%s4 + $0x20] sm:$0xf]
  %v15134 = vld [vmem:[%s4 + $0x24] sm:$0xf]
  %v15135 = vld [vmem:[%s4 + $0x28] sm:$0xf]
  %v15136 = vld [vmem:[%s4 + $0x2c] sm:$0xf]
  %v15137 = vld [vmem:[%s4 + $0x30] sm:$0xf]
  %v15138 = vld [vmem:[%s4 + $0x34] sm:$0xf]
  %v15139 = vld [vmem:[%s4 + $0x38] sm:$0xf]
  %v15140 = vld [vmem:[%s4 + $0x3c] sm:$0xf]
  %v15141 = vld [vmem:[%s4 + $0x40] sm:$0xf]
  %v15142 = vld [vmem:[%s4 + $0x44] sm:$0xf]
  %v15143 = vld [vmem:[%s4 + $0x48] sm:$0xf]
  %v15144 = vld [vmem:[%s4 + $0x4c] sm:$0xf]
  %v15145 = vld [vmem:[%s4 + $0x50] sm:$0xf]
  %v15146 = vld [vmem:[%s4 + $0x54] sm:$0xf]
  %v15147 = vld [vmem:[%s4 + $0x58] sm:$0xf]
  %v15148 = vld [vmem:[%s4 + $0x5c] sm:$0xf]
  %v15149 = vld [vmem:[%s4 + $0x60] sm:$0xf]
  %v15150 = vld [vmem:[%s4 + $0x64] sm:$0xf]
  %v15151 = vld [vmem:[%s4 + $0x68] sm:$0xf]
  %v15152 = vld [vmem:[%s4 + $0x6c] sm:$0xf]
  %v15153 = vld [vmem:[%s4 + $0x70] sm:$0xf]
  %v15154 = vld [vmem:[%s4 + $0x74] sm:$0xf]
  %v15155 = vld [vmem:[%s4 + $0x78] sm:$0xf]
  %v15156 = vld [vmem:[%s4 + $0x7c] sm:$0xf]
  %v15157 = vld [vmem:[%s4 + $0x80] sm:$0xf]
  %v15158 = vld [vmem:[%s4 + $0x84] sm:$0xf]
  %v15159 = vld [vmem:[%s4 + $0x88] sm:$0xf]
  %v15160 = vld [vmem:[%s4 + $0x8c] sm:$0xf]
  %v15161 = vld [vmem:[%s4 + $0x90] sm:$0xf]
  %v15162 = vld [vmem:[%s4 + $0x94] sm:$0xf]
  %v15163 = vld [vmem:[%s4 + $0x98] sm:$0xf]
  %v15164 = vld [vmem:[%s4 + $0x9c] sm:$0xf]
  %v15165 = vld [vmem:[%s4 + $0xa0] sm:$0xf]
  %v15166 = vld [vmem:[%s4 + $0xa4] sm:$0xf]
  %v15167 = vld [vmem:[%s4 + $0xa8] sm:$0xf]
  %v15168 = vld [vmem:[%s4 + $0xac] sm:$0xf]
  %v15169 = vld [vmem:[%s4 + $0xb0] sm:$0xf]
  %v15170 = vld [vmem:[%s4 + $0xb4] sm:$0xf]
  %v15171 = vld [vmem:[%s4 + $0xb8] sm:$0xf]
  %v15172 = vld [vmem:[%s4 + $0xbc] sm:$0xf]
  %v15173 = vld [vmem:[%s4 + $0xc0] sm:$0xf]
  %v15174 = vld [vmem:[%s4 + $0xc4] sm:$0xf]
  %v15175 = vld [vmem:[%s4 + $0xc8] sm:$0xf]
  %v15176 = vld [vmem:[%s4 + $0xcc] sm:$0xf]
  %v15177 = vld [vmem:[%s4 + $0xd0] sm:$0xf]
  %v15178 = vld [vmem:[%s4 + $0xd4] sm:$0xf]
  %v15179 = vld [vmem:[%s4 + $0xd8] sm:$0xf]
  %v15180 = vld [vmem:[%s4 + $0xdc] sm:$0xf]
  %v15181 = vld [vmem:[%s4 + $0xe0] sm:$0xf]
  %v15182 = vld [vmem:[%s4 + $0xe4] sm:$0xf]
  %v15183 = vld [vmem:[%s4 + $0xe8] sm:$0xf]
  %v15184 = vld [vmem:[%s4 + $0xec] sm:$0xf]
  %v15185 = vld [vmem:[%s4 + $0xf0] sm:$0xf]
  %v15186 = vld [vmem:[%s4 + $0xf4] sm:$0xf]
  %v15187 = vld [vmem:[%s4 + $0xf8] sm:$0xf]
  %v15188 = vunpack.c.l.bf16 %v15125
  %v15189 = vunpack.c.l.bf16 %v15126
  %v15190 = vunpack.c.l.bf16 %v15127
  %v15191 = vunpack.c.l.bf16 %v15128
  %v15192 = vunpack.c.l.bf16 %v15129
  %v15193 = vunpack.c.l.bf16 %v15130
  %v15194 = vunpack.c.l.bf16 %v15131
  %v15195 = vunpack.c.l.bf16 %v15132
  %v15196 = vunpack.c.l.bf16 %v15133
  %v15197 = vunpack.c.l.bf16 %v15134
  %v15198 = vunpack.c.l.bf16 %v15135
  %v15199 = vunpack.c.l.bf16 %v15136
  %v15200 = vunpack.c.l.bf16 %v15137
  %v15201 = vunpack.c.l.bf16 %v15138
  %v15202 = vunpack.c.l.bf16 %v15139
  %v15203 = vunpack.c.l.bf16 %v15140
  %v15204 = vunpack.c.l.bf16 %v15141
  %v15205 = vunpack.c.l.bf16 %v15142
  %v15206 = vunpack.c.l.bf16 %v15143
  %v15207 = vunpack.c.l.bf16 %v15144
  %v15208 = vunpack.c.l.bf16 %v15145
  %v15209 = vunpack.c.l.bf16 %v15146
  %v15210 = vunpack.c.l.bf16 %v15147
  %v15211 = vunpack.c.l.bf16 %v15148
  %v15212 = vunpack.c.l.bf16 %v15149
  %v15213 = vunpack.c.l.bf16 %v15150
  %v15214 = vunpack.c.l.bf16 %v15151
  %v15215 = vunpack.c.l.bf16 %v15152
  %v15216 = vunpack.c.l.bf16 %v15153
  %v15217 = vunpack.c.l.bf16 %v15154
  %v15218 = vunpack.c.l.bf16 %v15155
  %v15219 = vunpack.c.l.bf16 %v15156
  %v15220 = vunpack.c.l.bf16 %v15157
  %v15221 = vunpack.c.l.bf16 %v15158
  %v15222 = vunpack.c.l.bf16 %v15159
  %v15223 = vunpack.c.l.bf16 %v15160
  %v15224 = vunpack.c.l.bf16 %v15161
  %v15225 = vunpack.c.l.bf16 %v15162
  %v15226 = vunpack.c.l.bf16 %v15163
  %v15227 = vunpack.c.l.bf16 %v15164
  %v15228 = vunpack.c.l.bf16 %v15165
  %v15229 = vunpack.c.l.bf16 %v15166
  %v15230 = vunpack.c.l.bf16 %v15167
  %v15231 = vunpack.c.l.bf16 %v15168
  %v15232 = vunpack.c.l.bf16 %v15169
  %v15233 = vunpack.c.l.bf16 %v15170
  %v15234 = vunpack.c.l.bf16 %v15171
  %v15235 = vunpack.c.l.bf16 %v15172
  %v15236 = vunpack.c.l.bf16 %v15173
  %v15237 = vunpack.c.l.bf16 %v15174
  %v15238 = vunpack.c.l.bf16 %v15175
  %v15239 = vunpack.c.l.bf16 %v15176
  %v15240 = vunpack.c.l.bf16 %v15177
  %v15241 = vunpack.c.l.bf16 %v15178
  %v15242 = vunpack.c.l.bf16 %v15179
  %v15243 = vunpack.c.l.bf16 %v15180
  %v15244 = vunpack.c.l.bf16 %v15181
  %v15245 = vunpack.c.l.bf16 %v15182
  %v15246 = vunpack.c.l.bf16 %v15183
  %v15247 = vunpack.c.l.bf16 %v15184
  %v15248 = vunpack.c.l.bf16 %v15185
  %v15249 = vunpack.c.l.bf16 %v15186
  %v15250 = vunpack.c.l.bf16 %v15187
  %v15251 = vadd.f32 %v15062, %v15188
  %v15252 = vadd.f32 %v15063, %v15189
  %v15253 = vadd.f32 %v15064, %v15190
  %v15254 = vadd.f32 %v15065, %v15191
  %v15255 = vadd.f32 %v15066, %v15192
  %v15256 = vadd.f32 %v15067, %v15193
  %v15257 = vadd.f32 %v15068, %v15194
  %v15258 = vadd.f32 %v15069, %v15195
  %v15259 = vadd.f32 %v15070, %v15196
  %v15260 = vadd.f32 %v15071, %v15197
  %v15261 = vadd.f32 %v15072, %v15198
  %v15262 = vadd.f32 %v15073, %v15199
  %v15263 = vadd.f32 %v15074, %v15200
  %v15264 = vadd.f32 %v15075, %v15201
  %v15265 = vadd.f32 %v15076, %v15202
  %v15266 = vadd.f32 %v15077, %v15203
  %v15267 = vadd.f32 %v15078, %v15204
  %v15268 = vadd.f32 %v15079, %v15205
  %v15269 = vadd.f32 %v15080, %v15206
  %v15270 = vadd.f32 %v15081, %v15207
  %v15271 = vadd.f32 %v15082, %v15208
  %v15272 = vadd.f32 %v15083, %v15209
  %v15273 = vadd.f32 %v15084, %v15210
  %v15274 = vadd.f32 %v15085, %v15211
  %v15275 = vadd.f32 %v15086, %v15212
  %v15276 = vadd.f32 %v15087, %v15213
  %v15277 = vadd.f32 %v15088, %v15214
  %v15278 = vadd.f32 %v15089, %v15215
  %v15279 = vadd.f32 %v15090, %v15216
  %v15280 = vadd.f32 %v15091, %v15217
  %v15281 = vadd.f32 %v15092, %v15218
  %v15282 = vadd.f32 %v15093, %v15219
  %v15283 = vadd.f32 %v15094, %v15220
  %v15284 = vadd.f32 %v15095, %v15221
  %v15285 = vadd.f32 %v15096, %v15222
  %v15286 = vadd.f32 %v15097, %v15223
  %v15287 = vadd.f32 %v15098, %v15224
  %v15288 = vadd.f32 %v15099, %v15225
  %v15289 = vadd.f32 %v15100, %v15226
  %v15290 = vadd.f32 %v15101, %v15227
  %v15291 = vadd.f32 %v15102, %v15228
  %v15292 = vadd.f32 %v15103, %v15229
  %v15293 = vadd.f32 %v15104, %v15230
  %v15294 = vadd.f32 %v15105, %v15231
  %v15295 = vadd.f32 %v15106, %v15232
  %v15296 = vadd.f32 %v15107, %v15233
  %v15297 = vadd.f32 %v15108, %v15234
  %v15298 = vadd.f32 %v15109, %v15235
  %v15299 = vadd.f32 %v15110, %v15236
  %v15300 = vadd.f32 %v15111, %v15237
  %v15301 = vadd.f32 %v15112, %v15238
  %v15302 = vadd.f32 %v15113, %v15239
  %v15303 = vadd.f32 %v15114, %v15240
  %v15304 = vadd.f32 %v15115, %v15241
  %v15305 = vadd.f32 %v15116, %v15242
  %v15306 = vadd.f32 %v15117, %v15243
  %v15307 = vadd.f32 %v15118, %v15244
  %v15308 = vadd.f32 %v15119, %v15245
  %v15309 = vadd.f32 %v15120, %v15246
  %v15310 = vadd.f32 %v15121, %v15247
  %v15311 = vadd.f32 %v15122, %v15248
  %v15312 = vadd.f32 %v15123, %v15249
  %v15313 = vadd.f32 %v15124, %v15250
  %v15314 = vmax.f32 %v15251, 0.0
  %v15315 = vmax.f32 %v15252, 0.0
  %v15316 = vmax.f32 %v15253, 0.0
  %v15317 = vmax.f32 %v15254, 0.0
  %v15318 = vmax.f32 %v15255, 0.0
  %v15319 = vmax.f32 %v15256, 0.0
  %v15320 = vmax.f32 %v15257, 0.0
  %v15321 = vmax.f32 %v15258, 0.0
  %v15322 = vmax.f32 %v15259, 0.0
  %v15323 = vmax.f32 %v15260, 0.0
  %v15324 = vmax.f32 %v15261, 0.0
  %v15325 = vmax.f32 %v15262, 0.0
  %v15326 = vmax.f32 %v15263, 0.0
  %v15327 = vmax.f32 %v15264, 0.0
  %v15328 = vmax.f32 %v15265, 0.0
  %v15329 = vmax.f32 %v15266, 0.0
  %v15330 = vmax.f32 %v15267, 0.0
  %v15331 = vmax.f32 %v15268, 0.0
  %v15332 = vmax.f32 %v15269, 0.0
  %v15333 = vmax.f32 %v15270, 0.0
  %v15334 = vmax.f32 %v15271, 0.0
  %v15335 = vmax.f32 %v15272, 0.0
  %v15336 = vmax.f32 %v15273, 0.0
  %v15337 = vmax.f32 %v15274, 0.0
  %v15338 = vmax.f32 %v15275, 0.0
  %v15339 = vmax.f32 %v15276, 0.0
  %v15340 = vmax.f32 %v15277, 0.0
  %v15341 = vmax.f32 %v15278, 0.0
  %v15342 = vmax.f32 %v15279, 0.0
  %v15343 = vmax.f32 %v15280, 0.0
  %v15344 = vmax.f32 %v15281, 0.0
  %v15345 = vmax.f32 %v15282, 0.0
  %v15346 = vmax.f32 %v15283, 0.0
  %v15347 = vmax.f32 %v15284, 0.0
  %v15348 = vmax.f32 %v15285, 0.0
  %v15349 = vmax.f32 %v15286, 0.0
  %v15350 = vmax.f32 %v15287, 0.0
  %v15351 = vmax.f32 %v15288, 0.0
  %v15352 = vmax.f32 %v15289, 0.0
  %v15353 = vmax.f32 %v15290, 0.0
  %v15354 = vmax.f32 %v15291, 0.0
  %v15355 = vmax.f32 %v15292, 0.0
  %v15356 = vmax.f32 %v15293, 0.0
  %v15357 = vmax.f32 %v15294, 0.0
  %v15358 = vmax.f32 %v15295, 0.0
  %v15359 = vmax.f32 %v15296, 0.0
  %v15360 = vmax.f32 %v15297, 0.0
  %v15361 = vmax.f32 %v15298, 0.0
  %v15362 = vmax.f32 %v15299, 0.0
  %v15363 = vmax.f32 %v15300, 0.0
  %v15364 = vmax.f32 %v15301, 0.0
  %v15365 = vmax.f32 %v15302, 0.0
  %v15366 = vmax.f32 %v15303, 0.0
  %v15367 = vmax.f32 %v15304, 0.0
  %v15368 = vmax.f32 %v15305, 0.0
  %v15369 = vmax.f32 %v15306, 0.0
  %v15370 = vmax.f32 %v15307, 0.0
  %v15371 = vmax.f32 %v15308, 0.0
  %v15372 = vmax.f32 %v15309, 0.0
  %v15373 = vmax.f32 %v15310, 0.0
  %v15374 = vmax.f32 %v15311, 0.0
  %v15375 = vmax.f32 %v15312, 0.0
  %v15376 = vmax.f32 %v15313, 0.0
  %v15377 = vpack.c.bf16 %v15314, %v15314
  %v15378 = vpack.c.bf16 %v15315, %v15315
  %v15379 = vpack.c.bf16 %v15316, %v15316
  %v15380 = vpack.c.bf16 %v15317, %v15317
  %v15381 = vpack.c.bf16 %v15318, %v15318
  %v15382 = vpack.c.bf16 %v15319, %v15319
  %v15383 = vpack.c.bf16 %v15320, %v15320
  %v15384 = vpack.c.bf16 %v15321, %v15321
  %v15385 = vpack.c.bf16 %v15322, %v15322
  %v15386 = vpack.c.bf16 %v15323, %v15323
  %v15387 = vpack.c.bf16 %v15324, %v15324
  %v15388 = vpack.c.bf16 %v15325, %v15325
  %v15389 = vpack.c.bf16 %v15326, %v15326
  %v15390 = vpack.c.bf16 %v15327, %v15327
  %v15391 = vpack.c.bf16 %v15328, %v15328
  %v15392 = vpack.c.bf16 %v15329, %v15329
  %v15393 = vpack.c.bf16 %v15330, %v15330
  %v15394 = vpack.c.bf16 %v15331, %v15331
  %v15395 = vpack.c.bf16 %v15332, %v15332
  %v15396 = vpack.c.bf16 %v15333, %v15333
  %v15397 = vpack.c.bf16 %v15334, %v15334
  %v15398 = vpack.c.bf16 %v15335, %v15335
  %v15399 = vpack.c.bf16 %v15336, %v15336
  %v15400 = vpack.c.bf16 %v15337, %v15337
  %v15401 = vpack.c.bf16 %v15338, %v15338
  %v15402 = vpack.c.bf16 %v15339, %v15339
  %v15403 = vpack.c.bf16 %v15340, %v15340
  %v15404 = vpack.c.bf16 %v15341, %v15341
  %v15405 = vpack.c.bf16 %v15342, %v15342
  %v15406 = vpack.c.bf16 %v15343, %v15343
  %v15407 = vpack.c.bf16 %v15344, %v15344
  %v15408 = vpack.c.bf16 %v15345, %v15345
  %v15409 = vpack.c.bf16 %v15346, %v15346
  %v15410 = vpack.c.bf16 %v15347, %v15347
  %v15411 = vpack.c.bf16 %v15348, %v15348
  %v15412 = vpack.c.bf16 %v15349, %v15349
  %v15413 = vpack.c.bf16 %v15350, %v15350
  %v15414 = vpack.c.bf16 %v15351, %v15351
  %v15415 = vpack.c.bf16 %v15352, %v15352
  %v15416 = vpack.c.bf16 %v15353, %v15353
  %v15417 = vpack.c.bf16 %v15354, %v15354
  %v15418 = vpack.c.bf16 %v15355, %v15355
  %v15419 = vpack.c.bf16 %v15356, %v15356
  %v15420 = vpack.c.bf16 %v15357, %v15357
  %v15421 = vpack.c.bf16 %v15358, %v15358
  %v15422 = vpack.c.bf16 %v15359, %v15359
  %v15423 = vpack.c.bf16 %v15360, %v15360
  %v15424 = vpack.c.bf16 %v15361, %v15361
  %v15425 = vpack.c.bf16 %v15362, %v15362
  %v15426 = vpack.c.bf16 %v15363, %v15363
  %v15427 = vpack.c.bf16 %v15364, %v15364
  %v15428 = vpack.c.bf16 %v15365, %v15365
  %v15429 = vpack.c.bf16 %v15366, %v15366
  %v15430 = vpack.c.bf16 %v15367, %v15367
  %v15431 = vpack.c.bf16 %v15368, %v15368
  %v15432 = vpack.c.bf16 %v15369, %v15369
  %v15433 = vpack.c.bf16 %v15370, %v15370
  %v15434 = vpack.c.bf16 %v15371, %v15371
  %v15435 = vpack.c.bf16 %v15372, %v15372
  %v15436 = vpack.c.bf16 %v15373, %v15373
  %v15437 = vpack.c.bf16 %v15374, %v15374
  %v15438 = vpack.c.bf16 %v15375, %v15375
  %v15439 = vpack.c.bf16 %v15376, %v15376
  %vm15440 = vcmask 125952
  %15441 = vst.msk [vmem:[%s5] sm:$0xf] %vm15440, %v15377
  %15442 = vst.msk [vmem:[%s5 + $0x4] sm:$0xf] %vm15440, %v15378
  %15443 = vst.msk [vmem:[%s5 + $0x8] sm:$0xf] %vm15440, %v15379
  %15444 = vst.msk [vmem:[%s5 + $0xc] sm:$0xf] %vm15440, %v15380
  %15445 = vst.msk [vmem:[%s5 + $0x10] sm:$0xf] %vm15440, %v15381
  %15446 = vst.msk [vmem:[%s5 + $0x14] sm:$0xf] %vm15440, %v15382
  %15447 = vst.msk [vmem:[%s5 + $0x18] sm:$0xf] %vm15440, %v15383
  %15448 = vst.msk [vmem:[%s5 + $0x1c] sm:$0xf] %vm15440, %v15384
  %15449 = vst.msk [vmem:[%s5 + $0x20] sm:$0xf] %vm15440, %v15385
  %15450 = vst.msk [vmem:[%s5 + $0x24] sm:$0xf] %vm15440, %v15386
  %15451 = vst.msk [vmem:[%s5 + $0x28] sm:$0xf] %vm15440, %v15387
  %15452 = vst.msk [vmem:[%s5 + $0x2c] sm:$0xf] %vm15440, %v15388
  %15453 = vst.msk [vmem:[%s5 + $0x30] sm:$0xf] %vm15440, %v15389
  %15454 = vst.msk [vmem:[%s5 + $0x34] sm:$0xf] %vm15440, %v15390
  %15455 = vst.msk [vmem:[%s5 + $0x38] sm:$0xf] %vm15440, %v15391
  %15456 = vst.msk [vmem:[%s5 + $0x3c] sm:$0xf] %vm15440, %v15392
  %15457 = vst.msk [vmem:[%s5 + $0x40] sm:$0xf] %vm15440, %v15393
  %15458 = vst.msk [vmem:[%s5 + $0x44] sm:$0xf] %vm15440, %v15394
  %15459 = vst.msk [vmem:[%s5 + $0x48] sm:$0xf] %vm15440, %v15395
  %15460 = vst.msk [vmem:[%s5 + $0x4c] sm:$0xf] %vm15440, %v15396
  %15461 = vst.msk [vmem:[%s5 + $0x50] sm:$0xf] %vm15440, %v15397
  %15462 = vst.msk [vmem:[%s5 + $0x54] sm:$0xf] %vm15440, %v15398
  %15463 = vst.msk [vmem:[%s5 + $0x58] sm:$0xf] %vm15440, %v15399
  %15464 = vst.msk [vmem:[%s5 + $0x5c] sm:$0xf] %vm15440, %v15400
  %15465 = vst.msk [vmem:[%s5 + $0x60] sm:$0xf] %vm15440, %v15401
  %15466 = vst.msk [vmem:[%s5 + $0x64] sm:$0xf] %vm15440, %v15402
  %15467 = vst.msk [vmem:[%s5 + $0x68] sm:$0xf] %vm15440, %v15403
  %15468 = vst.msk [vmem:[%s5 + $0x6c] sm:$0xf] %vm15440, %v15404
  %15469 = vst.msk [vmem:[%s5 + $0x70] sm:$0xf] %vm15440, %v15405
  %15470 = vst.msk [vmem:[%s5 + $0x74] sm:$0xf] %vm15440, %v15406
  %15471 = vst.msk [vmem:[%s5 + $0x78] sm:$0xf] %vm15440, %v15407
  %15472 = vst.msk [vmem:[%s5 + $0x7c] sm:$0xf] %vm15440, %v15408
  %15473 = vst.msk [vmem:[%s5 + $0x80] sm:$0xf] %vm15440, %v15409
  %15474 = vst.msk [vmem:[%s5 + $0x84] sm:$0xf] %vm15440, %v15410
  %15475 = vst.msk [vmem:[%s5 + $0x88] sm:$0xf] %vm15440, %v15411
  %15476 = vst.msk [vmem:[%s5 + $0x8c] sm:$0xf] %vm15440, %v15412
  %15477 = vst.msk [vmem:[%s5 + $0x90] sm:$0xf] %vm15440, %v15413
  %15478 = vst.msk [vmem:[%s5 + $0x94] sm:$0xf] %vm15440, %v15414
  %15479 = vst.msk [vmem:[%s5 + $0x98] sm:$0xf] %vm15440, %v15415
  %15480 = vst.msk [vmem:[%s5 + $0x9c] sm:$0xf] %vm15440, %v15416
  %15481 = vst.msk [vmem:[%s5 + $0xa0] sm:$0xf] %vm15440, %v15417
  %15482 = vst.msk [vmem:[%s5 + $0xa4] sm:$0xf] %vm15440, %v15418
  %15483 = vst.msk [vmem:[%s5 + $0xa8] sm:$0xf] %vm15440, %v15419
  %15484 = vst.msk [vmem:[%s5 + $0xac] sm:$0xf] %vm15440, %v15420
  %15485 = vst.msk [vmem:[%s5 + $0xb0] sm:$0xf] %vm15440, %v15421
  %15486 = vst.msk [vmem:[%s5 + $0xb4] sm:$0xf] %vm15440, %v15422
  %15487 = vst.msk [vmem:[%s5 + $0xb8] sm:$0xf] %vm15440, %v15423
  %15488 = vst.msk [vmem:[%s5 + $0xbc] sm:$0xf] %vm15440, %v15424
  %15489 = vst.msk [vmem:[%s5 + $0xc0] sm:$0xf] %vm15440, %v15425
  %15490 = vst.msk [vmem:[%s5 + $0xc4] sm:$0xf] %vm15440, %v15426
  %15491 = vst.msk [vmem:[%s5 + $0xc8] sm:$0xf] %vm15440, %v15427
  %15492 = vst.msk [vmem:[%s5 + $0xcc] sm:$0xf] %vm15440, %v15428
  %15493 = vst.msk [vmem:[%s5 + $0xd0] sm:$0xf] %vm15440, %v15429
  %15494 = vst.msk [vmem:[%s5 + $0xd4] sm:$0xf] %vm15440, %v15430
  %15495 = vst.msk [vmem:[%s5 + $0xd8] sm:$0xf] %vm15440, %v15431
  %15496 = vst.msk [vmem:[%s5 + $0xdc] sm:$0xf] %vm15440, %v15432
  %15497 = vst.msk [vmem:[%s5 + $0xe0] sm:$0xf] %vm15440, %v15433
  %15498 = vst.msk [vmem:[%s5 + $0xe4] sm:$0xf] %vm15440, %v15434
  %15499 = vst.msk [vmem:[%s5 + $0xe8] sm:$0xf] %vm15440, %v15435
  %15500 = vst.msk [vmem:[%s5 + $0xec] sm:$0xf] %vm15440, %v15436
  %15501 = vst.msk [vmem:[%s5 + $0xf0] sm:$0xf] %vm15440, %v15437
  %15502 = vst.msk [vmem:[%s5 + $0xf4] sm:$0xf] %vm15440, %v15438
  %15503 = vst.msk [vmem:[%s5 + $0xf8] sm:$0xf] %vm15440, %v15439
  // Predicated region
  $region37: #{tpu_custom_call.1} parent=0 // pred_check
    _
  $region38: #{tpu_custom_call.1} parent=0 // pred_check_branch
    %15505 = sbr.rel (0) target = $region40
  $region39: #{tpu_custom_call.1} parent=0 // pred_region
    _
  $region40: #{tpu_custom_call.1} parent=0 // pred_fallthru
    _
  // Predicated region
  $region41: #{tpu_custom_call.1} parent=0 // pred_check
    _
  $region42: #{tpu_custom_call.1} parent=0 // pred_check_branch
    %15507 = sbr.rel (0) target = $region44
  $region43: #{tpu_custom_call.1} parent=0 // pred_region
    _
  $region44: #{tpu_custom_call.1} parent=0 // pred_fallthru
    _
  %15508 = vsyncmov [#allocation3]
  %s15509 = vpop.sfrf %15508
  %p15510 = scmp.eq.s32.totalorder %s15509, 0
  %p15511 = pneg %p15510
  %15513 = shalt.err (%p15511)

</llo_original>
